<compile_context>
chip_gen: v6e
topology: v6e:2x2x1
jax: 0.10.0
libtpu: 0.0.40
codegen_flags: <defaults>
</compile_context>

<pallas_src>
import jax
import jax.numpy as jnp
from jax import lax
from jax.experimental import pallas as pl
from jax.experimental.pallas import tpu as pltpu

TK = 2688   # conv1 reduction tile (21 * 128); Kpad = 21504 -> 8 K-steps
TM = 128    # conv1 row (B*T) tile


def _round_up(x, m):
    return (x + m - 1) // m * m


# ---------------------------------------------------------------------------
# Pallas kernel A: conv1 as one big stacked-tap matmul
#   Z = X @ W1p     X: (Mpad, Kpad) bf16,  W1p: (Kpad, 4*64) bf16,  Z: f32
# ---------------------------------------------------------------------------
def _conv1_matmul_kernel(x_ref, w_ref, o_ref, acc_ref):
    k = pl.program_id(1)

    @pl.when(k == 0)
    def _():
        acc_ref[...] = jnp.zeros_like(acc_ref)

    acc_ref[...] += jnp.dot(x_ref[...], w_ref[...],
                            preferred_element_type=jnp.float32)

    @pl.when(k == pl.num_programs(1) - 1)
    def _():
        o_ref[...] = acc_ref[...]


def conv1_stacked_matmul(x_pad, w1_packed):
    Mpad, Kpad = x_pad.shape
    _, N = w1_packed.shape                      # N = 4 * 64 = 256 (lane-dense)
    grid = (Mpad // TM, Kpad // TK)
    return pl.pallas_call(
        _conv1_matmul_kernel,
        out_shape=jax.ShapeDtypeStruct((Mpad, N), jnp.float32),
        grid_spec=pltpu.PrefetchScalarGridSpec(
            num_scalar_prefetch=0,
            grid=grid,
            in_specs=[
                pl.BlockSpec((TM, TK), lambda i, k: (i, k)),
                pl.BlockSpec((TK, N), lambda i, k: (k, 0)),
            ],
            out_specs=pl.BlockSpec((TM, N), lambda i, k: (i, 0)),
            scratch_shapes=[pltpu.VMEM((TM, N), jnp.float32)],
        ),
        compiler_params=pltpu.CompilerParams(
            dimension_semantics=("parallel", "arbitrary")),
    )(x_pad, w1_packed)


# ---------------------------------------------------------------------------
# Pallas kernel B: fused conv1-epilogue + conv2 + conv3 + conv4 + mask gate
# ---------------------------------------------------------------------------
def _tap_rows(x, l_out, k):
    """Rows k, k+2, ..., k+2*(l_out-1) of x via a tiny selection matmul."""
    L = x.shape[0]
    rows = lax.broadcasted_iota(jnp.int32, (l_out, L), 0)
    cols = lax.broadcasted_iota(jnp.int32, (l_out, L), 1)
    sel = (cols == 2 * rows + k).astype(x.dtype)
    return jnp.dot(sel, x, preferred_element_type=jnp.float32)


def _conv_k4_s2(x, w, b, relu):
    """Conv1d(kernel=4, stride=2) on channels-last (L, C) with packed weight
    w of shape (4*C, Cout) where row index = k*C + ci."""
    L, _ = x.shape
    l_out = (L - 4) // 2 + 1
    patches = jnp.concatenate([_tap_rows(x, l_out, k) for k in range(4)],
                              axis=-1)                         # (l_out, 4*C)
    y = jnp.dot(patches, w, preferred_element_type=jnp.float32) + b
    return jnp.maximum(y, 0.0) if relu else y


def _fused_tail_kernel(z_ref, b1_ref, w2_ref, b2_ref, w3_ref, b3_ref,
                       w4_ref, b4_ref, wm_ref, bm_ref, o_ref):
    z = z_ref[...]                         # (T, 256) f32, taps stacked on lanes
    T = z.shape[0]
    l1 = (T - 4) // 2 + 1

    # conv1 epilogue: y1[l, co] = relu(sum_k Z[2l+k, 64k+co] + b1[co])
    acc = _tap_rows(z[:, 0:64], l1, 0)
    for k in range(1, 4):
        acc = acc + _tap_rows(z[:, 64 * k:64 * (k + 1)], l1, k)
    y1 = jnp.maximum(acc + b1_ref[...], 0.0)                    # (l1, 64)

    y2 = _conv_k4_s2(y1, w2_ref[...], b2_ref[...], relu=True)   # (l2, 128)
    y3 = _conv_k4_s2(y2, w3_ref[...], b3_ref[...], relu=True)   # (l3, 256)
    y4 = _conv_k4_s2(y3, w4_ref[...], b4_ref[...], relu=False)  # (l4, 512)

    # 1x1 mask conv (512->1) as a row reduction + sigmoid + gating
    logit = jnp.sum(y4 * wm_ref[...], axis=-1, keepdims=True) + bm_ref[...]
    gate = jax.nn.sigmoid(logit)                                # (l4, 1)
    o_ref[...] = (y4 * gate).astype(o_ref.dtype)


def _full_spec(shape):
    n = len(shape)
    return pl.BlockSpec(shape, lambda b, _n=n: (0,) * _n)


def fused_tail(z, pp):
    B, T, _ = z.shape
    l1 = (T - 4) // 2 + 1
    l2 = (l1 - 4) // 2 + 1
    l3 = (l2 - 4) // 2 + 1
    l4 = (l3 - 4) // 2 + 1
    return pl.pallas_call(
        _fused_tail_kernel,
        out_shape=jax.ShapeDtypeStruct((B, l4, 512), jnp.float32),
        grid_spec=pltpu.PrefetchScalarGridSpec(
            num_scalar_prefetch=0,
            grid=(B,),
            in_specs=[
                pl.BlockSpec((None, T, 256), lambda b: (b, 0, 0)),
                _full_spec((1, 64)),
                _full_spec((256, 128)), _full_spec((1, 128)),
                _full_spec((512, 256)), _full_spec((1, 256)),
                _full_spec((1024, 512)), _full_spec((1, 512)),
                _full_spec((1, 512)), _full_spec((1, 1)),
            ],
            out_specs=pl.BlockSpec((None, l4, 512), lambda b: (b, 0, 0)),
        ),
        compiler_params=pltpu.CompilerParams(
            dimension_semantics=("parallel",)),
    )(z, pp["b1"], pp["w2p"], pp["b2"], pp["w3p"], pp["b3"],
      pp["w4p"], pp["b4"], pp["wm"], pp["bm"])


# ---------------------------------------------------------------------------
# One-time weight packing (OUTSIDE the jitted forward)
# ---------------------------------------------------------------------------
def prepare_params(raw):
    w1 = raw["w1"]                                   # (64, 21128, 4)
    cout1, v, k1 = w1.shape
    kpad = _round_up(v, TK)
    # stacked-tap slab: column index = k*Cout + co, bf16, K-padded
    w1p = jnp.transpose(w1, (1, 2, 0)).reshape(v, k1 * cout1)
    w1p = jnp.pad(w1p, ((0, kpad - v), (0, 0))).astype(jnp.bfloat16)

    def pack(w):                                     # (Cout, Cin, K) -> (K*Cin, Cout)
        cout, cin, k = w.shape
        return jnp.transpose(w, (2, 1, 0)).reshape(k * cin, cout).astype(jnp.float32)

    return dict(
        w1p=w1p, b1=raw["b1"].reshape(1, -1).astype(jnp.float32),
        w2p=pack(raw["w2"]), b2=raw["b2"].reshape(1, -1).astype(jnp.float32),
        w3p=pack(raw["w3"]), b3=raw["b3"].reshape(1, -1).astype(jnp.float32),
        w4p=pack(raw["w4"]), b4=raw["b4"].reshape(1, -1).astype(jnp.float32),
        wm=raw["wm"].reshape(1, -1).astype(jnp.float32),   # (1,512,1) -> (1,512)
        bm=raw["bm"].reshape(1, 1).astype(jnp.float32),
    )


# ---------------------------------------------------------------------------
# Full adapter forward: logits (B, T, 21128) -> gated inputs_embeds (B, Lf, 512)
# ---------------------------------------------------------------------------
def adapter_forward(logits, pp):
    B, T, V = logits.shape
    M = B * T
    kpad = pp["w1p"].shape[0]
    mpad = _round_up(M, TM)
    x = logits.reshape(M, V).astype(jnp.bfloat16)
    x = jnp.pad(x, ((0, mpad - M), (0, kpad - V)))
    z = conv1_stacked_matmul(x, pp["w1p"])[:M].reshape(B, T, 256)
    return fused_tail(z, pp)


# ---------------------------------------------------------------------------
# Reference (plain JAX, f32) for a correctness sanity check
# ---------------------------------------------------------------------------
def _ref_conv1d(x_nlc, w_oik, b, stride):
    _, L, _ = x_nlc.shape
    _, _, K = w_oik.shape
    lout = (L - K) // stride + 1
    idx = jnp.arange(lout)[:, None] * stride + jnp.arange(K)[None, :]
    patches = x_nlc[:, idx, :]                       # (B, lout, K, Cin)
    return jnp.einsum("blkc,ock->blo", patches, w_oik) + b


def _ref_forward(logits, raw):
    y = jax.nn.relu(_ref_conv1d(logits, raw["w1"], raw["b1"], 2))
    y = jax.nn.relu(_ref_conv1d(y, raw["w2"], raw["b2"], 2))
    y = jax.nn.relu(_ref_conv1d(y, raw["w3"], raw["b3"], 2))
    y = _ref_conv1d(y, raw["w4"], raw["b4"], 2)
    m = jax.nn.sigmoid(_ref_conv1d(y, raw["wm"], raw["bm"], 1))
    return y * m


def _init_conv(kw, kb, cout, cin, ksz):
    # PyTorch Conv1d default init: U(-1/sqrt(fan_in), 1/sqrt(fan_in))
    bound = 1.0 / float(jnp.sqrt(cin * ksz))
    w = jax.random.uniform(kw, (cout, cin, ksz), jnp.float32, -bound, bound)
    b = jax.random.uniform(kb, (cout,), jnp.float32, -bound, bound)
    return w, b


if __name__ == "__main__":
    key = jax.random.PRNGKey(0)
    ks = jax.random.split(key, 11)

    B, T, V = 2, 64, 21128          # ASR logits: (batch, frames, vocab=21128)
    logits = jax.random.normal(ks[0], (B, T, V), jnp.float32)

    w1, b1 = _init_conv(ks[1], ks[2], 64, V, 4)
    w2, b2 = _init_conv(ks[3], ks[4], 128, 64, 4)
    w3, b3 = _init_conv(ks[5], ks[6], 256, 128, 4)
    w4, b4 = _init_conv(ks[7], ks[8], 512, 256, 4)
    wm, bm = _init_conv(ks[9], ks[10], 1, 512, 1)   # mask_conv (1x1)

    raw = dict(w1=w1, b1=b1, w2=w2, b2=b2, w3=w3, b3=b3,
               w4=w4, b4=b4, wm=wm, bm=bm)
    pp = prepare_params(raw)        # one-time packing, outside the jitted fwd

    out = jax.jit(adapter_forward)(logits, pp)
    out = jax.block_until_ready(out)

    assert out.shape == (B, 2, 512), out.shape
    assert bool(jnp.all(jnp.isfinite(out)))

    ref = _ref_forward(logits, raw)
    tol = 5e-2 * float(jnp.max(jnp.abs(ref))) + 1e-3   # bf16 conv1 inputs
    assert float(jnp.max(jnp.abs(out - ref))) <= tol, \
        float(jnp.max(jnp.abs(out - ref)))

    print("KERNEL_OK")
</pallas_src>

<mosaic_0001>
module attributes {stable_mosaic.version = 11 : i64} {
  func.func @_conv1_matmul_kernel(%arg0: i32, %arg1: i32, %arg2: memref<128x2688xbf16, #tpu.memory_space<vmem>>, %arg3: memref<2688x256xbf16, #tpu.memory_space<vmem>>, %arg4: memref<128x256xf32, #tpu.memory_space<vmem>>, %arg5: memref<128x256xf32, #tpu.memory_space<vmem>>) attributes {dimension_semantics = [#tpu.dimension_semantics<parallel>, #tpu.dimension_semantics<arbitrary>], iteration_bounds = array<i64: 1, 8>, scalar_prefetch = 0 : i64, scratch_operands = 1 : i64, tpu.core_type = #tpu.core_type<tc>, window_params = [{transform_indices = @transform_0, window_bounds = array<i64: 128, 2688>}, {transform_indices = @transform_1, window_bounds = array<i64: 2688, 256>}, {transform_indices = @transform_2, window_bounds = array<i64: 128, 256>}]} {
    %c0_i32 = arith.constant 0 : i32
    %0 = arith.cmpi eq, %arg1, %c0_i32 : i32
    %1 = arith.extui %0 : i1 to i32
    %c0_i32_0 = arith.constant 0 : i32
    %2 = arith.cmpi ne, %1, %c0_i32_0 : i32
    scf.if %2 {
      %cst_9 = arith.constant 0.000000e+00 : f32
      %12 = vector.broadcast %cst_9 : f32 to vector<128x256xf32>
      %c0_10 = arith.constant 0 : index
      %c0_11 = arith.constant 0 : index
      %13 = vector.load %arg5[%c0_10, %c0_11] : memref<128x256xf32, #tpu.memory_space<vmem>>, vector<128x256xf32>
      tpu.vector_store %arg5[%c0_10, %c0_11], %12 {strides = array<i32>} : memref<128x256xf32, #tpu.memory_space<vmem>>, vector<128x256xf32>,
    } else {
    }
    %c0 = arith.constant 0 : index
    %c0_1 = arith.constant 0 : index
    %3 = vector.load %arg5[%c0, %c0_1] : memref<128x256xf32, #tpu.memory_space<vmem>>, vector<128x256xf32>
    %c0_2 = arith.constant 0 : index
    %c0_3 = arith.constant 0 : index
    %4 = vector.load %arg2[%c0_2, %c0_3] : memref<128x2688xbf16, #tpu.memory_space<vmem>>, vector<128x2688xbf16>
    %c0_4 = arith.constant 0 : index
    %c0_5 = arith.constant 0 : index
    %5 = vector.load %arg3[%c0_4, %c0_5] : memref<2688x256xbf16, #tpu.memory_space<vmem>>, vector<2688x256xbf16>
    %cst = arith.constant dense<0.000000e+00> : vector<128x256xf32>
    %6 = tpu.matmul %4, %5, %cst {dimension_numbers = #tpu.dot_dimension_numbers<[1], [0], [0], [1], [0, 0, 1, 1], [], []>} : vector<128x2688xbf16>, vector<2688x256xbf16>, vector<128x256xf32> -> vector<128x256xf32>
    %7 = arith.addf %3, %6 : vector<128x256xf32>
    %c0_6 = arith.constant 0 : index
    %c0_7 = arith.constant 0 : index
    %8 = vector.load %arg5[%c0_6, %c0_7] : memref<128x256xf32, #tpu.memory_space<vmem>>, vector<128x256xf32>
    tpu.vector_store %arg5[%c0_6, %c0_7], %7 {strides = array<i32>} : memref<128x256xf32, #tpu.memory_space<vmem>>, vector<128x256xf32>,
    %c7_i32 = arith.constant 7 : i32
    %9 = arith.cmpi eq, %arg1, %c7_i32 : i32
    %10 = arith.extui %9 : i1 to i32
    %c0_i32_8 = arith.constant 0 : i32
    %11 = arith.cmpi ne, %10, %c0_i32_8 : i32
    scf.if %11 {
      %c0_9 = arith.constant 0 : index
      %c0_10 = arith.constant 0 : index
      %12 = vector.load %arg5[%c0_9, %c0_10] : memref<128x256xf32, #tpu.memory_space<vmem>>, vector<128x256xf32>
      %c0_11 = arith.constant 0 : index
      %c0_12 = arith.constant 0 : index
      %13 = vector.load %arg4[%c0_11, %c0_12] : memref<128x256xf32, #tpu.memory_space<vmem>>, vector<128x256xf32>
      tpu.vector_store %arg4[%c0_11, %c0_12], %12 {strides = array<i32>} : memref<128x256xf32, #tpu.memory_space<vmem>>, vector<128x256xf32>,
    } else {
    }
    return
  }
  func.func @transform_0(%arg0: i32, %arg1: i32) -> (i32, i32) {
    %c0_i32 = arith.constant 0 : i32
    return %arg0, %arg1 : i32, i32
  }
  func.func @transform_1(%arg0: i32, %arg1: i32) -> (i32, i32) {
    %c0_i32 = arith.constant 0 : i32
    %c0_i32_0 = arith.constant 0 : i32
    return %arg1, %c0_i32 : i32, i32
  }
  func.func @transform_2(%arg0: i32, %arg1: i32) -> (i32, i32) {
    %c0_i32 = arith.constant 0 : i32
    %c0_i32_0 = arith.constant 0 : i32
    return %arg0, %c0_i32 : i32, i32
  }
}

module attributes {stable_mosaic.version = 11 : i64} {
  func.func @_fused_tail_kernel(%arg0: i32, %arg1: memref<1x64x256xf32, #tpu.memory_space<vmem>>, %arg2: memref<1x64xf32, #tpu.memory_space<vmem>>, %arg3: memref<256x128xf32, #tpu.memory_space<vmem>>, %arg4: memref<1x128xf32, #tpu.memory_space<vmem>>, %arg5: memref<512x256xf32, #tpu.memory_space<vmem>>, %arg6: memref<1x256xf32, #tpu.memory_space<vmem>>, %arg7: memref<1024x512xf32, #tpu.memory_space<vmem>>, %arg8: memref<1x512xf32, #tpu.memory_space<vmem>>, %arg9: memref<1x512xf32, #tpu.memory_space<vmem>>, %arg10: memref<1x1xf32, #tpu.memory_space<vmem>>, %arg11: memref<1x2x512xf32, #tpu.memory_space<vmem>>) attributes {dimension_semantics = [#tpu.dimension_semantics<parallel>], iteration_bounds = array<i64: 2>, scalar_prefetch = 0 : i64, scratch_operands = 0 : i64, tpu.core_type = #tpu.core_type<tc>, window_params = [{transform_indices = @transform_0, window_bounds = array<i64: 1, 64, 256>}, {pipeline_mode = #tpu.pipeline_mode<synchronous>, transform_indices = @transform_1, window_bounds = array<i64: 1, 64>}, {pipeline_mode = #tpu.pipeline_mode<synchronous>, transform_indices = @transform_2, window_bounds = array<i64: 256, 128>}, {pipeline_mode = #tpu.pipeline_mode<synchronous>, transform_indices = @transform_3, window_bounds = array<i64: 1, 128>}, {pipeline_mode = #tpu.pipeline_mode<synchronous>, transform_indices = @transform_4, window_bounds = array<i64: 512, 256>}, {pipeline_mode = #tpu.pipeline_mode<synchronous>, transform_indices = @transform_5, window_bounds = array<i64: 1, 256>}, {pipeline_mode = #tpu.pipeline_mode<synchronous>, transform_indices = @transform_6, window_bounds = array<i64: 1024, 512>}, {pipeline_mode = #tpu.pipeline_mode<synchronous>, transform_indices = @transform_7, window_bounds = array<i64: 1, 512>}, {pipeline_mode = #tpu.pipeline_mode<synchronous>, transform_indices = @transform_8, window_bounds = array<i64: 1, 512>}, {pipeline_mode = #tpu.pipeline_mode<synchronous>, transform_indices = @transform_9, window_bounds = array<i64: 1, 1>}, {transform_indices = @transform_10, window_bounds = array<i64: 1, 2, 512>}]} {
    %c0 = arith.constant 0 : index
    %c0_0 = arith.constant 0 : index
    %c0_1 = arith.constant 0 : index
    %0 = vector.load %arg1[%c0, %c0_0, %c0_1] : memref<1x64x256xf32, #tpu.memory_space<vmem>>, vector<1x64x256xf32>
    %1 = vector.shape_cast %0 : vector<1x64x256xf32> to vector<64x256xf32>
    %2 = vector.extract_strided_slice %1 {offsets = [0, 0], sizes = [64, 64], strides = [1, 1]} : vector<64x256xf32> to vector<64x64xf32>
    %3 = tpu.iota {dimensions = array<i32: 0>} : vector<31x64xi32>
    %4 = tpu.iota {dimensions = array<i32: 1>} : vector<31x64xi32>
    %c2_i32 = arith.constant 2 : i32
    %5 = vector.broadcast %c2_i32 : i32 to vector<31x64xi32>
    %6 = arith.muli %5, %3 : vector<31x64xi32>
    %c0_i32 = arith.constant 0 : i32
    %7 = vector.broadcast %c0_i32 : i32 to vector<31x64xi32>
    %8 = arith.addi %6, %7 : vector<31x64xi32>
    %9 = arith.cmpi eq, %4, %8 : vector<31x64xi32>
    %10 = arith.extui %9 : vector<31x64xi1> to vector<31x64xi32>
    %11 = arith.sitofp %10 : vector<31x64xi32> to vector<31x64xf32>
    %cst = arith.constant dense<0.000000e+00> : vector<31x64xf32>
    %12 = tpu.matmul %11, %2, %cst {dimension_numbers = #tpu.dot_dimension_numbers<[1], [0], [0], [1], [0, 0, 1, 1], [], []>} : vector<31x64xf32>, vector<64x64xf32>, vector<31x64xf32> -> vector<31x64xf32>
    %13 = vector.extract_strided_slice %1 {offsets = [0, 64], sizes = [64, 64], strides = [1, 1]} : vector<64x256xf32> to vector<64x64xf32>
    %14 = tpu.iota {dimensions = array<i32: 0>} : vector<31x64xi32>
    %15 = tpu.iota {dimensions = array<i32: 1>} : vector<31x64xi32>
    %c2_i32_2 = arith.constant 2 : i32
    %16 = vector.broadcast %c2_i32_2 : i32 to vector<31x64xi32>
    %17 = arith.muli %16, %14 : vector<31x64xi32>
    %c1_i32 = arith.constant 1 : i32
    %18 = vector.broadcast %c1_i32 : i32 to vector<31x64xi32>
    %19 = arith.addi %17, %18 : vector<31x64xi32>
    %20 = arith.cmpi eq, %15, %19 : vector<31x64xi32>
    %21 = arith.extui %20 : vector<31x64xi1> to vector<31x64xi32>
    %22 = arith.sitofp %21 : vector<31x64xi32> to vector<31x64xf32>
    %cst_3 = arith.constant dense<0.000000e+00> : vector<31x64xf32>
    %23 = tpu.matmul %22, %13, %cst_3 {dimension_numbers = #tpu.dot_dimension_numbers<[1], [0], [0], [1], [0, 0, 1, 1], [], []>} : vector<31x64xf32>, vector<64x64xf32>, vector<31x64xf32> -> vector<31x64xf32>
    %24 = arith.addf %12, %23 : vector<31x64xf32>
    %25 = vector.extract_strided_slice %1 {offsets = [0, 128], sizes = [64, 64], strides = [1, 1]} : vector<64x256xf32> to vector<64x64xf32>
    %26 = tpu.iota {dimensions = array<i32: 0>} : vector<31x64xi32>
    %27 = tpu.iota {dimensions = array<i32: 1>} : vector<31x64xi32>
    %c2_i32_4 = arith.constant 2 : i32
    %28 = vector.broadcast %c2_i32_4 : i32 to vector<31x64xi32>
    %29 = arith.muli %28, %26 : vector<31x64xi32>
    %c2_i32_5 = arith.constant 2 : i32
    %30 = vector.broadcast %c2_i32_5 : i32 to vector<31x64xi32>
    %31 = arith.addi %29, %30 : vector<31x64xi32>
    %32 = arith.cmpi eq, %27, %31 : vector<31x64xi32>
    %33 = arith.extui %32 : vector<31x64xi1> to vector<31x64xi32>
    %34 = arith.sitofp %33 : vector<31x64xi32> to vector<31x64xf32>
    %cst_6 = arith.constant dense<0.000000e+00> : vector<31x64xf32>
    %35 = tpu.matmul %34, %25, %cst_6 {dimension_numbers = #tpu.dot_dimension_numbers<[1], [0], [0], [1], [0, 0, 1, 1], [], []>} : vector<31x64xf32>, vector<64x64xf32>, vector<31x64xf32> -> vector<31x64xf32>
    %36 = arith.addf %24, %35 : vector<31x64xf32>
    %37 = vector.extract_strided_slice %1 {offsets = [0, 192], sizes = [64, 64], strides = [1, 1]} : vector<64x256xf32> to vector<64x64xf32>
    %38 = tpu.iota {dimensions = array<i32: 0>} : vector<31x64xi32>
    %39 = tpu.iota {dimensions = array<i32: 1>} : vector<31x64xi32>
    %c2_i32_7 = arith.constant 2 : i32
    %40 = vector.broadcast %c2_i32_7 : i32 to vector<31x64xi32>
    %41 = arith.muli %40, %38 : vector<31x64xi32>
    %c3_i32 = arith.constant 3 : i32
    %42 = vector.broadcast %c3_i32 : i32 to vector<31x64xi32>
    %43 = arith.addi %41, %42 : vector<31x64xi32>
    %44 = arith.cmpi eq, %39, %43 : vector<31x64xi32>
    %45 = arith.extui %44 : vector<31x64xi1> to vector<31x64xi32>
    %46 = arith.sitofp %45 : vector<31x64xi32> to vector<31x64xf32>
    %cst_8 = arith.constant dense<0.000000e+00> : vector<31x64xf32>
    %47 = tpu.matmul %46, %37, %cst_8 {dimension_numbers = #tpu.dot_dimension_numbers<[1], [0], [0], [1], [0, 0, 1, 1], [], []>} : vector<31x64xf32>, vector<64x64xf32>, vector<31x64xf32> -> vector<31x64xf32>
    %48 = arith.addf %36, %47 : vector<31x64xf32>
    %c0_9 = arith.constant 0 : index
    %c0_10 = arith.constant 0 : index
    %49 = vector.load %arg2[%c0_9, %c0_10] : memref<1x64xf32, #tpu.memory_space<vmem>>, vector<1x64xf32>
    %50 = vector.broadcast %49 : vector<1x64xf32> to vector<31x64xf32>
    %51 = arith.addf %48, %50 : vector<31x64xf32>
    %cst_11 = arith.constant 0.000000e+00 : f32
    %52 = vector.broadcast %cst_11 : f32 to vector<31x64xf32>
    %53 = arith.maximumf %51, %52 : vector<31x64xf32>
    %c0_12 = arith.constant 0 : index
    %c0_13 = arith.constant 0 : index
    %54 = vector.load %arg3[%c0_12, %c0_13] : memref<256x128xf32, #tpu.memory_space<vmem>>, vector<256x128xf32>
    %c0_14 = arith.constant 0 : index
    %c0_15 = arith.constant 0 : index
    %55 = vector.load %arg4[%c0_14, %c0_15] : memref<1x128xf32, #tpu.memory_space<vmem>>, vector<1x128xf32>
    %56 = tpu.iota {dimensions = array<i32: 0>} : vector<14x31xi32>
    %57 = tpu.iota {dimensions = array<i32: 1>} : vector<14x31xi32>
    %c2_i32_16 = arith.constant 2 : i32
    %58 = vector.broadcast %c2_i32_16 : i32 to vector<14x31xi32>
    %59 = arith.muli %58, %56 : vector<14x31xi32>
    %c0_i32_17 = arith.constant 0 : i32
    %60 = vector.broadcast %c0_i32_17 : i32 to vector<14x31xi32>
    %61 = arith.addi %59, %60 : vector<14x31xi32>
    %62 = arith.cmpi eq, %57, %61 : vector<14x31xi32>
    %63 = arith.extui %62 : vector<14x31xi1> to vector<14x31xi32>
    %64 = arith.sitofp %63 : vector<14x31xi32> to vector<14x31xf32>
    %cst_18 = arith.constant dense<0.000000e+00> : vector<14x64xf32>
    %65 = tpu.matmul %64, %53, %cst_18 {dimension_numbers = #tpu.dot_dimension_numbers<[1], [0], [0], [1], [0, 0, 1, 1], [], []>} : vector<14x31xf32>, vector<31x64xf32>, vector<14x64xf32> -> vector<14x64xf32>
    %66 = tpu.iota {dimensions = array<i32: 0>} : vector<14x31xi32>
    %67 = tpu.iota {dimensions = array<i32: 1>} : vector<14x31xi32>
    %c2_i32_19 = arith.constant 2 : i32
    %68 = vector.broadcast %c2_i32_19 : i32 to vector<14x31xi32>
    %69 = arith.muli %68, %66 : vector<14x31xi32>
    %c1_i32_20 = arith.constant 1 : i32
    %70 = vector.broadcast %c1_i32_20 : i32 to vector<14x31xi32>
    %71 = arith.addi %69, %70 : vector<14x31xi32>
    %72 = arith.cmpi eq, %67, %71 : vector<14x31xi32>
    %73 = arith.extui %72 : vector<14x31xi1> to vector<14x31xi32>
    %74 = arith.sitofp %73 : vector<14x31xi32> to vector<14x31xf32>
    %cst_21 = arith.constant dense<0.000000e+00> : vector<14x64xf32>
    %75 = tpu.matmul %74, %53, %cst_21 {dimension_numbers = #tpu.dot_dimension_numbers<[1], [0], [0], [1], [0, 0, 1, 1], [], []>} : vector<14x31xf32>, vector<31x64xf32>, vector<14x64xf32> -> vector<14x64xf32>
    %76 = tpu.iota {dimensions = array<i32: 0>} : vector<14x31xi32>
    %77 = tpu.iota {dimensions = array<i32: 1>} : vector<14x31xi32>
    %c2_i32_22 = arith.constant 2 : i32
    %78 = vector.broadcast %c2_i32_22 : i32 to vector<14x31xi32>
    %79 = arith.muli %78, %76 : vector<14x31xi32>
    %c2_i32_23 = arith.constant 2 : i32
    %80 = vector.broadcast %c2_i32_23 : i32 to vector<14x31xi32>
    %81 = arith.addi %79, %80 : vector<14x31xi32>
    %82 = arith.cmpi eq, %77, %81 : vector<14x31xi32>
    %83 = arith.extui %82 : vector<14x31xi1> to vector<14x31xi32>
    %84 = arith.sitofp %83 : vector<14x31xi32> to vector<14x31xf32>
    %cst_24 = arith.constant dense<0.000000e+00> : vector<14x64xf32>
    %85 = tpu.matmul %84, %53, %cst_24 {dimension_numbers = #tpu.dot_dimension_numbers<[1], [0], [0], [1], [0, 0, 1, 1], [], []>} : vector<14x31xf32>, vector<31x64xf32>, vector<14x64xf32> -> vector<14x64xf32>
    %86 = tpu.iota {dimensions = array<i32: 0>} : vector<14x31xi32>
    %87 = tpu.iota {dimensions = array<i32: 1>} : vector<14x31xi32>
    %c2_i32_25 = arith.constant 2 : i32
    %88 = vector.broadcast %c2_i32_25 : i32 to vector<14x31xi32>
    %89 = arith.muli %88, %86 : vector<14x31xi32>
    %c3_i32_26 = arith.constant 3 : i32
    %90 = vector.broadcast %c3_i32_26 : i32 to vector<14x31xi32>
    %91 = arith.addi %89, %90 : vector<14x31xi32>
    %92 = arith.cmpi eq, %87, %91 : vector<14x31xi32>
    %93 = arith.extui %92 : vector<14x31xi1> to vector<14x31xi32>
    %94 = arith.sitofp %93 : vector<14x31xi32> to vector<14x31xf32>
    %cst_27 = arith.constant dense<0.000000e+00> : vector<14x64xf32>
    %95 = tpu.matmul %94, %53, %cst_27 {dimension_numbers = #tpu.dot_dimension_numbers<[1], [0], [0], [1], [0, 0, 1, 1], [], []>} : vector<14x31xf32>, vector<31x64xf32>, vector<14x64xf32> -> vector<14x64xf32>
    %96 = tpu.concatenate %65, %75, %85, %95 in 1 : vector<14x64xf32>, vector<14x64xf32>, vector<14x64xf32>, vector<14x64xf32> -> vector<14x256xf32>
    %cst_28 = arith.constant dense<0.000000e+00> : vector<14x128xf32>
    %97 = tpu.matmul %96, %54, %cst_28 {dimension_numbers = #tpu.dot_dimension_numbers<[1], [0], [0], [1], [0, 0, 1, 1], [], []>} : vector<14x256xf32>, vector<256x128xf32>, vector<14x128xf32> -> vector<14x128xf32>
    %98 = vector.broadcast %55 : vector<1x128xf32> to vector<14x128xf32>
    %99 = arith.addf %97, %98 : vector<14x128xf32>
    %cst_29 = arith.constant 0.000000e+00 : f32
    %100 = vector.broadcast %cst_29 : f32 to vector<14x128xf32>
    %101 = arith.maximumf %99, %100 : vector<14x128xf32>
    %c0_30 = arith.constant 0 : index
    %c0_31 = arith.constant 0 : index
    %102 = vector.load %arg5[%c0_30, %c0_31] : memref<512x256xf32, #tpu.memory_space<vmem>>, vector<512x256xf32>
    %c0_32 = arith.constant 0 : index
    %c0_33 = arith.constant 0 : index
    %103 = vector.load %arg6[%c0_32, %c0_33] : memref<1x256xf32, #tpu.memory_space<vmem>>, vector<1x256xf32>
    %104 = tpu.iota {dimensions = array<i32: 0>} : vector<6x14xi32>
    %105 = tpu.iota {dimensions = array<i32: 1>} : vector<6x14xi32>
    %c2_i32_34 = arith.constant 2 : i32
    %106 = vector.broadcast %c2_i32_34 : i32 to vector<6x14xi32>
    %107 = arith.muli %106, %104 : vector<6x14xi32>
    %c0_i32_35 = arith.constant 0 : i32
    %108 = vector.broadcast %c0_i32_35 : i32 to vector<6x14xi32>
    %109 = arith.addi %107, %108 : vector<6x14xi32>
    %110 = arith.cmpi eq, %105, %109 : vector<6x14xi32>
    %111 = arith.extui %110 : vector<6x14xi1> to vector<6x14xi32>
    %112 = arith.sitofp %111 : vector<6x14xi32> to vector<6x14xf32>
    %cst_36 = arith.constant dense<0.000000e+00> : vector<6x128xf32>
    %113 = tpu.matmul %112, %101, %cst_36 {dimension_numbers = #tpu.dot_dimension_numbers<[1], [0], [0], [1], [0, 0, 1, 1], [], []>} : vector<6x14xf32>, vector<14x128xf32>, vector<6x128xf32> -> vector<6x128xf32>
    %114 = tpu.iota {dimensions = array<i32: 0>} : vector<6x14xi32>
    %115 = tpu.iota {dimensions = array<i32: 1>} : vector<6x14xi32>
    %c2_i32_37 = arith.constant 2 : i32
    %116 = vector.broadcast %c2_i32_37 : i32 to vector<6x14xi32>
    %117 = arith.muli %116, %114 : vector<6x14xi32>
    %c1_i32_38 = arith.constant 1 : i32
    %118 = vector.broadcast %c1_i32_38 : i32 to vector<6x14xi32>
    %119 = arith.addi %117, %118 : vector<6x14xi32>
    %120 = arith.cmpi eq, %115, %119 : vector<6x14xi32>
    %121 = arith.extui %120 : vector<6x14xi1> to vector<6x14xi32>
    %122 = arith.sitofp %121 : vector<6x14xi32> to vector<6x14xf32>
    %cst_39 = arith.constant dense<0.000000e+00> : vector<6x128xf32>
    %123 = tpu.matmul %122, %101, %cst_39 {dimension_numbers = #tpu.dot_dimension_numbers<[1], [0], [0], [1], [0, 0, 1, 1], [], []>} : vector<6x14xf32>, vector<14x128xf32>, vector<6x128xf32> -> vector<6x128xf32>
    %124 = tpu.iota {dimensions = array<i32: 0>} : vector<6x14xi32>
    %125 = tpu.iota {dimensions = array<i32: 1>} : vector<6x14xi32>
    %c2_i32_40 = arith.constant 2 : i32
    %126 = vector.broadcast %c2_i32_40 : i32 to vector<6x14xi32>
    %127 = arith.muli %126, %124 : vector<6x14xi32>
    %c2_i32_41 = arith.constant 2 : i32
    %128 = vector.broadcast %c2_i32_41 : i32 to vector<6x14xi32>
    %129 = arith.addi %127, %128 : vector<6x14xi32>
    %130 = arith.cmpi eq, %125, %129 : vector<6x14xi32>
    %131 = arith.extui %130 : vector<6x14xi1> to vector<6x14xi32>
    %132 = arith.sitofp %131 : vector<6x14xi32> to vector<6x14xf32>
    %cst_42 = arith.constant dense<0.000000e+00> : vector<6x128xf32>
    %133 = tpu.matmul %132, %101, %cst_42 {dimension_numbers = #tpu.dot_dimension_numbers<[1], [0], [0], [1], [0, 0, 1, 1], [], []>} : vector<6x14xf32>, vector<14x128xf32>, vector<6x128xf32> -> vector<6x128xf32>
    %134 = tpu.iota {dimensions = array<i32: 0>} : vector<6x14xi32>
    %135 = tpu.iota {dimensions = array<i32: 1>} : vector<6x14xi32>
    %c2_i32_43 = arith.constant 2 : i32
    %136 = vector.broadcast %c2_i32_43 : i32 to vector<6x14xi32>
    %137 = arith.muli %136, %134 : vector<6x14xi32>
    %c3_i32_44 = arith.constant 3 : i32
    %138 = vector.broadcast %c3_i32_44 : i32 to vector<6x14xi32>
    %139 = arith.addi %137, %138 : vector<6x14xi32>
    %140 = arith.cmpi eq, %135, %139 : vector<6x14xi32>
    %141 = arith.extui %140 : vector<6x14xi1> to vector<6x14xi32>
    %142 = arith.sitofp %141 : vector<6x14xi32> to vector<6x14xf32>
    %cst_45 = arith.constant dense<0.000000e+00> : vector<6x128xf32>
    %143 = tpu.matmul %142, %101, %cst_45 {dimension_numbers = #tpu.dot_dimension_numbers<[1], [0], [0], [1], [0, 0, 1, 1], [], []>} : vector<6x14xf32>, vector<14x128xf32>, vector<6x128xf32> -> vector<6x128xf32>
    %144 = tpu.concatenate %113, %123, %133, %143 in 1 : vector<6x128xf32>, vector<6x128xf32>, vector<6x128xf32>, vector<6x128xf32> -> vector<6x512xf32>
    %cst_46 = arith.constant dense<0.000000e+00> : vector<6x256xf32>
    %145 = tpu.matmul %144, %102, %cst_46 {dimension_numbers = #tpu.dot_dimension_numbers<[1], [0], [0], [1], [0, 0, 1, 1], [], []>} : vector<6x512xf32>, vector<512x256xf32>, vector<6x256xf32> -> vector<6x256xf32>
    %146 = vector.broadcast %103 : vector<1x256xf32> to vector<6x256xf32>
    %147 = arith.addf %145, %146 : vector<6x256xf32>
    %cst_47 = arith.constant 0.000000e+00 : f32
    %148 = vector.broadcast %cst_47 : f32 to vector<6x256xf32>
    %149 = arith.maximumf %147, %148 : vector<6x256xf32>
    %c0_48 = arith.constant 0 : index
    %c0_49 = arith.constant 0 : index
    %150 = vector.load %arg7[%c0_48, %c0_49] : memref<1024x512xf32, #tpu.memory_space<vmem>>, vector<1024x512xf32>
    %c0_50 = arith.constant 0 : index
    %c0_51 = arith.constant 0 : index
    %151 = vector.load %arg8[%c0_50, %c0_51] : memref<1x512xf32, #tpu.memory_space<vmem>>, vector<1x512xf32>
    %152 = tpu.iota {dimensions = array<i32: 0>} : vector<2x6xi32>
    %153 = tpu.iota {dimensions = array<i32: 1>} : vector<2x6xi32>
    %c2_i32_52 = arith.constant 2 : i32
    %154 = vector.broadcast %c2_i32_52 : i32 to vector<2x6xi32>
    %155 = arith.muli %154, %152 : vector<2x6xi32>
    %c0_i32_53 = arith.constant 0 : i32
    %156 = vector.broadcast %c0_i32_53 : i32 to vector<2x6xi32>
    %157 = arith.addi %155, %156 : vector<2x6xi32>
    %158 = arith.cmpi eq, %153, %157 : vector<2x6xi32>
    %159 = arith.extui %158 : vector<2x6xi1> to vector<2x6xi32>
    %160 = arith.sitofp %159 : vector<2x6xi32> to vector<2x6xf32>
    %cst_54 = arith.constant dense<0.000000e+00> : vector<2x256xf32>
    %161 = tpu.matmul %160, %149, %cst_54 {dimension_numbers = #tpu.dot_dimension_numbers<[1], [0], [0], [1], [0, 0, 1, 1], [], []>} : vector<2x6xf32>, vector<6x256xf32>, vector<2x256xf32> -> vector<2x256xf32>
    %162 = tpu.iota {dimensions = array<i32: 0>} : vector<2x6xi32>
    %163 = tpu.iota {dimensions = array<i32: 1>} : vector<2x6xi32>
    %c2_i32_55 = arith.constant 2 : i32
    %164 = vector.broadcast %c2_i32_55 : i32 to vector<2x6xi32>
    %165 = arith.muli %164, %162 : vector<2x6xi32>
    %c1_i32_56 = arith.constant 1 : i32
    %166 = vector.broadcast %c1_i32_56 : i32 to vector<2x6xi32>
    %167 = arith.addi %165, %166 : vector<2x6xi32>
    %168 = arith.cmpi eq, %163, %167 : vector<2x6xi32>
    %169 = arith.extui %168 : vector<2x6xi1> to vector<2x6xi32>
    %170 = arith.sitofp %169 : vector<2x6xi32> to vector<2x6xf32>
    %cst_57 = arith.constant dense<0.000000e+00> : vector<2x256xf32>
    %171 = tpu.matmul %170, %149, %cst_57 {dimension_numbers = #tpu.dot_dimension_numbers<[1], [0], [0], [1], [0, 0, 1, 1], [], []>} : vector<2x6xf32>, vector<6x256xf32>, vector<2x256xf32> -> vector<2x256xf32>
    %172 = tpu.iota {dimensions = array<i32: 0>} : vector<2x6xi32>
    %173 = tpu.iota {dimensions = array<i32: 1>} : vector<2x6xi32>
    %c2_i32_58 = arith.constant 2 : i32
    %174 = vector.broadcast %c2_i32_58 : i32 to vector<2x6xi32>
    %175 = arith.muli %174, %172 : vector<2x6xi32>
    %c2_i32_59 = arith.constant 2 : i32
    %176 = vector.broadcast %c2_i32_59 : i32 to vector<2x6xi32>
    %177 = arith.addi %175, %176 : vector<2x6xi32>
    %178 = arith.cmpi eq, %173, %177 : vector<2x6xi32>
    %179 = arith.extui %178 : vector<2x6xi1> to vector<2x6xi32>
    %180 = arith.sitofp %179 : vector<2x6xi32> to vector<2x6xf32>
    %cst_60 = arith.constant dense<0.000000e+00> : vector<2x256xf32>
    %181 = tpu.matmul %180, %149, %cst_60 {dimension_numbers = #tpu.dot_dimension_numbers<[1], [0], [0], [1], [0, 0, 1, 1], [], []>} : vector<2x6xf32>, vector<6x256xf32>, vector<2x256xf32> -> vector<2x256xf32>
    %182 = tpu.iota {dimensions = array<i32: 0>} : vector<2x6xi32>
    %183 = tpu.iota {dimensions = array<i32: 1>} : vector<2x6xi32>
    %c2_i32_61 = arith.constant 2 : i32
    %184 = vector.broadcast %c2_i32_61 : i32 to vector<2x6xi32>
    %185 = arith.muli %184, %182 : vector<2x6xi32>
    %c3_i32_62 = arith.constant 3 : i32
    %186 = vector.broadcast %c3_i32_62 : i32 to vector<2x6xi32>
    %187 = arith.addi %185, %186 : vector<2x6xi32>
    %188 = arith.cmpi eq, %183, %187 : vector<2x6xi32>
    %189 = arith.extui %188 : vector<2x6xi1> to vector<2x6xi32>
    %190 = arith.sitofp %189 : vector<2x6xi32> to vector<2x6xf32>
    %cst_63 = arith.constant dense<0.000000e+00> : vector<2x256xf32>
    %191 = tpu.matmul %190, %149, %cst_63 {dimension_numbers = #tpu.dot_dimension_numbers<[1], [0], [0], [1], [0, 0, 1, 1], [], []>} : vector<2x6xf32>, vector<6x256xf32>, vector<2x256xf32> -> vector<2x256xf32>
    %192 = tpu.concatenate %161, %171, %181, %191 in 1 : vector<2x256xf32>, vector<2x256xf32>, vector<2x256xf32>, vector<2x256xf32> -> vector<2x1024xf32>
    %cst_64 = arith.constant dense<0.000000e+00> : vector<2x512xf32>
    %193 = tpu.matmul %192, %150, %cst_64 {dimension_numbers = #tpu.dot_dimension_numbers<[1], [0], [0], [1], [0, 0, 1, 1], [], []>} : vector<2x1024xf32>, vector<1024x512xf32>, vector<2x512xf32> -> vector<2x512xf32>
    %194 = vector.broadcast %151 : vector<1x512xf32> to vector<2x512xf32>
    %195 = arith.addf %193, %194 : vector<2x512xf32>
    %c0_65 = arith.constant 0 : index
    %c0_66 = arith.constant 0 : index
    %196 = vector.load %arg9[%c0_65, %c0_66] : memref<1x512xf32, #tpu.memory_space<vmem>>, vector<1x512xf32>
    %197 = vector.broadcast %196 : vector<1x512xf32> to vector<2x512xf32>
    %198 = arith.mulf %195, %197 : vector<2x512xf32>
    %cst_67 = arith.constant dense<0.000000e+00> : vector<2xf32>
    %199 = vector.multi_reduction <add>, %198, %cst_67 [1] : vector<2x512xf32> to vector<2xf32>
    %200 = vector.shape_cast %199 : vector<2xf32> to vector<2x1xf32>
    %c0_68 = arith.constant 0 : index
    %c0_69 = arith.constant 0 : index
    %201 = vector.load %arg10[%c0_68, %c0_69] : memref<1x1xf32, #tpu.memory_space<vmem>>, vector<1x1xf32>
    %202 = vector.broadcast %201 : vector<1x1xf32> to vector<2x1xf32>
    %203 = arith.addf %200, %202 : vector<2x1xf32>
    %204 = arith.negf %203 : vector<2x1xf32>
    %205 = math.exp %204 : vector<2x1xf32>
    %cst_70 = arith.constant 1.000000e+00 : f32
    %206 = vector.broadcast %cst_70 : f32 to vector<2x1xf32>
    %207 = arith.addf %206, %205 : vector<2x1xf32>
    %208 = arith.divf %206, %207 : vector<2x1xf32>
    %209 = vector.broadcast %208 : vector<2x1xf32> to vector<2x512xf32>
    %210 = arith.mulf %195, %209 : vector<2x512xf32>
    %c0_71 = arith.constant 0 : index
    %c0_72 = arith.constant 0 : index
    %c0_73 = arith.constant 0 : index
    %211 = vector.load %arg11[%c0_71, %c0_72, %c0_73] : memref<1x2x512xf32, #tpu.memory_space<vmem>>, vector<1x2x512xf32>
    %212 = vector.shape_cast %211 : vector<1x2x512xf32> to vector<2x512xf32>
    %213 = vector.shape_cast %210 : vector<2x512xf32> to vector<1x2x512xf32>
    tpu.vector_store %arg11[%c0_71, %c0_72, %c0_73], %213 {strides = array<i32>} : memref<1x2x512xf32, #tpu.memory_space<vmem>>, vector<1x2x512xf32>,
    return
  }
  func.func @transform_0(%arg0: i32) -> (i32, i32, i32) {
    %c0_i32 = arith.constant 0 : i32
    %c0_i32_0 = arith.constant 0 : i32
    %c0_i32_1 = arith.constant 0 : i32
    return %arg0, %c0_i32, %c0_i32_0 : i32, i32, i32
  }
  func.func @transform_1(%arg0: i32) -> (i32, i32) {
    %c0_i32 = arith.constant 0 : i32
    %c0_i32_0 = arith.constant 0 : i32
    %c0_i32_1 = arith.constant 0 : i32
    return %c0_i32, %c0_i32_0 : i32, i32
  }
  func.func @transform_2(%arg0: i32) -> (i32, i32) {
    %c0_i32 = arith.constant 0 : i32
    %c0_i32_0 = arith.constant 0 : i32
    %c0_i32_1 = arith.constant 0 : i32
    return %c0_i32, %c0_i32_0 : i32, i32
  }
  func.func @transform_3(%arg0: i32) -> (i32, i32) {
    %c0_i32 = arith.constant 0 : i32
    %c0_i32_0 = arith.constant 0 : i32
    %c0_i32_1 = arith.constant 0 : i32
    return %c0_i32, %c0_i32_0 : i32, i32
  }
  func.func @transform_4(%arg0: i32) -> (i32, i32) {
    %c0_i32 = arith.constant 0 : i32
    %c0_i32_0 = arith.constant 0 : i32
    %c0_i32_1 = arith.constant 0 : i32
    return %c0_i32, %c0_i32_0 : i32, i32
  }
  func.func @transform_5(%arg0: i32) -> (i32, i32) {
    %c0_i32 = arith.constant 0 : i32
    %c0_i32_0 = arith.constant 0 : i32
    %c0_i32_1 = arith.constant 0 : i32
    return %c0_i32, %c0_i32_0 : i32, i32
  }
  func.func @transform_6(%arg0: i32) -> (i32, i32) {
    %c0_i32 = arith.constant 0 : i32
    %c0_i32_0 = arith.constant 0 : i32
    %c0_i32_1 = arith.constant 0 : i32
    return %c0_i32, %c0_i32_0 : i32, i32
  }
  func.func @transform_7(%arg0: i32) -> (i32, i32) {
    %c0_i32 = arith.constant 0 : i32
    %c0_i32_0 = arith.constant 0 : i32
    %c0_i32_1 = arith.constant 0 : i32
    return %c0_i32, %c0_i32_0 : i32, i32
  }
  func.func @transform_8(%arg0: i32) -> (i32, i32) {
    %c0_i32 = arith.constant 0 : i32
    %c0_i32_0 = arith.constant 0 : i32
    %c0_i32_1 = arith.constant 0 : i32
    return %c0_i32, %c0_i32_0 : i32, i32
  }
  func.func @transform_9(%arg0: i32) -> (i32, i32) {
    %c0_i32 = arith.constant 0 : i32
    %c0_i32_0 = arith.constant 0 : i32
    %c0_i32_1 = arith.constant 0 : i32
    return %c0_i32, %c0_i32_0 : i32, i32
  }
  func.func @transform_10(%arg0: i32) -> (i32, i32, i32) {
    %c0_i32 = arith.constant 0 : i32
    %c0_i32_0 = arith.constant 0 : i32
    %c0_i32_1 = arith.constant 0 : i32
    return %arg0, %c0_i32, %c0_i32_0 : i32, i32, i32
  }
}

</mosaic_0001>

<llo_original>
// kernel: adapter_forward.3
$region0: #{adapter_forward.3}
  #allocation0 [shape = 'u32[]', space=smem, size = 0x4, offset = 0x4, fixed_abs, tag = 'smem constant byte address 0x4 - core index']
  #allocation1 [shape = 'u32[144,128]{1,0:T(1,128)}', space=vmem, size = 0x12000, scoped, tag = 'internal scratch']
  #allocation2 [shape = 'f32[1,1]{1,0:T(1,128)S(1)}', space=vmem, size = 0x200, scoped, tag = 'scoped memory for adapter_forward.3']
  %s0 = inlined_call_operand.vmem [shape: f32[2,64,256], index: 0, kind: input, shape index: {}]
  %s1 = inlined_call_operand.vmem [shape: f32[1,64], index: 1, kind: input, shape index: {}]
  %s2 = inlined_call_operand.vmem [shape: f32[256,128], index: 2, kind: input, shape index: {}]
  %s3 = inlined_call_operand.vmem [shape: f32[1,128], index: 3, kind: input, shape index: {}]
  %s4 = inlined_call_operand.vmem [shape: f32[512,256], index: 4, kind: input, shape index: {}]
  %s5 = inlined_call_operand.vmem [shape: f32[1,256], index: 5, kind: input, shape index: {}]
  %s6 = inlined_call_operand.vmem [shape: f32[1024,512], index: 6, kind: input, shape index: {}]
  %s7 = inlined_call_operand.vmem [shape: f32[1,512], index: 7, kind: input, shape index: {}]
  %s8 = inlined_call_operand.vmem [shape: f32[1,512], index: 8, kind: input, shape index: {}]
  %s9 = inlined_call_operand.<no memory space> [shape: f32[1,1], index: 9, kind: input, shape index: {}]
  %s10 = inlined_call_operand.hbm [shape: f32[2,2,512], index: 10, kind: output, shape index: {}]
  %s11 = sld [smem:[#allocation0]]
  $region73: #{adapter_forward.3} parent=0
    _
  %s13 = ssub.s32 1, %s11
  %s14 = scalar_select 0, %s13, %s11
  %v15 = vstv %s9
  %16 = vst [vmem:[#allocation2] sm:$0x1] %v15
  $region1: #{adapter_forward.3} parent=0
    #allocation3 [shape = 'u8[8192]{0}', space=vmem, size = 0x2000, scoped, tag = 'output window, operand 0']
    #allocation4 [shape = 's32[2]{0}', space=sflag, size = 0x8, scoped, tag = 'scoped memory for adapter_forward.3']
    %17 = vsyncpa [#allocation4], 0
    %s18 = scalar_lea.sflag [#allocation4], 1
    %19 = vsyncpa %s18, 0
    loop: start=0, step=1, limit=4
    $region2: #{adapter_forward.3} parent=1 // loop_pre_header
      _
    $region3: #{adapter_forward.3} parent=1 // loop_header
      %s21 = sphi 0, %s25
      %p22 = scmp.ge.s32.totalorder %s21, 4
      %s31 = sphi 0, %s33
      %s34 = sphi 0, %s31
      %s35 = sphi 0, %s34
      %s51 = sphi 0, %s35
      %s55 = sphi 0, %s55
      %s57 = sphi 0, %s55
      %s58 = sphi 0, %s57
      %s72 = sphi 0, %s58
      %s76 = sphi 0, %s76
      %s78 = sphi 0, %s76
      %s79 = sphi 0, %s78
      %s93 = sphi 0, %s79
      %s97 = sphi 0, %s97
      %s99 = sphi 0, %s97
      %s100 = sphi 0, %s99
      %s114 = sphi 0, %s100
      %s118 = sphi 0, %s118
      %s120 = sphi 0, %s118
      %s121 = sphi 0, %s120
      %s135 = sphi 0, %s121
      %s139 = sphi 0, %s139
      %s141 = sphi 0, %s139
      %s142 = sphi 0, %s141
      %s156 = sphi 0, %s142
      %s160 = sphi 0, %s160
      %s162 = sphi 0, %s160
      %s163 = sphi 0, %s162
      %s177 = sphi 0, %s163
      %s181 = sphi 0, %s181
      %s183 = sphi 0, %s181
      %s184 = sphi 0, %s183
      %s198 = sphi 0, %s184
      %s202 = sphi 0, %s202
      %s204 = sphi 0, %s202
      %s205 = sphi 0, %s204
      %s219 = sphi 0, %s205
      %s223 = sphi 0, %s223
      %s225 = sphi 0, %s223
      %s226 = sphi 0, %s225
      %s240 = sphi 0, %s226
      %s246 = sphi 0, %s248
      %s249 = sphi 0, %s246
      %s250 = sphi 0, %s249
      %s266 = sphi 0, %s250
    $region4: #{adapter_forward.3} parent=1 // loop_header_branch
      %24 = sbr.rel (%p22) target = $region8
    $region5: #{adapter_forward.3} parent=1 // loop_body
      %s26 = ssub.s32 %s21, 1
      %s27 = ssub.s32 %s21, 2
      %s28 = sadd.s32 %s21, 1
      %s29 = ssub.s32 %s21, %s28
      %p30 = scmp.eq.s32.totalorder %s29, 0
      %s32 = sadd.s32 %s31, 1
      %s33 = scalar_select %p30, %s31, %s32
      %p36 = pneg %p30
      %p37 = scmp.eq.s32.totalorder %s21, 1
      %p38 = por %p36, %p37
      %p39 = scmp.ne.s32.totalorder %s31, %s34
      %p40 = scmp.eq.s32.totalorder %s21, 0
      %p41 = por %p39, %p40
      %p42 = scmp.ne.s32.totalorder %s31, %s34
      %p43 = scmp.eq.s32.totalorder %s26, 1
      %p44 = por %p42, %p43
      %p45 = scmp.ne.s32.totalorder %s34, %s35
      %p46 = scmp.eq.s32.totalorder %s26, 0
      %p47 = por %p45, %p46
      %p48 = scmp.ne.s32.totalorder %s34, %s35
      %p49 = scmp.eq.s32.totalorder %s27, 1
      %p50 = por %p48, %p49
      %p52 = scmp.ne.s32.totalorder %s35, %s51
      %p53 = scmp.eq.s32.totalorder %s27, 0
      %p54 = por %p52, %p53
      %s56 = sadd.s32 %s55, 1
      %p59 = scmp.eq.s32.totalorder %s21, 1
      %p60 = scmp.ne.s32.totalorder %s55, %s57
      %p61 = scmp.eq.s32.totalorder %s21, 0
      %p62 = por %p60, %p61
      %p63 = scmp.ne.s32.totalorder %s55, %s57
      %p64 = scmp.eq.s32.totalorder %s26, 1
      %p65 = por %p63, %p64
      %p66 = scmp.ne.s32.totalorder %s57, %s58
      %p67 = scmp.eq.s32.totalorder %s26, 0
      %p68 = por %p66, %p67
      %p69 = scmp.ne.s32.totalorder %s57, %s58
      %p70 = scmp.eq.s32.totalorder %s27, 1
      %p71 = por %p69, %p70
      %p73 = scmp.ne.s32.totalorder %s58, %s72
      %p74 = scmp.eq.s32.totalorder %s27, 0
      %p75 = por %p73, %p74
      %s77 = sadd.s32 %s76, 1
      %p80 = scmp.eq.s32.totalorder %s21, 1
      %p81 = scmp.ne.s32.totalorder %s76, %s78
      %p82 = scmp.eq.s32.totalorder %s21, 0
      %p83 = por %p81, %p82
      %p84 = scmp.ne.s32.totalorder %s76, %s78
      %p85 = scmp.eq.s32.totalorder %s26, 1
      %p86 = por %p84, %p85
      %p87 = scmp.ne.s32.totalorder %s78, %s79
      %p88 = scmp.eq.s32.totalorder %s26, 0
      %p89 = por %p87, %p88
      %p90 = scmp.ne.s32.totalorder %s78, %s79
      %p91 = scmp.eq.s32.totalorder %s27, 1
      %p92 = por %p90, %p91
      %p94 = scmp.ne.s32.totalorder %s79, %s93
      %p95 = scmp.eq.s32.totalorder %s27, 0
      %p96 = por %p94, %p95
      %s98 = sadd.s32 %s97, 1
      %p101 = scmp.eq.s32.totalorder %s21, 1
      %p102 = scmp.ne.s32.totalorder %s97, %s99
      %p103 = scmp.eq.s32.totalorder %s21, 0
      %p104 = por %p102, %p103
      %p105 = scmp.ne.s32.totalorder %s97, %s99
      %p106 = scmp.eq.s32.totalorder %s26, 1
      %p107 = por %p105, %p106
      %p108 = scmp.ne.s32.totalorder %s99, %s100
      %p109 = scmp.eq.s32.totalorder %s26, 0
      %p110 = por %p108, %p109
      %p111 = scmp.ne.s32.totalorder %s99, %s100
      %p112 = scmp.eq.s32.totalorder %s27, 1
      %p113 = por %p111, %p112
      %p115 = scmp.ne.s32.totalorder %s100, %s114
      %p116 = scmp.eq.s32.totalorder %s27, 0
      %p117 = por %p115, %p116
      %s119 = sadd.s32 %s118, 1
      %p122 = scmp.eq.s32.totalorder %s21, 1
      %p123 = scmp.ne.s32.totalorder %s118, %s120
      %p124 = scmp.eq.s32.totalorder %s21, 0
      %p125 = por %p123, %p124
      %p126 = scmp.ne.s32.totalorder %s118, %s120
      %p127 = scmp.eq.s32.totalorder %s26, 1
      %p128 = por %p126, %p127
      %p129 = scmp.ne.s32.totalorder %s120, %s121
      %p130 = scmp.eq.s32.totalorder %s26, 0
      %p131 = por %p129, %p130
      %p132 = scmp.ne.s32.totalorder %s120, %s121
      %p133 = scmp.eq.s32.totalorder %s27, 1
      %p134 = por %p132, %p133
      %p136 = scmp.ne.s32.totalorder %s121, %s135
      %p137 = scmp.eq.s32.totalorder %s27, 0
      %p138 = por %p136, %p137
      %s140 = sadd.s32 %s139, 1
      %p143 = scmp.eq.s32.totalorder %s21, 1
      %p144 = scmp.ne.s32.totalorder %s139, %s141
      %p145 = scmp.eq.s32.totalorder %s21, 0
      %p146 = por %p144, %p145
      %p147 = scmp.ne.s32.totalorder %s139, %s141
      %p148 = scmp.eq.s32.totalorder %s26, 1
      %p149 = por %p147, %p148
      %p150 = scmp.ne.s32.totalorder %s141, %s142
      %p151 = scmp.eq.s32.totalorder %s26, 0
      %p152 = por %p150, %p151
      %p153 = scmp.ne.s32.totalorder %s141, %s142
      %p154 = scmp.eq.s32.totalorder %s27, 1
      %p155 = por %p153, %p154
      %p157 = scmp.ne.s32.totalorder %s142, %s156
      %p158 = scmp.eq.s32.totalorder %s27, 0
      %p159 = por %p157, %p158
      %s161 = sadd.s32 %s160, 1
      %p164 = scmp.eq.s32.totalorder %s21, 1
      %p165 = scmp.ne.s32.totalorder %s160, %s162
      %p166 = scmp.eq.s32.totalorder %s21, 0
      %p167 = por %p165, %p166
      %p168 = scmp.ne.s32.totalorder %s160, %s162
      %p169 = scmp.eq.s32.totalorder %s26, 1
      %p170 = por %p168, %p169
      %p171 = scmp.ne.s32.totalorder %s162, %s163
      %p172 = scmp.eq.s32.totalorder %s26, 0
      %p173 = por %p171, %p172
      %p174 = scmp.ne.s32.totalorder %s162, %s163
      %p175 = scmp.eq.s32.totalorder %s27, 1
      %p176 = por %p174, %p175
      %p178 = scmp.ne.s32.totalorder %s163, %s177
      %p179 = scmp.eq.s32.totalorder %s27, 0
      %p180 = por %p178, %p179
      %s182 = sadd.s32 %s181, 1
      %p185 = scmp.eq.s32.totalorder %s21, 1
      %p186 = scmp.ne.s32.totalorder %s181, %s183
      %p187 = scmp.eq.s32.totalorder %s21, 0
      %p188 = por %p186, %p187
      %p189 = scmp.ne.s32.totalorder %s181, %s183
      %p190 = scmp.eq.s32.totalorder %s26, 1
      %p191 = por %p189, %p190
      %p192 = scmp.ne.s32.totalorder %s183, %s184
      %p193 = scmp.eq.s32.totalorder %s26, 0
      %p194 = por %p192, %p193
      %p195 = scmp.ne.s32.totalorder %s183, %s184
      %p196 = scmp.eq.s32.totalorder %s27, 1
      %p197 = por %p195, %p196
      %p199 = scmp.ne.s32.totalorder %s184, %s198
      %p200 = scmp.eq.s32.totalorder %s27, 0
      %p201 = por %p199, %p200
      %s203 = sadd.s32 %s202, 1
      %p206 = scmp.eq.s32.totalorder %s21, 1
      %p207 = scmp.ne.s32.totalorder %s202, %s204
      %p208 = scmp.eq.s32.totalorder %s21, 0
      %p209 = por %p207, %p208
      %p210 = scmp.ne.s32.totalorder %s202, %s204
      %p211 = scmp.eq.s32.totalorder %s26, 1
      %p212 = por %p210, %p211
      %p213 = scmp.ne.s32.totalorder %s204, %s205
      %p214 = scmp.eq.s32.totalorder %s26, 0
      %p215 = por %p213, %p214
      %p216 = scmp.ne.s32.totalorder %s204, %s205
      %p217 = scmp.eq.s32.totalorder %s27, 1
      %p218 = por %p216, %p217
      %p220 = scmp.ne.s32.totalorder %s205, %s219
      %p221 = scmp.eq.s32.totalorder %s27, 0
      %p222 = por %p220, %p221
      %s224 = sadd.s32 %s223, 1
      %p227 = scmp.eq.s32.totalorder %s21, 1
      %p228 = scmp.ne.s32.totalorder %s223, %s225
      %p229 = scmp.eq.s32.totalorder %s21, 0
      %p230 = por %p228, %p229
      %p231 = scmp.ne.s32.totalorder %s223, %s225
      %p232 = scmp.eq.s32.totalorder %s26, 1
      %p233 = por %p231, %p232
      %p234 = scmp.ne.s32.totalorder %s225, %s226
      %p235 = scmp.eq.s32.totalorder %s26, 0
      %p236 = por %p234, %p235
      %p237 = scmp.ne.s32.totalorder %s225, %s226
      %p238 = scmp.eq.s32.totalorder %s27, 1
      %p239 = por %p237, %p238
      %p241 = scmp.ne.s32.totalorder %s226, %s240
      %p242 = scmp.eq.s32.totalorder %s27, 0
      %p243 = por %p241, %p242
      %s244 = ssub.s32 %s21, %s28
      %p245 = scmp.eq.s32.totalorder %s244, 0
      %s247 = sadd.s32 %s246, 1
      %s248 = scalar_select %p245, %s246, %s247
      %p251 = pneg %p245
      %p252 = scmp.eq.s32.totalorder %s21, 1
      %p253 = por %p251, %p252
      %p254 = scmp.ne.s32.totalorder %s246, %s249
      %p255 = scmp.eq.s32.totalorder %s21, 0
      %p256 = por %p254, %p255
      %p257 = scmp.ne.s32.totalorder %s246, %s249
      %p258 = scmp.eq.s32.totalorder %s26, 1
      %p259 = por %p257, %p258
      %p260 = scmp.ne.s32.totalorder %s249, %s250
      %p261 = scmp.eq.s32.totalorder %s26, 0
      %p262 = por %p260, %p261
      %p263 = scmp.ne.s32.totalorder %s249, %s250
      %p264 = scmp.eq.s32.totalorder %s27, 1
      %p265 = por %p263, %p264
      %p267 = scmp.ne.s32.totalorder %s250, %s266
      %p268 = scmp.eq.s32.totalorder %s27, 0
      %p269 = por %p267, %p268
      %p270 = scmp.le.s32.totalorder 1, %s21
      %p271 = scmp.lt.s32.totalorder %s21, 3
      %p272 = pnand %p270, %p271
      %p273 = pneg %p272
      // Predicated region
      $region9: #{adapter_forward.3} parent=5 // pred_check
        _
      $region10: #{adapter_forward.3} parent=5 // pred_check_branch
        %275 = sbr.rel (%p272) target = $region12
      $region11: #{adapter_forward.3} parent=5 // pred_region
        %s276 = ssub.s32 %s21, 1
        // Predicated region
        $region13: #{adapter_forward.3} parent=11 // pred_check
          %p277 = pneg %p68
        $region14: #{adapter_forward.3} parent=11 // pred_check_branch
          %279 = sbr.rel (%p277) target = $region16
        $region15: #{adapter_forward.3} parent=11 // pred_region
          _
        $region16: #{adapter_forward.3} parent=11 // pred_fallthru
          _
        // Predicated region
        $region17: #{adapter_forward.3} parent=11 // pred_check
          %p280 = pneg %p89
        $region18: #{adapter_forward.3} parent=11 // pred_check_branch
          %282 = sbr.rel (%p280) target = $region20
        $region19: #{adapter_forward.3} parent=11 // pred_region
          _
        $region20: #{adapter_forward.3} parent=11 // pred_fallthru
          _
        // Predicated region
        $region21: #{adapter_forward.3} parent=11 // pred_check
          %p283 = pneg %p110
        $region22: #{adapter_forward.3} parent=11 // pred_check_branch
          %285 = sbr.rel (%p283) target = $region24
        $region23: #{adapter_forward.3} parent=11 // pred_region
          _
        $region24: #{adapter_forward.3} parent=11 // pred_fallthru
          _
        // Predicated region
        $region25: #{adapter_forward.3} parent=11 // pred_check
          %p286 = pneg %p131
        $region26: #{adapter_forward.3} parent=11 // pred_check_branch
          %288 = sbr.rel (%p286) target = $region28
        $region27: #{adapter_forward.3} parent=11 // pred_region
          _
        $region28: #{adapter_forward.3} parent=11 // pred_fallthru
          _
        // Predicated region
        $region29: #{adapter_forward.3} parent=11 // pred_check
          %p289 = pneg %p152
        $region30: #{adapter_forward.3} parent=11 // pred_check_branch
          %291 = sbr.rel (%p289) target = $region32
        $region31: #{adapter_forward.3} parent=11 // pred_region
          _
        $region32: #{adapter_forward.3} parent=11 // pred_fallthru
          _
        // Predicated region
        $region33: #{adapter_forward.3} parent=11 // pred_check
          %p292 = pneg %p173
        $region34: #{adapter_forward.3} parent=11 // pred_check_branch
          %294 = sbr.rel (%p292) target = $region36
        $region35: #{adapter_forward.3} parent=11 // pred_region
          _
        $region36: #{adapter_forward.3} parent=11 // pred_fallthru
          _
        // Predicated region
        $region37: #{adapter_forward.3} parent=11 // pred_check
          %p295 = pneg %p194
        $region38: #{adapter_forward.3} parent=11 // pred_check_branch
          %297 = sbr.rel (%p295) target = $region40
        $region39: #{adapter_forward.3} parent=11 // pred_region
          _
        $region40: #{adapter_forward.3} parent=11 // pred_fallthru
          _
        // Predicated region
        $region41: #{adapter_forward.3} parent=11 // pred_check
          %p298 = pneg %p215
        $region42: #{adapter_forward.3} parent=11 // pred_check_branch
          %300 = sbr.rel (%p298) target = $region44
        $region43: #{adapter_forward.3} parent=11 // pred_region
          _
        $region44: #{adapter_forward.3} parent=11 // pred_fallthru
          _
        // Predicated region
        $region45: #{adapter_forward.3} parent=11 // pred_check
          %p301 = pneg %p236
        $region46: #{adapter_forward.3} parent=11 // pred_check_branch
          %303 = sbr.rel (%p301) target = $region48
        $region47: #{adapter_forward.3} parent=11 // pred_region
          _
        $region48: #{adapter_forward.3} parent=11 // pred_fallthru
          _
      $region12: #{adapter_forward.3} parent=5 // pred_fallthru
        _
      %p304 = scmp.lt.s32.totalorder %s21, 2
      // Predicated region
      $region49: #{adapter_forward.3} parent=5 // pred_check
        %p305 = pneg %p304
      $region50: #{adapter_forward.3} parent=5 // pred_check_branch
        %307 = sbr.rel (%p305) target = $region52
      $region51: #{adapter_forward.3} parent=5 // pred_region
        // Predicated region
        $region53: #{adapter_forward.3} parent=51 // pred_check
          %p308 = pneg %p41
        $region54: #{adapter_forward.3} parent=51 // pred_check_branch
          %310 = sbr.rel (%p308) target = $region56
        $region55: #{adapter_forward.3} parent=51 // pred_region
          %p311 = scmp.lt.s32.totalorder %s21, 1
          %s312 = scalar_select %p311, %s21, 1
          %s313 = smul.addr %s312, 16
          %s314 = smul.addr %s313, 8
          %s315 = scalar_lea.vmem %s0, %s314
        $region56: #{adapter_forward.3} parent=51 // pred_fallthru
          _
      $region52: #{adapter_forward.3} parent=5 // pred_fallthru
        _
      %p316 = scmp.le.s32.totalorder 1, %s21
      %p317 = scmp.lt.s32.totalorder %s21, 3
      %p318 = pnand %p316, %p317
      %p319 = pneg %p318
      // Predicated region
      $region57: #{adapter_forward.3} parent=5 // pred_check
        _
      $region58: #{adapter_forward.3} parent=5 // pred_check_branch
        %321 = sbr.rel (%p318) target = $region60
      $region59: #{adapter_forward.3} parent=5 // pred_region
        %s322 = ssub.s32 %s21, 1
        %p323 = scmp.lt.s32.totalorder %s26, 1
        %s324 = scalar_select %p323, %s26, 1
        %s325 = smul.addr %s324, 16
        %s326 = smul.addr %s325, 8
        %s327 = scalar_lea.vmem %s0, %s326
        %p328 = pneg %p47
        %p329 = pneg %p44
        %p330 = pneg %p68
        %p331 = pneg %p65
        %p332 = pneg %p89
        %p333 = pneg %p86
        %p334 = pneg %p110
        %p335 = pneg %p107
        %p336 = pneg %p131
        %p337 = pneg %p128
        %p338 = pneg %p152
        %p339 = pneg %p149
        %p340 = pneg %p173
        %p341 = pneg %p170
        %p342 = pneg %p194
        %p343 = pneg %p191
        %p344 = pneg %p215
        %p345 = pneg %p212
        %p346 = pneg %p236
        %p347 = pneg %p233
        %p348 = pneg %p262
        %p349 = pneg %p259
        %s350 = sand.u32 %s249, 1
        %s351 = scalar_lea.sflag [#allocation4], %s350
        %s352 = sand.u32 %s249, 1
        %s353 = smul.addr %s352, 8
        %s354 = scalar_lea.vmem [#allocation3], %s353
        %p355 = scmp.lt.s32.totalorder %s26, 1
        %s356 = scalar_select %p355, %s26, 1
        %s357 = smul.addr %s356, 16
        %s358 = smul.addr %s357, 8
        %s359 = scalar_lea.vmem %s0, %s358
        %v360 = vld [vmem:[%s359] sm:$0xff]
        %v361 = vld [vmem:[%s359 + $0x8] sm:$0xff]
        %v362 = vld [vmem:[%s359 + $0x10] sm:$0xff]
        %v363 = vld [vmem:[%s359 + $0x18] sm:$0xff]
        %v364 = vld [vmem:[%s359 + $0x20] sm:$0xff]
        %v365 = vld [vmem:[%s359 + $0x28] sm:$0xff]
        %v366 = vld [vmem:[%s359 + $0x30] sm:$0xff]
        %v367 = vld [vmem:[%s359 + $0x38] sm:$0xff]
        %v368 = vld [vmem:[%s359 + $0x40] sm:$0xff]
        %v369 = vld [vmem:[%s359 + $0x48] sm:$0xff]
        %v370 = vld [vmem:[%s359 + $0x50] sm:$0xff]
        %v371 = vld [vmem:[%s359 + $0x58] sm:$0xff]
        %v372 = vld [vmem:[%s359 + $0x60] sm:$0xff]
        %v373 = vld [vmem:[%s359 + $0x68] sm:$0xff]
        %v374 = vld [vmem:[%s359 + $0x70] sm:$0xff]
        %v375 = vld [vmem:[%s359 + $0x78] sm:$0xff]
        %v376 = vlaneseq
        %v377 = vshrl.u32 %v376, 7
        %v378 = vadd.s32 %v377, 8
        %v379 = vadd.s32 %v377, 16
        %v380 = vadd.s32 %v377, 24
        %v381 = vlaneseq
        %v382 = vand.u32 %v381, 127
        %v383 = vmul.u32 %v377, 2
        %v384 = vmul.u32 %v378, 2
        %v385 = vmul.u32 %v379, 2
        %v386 = vmul.u32 %v380, 2
        %vm387 = vcmp.eq.s32.totalorder %v382, %v383
        %vm388 = vcmp.eq.s32.totalorder %v382, %v384
        %vm389 = vcmp.eq.s32.totalorder %v382, %v385
        %vm390 = vcmp.eq.s32.totalorder %v382, %v386
        %v391 = vsel %vm387, 1, 0
        %v392 = vsel %vm388, 1, 0
        %v393 = vsel %vm389, 1, 0
        %v394 = vsel %vm390, 1, 0
        %v395 = vcvt.s32.f32 %v391
        %v396 = vcvt.s32.f32 %v392
        %v397 = vcvt.s32.f32 %v393
        %v398 = vcvt.s32.f32 %v394
        %v399 = vadd.s32 %v383, 1
        %v400 = vadd.s32 %v384, 1
        %v401 = vadd.s32 %v385, 1
        %v402 = vadd.s32 %v386, 1
        %vm403 = vcmp.eq.s32.totalorder %v382, %v399
        %vm404 = vcmp.eq.s32.totalorder %v382, %v400
        %vm405 = vcmp.eq.s32.totalorder %v382, %v401
        %vm406 = vcmp.eq.s32.totalorder %v382, %v402
        %v407 = vsel %vm403, 1, 0
        %v408 = vsel %vm404, 1, 0
        %v409 = vsel %vm405, 1, 0
        %v410 = vsel %vm406, 1, 0
        %v411 = vcvt.s32.f32 %v407
        %v412 = vcvt.s32.f32 %v408
        %v413 = vcvt.s32.f32 %v409
        %v414 = vcvt.s32.f32 %v410
        %423 = vrot.lane.b32.xlu0 %v360, 64
        %v424 = vpop.permute.xlu0 %423
        %425 = vrot.lane.b32.xlu0 %v362, 64
        %v426 = vpop.permute.xlu0 %425
        %427 = vrot.lane.b32.xlu0 %v364, 64
        %v428 = vpop.permute.xlu0 %427
        %429 = vrot.lane.b32.xlu0 %v366, 64
        %v430 = vpop.permute.xlu0 %429
        %431 = vrot.lane.b32.xlu0 %v368, 64
        %v432 = vpop.permute.xlu0 %431
        %433 = vrot.lane.b32.xlu0 %v370, 64
        %v434 = vpop.permute.xlu0 %433
        %435 = vrot.lane.b32.xlu0 %v372, 64
        %v436 = vpop.permute.xlu0 %435
        %437 = vrot.lane.b32.xlu0 %v374, 64
        %v438 = vpop.permute.xlu0 %437
        %vm447 = vcmask 523264
        %v449 = vsel %vm447, %v411, 0
        %v452 = vsel %vm447, %v412, 0
        %v455 = vsel %vm447, %v413, 0
        %v458 = vsel %vm447, %v414, 0
        %460 = vmatprep.subr.mxu0 0.0
        %461 = vmatpush1.msra.mxu0 0.0
        %462 = vmatprep.subr.mxu0 0.0
        %463 = vmatpush1.msra.mxu0 0.0
        %464 = vmatprep.subr.mxu0 0.0
        %465 = vmatpush1.msra.mxu0 0.0
        %466 = vmatprep.subr.mxu0 0.0
        %467 = vmatpush1.msra.mxu0 0.0
        %468 = vmatprep.subr.mxu0 0.0
        %469 = vmatpush1.msra.mxu0 0.0
        %470 = vmatprep.subr.mxu0 0.0
        %471 = vmatpush1.msra.mxu0 0.0
        %472 = vmatprep.subr.mxu0 0.0
        %473 = vmatpush1.msra.mxu0 0.0
        %474 = vmatprep.subr.mxu0 0.0
        %475 = vmatpush1.msra.mxu0 0.0
        %476 = vmatprep.subr.mxu0 0.0
        %477 = vmatpush1.msra.mxu0 %v438
        %478 = vmatprep.subr.mxu0 0.0
        %479 = vmatpush1.msra.mxu0 %v436
        %480 = vmatprep.subr.mxu0 0.0
        %481 = vmatpush1.msra.mxu0 %v434
        %482 = vmatprep.subr.mxu0 0.0
        %483 = vmatpush1.msra.mxu0 %v432
        %484 = vmatprep.subr.mxu0 0.0
        %485 = vmatpush1.msra.mxu0 %v430
        %486 = vmatprep.subr.mxu0 0.0
        %487 = vmatpush1.msra.mxu0 %v428
        %488 = vmatprep.subr.mxu0 0.0
        %489 = vmatpush1.msra.mxu0 %v426
        %490 = vmatprep.subr.mxu0 0.0
        %491 = vmatpush1.msra.mxu0 %v424
        %492 = vmatprep.subr.mxu0 0.0
        %493 = vmatpush2.msra.mxu0 0.0
        %494 = vmatprep.subr.mxu0 0.0
        %495 = vmatpush2.msra.mxu0 0.0
        %496 = vmatprep.subr.mxu0 0.0
        %497 = vmatpush2.msra.mxu0 0.0
        %498 = vmatprep.subr.mxu0 0.0
        %499 = vmatpush2.msra.mxu0 0.0
        %500 = vmatprep.subr.mxu0 0.0
        %501 = vmatpush2.msra.mxu0 0.0
        %502 = vmatprep.subr.mxu0 0.0
        %503 = vmatpush2.msra.mxu0 0.0
        %504 = vmatprep.subr.mxu0 0.0
        %505 = vmatpush2.msra.mxu0 0.0
        %506 = vmatprep.subr.mxu0 0.0
        %507 = vmatpush2.msra.mxu0 0.0
        %508 = vmatprep.subr.mxu0 0.0
        %509 = vmatpush2.msra.mxu0 0.0
        %510 = vmatprep.subr.mxu0 0.0
        %511 = vmatpush2.msra.mxu0 0.0
        %512 = vmatprep.subr.mxu0 0.0
        %513 = vmatpush2.msra.mxu0 0.0
        %514 = vmatprep.subr.mxu0 0.0
        %515 = vmatpush2.msra.mxu0 0.0
        %516 = vmatprep.subr.mxu0 0.0
        %517 = vmatpush2.msra.mxu0 0.0
        %518 = vmatprep.subr.mxu0 0.0
        %519 = vmatpush2.msra.mxu0 0.0
        %520 = vmatprep.subr.mxu0 0.0
        %521 = vmatpush2.msra.mxu0 0.0
        %522 = vmatprep.subr.mxu0 0.0
        %523 = vmatpush2.msra.mxu0 0.0
        %524 = vmatprep.mubr.f32.mxu0 0.0
        %525 = vmatmul.mubr.f32.gmra.mxu0 %v449
        %v526 = vpop.f32.mrf.mxu0
        %v527 = vadd.f32 0.0, %v526
        %v528 = vpop.f32.mrf.mxu0
        %529 = vmatprep.mubr.f32.mxu0 0.0
        %530 = vmatmul.mubr.f32.gmra.mxu0 %v452
        %v531 = vpop.f32.mrf.mxu0
        %v532 = vadd.f32 0.0, %v531
        %v533 = vpop.f32.mrf.mxu0
        %534 = vmatprep.mubr.f32.mxu0 0.0
        %535 = vmatmul.mubr.f32.gmra.mxu0 %v455
        %v536 = vpop.f32.mrf.mxu0
        %v537 = vadd.f32 0.0, %v536
        %v538 = vpop.f32.mrf.mxu0
        %539 = vmatprep.mubr.f32.mxu0 0.0
        %540 = vmatmul.mubr.f32.gmra.mxu0 %v458
        %v541 = vpop.f32.mrf.mxu0
        %v542 = vadd.f32 0.0, %v541
        %v543 = vpop.f32.mrf.mxu0
        %544 = vdwg.mxu0
        %v546 = vsel %vm447, %v395, 0
        %v549 = vsel %vm447, %v396, 0
        %v552 = vsel %vm447, %v397, 0
        %v555 = vsel %vm447, %v398, 0
        %557 = vmatprep.subr.mxu0 0.0
        %558 = vmatpush1.msra.mxu0 0.0
        %559 = vmatprep.subr.mxu0 0.0
        %560 = vmatpush1.msra.mxu0 0.0
        %561 = vmatprep.subr.mxu0 0.0
        %562 = vmatpush1.msra.mxu0 0.0
        %563 = vmatprep.subr.mxu0 0.0
        %564 = vmatpush1.msra.mxu0 0.0
        %565 = vmatprep.subr.mxu0 0.0
        %566 = vmatpush1.msra.mxu0 0.0
        %567 = vmatprep.subr.mxu0 0.0
        %568 = vmatpush1.msra.mxu0 0.0
        %569 = vmatprep.subr.mxu0 0.0
        %570 = vmatpush1.msra.mxu0 0.0
        %571 = vmatprep.subr.mxu0 0.0
        %572 = vmatpush1.msra.mxu0 0.0
        %573 = vmatprep.subr.mxu0 0.0
        %574 = vmatpush1.msra.mxu0 %v374
        %575 = vmatprep.subr.mxu0 0.0
        %576 = vmatpush1.msra.mxu0 %v372
        %577 = vmatprep.subr.mxu0 0.0
        %578 = vmatpush1.msra.mxu0 %v370
        %579 = vmatprep.subr.mxu0 0.0
        %580 = vmatpush1.msra.mxu0 %v368
        %581 = vmatprep.subr.mxu0 0.0
        %582 = vmatpush1.msra.mxu0 %v366
        %583 = vmatprep.subr.mxu0 0.0
        %584 = vmatpush1.msra.mxu0 %v364
        %585 = vmatprep.subr.mxu0 0.0
        %586 = vmatpush1.msra.mxu0 %v362
        %587 = vmatprep.subr.mxu0 0.0
        %588 = vmatpush1.msra.mxu0 %v360
        %589 = vmatprep.subr.mxu0 0.0
        %590 = vmatpush2.msra.mxu0 0.0
        %591 = vmatprep.subr.mxu0 0.0
        %592 = vmatpush2.msra.mxu0 0.0
        %593 = vmatprep.subr.mxu0 0.0
        %594 = vmatpush2.msra.mxu0 0.0
        %595 = vmatprep.subr.mxu0 0.0
        %596 = vmatpush2.msra.mxu0 0.0
        %597 = vmatprep.subr.mxu0 0.0
        %598 = vmatpush2.msra.mxu0 0.0
        %599 = vmatprep.subr.mxu0 0.0
        %600 = vmatpush2.msra.mxu0 0.0
        %601 = vmatprep.subr.mxu0 0.0
        %602 = vmatpush2.msra.mxu0 0.0
        %603 = vmatprep.subr.mxu0 0.0
        %604 = vmatpush2.msra.mxu0 0.0
        %605 = vmatprep.subr.mxu0 0.0
        %606 = vmatpush2.msra.mxu0 0.0
        %607 = vmatprep.subr.mxu0 0.0
        %608 = vmatpush2.msra.mxu0 0.0
        %609 = vmatprep.subr.mxu0 0.0
        %610 = vmatpush2.msra.mxu0 0.0
        %611 = vmatprep.subr.mxu0 0.0
        %612 = vmatpush2.msra.mxu0 0.0
        %613 = vmatprep.subr.mxu0 0.0
        %614 = vmatpush2.msra.mxu0 0.0
        %615 = vmatprep.subr.mxu0 0.0
        %616 = vmatpush2.msra.mxu0 0.0
        %617 = vmatprep.subr.mxu0 0.0
        %618 = vmatpush2.msra.mxu0 0.0
        %619 = vmatprep.subr.mxu0 0.0
        %620 = vmatpush2.msra.mxu0 0.0
        %621 = vmatprep.mubr.f32.mxu0 0.0
        %622 = vmatmul.mubr.f32.gmra.mxu0 %v546
        %v623 = vpop.f32.mrf.mxu0
        %v624 = vadd.f32 %v527, %v623
        %v625 = vpop.f32.mrf.mxu0
        %626 = vmatprep.mubr.f32.mxu0 0.0
        %627 = vmatmul.mubr.f32.gmra.mxu0 %v549
        %v628 = vpop.f32.mrf.mxu0
        %v629 = vadd.f32 %v532, %v628
        %v630 = vpop.f32.mrf.mxu0
        %631 = vmatprep.mubr.f32.mxu0 0.0
        %632 = vmatmul.mubr.f32.gmra.mxu0 %v552
        %v633 = vpop.f32.mrf.mxu0
        %v634 = vadd.f32 %v537, %v633
        %v635 = vpop.f32.mrf.mxu0
        %636 = vmatprep.mubr.f32.mxu0 0.0
        %637 = vmatmul.mubr.f32.gmra.mxu0 %v555
        %v638 = vpop.f32.mrf.mxu0
        %v639 = vadd.f32 %v542, %v638
        %v640 = vpop.f32.mrf.mxu0
        %641 = vdwg.mxu0
        %v642 = vadd.s32 %v383, 2
        %v643 = vadd.s32 %v384, 2
        %v644 = vadd.s32 %v385, 2
        %v645 = vadd.s32 %v386, 2
        %vm646 = vcmp.eq.s32.totalorder %v382, %v642
        %vm647 = vcmp.eq.s32.totalorder %v382, %v643
        %vm648 = vcmp.eq.s32.totalorder %v382, %v644
        %vm649 = vcmp.eq.s32.totalorder %v382, %v645
        %v650 = vsel %vm646, 1, 0
        %v651 = vsel %vm647, 1, 0
        %v652 = vsel %vm648, 1, 0
        %v653 = vsel %vm649, 1, 0
        %v654 = vcvt.s32.f32 %v650
        %v655 = vcvt.s32.f32 %v651
        %v656 = vcvt.s32.f32 %v652
        %v657 = vcvt.s32.f32 %v653
        %v659 = vsel %vm447, %v654, 0
        %v662 = vsel %vm447, %v655, 0
        %v665 = vsel %vm447, %v656, 0
        %v668 = vsel %vm447, %v657, 0
        %670 = vmatprep.subr.mxu0 0.0
        %671 = vmatpush1.msra.mxu0 0.0
        %672 = vmatprep.subr.mxu0 0.0
        %673 = vmatpush1.msra.mxu0 0.0
        %674 = vmatprep.subr.mxu0 0.0
        %675 = vmatpush1.msra.mxu0 0.0
        %676 = vmatprep.subr.mxu0 0.0
        %677 = vmatpush1.msra.mxu0 0.0
        %678 = vmatprep.subr.mxu0 0.0
        %679 = vmatpush1.msra.mxu0 0.0
        %680 = vmatprep.subr.mxu0 0.0
        %681 = vmatpush1.msra.mxu0 0.0
        %682 = vmatprep.subr.mxu0 0.0
        %683 = vmatpush1.msra.mxu0 0.0
        %684 = vmatprep.subr.mxu0 0.0
        %685 = vmatpush1.msra.mxu0 0.0
        %686 = vmatprep.subr.mxu0 0.0
        %687 = vmatpush1.msra.mxu0 %v375
        %688 = vmatprep.subr.mxu0 0.0
        %689 = vmatpush1.msra.mxu0 %v373
        %690 = vmatprep.subr.mxu0 0.0
        %691 = vmatpush1.msra.mxu0 %v371
        %692 = vmatprep.subr.mxu0 0.0
        %693 = vmatpush1.msra.mxu0 %v369
        %694 = vmatprep.subr.mxu0 0.0
        %695 = vmatpush1.msra.mxu0 %v367
        %696 = vmatprep.subr.mxu0 0.0
        %697 = vmatpush1.msra.mxu0 %v365
        %698 = vmatprep.subr.mxu0 0.0
        %699 = vmatpush1.msra.mxu0 %v363
        %700 = vmatprep.subr.mxu0 0.0
        %701 = vmatpush1.msra.mxu0 %v361
        %702 = vmatprep.subr.mxu0 0.0
        %703 = vmatpush2.msra.mxu0 0.0
        %704 = vmatprep.subr.mxu0 0.0
        %705 = vmatpush2.msra.mxu0 0.0
        %706 = vmatprep.subr.mxu0 0.0
        %707 = vmatpush2.msra.mxu0 0.0
        %708 = vmatprep.subr.mxu0 0.0
        %709 = vmatpush2.msra.mxu0 0.0
        %710 = vmatprep.subr.mxu0 0.0
        %711 = vmatpush2.msra.mxu0 0.0
        %712 = vmatprep.subr.mxu0 0.0
        %713 = vmatpush2.msra.mxu0 0.0
        %714 = vmatprep.subr.mxu0 0.0
        %715 = vmatpush2.msra.mxu0 0.0
        %716 = vmatprep.subr.mxu0 0.0
        %717 = vmatpush2.msra.mxu0 0.0
        %718 = vmatprep.subr.mxu0 0.0
        %719 = vmatpush2.msra.mxu0 0.0
        %720 = vmatprep.subr.mxu0 0.0
        %721 = vmatpush2.msra.mxu0 0.0
        %722 = vmatprep.subr.mxu0 0.0
        %723 = vmatpush2.msra.mxu0 0.0
        %724 = vmatprep.subr.mxu0 0.0
        %725 = vmatpush2.msra.mxu0 0.0
        %726 = vmatprep.subr.mxu0 0.0
        %727 = vmatpush2.msra.mxu0 0.0
        %728 = vmatprep.subr.mxu0 0.0
        %729 = vmatpush2.msra.mxu0 0.0
        %730 = vmatprep.subr.mxu0 0.0
        %731 = vmatpush2.msra.mxu0 0.0
        %732 = vmatprep.subr.mxu0 0.0
        %733 = vmatpush2.msra.mxu0 0.0
        %734 = vmatprep.mubr.f32.mxu0 0.0
        %735 = vmatmul.mubr.f32.gmra.mxu0 %v659
        %v736 = vpop.f32.mrf.mxu0
        %v737 = vadd.f32 0.0, %v736
        %v738 = vpop.f32.mrf.mxu0
        %739 = vmatprep.mubr.f32.mxu0 0.0
        %740 = vmatmul.mubr.f32.gmra.mxu0 %v662
        %v741 = vpop.f32.mrf.mxu0
        %v742 = vadd.f32 0.0, %v741
        %v743 = vpop.f32.mrf.mxu0
        %744 = vmatprep.mubr.f32.mxu0 0.0
        %745 = vmatmul.mubr.f32.gmra.mxu0 %v665
        %v746 = vpop.f32.mrf.mxu0
        %v747 = vadd.f32 0.0, %v746
        %v748 = vpop.f32.mrf.mxu0
        %749 = vmatprep.mubr.f32.mxu0 0.0
        %750 = vmatmul.mubr.f32.gmra.mxu0 %v668
        %v751 = vpop.f32.mrf.mxu0
        %v752 = vadd.f32 0.0, %v751
        %v753 = vpop.f32.mrf.mxu0
        %754 = vdwg.mxu0
        %v755 = vadd.f32 %v624, %v737
        %v756 = vadd.f32 %v629, %v742
        %v757 = vadd.f32 %v634, %v747
        %v758 = vadd.f32 %v639, %v752
        %v759 = vadd.s32 %v383, 3
        %v760 = vadd.s32 %v384, 3
        %v761 = vadd.s32 %v385, 3
        %v762 = vadd.s32 %v386, 3
        %vm763 = vcmp.eq.s32.totalorder %v382, %v759
        %vm764 = vcmp.eq.s32.totalorder %v382, %v760
        %vm765 = vcmp.eq.s32.totalorder %v382, %v761
        %vm766 = vcmp.eq.s32.totalorder %v382, %v762
        %v767 = vsel %vm763, 1, 0
        %v768 = vsel %vm764, 1, 0
        %v769 = vsel %vm765, 1, 0
        %v770 = vsel %vm766, 1, 0
        %v771 = vcvt.s32.f32 %v767
        %v772 = vcvt.s32.f32 %v768
        %v773 = vcvt.s32.f32 %v769
        %v774 = vcvt.s32.f32 %v770
        %783 = vrot.lane.b32.xlu0 %v361, 64
        %v784 = vpop.permute.xlu0 %783
        %785 = vrot.lane.b32.xlu0 %v363, 64
        %v786 = vpop.permute.xlu0 %785
        %787 = vrot.lane.b32.xlu0 %v365, 64
        %v788 = vpop.permute.xlu0 %787
        %789 = vrot.lane.b32.xlu0 %v367, 64
        %v790 = vpop.permute.xlu0 %789
        %791 = vrot.lane.b32.xlu0 %v369, 64
        %v792 = vpop.permute.xlu0 %791
        %793 = vrot.lane.b32.xlu0 %v371, 64
        %v794 = vpop.permute.xlu0 %793
        %795 = vrot.lane.b32.xlu0 %v373, 64
        %v796 = vpop.permute.xlu0 %795
        %797 = vrot.lane.b32.xlu0 %v375, 64
        %v798 = vpop.permute.xlu0 %797
        %v808 = vsel %vm447, %v771, 0
        %v811 = vsel %vm447, %v772, 0
        %v814 = vsel %vm447, %v773, 0
        %v817 = vsel %vm447, %v774, 0
        %819 = vmatprep.subr.mxu0 0.0
        %820 = vmatpush1.msra.mxu0 0.0
        %821 = vmatprep.subr.mxu0 0.0
        %822 = vmatpush1.msra.mxu0 0.0
        %823 = vmatprep.subr.mxu0 0.0
        %824 = vmatpush1.msra.mxu0 0.0
        %825 = vmatprep.subr.mxu0 0.0
        %826 = vmatpush1.msra.mxu0 0.0
        %827 = vmatprep.subr.mxu0 0.0
        %828 = vmatpush1.msra.mxu0 0.0
        %829 = vmatprep.subr.mxu0 0.0
        %830 = vmatpush1.msra.mxu0 0.0
        %831 = vmatprep.subr.mxu0 0.0
        %832 = vmatpush1.msra.mxu0 0.0
        %833 = vmatprep.subr.mxu0 0.0
        %834 = vmatpush1.msra.mxu0 0.0
        %835 = vmatprep.subr.mxu0 0.0
        %836 = vmatpush1.msra.mxu0 %v798
        %837 = vmatprep.subr.mxu0 0.0
        %838 = vmatpush1.msra.mxu0 %v796
        %839 = vmatprep.subr.mxu0 0.0
        %840 = vmatpush1.msra.mxu0 %v794
        %841 = vmatprep.subr.mxu0 0.0
        %842 = vmatpush1.msra.mxu0 %v792
        %843 = vmatprep.subr.mxu0 0.0
        %844 = vmatpush1.msra.mxu0 %v790
        %845 = vmatprep.subr.mxu0 0.0
        %846 = vmatpush1.msra.mxu0 %v788
        %847 = vmatprep.subr.mxu0 0.0
        %848 = vmatpush1.msra.mxu0 %v786
        %849 = vmatprep.subr.mxu0 0.0
        %850 = vmatpush1.msra.mxu0 %v784
        %851 = vmatprep.subr.mxu0 0.0
        %852 = vmatpush2.msra.mxu0 0.0
        %853 = vmatprep.subr.mxu0 0.0
        %854 = vmatpush2.msra.mxu0 0.0
        %855 = vmatprep.subr.mxu0 0.0
        %856 = vmatpush2.msra.mxu0 0.0
        %857 = vmatprep.subr.mxu0 0.0
        %858 = vmatpush2.msra.mxu0 0.0
        %859 = vmatprep.subr.mxu0 0.0
        %860 = vmatpush2.msra.mxu0 0.0
        %861 = vmatprep.subr.mxu0 0.0
        %862 = vmatpush2.msra.mxu0 0.0
        %863 = vmatprep.subr.mxu0 0.0
        %864 = vmatpush2.msra.mxu0 0.0
        %865 = vmatprep.subr.mxu0 0.0
        %866 = vmatpush2.msra.mxu0 0.0
        %867 = vmatprep.subr.mxu0 0.0
        %868 = vmatpush2.msra.mxu0 0.0
        %869 = vmatprep.subr.mxu0 0.0
        %870 = vmatpush2.msra.mxu0 0.0
        %871 = vmatprep.subr.mxu0 0.0
        %872 = vmatpush2.msra.mxu0 0.0
        %873 = vmatprep.subr.mxu0 0.0
        %874 = vmatpush2.msra.mxu0 0.0
        %875 = vmatprep.subr.mxu0 0.0
        %876 = vmatpush2.msra.mxu0 0.0
        %877 = vmatprep.subr.mxu0 0.0
        %878 = vmatpush2.msra.mxu0 0.0
        %879 = vmatprep.subr.mxu0 0.0
        %880 = vmatpush2.msra.mxu0 0.0
        %881 = vmatprep.subr.mxu0 0.0
        %882 = vmatpush2.msra.mxu0 0.0
        %883 = vmatprep.mubr.f32.mxu0 0.0
        %884 = vmatmul.mubr.f32.gmra.mxu0 %v808
        %v885 = vpop.f32.mrf.mxu0
        %v886 = vadd.f32 0.0, %v885
        %v887 = vpop.f32.mrf.mxu0
        %888 = vmatprep.mubr.f32.mxu0 0.0
        %889 = vmatmul.mubr.f32.gmra.mxu0 %v811
        %v890 = vpop.f32.mrf.mxu0
        %v891 = vadd.f32 0.0, %v890
        %v892 = vpop.f32.mrf.mxu0
        %893 = vmatprep.mubr.f32.mxu0 0.0
        %894 = vmatmul.mubr.f32.gmra.mxu0 %v814
        %v895 = vpop.f32.mrf.mxu0
        %v896 = vadd.f32 0.0, %v895
        %v897 = vpop.f32.mrf.mxu0
        %898 = vmatprep.mubr.f32.mxu0 0.0
        %899 = vmatmul.mubr.f32.gmra.mxu0 %v817
        %v900 = vpop.f32.mrf.mxu0
        %v901 = vadd.f32 0.0, %v900
        %v902 = vpop.f32.mrf.mxu0
        %903 = vdwg.mxu0
        %v904 = vadd.f32 %v755, %v886
        %v905 = vadd.f32 %v756, %v891
        %v906 = vadd.f32 %v757, %v896
        %v907 = vadd.f32 %v758, %v901
        %v908 = vld [vmem:[%s1] sm:$0x1]
        %v910 = vlaneseq
        %v911 = vshrl.u32 %v910, 7
        %v912 = vsub.s32 0, %v911
        %v913 = vrot.slane %v908, %v912
        %v915 = vadd.f32 %v904, %v913
        %v916 = vadd.f32 %v905, %v913
        %v917 = vadd.f32 %v906, %v913
        %v918 = vadd.f32 %v907, %v913
        %v919 = vmax.f32 %v915, 0.0
        %v920 = vmax.f32 %v916, 0.0
        %v921 = vmax.f32 %v917, 0.0
        %v922 = vmax.f32 %v918, 0.0
        %v923 = vld [vmem:[%s2] sm:$0xff]
        %v924 = vld [vmem:[%s2 + $0x8] sm:$0xff]
        %v925 = vld [vmem:[%s2 + $0x10] sm:$0xff]
        %v926 = vld [vmem:[%s2 + $0x18] sm:$0xff]
        %v927 = vld [vmem:[%s2 + $0x20] sm:$0xff]
        %v928 = vld [vmem:[%s2 + $0x28] sm:$0xff]
        %v929 = vld [vmem:[%s2 + $0x30] sm:$0xff]
        %v930 = vld [vmem:[%s2 + $0x38] sm:$0xff]
        %v931 = vld [vmem:[%s2 + $0x40] sm:$0xff]
        %v932 = vld [vmem:[%s2 + $0x48] sm:$0xff]
        %v933 = vld [vmem:[%s2 + $0x50] sm:$0xff]
        %v934 = vld [vmem:[%s2 + $0x58] sm:$0xff]
        %v935 = vld [vmem:[%s2 + $0x60] sm:$0xff]
        %v936 = vld [vmem:[%s2 + $0x68] sm:$0xff]
        %v937 = vld [vmem:[%s2 + $0x70] sm:$0xff]
        %v938 = vld [vmem:[%s2 + $0x78] sm:$0xff]
        %v939 = vld [vmem:[%s2 + $0x80] sm:$0xff]
        %v940 = vld [vmem:[%s2 + $0x88] sm:$0xff]
        %v941 = vld [vmem:[%s2 + $0x90] sm:$0xff]
        %v942 = vld [vmem:[%s2 + $0x98] sm:$0xff]
        %v943 = vld [vmem:[%s2 + $0xa0] sm:$0xff]
        %v944 = vld [vmem:[%s2 + $0xa8] sm:$0xff]
        %v945 = vld [vmem:[%s2 + $0xb0] sm:$0xff]
        %v946 = vld [vmem:[%s2 + $0xb8] sm:$0xff]
        %v947 = vld [vmem:[%s2 + $0xc0] sm:$0xff]
        %v948 = vld [vmem:[%s2 + $0xc8] sm:$0xff]
        %v949 = vld [vmem:[%s2 + $0xd0] sm:$0xff]
        %v950 = vld [vmem:[%s2 + $0xd8] sm:$0xff]
        %v951 = vld [vmem:[%s2 + $0xe0] sm:$0xff]
        %v952 = vld [vmem:[%s2 + $0xe8] sm:$0xff]
        %v953 = vld [vmem:[%s2 + $0xf0] sm:$0xff]
        %v954 = vld [vmem:[%s2 + $0xf8] sm:$0xff]
        %v955 = vld [vmem:[%s3] sm:$0x1]
        %vm956 = vcmask 252928
        %v957 = vsel %vm956, %v395, 0
        %v959 = vsel %vm956, %v396, 0
        %vm961 = vcmask 1046528
        %v963 = vsel %vm961, %v922, 0
        %965 = vmatprep.subr.mxu0 0.0
        %966 = vmatpush1.msra.mxu0 0.0
        %967 = vmatprep.subr.mxu0 0.0
        %968 = vmatpush1.msra.mxu0 0.0
        %969 = vmatprep.subr.mxu0 0.0
        %970 = vmatpush1.msra.mxu0 0.0
        %971 = vmatprep.subr.mxu0 0.0
        %972 = vmatpush1.msra.mxu0 0.0
        %973 = vmatprep.subr.mxu0 0.0
        %974 = vmatpush1.msra.mxu0 0.0
        %975 = vmatprep.subr.mxu0 0.0
        %976 = vmatpush1.msra.mxu0 0.0
        %977 = vmatprep.subr.mxu0 0.0
        %978 = vmatpush1.msra.mxu0 0.0
        %979 = vmatprep.subr.mxu0 0.0
        %980 = vmatpush1.msra.mxu0 0.0
        %981 = vmatprep.subr.mxu0 0.0
        %982 = vmatpush1.msra.mxu0 0.0
        %983 = vmatprep.subr.mxu0 0.0
        %984 = vmatpush1.msra.mxu0 0.0
        %985 = vmatprep.subr.mxu0 0.0
        %986 = vmatpush1.msra.mxu0 0.0
        %987 = vmatprep.subr.mxu0 0.0
        %988 = vmatpush1.msra.mxu0 0.0
        %989 = vmatprep.subr.mxu0 0.0
        %990 = vmatpush1.msra.mxu0 %v963
        %991 = vmatprep.subr.mxu0 0.0
        %992 = vmatpush1.msra.mxu0 %v921
        %993 = vmatprep.subr.mxu0 0.0
        %994 = vmatpush1.msra.mxu0 %v920
        %995 = vmatprep.subr.mxu0 0.0
        %996 = vmatpush1.msra.mxu0 %v919
        %997 = vmatprep.subr.mxu0 0.0
        %998 = vmatpush2.msra.mxu0 0.0
        %999 = vmatprep.subr.mxu0 0.0
        %1000 = vmatpush2.msra.mxu0 0.0
        %1001 = vmatprep.subr.mxu0 0.0
        %1002 = vmatpush2.msra.mxu0 0.0
        %1003 = vmatprep.subr.mxu0 0.0
        %1004 = vmatpush2.msra.mxu0 0.0
        %1005 = vmatprep.subr.mxu0 0.0
        %1006 = vmatpush2.msra.mxu0 0.0
        %1007 = vmatprep.subr.mxu0 0.0
        %1008 = vmatpush2.msra.mxu0 0.0
        %1009 = vmatprep.subr.mxu0 0.0
        %1010 = vmatpush2.msra.mxu0 0.0
        %1011 = vmatprep.subr.mxu0 0.0
        %1012 = vmatpush2.msra.mxu0 0.0
        %1013 = vmatprep.subr.mxu0 0.0
        %1014 = vmatpush2.msra.mxu0 0.0
        %1015 = vmatprep.subr.mxu0 0.0
        %1016 = vmatpush2.msra.mxu0 0.0
        %1017 = vmatprep.subr.mxu0 0.0
        %1018 = vmatpush2.msra.mxu0 0.0
        %1019 = vmatprep.subr.mxu0 0.0
        %1020 = vmatpush2.msra.mxu0 0.0
        %1021 = vmatprep.subr.mxu0 0.0
        %1022 = vmatpush2.msra.mxu0 0.0
        %1023 = vmatprep.subr.mxu0 0.0
        %1024 = vmatpush2.msra.mxu0 0.0
        %1025 = vmatprep.subr.mxu0 0.0
        %1026 = vmatpush2.msra.mxu0 0.0
        %1027 = vmatprep.subr.mxu0 0.0
        %1028 = vmatpush2.msra.mxu0 0.0
        %1029 = vmatprep.mubr.f32.mxu0 0.0
        %1030 = vmatmul.mubr.f32.gmra.mxu0 %v957
        %v1031 = vpop.f32.mrf.mxu0
        %v1032 = vadd.f32 0.0, %v1031
        %v1033 = vpop.f32.mrf.mxu0
        %1034 = vmatprep.mubr.f32.mxu0 0.0
        %1035 = vmatmul.mubr.f32.gmra.mxu0 %v959
        %v1036 = vpop.f32.mrf.mxu0
        %v1037 = vadd.f32 0.0, %v1036
        %v1038 = vpop.f32.mrf.mxu0
        %1039 = vdwg.mxu0
        %v1040 = vsel %vm956, %v411, 0
        %v1042 = vsel %vm956, %v412, 0
        %1044 = vmatprep.subr.mxu0 0.0
        %1045 = vmatpush1.msra.mxu0 0.0
        %1046 = vmatprep.subr.mxu0 0.0
        %1047 = vmatpush1.msra.mxu0 0.0
        %1048 = vmatprep.subr.mxu0 0.0
        %1049 = vmatpush1.msra.mxu0 0.0
        %1050 = vmatprep.subr.mxu0 0.0
        %1051 = vmatpush1.msra.mxu0 0.0
        %1052 = vmatprep.subr.mxu0 0.0
        %1053 = vmatpush1.msra.mxu0 0.0
        %1054 = vmatprep.subr.mxu0 0.0
        %1055 = vmatpush1.msra.mxu0 0.0
        %1056 = vmatprep.subr.mxu0 0.0
        %1057 = vmatpush1.msra.mxu0 0.0
        %1058 = vmatprep.subr.mxu0 0.0
        %1059 = vmatpush1.msra.mxu0 0.0
        %1060 = vmatprep.subr.mxu0 0.0
        %1061 = vmatpush1.msra.mxu0 0.0
        %1062 = vmatprep.subr.mxu0 0.0
        %1063 = vmatpush1.msra.mxu0 0.0
        %1064 = vmatprep.subr.mxu0 0.0
        %1065 = vmatpush1.msra.mxu0 0.0
        %1066 = vmatprep.subr.mxu0 0.0
        %1067 = vmatpush1.msra.mxu0 0.0
        %1068 = vmatprep.subr.mxu0 0.0
        %1069 = vmatpush1.msra.mxu0 %v963
        %1070 = vmatprep.subr.mxu0 0.0
        %1071 = vmatpush1.msra.mxu0 %v921
        %1072 = vmatprep.subr.mxu0 0.0
        %1073 = vmatpush1.msra.mxu0 %v920
        %1074 = vmatprep.subr.mxu0 0.0
        %1075 = vmatpush1.msra.mxu0 %v919
        %1076 = vmatprep.subr.mxu0 0.0
        %1077 = vmatpush2.msra.mxu0 0.0
        %1078 = vmatprep.subr.mxu0 0.0
        %1079 = vmatpush2.msra.mxu0 0.0
        %1080 = vmatprep.subr.mxu0 0.0
        %1081 = vmatpush2.msra.mxu0 0.0
        %1082 = vmatprep.subr.mxu0 0.0
        %1083 = vmatpush2.msra.mxu0 0.0
        %1084 = vmatprep.subr.mxu0 0.0
        %1085 = vmatpush2.msra.mxu0 0.0
        %1086 = vmatprep.subr.mxu0 0.0
        %1087 = vmatpush2.msra.mxu0 0.0
        %1088 = vmatprep.subr.mxu0 0.0
        %1089 = vmatpush2.msra.mxu0 0.0
        %1090 = vmatprep.subr.mxu0 0.0
        %1091 = vmatpush2.msra.mxu0 0.0
        %1092 = vmatprep.subr.mxu0 0.0
        %1093 = vmatpush2.msra.mxu0 0.0
        %1094 = vmatprep.subr.mxu0 0.0
        %1095 = vmatpush2.msra.mxu0 0.0
        %1096 = vmatprep.subr.mxu0 0.0
        %1097 = vmatpush2.msra.mxu0 0.0
        %1098 = vmatprep.subr.mxu0 0.0
        %1099 = vmatpush2.msra.mxu0 0.0
        %1100 = vmatprep.subr.mxu0 0.0
        %1101 = vmatpush2.msra.mxu0 0.0
        %1102 = vmatprep.subr.mxu0 0.0
        %1103 = vmatpush2.msra.mxu0 0.0
        %1104 = vmatprep.subr.mxu0 0.0
        %1105 = vmatpush2.msra.mxu0 0.0
        %1106 = vmatprep.subr.mxu0 0.0
        %1107 = vmatpush2.msra.mxu0 0.0
        %1108 = vmatprep.mubr.f32.mxu0 0.0
        %1109 = vmatmul.mubr.f32.gmra.mxu0 %v1040
        %v1110 = vpop.f32.mrf.mxu0
        %v1111 = vadd.f32 0.0, %v1110
        %v1112 = vpop.f32.mrf.mxu0
        %1113 = vmatprep.mubr.f32.mxu0 0.0
        %1114 = vmatmul.mubr.f32.gmra.mxu0 %v1042
        %v1115 = vpop.f32.mrf.mxu0
        %v1116 = vadd.f32 0.0, %v1115
        %v1117 = vpop.f32.mrf.mxu0
        %1118 = vdwg.mxu0
        %v1119 = vsel %vm956, %v654, 0
        %v1121 = vsel %vm956, %v655, 0
        %1123 = vmatprep.subr.mxu0 0.0
        %1124 = vmatpush1.msra.mxu0 0.0
        %1125 = vmatprep.subr.mxu0 0.0
        %1126 = vmatpush1.msra.mxu0 0.0
        %1127 = vmatprep.subr.mxu0 0.0
        %1128 = vmatpush1.msra.mxu0 0.0
        %1129 = vmatprep.subr.mxu0 0.0
        %1130 = vmatpush1.msra.mxu0 0.0
        %1131 = vmatprep.subr.mxu0 0.0
        %1132 = vmatpush1.msra.mxu0 0.0
        %1133 = vmatprep.subr.mxu0 0.0
        %1134 = vmatpush1.msra.mxu0 0.0
        %1135 = vmatprep.subr.mxu0 0.0
        %1136 = vmatpush1.msra.mxu0 0.0
        %1137 = vmatprep.subr.mxu0 0.0
        %1138 = vmatpush1.msra.mxu0 0.0
        %1139 = vmatprep.subr.mxu0 0.0
        %1140 = vmatpush1.msra.mxu0 0.0
        %1141 = vmatprep.subr.mxu0 0.0
        %1142 = vmatpush1.msra.mxu0 0.0
        %1143 = vmatprep.subr.mxu0 0.0
        %1144 = vmatpush1.msra.mxu0 0.0
        %1145 = vmatprep.subr.mxu0 0.0
        %1146 = vmatpush1.msra.mxu0 0.0
        %1147 = vmatprep.subr.mxu0 0.0
        %1148 = vmatpush1.msra.mxu0 %v963
        %1149 = vmatprep.subr.mxu0 0.0
        %1150 = vmatpush1.msra.mxu0 %v921
        %1151 = vmatprep.subr.mxu0 0.0
        %1152 = vmatpush1.msra.mxu0 %v920
        %1153 = vmatprep.subr.mxu0 0.0
        %1154 = vmatpush1.msra.mxu0 %v919
        %1155 = vmatprep.subr.mxu0 0.0
        %1156 = vmatpush2.msra.mxu0 0.0
        %1157 = vmatprep.subr.mxu0 0.0
        %1158 = vmatpush2.msra.mxu0 0.0
        %1159 = vmatprep.subr.mxu0 0.0
        %1160 = vmatpush2.msra.mxu0 0.0
        %1161 = vmatprep.subr.mxu0 0.0
        %1162 = vmatpush2.msra.mxu0 0.0
        %1163 = vmatprep.subr.mxu0 0.0
        %1164 = vmatpush2.msra.mxu0 0.0
        %1165 = vmatprep.subr.mxu0 0.0
        %1166 = vmatpush2.msra.mxu0 0.0
        %1167 = vmatprep.subr.mxu0 0.0
        %1168 = vmatpush2.msra.mxu0 0.0
        %1169 = vmatprep.subr.mxu0 0.0
        %1170 = vmatpush2.msra.mxu0 0.0
        %1171 = vmatprep.subr.mxu0 0.0
        %1172 = vmatpush2.msra.mxu0 0.0
        %1173 = vmatprep.subr.mxu0 0.0
        %1174 = vmatpush2.msra.mxu0 0.0
        %1175 = vmatprep.subr.mxu0 0.0
        %1176 = vmatpush2.msra.mxu0 0.0
        %1177 = vmatprep.subr.mxu0 0.0
        %1178 = vmatpush2.msra.mxu0 0.0
        %1179 = vmatprep.subr.mxu0 0.0
        %1180 = vmatpush2.msra.mxu0 0.0
        %1181 = vmatprep.subr.mxu0 0.0
        %1182 = vmatpush2.msra.mxu0 0.0
        %1183 = vmatprep.subr.mxu0 0.0
        %1184 = vmatpush2.msra.mxu0 0.0
        %1185 = vmatprep.subr.mxu0 0.0
        %1186 = vmatpush2.msra.mxu0 0.0
        %1187 = vmatprep.mubr.f32.mxu0 0.0
        %1188 = vmatmul.mubr.f32.gmra.mxu0 %v1119
        %v1189 = vpop.f32.mrf.mxu0
        %v1190 = vadd.f32 0.0, %v1189
        %v1191 = vpop.f32.mrf.mxu0
        %1192 = vmatprep.mubr.f32.mxu0 0.0
        %1193 = vmatmul.mubr.f32.gmra.mxu0 %v1121
        %v1194 = vpop.f32.mrf.mxu0
        %v1195 = vadd.f32 0.0, %v1194
        %v1196 = vpop.f32.mrf.mxu0
        %1197 = vdwg.mxu0
        %v1198 = vsel %vm956, %v771, 0
        %v1200 = vsel %vm956, %v772, 0
        %1202 = vmatprep.subr.mxu0 0.0
        %1203 = vmatpush1.msra.mxu0 0.0
        %1204 = vmatprep.subr.mxu0 0.0
        %1205 = vmatpush1.msra.mxu0 0.0
        %1206 = vmatprep.subr.mxu0 0.0
        %1207 = vmatpush1.msra.mxu0 0.0
        %1208 = vmatprep.subr.mxu0 0.0
        %1209 = vmatpush1.msra.mxu0 0.0
        %1210 = vmatprep.subr.mxu0 0.0
        %1211 = vmatpush1.msra.mxu0 0.0
        %1212 = vmatprep.subr.mxu0 0.0
        %1213 = vmatpush1.msra.mxu0 0.0
        %1214 = vmatprep.subr.mxu0 0.0
        %1215 = vmatpush1.msra.mxu0 0.0
        %1216 = vmatprep.subr.mxu0 0.0
        %1217 = vmatpush1.msra.mxu0 0.0
        %1218 = vmatprep.subr.mxu0 0.0
        %1219 = vmatpush1.msra.mxu0 0.0
        %1220 = vmatprep.subr.mxu0 0.0
        %1221 = vmatpush1.msra.mxu0 0.0
        %1222 = vmatprep.subr.mxu0 0.0
        %1223 = vmatpush1.msra.mxu0 0.0
        %1224 = vmatprep.subr.mxu0 0.0
        %1225 = vmatpush1.msra.mxu0 0.0
        %1226 = vmatprep.subr.mxu0 0.0
        %1227 = vmatpush1.msra.mxu0 %v963
        %1228 = vmatprep.subr.mxu0 0.0
        %1229 = vmatpush1.msra.mxu0 %v921
        %1230 = vmatprep.subr.mxu0 0.0
        %1231 = vmatpush1.msra.mxu0 %v920
        %1232 = vmatprep.subr.mxu0 0.0
        %1233 = vmatpush1.msra.mxu0 %v919
        %1234 = vmatprep.subr.mxu0 0.0
        %1235 = vmatpush2.msra.mxu0 0.0
        %1236 = vmatprep.subr.mxu0 0.0
        %1237 = vmatpush2.msra.mxu0 0.0
        %1238 = vmatprep.subr.mxu0 0.0
        %1239 = vmatpush2.msra.mxu0 0.0
        %1240 = vmatprep.subr.mxu0 0.0
        %1241 = vmatpush2.msra.mxu0 0.0
        %1242 = vmatprep.subr.mxu0 0.0
        %1243 = vmatpush2.msra.mxu0 0.0
        %1244 = vmatprep.subr.mxu0 0.0
        %1245 = vmatpush2.msra.mxu0 0.0
        %1246 = vmatprep.subr.mxu0 0.0
        %1247 = vmatpush2.msra.mxu0 0.0
        %1248 = vmatprep.subr.mxu0 0.0
        %1249 = vmatpush2.msra.mxu0 0.0
        %1250 = vmatprep.subr.mxu0 0.0
        %1251 = vmatpush2.msra.mxu0 0.0
        %1252 = vmatprep.subr.mxu0 0.0
        %1253 = vmatpush2.msra.mxu0 0.0
        %1254 = vmatprep.subr.mxu0 0.0
        %1255 = vmatpush2.msra.mxu0 0.0
        %1256 = vmatprep.subr.mxu0 0.0
        %1257 = vmatpush2.msra.mxu0 0.0
        %1258 = vmatprep.subr.mxu0 0.0
        %1259 = vmatpush2.msra.mxu0 0.0
        %1260 = vmatprep.subr.mxu0 0.0
        %1261 = vmatpush2.msra.mxu0 0.0
        %1262 = vmatprep.subr.mxu0 0.0
        %1263 = vmatpush2.msra.mxu0 0.0
        %1264 = vmatprep.subr.mxu0 0.0
        %1265 = vmatpush2.msra.mxu0 0.0
        %1266 = vmatprep.mubr.f32.mxu0 0.0
        %1267 = vmatmul.mubr.f32.gmra.mxu0 %v1198
        %v1268 = vpop.f32.mrf.mxu0
        %v1269 = vadd.f32 0.0, %v1268
        %v1270 = vpop.f32.mrf.mxu0
        %1271 = vmatprep.mubr.f32.mxu0 0.0
        %1272 = vmatmul.mubr.f32.gmra.mxu0 %v1200
        %v1273 = vpop.f32.mrf.mxu0
        %v1274 = vadd.f32 0.0, %v1273
        %v1275 = vpop.f32.mrf.mxu0
        %1276 = vdwg.mxu0
        %1279 = vrot.lane.b32.xlu0 %v1111, 64
        %v1280 = vpop.permute.xlu0 %1279
        %1281 = vrot.lane.b32.xlu0 %v1116, 64
        %v1282 = vpop.permute.xlu0 %1281
        %1287 = vrot.lane.b32.xlu0 %v1269, 64
        %v1288 = vpop.permute.xlu0 %1287
        %1289 = vrot.lane.b32.xlu0 %v1274, 64
        %v1290 = vpop.permute.xlu0 %1289
        %v1293 = vsel %vm447, %v1032, %v1280
        %v1294 = vsel %vm447, %v1037, %v1282
        %v1295 = vsel %vm447, %v1190, %v1288
        %v1296 = vsel %vm447, %v1195, %v1290
        %v1298 = vlaneseq
        %v1299 = vshrl.u32 %v1298, 7
        %v1300 = vsub.s32 0, %v1299
        %v1301 = vrot.slane %v955, %v1300
        %1303 = vmatprep.subr.mxu0 0.0
        %1304 = vmatpush1.msra.mxu0 %v938
        %1305 = vmatprep.subr.mxu0 0.0
        %1306 = vmatpush1.msra.mxu0 %v937
        %1307 = vmatprep.subr.mxu0 0.0
        %1308 = vmatpush1.msra.mxu0 %v936
        %1309 = vmatprep.subr.mxu0 0.0
        %1310 = vmatpush1.msra.mxu0 %v935
        %1311 = vmatprep.subr.mxu0 0.0
        %1312 = vmatpush1.msra.mxu0 %v934
        %1313 = vmatprep.subr.mxu0 0.0
        %1314 = vmatpush1.msra.mxu0 %v933
        %1315 = vmatprep.subr.mxu0 0.0
        %1316 = vmatpush1.msra.mxu0 %v932
        %1317 = vmatprep.subr.mxu0 0.0
        %1318 = vmatpush1.msra.mxu0 %v931
        %1319 = vmatprep.subr.mxu0 0.0
        %1320 = vmatpush1.msra.mxu0 %v930
        %1321 = vmatprep.subr.mxu0 0.0
        %1322 = vmatpush1.msra.mxu0 %v929
        %1323 = vmatprep.subr.mxu0 0.0
        %1324 = vmatpush1.msra.mxu0 %v928
        %1325 = vmatprep.subr.mxu0 0.0
        %1326 = vmatpush1.msra.mxu0 %v927
        %1327 = vmatprep.subr.mxu0 0.0
        %1328 = vmatpush1.msra.mxu0 %v926
        %1329 = vmatprep.subr.mxu0 0.0
        %1330 = vmatpush1.msra.mxu0 %v925
        %1331 = vmatprep.subr.mxu0 0.0
        %1332 = vmatpush1.msra.mxu0 %v924
        %1333 = vmatprep.subr.mxu0 0.0
        %1334 = vmatpush1.msra.mxu0 %v923
        %1335 = vmatprep.subr.mxu0 0.0
        %1336 = vmatpush2.msra.mxu0 %v954
        %1337 = vmatprep.subr.mxu0 0.0
        %1338 = vmatpush2.msra.mxu0 %v953
        %1339 = vmatprep.subr.mxu0 0.0
        %1340 = vmatpush2.msra.mxu0 %v952
        %1341 = vmatprep.subr.mxu0 0.0
        %1342 = vmatpush2.msra.mxu0 %v951
        %1343 = vmatprep.subr.mxu0 0.0
        %1344 = vmatpush2.msra.mxu0 %v950
        %1345 = vmatprep.subr.mxu0 0.0
        %1346 = vmatpush2.msra.mxu0 %v949
        %1347 = vmatprep.subr.mxu0 0.0
        %1348 = vmatpush2.msra.mxu0 %v948
        %1349 = vmatprep.subr.mxu0 0.0
        %1350 = vmatpush2.msra.mxu0 %v947
        %1351 = vmatprep.subr.mxu0 0.0
        %1352 = vmatpush2.msra.mxu0 %v946
        %1353 = vmatprep.subr.mxu0 0.0
        %1354 = vmatpush2.msra.mxu0 %v945
        %1355 = vmatprep.subr.mxu0 0.0
        %1356 = vmatpush2.msra.mxu0 %v944
        %1357 = vmatprep.subr.mxu0 0.0
        %1358 = vmatpush2.msra.mxu0 %v943
        %1359 = vmatprep.subr.mxu0 0.0
        %1360 = vmatpush2.msra.mxu0 %v942
        %1361 = vmatprep.subr.mxu0 0.0
        %1362 = vmatpush2.msra.mxu0 %v941
        %1363 = vmatprep.subr.mxu0 0.0
        %1364 = vmatpush2.msra.mxu0 %v940
        %1365 = vmatprep.subr.mxu0 0.0
        %1366 = vmatpush2.msra.mxu0 %v939
        %1367 = vmatprep.mubr.f32.mxu0 %v1295
        %1368 = vmatmul.mubr.f32.gmra.mxu0 %v1293
        %v1369 = vpop.f32.mrf.mxu0
        %v1370 = vadd.f32 %v1301, %v1369
        %v1371 = vpop.f32.mrf.mxu0
        %1372 = vmatprep.mubr.f32.mxu0 %v1296
        %1373 = vmatmul.mubr.f32.gmra.mxu0 %v1294
        %v1374 = vpop.f32.mrf.mxu0
        %v1375 = vadd.f32 %v1301, %v1374
        %v1376 = vpop.f32.mrf.mxu0
        %1377 = vdwg.mxu0
        %v1378 = vmax.f32 %v1370, 0.0
        %v1379 = vmax.f32 %v1375, 0.0
        %v1380 = vld [vmem:[%s4] sm:$0xff]
        %v1381 = vld [vmem:[%s4 + $0x8] sm:$0xff]
        %v1382 = vld [vmem:[%s4 + $0x10] sm:$0xff]
        %v1383 = vld [vmem:[%s4 + $0x18] sm:$0xff]
        %v1384 = vld [vmem:[%s4 + $0x20] sm:$0xff]
        %v1385 = vld [vmem:[%s4 + $0x28] sm:$0xff]
        %v1386 = vld [vmem:[%s4 + $0x30] sm:$0xff]
        %v1387 = vld [vmem:[%s4 + $0x38] sm:$0xff]
        %v1388 = vld [vmem:[%s4 + $0x40] sm:$0xff]
        %v1389 = vld [vmem:[%s4 + $0x48] sm:$0xff]
        %v1390 = vld [vmem:[%s4 + $0x50] sm:$0xff]
        %v1391 = vld [vmem:[%s4 + $0x58] sm:$0xff]
        %v1392 = vld [vmem:[%s4 + $0x60] sm:$0xff]
        %v1393 = vld [vmem:[%s4 + $0x68] sm:$0xff]
        %v1394 = vld [vmem:[%s4 + $0x70] sm:$0xff]
        %v1395 = vld [vmem:[%s4 + $0x78] sm:$0xff]
        %v1396 = vld [vmem:[%s4 + $0x80] sm:$0xff]
        %v1397 = vld [vmem:[%s4 + $0x88] sm:$0xff]
        %v1398 = vld [vmem:[%s4 + $0x90] sm:$0xff]
        %v1399 = vld [vmem:[%s4 + $0x98] sm:$0xff]
        %v1400 = vld [vmem:[%s4 + $0xa0] sm:$0xff]
        %v1401 = vld [vmem:[%s4 + $0xa8] sm:$0xff]
        %v1402 = vld [vmem:[%s4 + $0xb0] sm:$0xff]
        %v1403 = vld [vmem:[%s4 + $0xb8] sm:$0xff]
        %v1404 = vld [vmem:[%s4 + $0xc0] sm:$0xff]
        %v1405 = vld [vmem:[%s4 + $0xc8] sm:$0xff]
        %v1406 = vld [vmem:[%s4 + $0xd0] sm:$0xff]
        %v1407 = vld [vmem:[%s4 + $0xd8] sm:$0xff]
        %v1408 = vld [vmem:[%s4 + $0xe0] sm:$0xff]
        %v1409 = vld [vmem:[%s4 + $0xe8] sm:$0xff]
        %v1410 = vld [vmem:[%s4 + $0xf0] sm:$0xff]
        %v1411 = vld [vmem:[%s4 + $0xf8] sm:$0xff]
        %v1412 = vld [vmem:[%s4 + $0x100] sm:$0xff]
        %v1413 = vld [vmem:[%s4 + $0x108] sm:$0xff]
        %v1414 = vld [vmem:[%s4 + $0x110] sm:$0xff]
        %v1415 = vld [vmem:[%s4 + $0x118] sm:$0xff]
        %v1416 = vld [vmem:[%s4 + $0x120] sm:$0xff]
        %v1417 = vld [vmem:[%s4 + $0x128] sm:$0xff]
        %v1418 = vld [vmem:[%s4 + $0x130] sm:$0xff]
        %v1419 = vld [vmem:[%s4 + $0x138] sm:$0xff]
        %v1420 = vld [vmem:[%s4 + $0x140] sm:$0xff]
        %v1421 = vld [vmem:[%s4 + $0x148] sm:$0xff]
        %v1422 = vld [vmem:[%s4 + $0x150] sm:$0xff]
        %v1423 = vld [vmem:[%s4 + $0x158] sm:$0xff]
        %v1424 = vld [vmem:[%s4 + $0x160] sm:$0xff]
        %v1425 = vld [vmem:[%s4 + $0x168] sm:$0xff]
        %v1426 = vld [vmem:[%s4 + $0x170] sm:$0xff]
        %v1427 = vld [vmem:[%s4 + $0x178] sm:$0xff]
        %v1428 = vld [vmem:[%s4 + $0x180] sm:$0xff]
        %v1429 = vld [vmem:[%s4 + $0x188] sm:$0xff]
        %v1430 = vld [vmem:[%s4 + $0x190] sm:$0xff]
        %v1431 = vld [vmem:[%s4 + $0x198] sm:$0xff]
        %v1432 = vld [vmem:[%s4 + $0x1a0] sm:$0xff]
        %v1433 = vld [vmem:[%s4 + $0x1a8] sm:$0xff]
        %v1434 = vld [vmem:[%s4 + $0x1b0] sm:$0xff]
        %v1435 = vld [vmem:[%s4 + $0x1b8] sm:$0xff]
        %v1436 = vld [vmem:[%s4 + $0x1c0] sm:$0xff]
        %v1437 = vld [vmem:[%s4 + $0x1c8] sm:$0xff]
        %v1438 = vld [vmem:[%s4 + $0x1d0] sm:$0xff]
        %v1439 = vld [vmem:[%s4 + $0x1d8] sm:$0xff]
        %v1440 = vld [vmem:[%s4 + $0x1e0] sm:$0xff]
        %v1441 = vld [vmem:[%s4 + $0x1e8] sm:$0xff]
        %v1442 = vld [vmem:[%s4 + $0x1f0] sm:$0xff]
        %v1443 = vld [vmem:[%s4 + $0x1f8] sm:$0xff]
        %v1444 = vld [vmem:[%s4 + $0x200] sm:$0xff]
        %v1445 = vld [vmem:[%s4 + $0x208] sm:$0xff]
        %v1446 = vld [vmem:[%s4 + $0x210] sm:$0xff]
        %v1447 = vld [vmem:[%s4 + $0x218] sm:$0xff]
        %v1448 = vld [vmem:[%s4 + $0x220] sm:$0xff]
        %v1449 = vld [vmem:[%s4 + $0x228] sm:$0xff]
        %v1450 = vld [vmem:[%s4 + $0x230] sm:$0xff]
        %v1451 = vld [vmem:[%s4 + $0x238] sm:$0xff]
        %v1452 = vld [vmem:[%s4 + $0x240] sm:$0xff]
        %v1453 = vld [vmem:[%s4 + $0x248] sm:$0xff]
        %v1454 = vld [vmem:[%s4 + $0x250] sm:$0xff]
        %v1455 = vld [vmem:[%s4 + $0x258] sm:$0xff]
        %v1456 = vld [vmem:[%s4 + $0x260] sm:$0xff]
        %v1457 = vld [vmem:[%s4 + $0x268] sm:$0xff]
        %v1458 = vld [vmem:[%s4 + $0x270] sm:$0xff]
        %v1459 = vld [vmem:[%s4 + $0x278] sm:$0xff]
        %v1460 = vld [vmem:[%s4 + $0x280] sm:$0xff]
        %v1461 = vld [vmem:[%s4 + $0x288] sm:$0xff]
        %v1462 = vld [vmem:[%s4 + $0x290] sm:$0xff]
        %v1463 = vld [vmem:[%s4 + $0x298] sm:$0xff]
        %v1464 = vld [vmem:[%s4 + $0x2a0] sm:$0xff]
        %v1465 = vld [vmem:[%s4 + $0x2a8] sm:$0xff]
        %v1466 = vld [vmem:[%s4 + $0x2b0] sm:$0xff]
        %v1467 = vld [vmem:[%s4 + $0x2b8] sm:$0xff]
        %v1468 = vld [vmem:[%s4 + $0x2c0] sm:$0xff]
        %v1469 = vld [vmem:[%s4 + $0x2c8] sm:$0xff]
        %v1470 = vld [vmem:[%s4 + $0x2d0] sm:$0xff]
        %v1471 = vld [vmem:[%s4 + $0x2d8] sm:$0xff]
        %v1472 = vld [vmem:[%s4 + $0x2e0] sm:$0xff]
        %v1473 = vld [vmem:[%s4 + $0x2e8] sm:$0xff]
        %v1474 = vld [vmem:[%s4 + $0x2f0] sm:$0xff]
        %v1475 = vld [vmem:[%s4 + $0x2f8] sm:$0xff]
        %v1476 = vld [vmem:[%s4 + $0x300] sm:$0xff]
        %v1477 = vld [vmem:[%s4 + $0x308] sm:$0xff]
        %v1478 = vld [vmem:[%s4 + $0x310] sm:$0xff]
        %v1479 = vld [vmem:[%s4 + $0x318] sm:$0xff]
        %v1480 = vld [vmem:[%s4 + $0x320] sm:$0xff]
        %v1481 = vld [vmem:[%s4 + $0x328] sm:$0xff]
        %v1482 = vld [vmem:[%s4 + $0x330] sm:$0xff]
        %v1483 = vld [vmem:[%s4 + $0x338] sm:$0xff]
        %v1484 = vld [vmem:[%s4 + $0x340] sm:$0xff]
        %v1485 = vld [vmem:[%s4 + $0x348] sm:$0xff]
        %v1486 = vld [vmem:[%s4 + $0x350] sm:$0xff]
        %v1487 = vld [vmem:[%s4 + $0x358] sm:$0xff]
        %v1488 = vld [vmem:[%s4 + $0x360] sm:$0xff]
        %v1489 = vld [vmem:[%s4 + $0x368] sm:$0xff]
        %v1490 = vld [vmem:[%s4 + $0x370] sm:$0xff]
        %v1491 = vld [vmem:[%s4 + $0x378] sm:$0xff]
        %v1492 = vld [vmem:[%s4 + $0x380] sm:$0xff]
        %v1493 = vld [vmem:[%s4 + $0x388] sm:$0xff]
        %v1494 = vld [vmem:[%s4 + $0x390] sm:$0xff]
        %v1495 = vld [vmem:[%s4 + $0x398] sm:$0xff]
        %v1496 = vld [vmem:[%s4 + $0x3a0] sm:$0xff]
        %v1497 = vld [vmem:[%s4 + $0x3a8] sm:$0xff]
        %v1498 = vld [vmem:[%s4 + $0x3b0] sm:$0xff]
        %v1499 = vld [vmem:[%s4 + $0x3b8] sm:$0xff]
        %v1500 = vld [vmem:[%s4 + $0x3c0] sm:$0xff]
        %v1501 = vld [vmem:[%s4 + $0x3c8] sm:$0xff]
        %v1502 = vld [vmem:[%s4 + $0x3d0] sm:$0xff]
        %v1503 = vld [vmem:[%s4 + $0x3d8] sm:$0xff]
        %v1504 = vld [vmem:[%s4 + $0x3e0] sm:$0xff]
        %v1505 = vld [vmem:[%s4 + $0x3e8] sm:$0xff]
        %v1506 = vld [vmem:[%s4 + $0x3f0] sm:$0xff]
        %v1507 = vld [vmem:[%s4 + $0x3f8] sm:$0xff]
        %v1508 = vld [vmem:[%s5] sm:$0x3]
        %vm1509 = vcmask 113664
        %v1510 = vsel %vm1509, %v395, 0
        %vm1512 = vcmask 1045504
        %v1514 = vsel %vm1512, %v1379, 0
        %1516 = vmatprep.subr.mxu0 0.0
        %1517 = vmatpush1.msra.mxu0 0.0
        %1518 = vmatprep.subr.mxu0 0.0
        %1519 = vmatpush1.msra.mxu0 0.0
        %1520 = vmatprep.subr.mxu0 0.0
        %1521 = vmatpush1.msra.mxu0 0.0
        %1522 = vmatprep.subr.mxu0 0.0
        %1523 = vmatpush1.msra.mxu0 0.0
        %1524 = vmatprep.subr.mxu0 0.0
        %1525 = vmatpush1.msra.mxu0 0.0
        %1526 = vmatprep.subr.mxu0 0.0
        %1527 = vmatpush1.msra.mxu0 0.0
        %1528 = vmatprep.subr.mxu0 0.0
        %1529 = vmatpush1.msra.mxu0 0.0
        %1530 = vmatprep.subr.mxu0 0.0
        %1531 = vmatpush1.msra.mxu0 0.0
        %1532 = vmatprep.subr.mxu0 0.0
        %1533 = vmatpush1.msra.mxu0 0.0
        %1534 = vmatprep.subr.mxu0 0.0
        %1535 = vmatpush1.msra.mxu0 0.0
        %1536 = vmatprep.subr.mxu0 0.0
        %1537 = vmatpush1.msra.mxu0 0.0
        %1538 = vmatprep.subr.mxu0 0.0
        %1539 = vmatpush1.msra.mxu0 0.0
        %1540 = vmatprep.subr.mxu0 0.0
        %1541 = vmatpush1.msra.mxu0 0.0
        %1542 = vmatprep.subr.mxu0 0.0
        %1543 = vmatpush1.msra.mxu0 0.0
        %1544 = vmatprep.subr.mxu0 0.0
        %1545 = vmatpush1.msra.mxu0 %v1514
        %1546 = vmatprep.subr.mxu0 0.0
        %1547 = vmatpush1.msra.mxu0 %v1378
        %1548 = vmatprep.subr.mxu0 0.0
        %1549 = vmatpush2.msra.mxu0 0.0
        %1550 = vmatprep.subr.mxu0 0.0
        %1551 = vmatpush2.msra.mxu0 0.0
        %1552 = vmatprep.subr.mxu0 0.0
        %1553 = vmatpush2.msra.mxu0 0.0
        %1554 = vmatprep.subr.mxu0 0.0
        %1555 = vmatpush2.msra.mxu0 0.0
        %1556 = vmatprep.subr.mxu0 0.0
        %1557 = vmatpush2.msra.mxu0 0.0
        %1558 = vmatprep.subr.mxu0 0.0
        %1559 = vmatpush2.msra.mxu0 0.0
        %1560 = vmatprep.subr.mxu0 0.0
        %1561 = vmatpush2.msra.mxu0 0.0
        %1562 = vmatprep.subr.mxu0 0.0
        %1563 = vmatpush2.msra.mxu0 0.0
        %1564 = vmatprep.subr.mxu0 0.0
        %1565 = vmatpush2.msra.mxu0 0.0
        %1566 = vmatprep.subr.mxu0 0.0
        %1567 = vmatpush2.msra.mxu0 0.0
        %1568 = vmatprep.subr.mxu0 0.0
        %1569 = vmatpush2.msra.mxu0 0.0
        %1570 = vmatprep.subr.mxu0 0.0
        %1571 = vmatpush2.msra.mxu0 0.0
        %1572 = vmatprep.subr.mxu0 0.0
        %1573 = vmatpush2.msra.mxu0 0.0
        %1574 = vmatprep.subr.mxu0 0.0
        %1575 = vmatpush2.msra.mxu0 0.0
        %1576 = vmatprep.subr.mxu0 0.0
        %1577 = vmatpush2.msra.mxu0 0.0
        %1578 = vmatprep.subr.mxu0 0.0
        %1579 = vmatpush2.msra.mxu0 0.0
        %1580 = vmatprep.mubr.f32.mxu0 0.0
        %1581 = vmatmul.mubr.f32.gmra.mxu0 %v1510
        %v1582 = vpop.f32.mrf.mxu0
        %v1583 = vadd.f32 0.0, %v1582
        %v1584 = vpop.f32.mrf.mxu0
        %1585 = vdwg.mxu0
        %v1586 = vsel %vm1509, %v411, 0
        %1588 = vmatprep.subr.mxu0 0.0
        %1589 = vmatpush1.msra.mxu0 0.0
        %1590 = vmatprep.subr.mxu0 0.0
        %1591 = vmatpush1.msra.mxu0 0.0
        %1592 = vmatprep.subr.mxu0 0.0
        %1593 = vmatpush1.msra.mxu0 0.0
        %1594 = vmatprep.subr.mxu0 0.0
        %1595 = vmatpush1.msra.mxu0 0.0
        %1596 = vmatprep.subr.mxu0 0.0
        %1597 = vmatpush1.msra.mxu0 0.0
        %1598 = vmatprep.subr.mxu0 0.0
        %1599 = vmatpush1.msra.mxu0 0.0
        %1600 = vmatprep.subr.mxu0 0.0
        %1601 = vmatpush1.msra.mxu0 0.0
        %1602 = vmatprep.subr.mxu0 0.0
        %1603 = vmatpush1.msra.mxu0 0.0
        %1604 = vmatprep.subr.mxu0 0.0
        %1605 = vmatpush1.msra.mxu0 0.0
        %1606 = vmatprep.subr.mxu0 0.0
        %1607 = vmatpush1.msra.mxu0 0.0
        %1608 = vmatprep.subr.mxu0 0.0
        %1609 = vmatpush1.msra.mxu0 0.0
        %1610 = vmatprep.subr.mxu0 0.0
        %1611 = vmatpush1.msra.mxu0 0.0
        %1612 = vmatprep.subr.mxu0 0.0
        %1613 = vmatpush1.msra.mxu0 0.0
        %1614 = vmatprep.subr.mxu0 0.0
        %1615 = vmatpush1.msra.mxu0 0.0
        %1616 = vmatprep.subr.mxu0 0.0
        %1617 = vmatpush1.msra.mxu0 %v1514
        %1618 = vmatprep.subr.mxu0 0.0
        %1619 = vmatpush1.msra.mxu0 %v1378
        %1620 = vmatprep.subr.mxu0 0.0
        %1621 = vmatpush2.msra.mxu0 0.0
        %1622 = vmatprep.subr.mxu0 0.0
        %1623 = vmatpush2.msra.mxu0 0.0
        %1624 = vmatprep.subr.mxu0 0.0
        %1625 = vmatpush2.msra.mxu0 0.0
        %1626 = vmatprep.subr.mxu0 0.0
        %1627 = vmatpush2.msra.mxu0 0.0
        %1628 = vmatprep.subr.mxu0 0.0
        %1629 = vmatpush2.msra.mxu0 0.0
        %1630 = vmatprep.subr.mxu0 0.0
        %1631 = vmatpush2.msra.mxu0 0.0
        %1632 = vmatprep.subr.mxu0 0.0
        %1633 = vmatpush2.msra.mxu0 0.0
        %1634 = vmatprep.subr.mxu0 0.0
        %1635 = vmatpush2.msra.mxu0 0.0
        %1636 = vmatprep.subr.mxu0 0.0
        %1637 = vmatpush2.msra.mxu0 0.0
        %1638 = vmatprep.subr.mxu0 0.0
        %1639 = vmatpush2.msra.mxu0 0.0
        %1640 = vmatprep.subr.mxu0 0.0
        %1641 = vmatpush2.msra.mxu0 0.0
        %1642 = vmatprep.subr.mxu0 0.0
        %1643 = vmatpush2.msra.mxu0 0.0
        %1644 = vmatprep.subr.mxu0 0.0
        %1645 = vmatpush2.msra.mxu0 0.0
        %1646 = vmatprep.subr.mxu0 0.0
        %1647 = vmatpush2.msra.mxu0 0.0
        %1648 = vmatprep.subr.mxu0 0.0
        %1649 = vmatpush2.msra.mxu0 0.0
        %1650 = vmatprep.subr.mxu0 0.0
        %1651 = vmatpush2.msra.mxu0 0.0
        %1652 = vmatprep.mubr.f32.mxu0 0.0
        %1653 = vmatmul.mubr.f32.gmra.mxu0 %v1586
        %v1654 = vpop.f32.mrf.mxu0
        %v1655 = vadd.f32 0.0, %v1654
        %v1656 = vpop.f32.mrf.mxu0
        %1657 = vdwg.mxu0
        %v1658 = vsel %vm1509, %v654, 0
        %1660 = vmatprep.subr.mxu0 0.0
        %1661 = vmatpush1.msra.mxu0 0.0
        %1662 = vmatprep.subr.mxu0 0.0
        %1663 = vmatpush1.msra.mxu0 0.0
        %1664 = vmatprep.subr.mxu0 0.0
        %1665 = vmatpush1.msra.mxu0 0.0
        %1666 = vmatprep.subr.mxu0 0.0
        %1667 = vmatpush1.msra.mxu0 0.0
        %1668 = vmatprep.subr.mxu0 0.0
        %1669 = vmatpush1.msra.mxu0 0.0
        %1670 = vmatprep.subr.mxu0 0.0
        %1671 = vmatpush1.msra.mxu0 0.0
        %1672 = vmatprep.subr.mxu0 0.0
        %1673 = vmatpush1.msra.mxu0 0.0
        %1674 = vmatprep.subr.mxu0 0.0
        %1675 = vmatpush1.msra.mxu0 0.0
        %1676 = vmatprep.subr.mxu0 0.0
        %1677 = vmatpush1.msra.mxu0 0.0
        %1678 = vmatprep.subr.mxu0 0.0
        %1679 = vmatpush1.msra.mxu0 0.0
        %1680 = vmatprep.subr.mxu0 0.0
        %1681 = vmatpush1.msra.mxu0 0.0
        %1682 = vmatprep.subr.mxu0 0.0
        %1683 = vmatpush1.msra.mxu0 0.0
        %1684 = vmatprep.subr.mxu0 0.0
        %1685 = vmatpush1.msra.mxu0 0.0
        %1686 = vmatprep.subr.mxu0 0.0
        %1687 = vmatpush1.msra.mxu0 0.0
        %1688 = vmatprep.subr.mxu0 0.0
        %1689 = vmatpush1.msra.mxu0 %v1514
        %1690 = vmatprep.subr.mxu0 0.0
        %1691 = vmatpush1.msra.mxu0 %v1378
        %1692 = vmatprep.subr.mxu0 0.0
        %1693 = vmatpush2.msra.mxu0 0.0
        %1694 = vmatprep.subr.mxu0 0.0
        %1695 = vmatpush2.msra.mxu0 0.0
        %1696 = vmatprep.subr.mxu0 0.0
        %1697 = vmatpush2.msra.mxu0 0.0
        %1698 = vmatprep.subr.mxu0 0.0
        %1699 = vmatpush2.msra.mxu0 0.0
        %1700 = vmatprep.subr.mxu0 0.0
        %1701 = vmatpush2.msra.mxu0 0.0
        %1702 = vmatprep.subr.mxu0 0.0
        %1703 = vmatpush2.msra.mxu0 0.0
        %1704 = vmatprep.subr.mxu0 0.0
        %1705 = vmatpush2.msra.mxu0 0.0
        %1706 = vmatprep.subr.mxu0 0.0
        %1707 = vmatpush2.msra.mxu0 0.0
        %1708 = vmatprep.subr.mxu0 0.0
        %1709 = vmatpush2.msra.mxu0 0.0
        %1710 = vmatprep.subr.mxu0 0.0
        %1711 = vmatpush2.msra.mxu0 0.0
        %1712 = vmatprep.subr.mxu0 0.0
        %1713 = vmatpush2.msra.mxu0 0.0
        %1714 = vmatprep.subr.mxu0 0.0
        %1715 = vmatpush2.msra.mxu0 0.0
        %1716 = vmatprep.subr.mxu0 0.0
        %1717 = vmatpush2.msra.mxu0 0.0
        %1718 = vmatprep.subr.mxu0 0.0
        %1719 = vmatpush2.msra.mxu0 0.0
        %1720 = vmatprep.subr.mxu0 0.0
        %1721 = vmatpush2.msra.mxu0 0.0
        %1722 = vmatprep.subr.mxu0 0.0
        %1723 = vmatpush2.msra.mxu0 0.0
        %1724 = vmatprep.mubr.f32.mxu0 0.0
        %1725 = vmatmul.mubr.f32.gmra.mxu0 %v1658
        %v1726 = vpop.f32.mrf.mxu0
        %v1727 = vadd.f32 0.0, %v1726
        %v1728 = vpop.f32.mrf.mxu0
        %1729 = vdwg.mxu0
        %v1730 = vsel %vm1509, %v771, 0
        %1732 = vmatprep.subr.mxu0 0.0
        %1733 = vmatpush1.msra.mxu0 0.0
        %1734 = vmatprep.subr.mxu0 0.0
        %1735 = vmatpush1.msra.mxu0 0.0
        %1736 = vmatprep.subr.mxu0 0.0
        %1737 = vmatpush1.msra.mxu0 0.0
        %1738 = vmatprep.subr.mxu0 0.0
        %1739 = vmatpush1.msra.mxu0 0.0
        %1740 = vmatprep.subr.mxu0 0.0
        %1741 = vmatpush1.msra.mxu0 0.0
        %1742 = vmatprep.subr.mxu0 0.0
        %1743 = vmatpush1.msra.mxu0 0.0
        %1744 = vmatprep.subr.mxu0 0.0
        %1745 = vmatpush1.msra.mxu0 0.0
        %1746 = vmatprep.subr.mxu0 0.0
        %1747 = vmatpush1.msra.mxu0 0.0
        %1748 = vmatprep.subr.mxu0 0.0
        %1749 = vmatpush1.msra.mxu0 0.0
        %1750 = vmatprep.subr.mxu0 0.0
        %1751 = vmatpush1.msra.mxu0 0.0
        %1752 = vmatprep.subr.mxu0 0.0
        %1753 = vmatpush1.msra.mxu0 0.0
        %1754 = vmatprep.subr.mxu0 0.0
        %1755 = vmatpush1.msra.mxu0 0.0
        %1756 = vmatprep.subr.mxu0 0.0
        %1757 = vmatpush1.msra.mxu0 0.0
        %1758 = vmatprep.subr.mxu0 0.0
        %1759 = vmatpush1.msra.mxu0 0.0
        %1760 = vmatprep.subr.mxu0 0.0
        %1761 = vmatpush1.msra.mxu0 %v1514
        %1762 = vmatprep.subr.mxu0 0.0
        %1763 = vmatpush1.msra.mxu0 %v1378
        %1764 = vmatprep.subr.mxu0 0.0
        %1765 = vmatpush2.msra.mxu0 0.0
        %1766 = vmatprep.subr.mxu0 0.0
        %1767 = vmatpush2.msra.mxu0 0.0
        %1768 = vmatprep.subr.mxu0 0.0
        %1769 = vmatpush2.msra.mxu0 0.0
        %1770 = vmatprep.subr.mxu0 0.0
        %1771 = vmatpush2.msra.mxu0 0.0
        %1772 = vmatprep.subr.mxu0 0.0
        %1773 = vmatpush2.msra.mxu0 0.0
        %1774 = vmatprep.subr.mxu0 0.0
        %1775 = vmatpush2.msra.mxu0 0.0
        %1776 = vmatprep.subr.mxu0 0.0
        %1777 = vmatpush2.msra.mxu0 0.0
        %1778 = vmatprep.subr.mxu0 0.0
        %1779 = vmatpush2.msra.mxu0 0.0
        %1780 = vmatprep.subr.mxu0 0.0
        %1781 = vmatpush2.msra.mxu0 0.0
        %1782 = vmatprep.subr.mxu0 0.0
        %1783 = vmatpush2.msra.mxu0 0.0
        %1784 = vmatprep.subr.mxu0 0.0
        %1785 = vmatpush2.msra.mxu0 0.0
        %1786 = vmatprep.subr.mxu0 0.0
        %1787 = vmatpush2.msra.mxu0 0.0
        %1788 = vmatprep.subr.mxu0 0.0
        %1789 = vmatpush2.msra.mxu0 0.0
        %1790 = vmatprep.subr.mxu0 0.0
        %1791 = vmatpush2.msra.mxu0 0.0
        %1792 = vmatprep.subr.mxu0 0.0
        %1793 = vmatpush2.msra.mxu0 0.0
        %1794 = vmatprep.subr.mxu0 0.0
        %1795 = vmatpush2.msra.mxu0 0.0
        %1796 = vmatprep.mubr.f32.mxu0 0.0
        %1797 = vmatmul.mubr.f32.gmra.mxu0 %v1730
        %v1798 = vpop.f32.mrf.mxu0
        %v1799 = vadd.f32 0.0, %v1798
        %v1800 = vpop.f32.mrf.mxu0
        %1801 = vdwg.mxu0
        %v1803 = vlaneseq
        %v1804 = vshrl.u32 %v1803, 7
        %v1805 = vsub.s32 0, %v1804
        %v1806 = vrot.slane %v1508, %v1805
        %v1807 = vlaneseq
        %v1808 = vshrl.u32 %v1807, 7
        %v1809 = vsub.s32 1, %v1808
        %v1810 = vrot.slane %v1508, %v1809
        %1813 = vmatprep.subr.mxu0 %v1411
        %1814 = vmatpush1.msra.mxu0 %v1410
        %1815 = vmatprep.subr.mxu0 %v1409
        %1816 = vmatpush1.msra.mxu0 %v1408
        %1817 = vmatprep.subr.mxu0 %v1407
        %1818 = vmatpush1.msra.mxu0 %v1406
        %1819 = vmatprep.subr.mxu0 %v1405
        %1820 = vmatpush1.msra.mxu0 %v1404
        %1821 = vmatprep.subr.mxu0 %v1403
        %1822 = vmatpush1.msra.mxu0 %v1402
        %1823 = vmatprep.subr.mxu0 %v1401
        %1824 = vmatpush1.msra.mxu0 %v1400
        %1825 = vmatprep.subr.mxu0 %v1399
        %1826 = vmatpush1.msra.mxu0 %v1398
        %1827 = vmatprep.subr.mxu0 %v1397
        %1828 = vmatpush1.msra.mxu0 %v1396
        %1829 = vmatprep.subr.mxu0 %v1395
        %1830 = vmatpush1.msra.mxu0 %v1394
        %1831 = vmatprep.subr.mxu0 %v1393
        %1832 = vmatpush1.msra.mxu0 %v1392
        %1833 = vmatprep.subr.mxu0 %v1391
        %1834 = vmatpush1.msra.mxu0 %v1390
        %1835 = vmatprep.subr.mxu0 %v1389
        %1836 = vmatpush1.msra.mxu0 %v1388
        %1837 = vmatprep.subr.mxu0 %v1387
        %1838 = vmatpush1.msra.mxu0 %v1386
        %1839 = vmatprep.subr.mxu0 %v1385
        %1840 = vmatpush1.msra.mxu0 %v1384
        %1841 = vmatprep.subr.mxu0 %v1383
        %1842 = vmatpush1.msra.mxu0 %v1382
        %1843 = vmatprep.subr.mxu0 %v1381
        %1844 = vmatpush1.msra.mxu0 %v1380
        %1845 = vmatprep.subr.mxu0 %v1443
        %1846 = vmatpush2.msra.mxu0 %v1442
        %1847 = vmatprep.subr.mxu0 %v1441
        %1848 = vmatpush2.msra.mxu0 %v1440
        %1849 = vmatprep.subr.mxu0 %v1439
        %1850 = vmatpush2.msra.mxu0 %v1438
        %1851 = vmatprep.subr.mxu0 %v1437
        %1852 = vmatpush2.msra.mxu0 %v1436
        %1853 = vmatprep.subr.mxu0 %v1435
        %1854 = vmatpush2.msra.mxu0 %v1434
        %1855 = vmatprep.subr.mxu0 %v1433
        %1856 = vmatpush2.msra.mxu0 %v1432
        %1857 = vmatprep.subr.mxu0 %v1431
        %1858 = vmatpush2.msra.mxu0 %v1430
        %1859 = vmatprep.subr.mxu0 %v1429
        %1860 = vmatpush2.msra.mxu0 %v1428
        %1861 = vmatprep.subr.mxu0 %v1427
        %1862 = vmatpush2.msra.mxu0 %v1426
        %1863 = vmatprep.subr.mxu0 %v1425
        %1864 = vmatpush2.msra.mxu0 %v1424
        %1865 = vmatprep.subr.mxu0 %v1423
        %1866 = vmatpush2.msra.mxu0 %v1422
        %1867 = vmatprep.subr.mxu0 %v1421
        %1868 = vmatpush2.msra.mxu0 %v1420
        %1869 = vmatprep.subr.mxu0 %v1419
        %1870 = vmatpush2.msra.mxu0 %v1418
        %1871 = vmatprep.subr.mxu0 %v1417
        %1872 = vmatpush2.msra.mxu0 %v1416
        %1873 = vmatprep.subr.mxu0 %v1415
        %1874 = vmatpush2.msra.mxu0 %v1414
        %1875 = vmatprep.subr.mxu0 %v1413
        %1876 = vmatpush2.msra.mxu0 %v1412
        %1877 = vmatprep.mubr.f32.mxu0 %v1655
        %1878 = vmatmul.mubr.f32.gmra.mxu0 %v1583
        %v1879 = vpop.f32.mrf.mxu0
        %v1880 = vadd.f32 %v1806, %v1879
        %v1881 = vpop.f32.mrf.mxu0
        %v1882 = vadd.f32 %v1810, %v1881
        %1883 = vdwg.mxu0
        %1884 = vmatprep.subr.mxu0 %v1475
        %1885 = vmatpush1.msra.mxu0 %v1474
        %1886 = vmatprep.subr.mxu0 %v1473
        %1887 = vmatpush1.msra.mxu0 %v1472
        %1888 = vmatprep.subr.mxu0 %v1471
        %1889 = vmatpush1.msra.mxu0 %v1470
        %1890 = vmatprep.subr.mxu0 %v1469
        %1891 = vmatpush1.msra.mxu0 %v1468
        %1892 = vmatprep.subr.mxu0 %v1467
        %1893 = vmatpush1.msra.mxu0 %v1466
        %1894 = vmatprep.subr.mxu0 %v1465
        %1895 = vmatpush1.msra.mxu0 %v1464
        %1896 = vmatprep.subr.mxu0 %v1463
        %1897 = vmatpush1.msra.mxu0 %v1462
        %1898 = vmatprep.subr.mxu0 %v1461
        %1899 = vmatpush1.msra.mxu0 %v1460
        %1900 = vmatprep.subr.mxu0 %v1459
        %1901 = vmatpush1.msra.mxu0 %v1458
        %1902 = vmatprep.subr.mxu0 %v1457
        %1903 = vmatpush1.msra.mxu0 %v1456
        %1904 = vmatprep.subr.mxu0 %v1455
        %1905 = vmatpush1.msra.mxu0 %v1454
        %1906 = vmatprep.subr.mxu0 %v1453
        %1907 = vmatpush1.msra.mxu0 %v1452
        %1908 = vmatprep.subr.mxu0 %v1451
        %1909 = vmatpush1.msra.mxu0 %v1450
        %1910 = vmatprep.subr.mxu0 %v1449
        %1911 = vmatpush1.msra.mxu0 %v1448
        %1912 = vmatprep.subr.mxu0 %v1447
        %1913 = vmatpush1.msra.mxu0 %v1446
        %1914 = vmatprep.subr.mxu0 %v1445
        %1915 = vmatpush1.msra.mxu0 %v1444
        %1916 = vmatprep.subr.mxu0 %v1507
        %1917 = vmatpush2.msra.mxu0 %v1506
        %1918 = vmatprep.subr.mxu0 %v1505
        %1919 = vmatpush2.msra.mxu0 %v1504
        %1920 = vmatprep.subr.mxu0 %v1503
        %1921 = vmatpush2.msra.mxu0 %v1502
        %1922 = vmatprep.subr.mxu0 %v1501
        %1923 = vmatpush2.msra.mxu0 %v1500
        %1924 = vmatprep.subr.mxu0 %v1499
        %1925 = vmatpush2.msra.mxu0 %v1498
        %1926 = vmatprep.subr.mxu0 %v1497
        %1927 = vmatpush2.msra.mxu0 %v1496
        %1928 = vmatprep.subr.mxu0 %v1495
        %1929 = vmatpush2.msra.mxu0 %v1494
        %1930 = vmatprep.subr.mxu0 %v1493
        %1931 = vmatpush2.msra.mxu0 %v1492
        %1932 = vmatprep.subr.mxu0 %v1491
        %1933 = vmatpush2.msra.mxu0 %v1490
        %1934 = vmatprep.subr.mxu0 %v1489
        %1935 = vmatpush2.msra.mxu0 %v1488
        %1936 = vmatprep.subr.mxu0 %v1487
        %1937 = vmatpush2.msra.mxu0 %v1486
        %1938 = vmatprep.subr.mxu0 %v1485
        %1939 = vmatpush2.msra.mxu0 %v1484
        %1940 = vmatprep.subr.mxu0 %v1483
        %1941 = vmatpush2.msra.mxu0 %v1482
        %1942 = vmatprep.subr.mxu0 %v1481
        %1943 = vmatpush2.msra.mxu0 %v1480
        %1944 = vmatprep.subr.mxu0 %v1479
        %1945 = vmatpush2.msra.mxu0 %v1478
        %1946 = vmatprep.subr.mxu0 %v1477
        %1947 = vmatpush2.msra.mxu0 %v1476
        %1948 = vmatprep.mubr.f32.mxu0 %v1799
        %1949 = vmatmul.mubr.f32.gmra.mxu0 %v1727
        %v1950 = vpop.f32.mrf.mxu0
        %v1951 = vadd.f32 %v1880, %v1950
        %v1952 = vpop.f32.mrf.mxu0
        %v1953 = vadd.f32 %v1882, %v1952
        %1954 = vdwg.mxu0
        %v1955 = vmax.f32 %v1951, 0.0
        %v1956 = vmax.f32 %v1953, 0.0
        %v1957 = vld [vmem:[%s6] sm:$0xff]
        %v1958 = vld [vmem:[%s6 + $0x8] sm:$0xff]
        %v1959 = vld [vmem:[%s6 + $0x10] sm:$0xff]
        %v1960 = vld [vmem:[%s6 + $0x18] sm:$0xff]
        %v1961 = vld [vmem:[%s6 + $0x20] sm:$0xff]
        %v1962 = vld [vmem:[%s6 + $0x28] sm:$0xff]
        %v1963 = vld [vmem:[%s6 + $0x30] sm:$0xff]
        %v1964 = vld [vmem:[%s6 + $0x38] sm:$0xff]
        %v1965 = vld [vmem:[%s6 + $0x40] sm:$0xff]
        %v1966 = vld [vmem:[%s6 + $0x48] sm:$0xff]
        %v1967 = vld [vmem:[%s6 + $0x50] sm:$0xff]
        %v1968 = vld [vmem:[%s6 + $0x58] sm:$0xff]
        %v1969 = vld [vmem:[%s6 + $0x60] sm:$0xff]
        %v1970 = vld [vmem:[%s6 + $0x68] sm:$0xff]
        %v1971 = vld [vmem:[%s6 + $0x70] sm:$0xff]
        %v1972 = vld [vmem:[%s6 + $0x78] sm:$0xff]
        %v1973 = vld [vmem:[%s6 + $0x80] sm:$0xff]
        %v1974 = vld [vmem:[%s6 + $0x88] sm:$0xff]
        %v1975 = vld [vmem:[%s6 + $0x90] sm:$0xff]
        %v1976 = vld [vmem:[%s6 + $0x98] sm:$0xff]
        %v1977 = vld [vmem:[%s6 + $0xa0] sm:$0xff]
        %v1978 = vld [vmem:[%s6 + $0xa8] sm:$0xff]
        %v1979 = vld [vmem:[%s6 + $0xb0] sm:$0xff]
        %v1980 = vld [vmem:[%s6 + $0xb8] sm:$0xff]
        %v1981 = vld [vmem:[%s6 + $0xc0] sm:$0xff]
        %v1982 = vld [vmem:[%s6 + $0xc8] sm:$0xff]
        %v1983 = vld [vmem:[%s6 + $0xd0] sm:$0xff]
        %v1984 = vld [vmem:[%s6 + $0xd8] sm:$0xff]
        %v1985 = vld [vmem:[%s6 + $0xe0] sm:$0xff]
        %v1986 = vld [vmem:[%s6 + $0xe8] sm:$0xff]
        %v1987 = vld [vmem:[%s6 + $0xf0] sm:$0xff]
        %v1988 = vld [vmem:[%s6 + $0xf8] sm:$0xff]
        %v1989 = vld [vmem:[%s6 + $0x100] sm:$0xff]
        %v1990 = vld [vmem:[%s6 + $0x108] sm:$0xff]
        %v1991 = vld [vmem:[%s6 + $0x110] sm:$0xff]
        %v1992 = vld [vmem:[%s6 + $0x118] sm:$0xff]
        %v1993 = vld [vmem:[%s6 + $0x120] sm:$0xff]
        %v1994 = vld [vmem:[%s6 + $0x128] sm:$0xff]
        %v1995 = vld [vmem:[%s6 + $0x130] sm:$0xff]
        %v1996 = vld [vmem:[%s6 + $0x138] sm:$0xff]
        %v1997 = vld [vmem:[%s6 + $0x140] sm:$0xff]
        %v1998 = vld [vmem:[%s6 + $0x148] sm:$0xff]
        %v1999 = vld [vmem:[%s6 + $0x150] sm:$0xff]
        %v2000 = vld [vmem:[%s6 + $0x158] sm:$0xff]
        %v2001 = vld [vmem:[%s6 + $0x160] sm:$0xff]
        %v2002 = vld [vmem:[%s6 + $0x168] sm:$0xff]
        %v2003 = vld [vmem:[%s6 + $0x170] sm:$0xff]
        %v2004 = vld [vmem:[%s6 + $0x178] sm:$0xff]
        %v2005 = vld [vmem:[%s6 + $0x180] sm:$0xff]
        %v2006 = vld [vmem:[%s6 + $0x188] sm:$0xff]
        %v2007 = vld [vmem:[%s6 + $0x190] sm:$0xff]
        %v2008 = vld [vmem:[%s6 + $0x198] sm:$0xff]
        %v2009 = vld [vmem:[%s6 + $0x1a0] sm:$0xff]
        %v2010 = vld [vmem:[%s6 + $0x1a8] sm:$0xff]
        %v2011 = vld [vmem:[%s6 + $0x1b0] sm:$0xff]
        %v2012 = vld [vmem:[%s6 + $0x1b8] sm:$0xff]
        %v2013 = vld [vmem:[%s6 + $0x1c0] sm:$0xff]
        %v2014 = vld [vmem:[%s6 + $0x1c8] sm:$0xff]
        %v2015 = vld [vmem:[%s6 + $0x1d0] sm:$0xff]
        %v2016 = vld [vmem:[%s6 + $0x1d8] sm:$0xff]
        %v2017 = vld [vmem:[%s6 + $0x1e0] sm:$0xff]
        %v2018 = vld [vmem:[%s6 + $0x1e8] sm:$0xff]
        %v2019 = vld [vmem:[%s6 + $0x1f0] sm:$0xff]
        %v2020 = vld [vmem:[%s6 + $0x1f8] sm:$0xff]
        %v2021 = vld [vmem:[%s6 + $0x200] sm:$0xff]
        %v2022 = vld [vmem:[%s6 + $0x208] sm:$0xff]
        %v2023 = vld [vmem:[%s6 + $0x210] sm:$0xff]
        %v2024 = vld [vmem:[%s6 + $0x218] sm:$0xff]
        %v2025 = vld [vmem:[%s6 + $0x220] sm:$0xff]
        %v2026 = vld [vmem:[%s6 + $0x228] sm:$0xff]
        %v2027 = vld [vmem:[%s6 + $0x230] sm:$0xff]
        %v2028 = vld [vmem:[%s6 + $0x238] sm:$0xff]
        %v2029 = vld [vmem:[%s6 + $0x240] sm:$0xff]
        %v2030 = vld [vmem:[%s6 + $0x248] sm:$0xff]
        %v2031 = vld [vmem:[%s6 + $0x250] sm:$0xff]
        %v2032 = vld [vmem:[%s6 + $0x258] sm:$0xff]
        %v2033 = vld [vmem:[%s6 + $0x260] sm:$0xff]
        %v2034 = vld [vmem:[%s6 + $0x268] sm:$0xff]
        %v2035 = vld [vmem:[%s6 + $0x270] sm:$0xff]
        %v2036 = vld [vmem:[%s6 + $0x278] sm:$0xff]
        %v2037 = vld [vmem:[%s6 + $0x280] sm:$0xff]
        %v2038 = vld [vmem:[%s6 + $0x288] sm:$0xff]
        %v2039 = vld [vmem:[%s6 + $0x290] sm:$0xff]
        %v2040 = vld [vmem:[%s6 + $0x298] sm:$0xff]
        %v2041 = vld [vmem:[%s6 + $0x2a0] sm:$0xff]
        %v2042 = vld [vmem:[%s6 + $0x2a8] sm:$0xff]
        %v2043 = vld [vmem:[%s6 + $0x2b0] sm:$0xff]
        %v2044 = vld [vmem:[%s6 + $0x2b8] sm:$0xff]
        %v2045 = vld [vmem:[%s6 + $0x2c0] sm:$0xff]
        %v2046 = vld [vmem:[%s6 + $0x2c8] sm:$0xff]
        %v2047 = vld [vmem:[%s6 + $0x2d0] sm:$0xff]
        %v2048 = vld [vmem:[%s6 + $0x2d8] sm:$0xff]
        %v2049 = vld [vmem:[%s6 + $0x2e0] sm:$0xff]
        %v2050 = vld [vmem:[%s6 + $0x2e8] sm:$0xff]
        %v2051 = vld [vmem:[%s6 + $0x2f0] sm:$0xff]
        %v2052 = vld [vmem:[%s6 + $0x2f8] sm:$0xff]
        %v2053 = vld [vmem:[%s6 + $0x300] sm:$0xff]
        %v2054 = vld [vmem:[%s6 + $0x308] sm:$0xff]
        %v2055 = vld [vmem:[%s6 + $0x310] sm:$0xff]
        %v2056 = vld [vmem:[%s6 + $0x318] sm:$0xff]
        %v2057 = vld [vmem:[%s6 + $0x320] sm:$0xff]
        %v2058 = vld [vmem:[%s6 + $0x328] sm:$0xff]
        %v2059 = vld [vmem:[%s6 + $0x330] sm:$0xff]
        %v2060 = vld [vmem:[%s6 + $0x338] sm:$0xff]
        %v2061 = vld [vmem:[%s6 + $0x340] sm:$0xff]
        %v2062 = vld [vmem:[%s6 + $0x348] sm:$0xff]
        %v2063 = vld [vmem:[%s6 + $0x350] sm:$0xff]
        %v2064 = vld [vmem:[%s6 + $0x358] sm:$0xff]
        %v2065 = vld [vmem:[%s6 + $0x360] sm:$0xff]
        %v2066 = vld [vmem:[%s6 + $0x368] sm:$0xff]
        %v2067 = vld [vmem:[%s6 + $0x370] sm:$0xff]
        %v2068 = vld [vmem:[%s6 + $0x378] sm:$0xff]
        %v2069 = vld [vmem:[%s6 + $0x380] sm:$0xff]
        %v2070 = vld [vmem:[%s6 + $0x388] sm:$0xff]
        %v2071 = vld [vmem:[%s6 + $0x390] sm:$0xff]
        %v2072 = vld [vmem:[%s6 + $0x398] sm:$0xff]
        %v2073 = vld [vmem:[%s6 + $0x3a0] sm:$0xff]
        %v2074 = vld [vmem:[%s6 + $0x3a8] sm:$0xff]
        %v2075 = vld [vmem:[%s6 + $0x3b0] sm:$0xff]
        %v2076 = vld [vmem:[%s6 + $0x3b8] sm:$0xff]
        %v2077 = vld [vmem:[%s6 + $0x3c0] sm:$0xff]
        %v2078 = vld [vmem:[%s6 + $0x3c8] sm:$0xff]
        %v2079 = vld [vmem:[%s6 + $0x3d0] sm:$0xff]
        %v2080 = vld [vmem:[%s6 + $0x3d8] sm:$0xff]
        %v2081 = vld [vmem:[%s6 + $0x3e0] sm:$0xff]
        %v2082 = vld [vmem:[%s6 + $0x3e8] sm:$0xff]
        %v2083 = vld [vmem:[%s6 + $0x3f0] sm:$0xff]
        %v2084 = vld [vmem:[%s6 + $0x3f8] sm:$0xff]
        %v2085 = vld [vmem:[%s6 + $0x400] sm:$0xff]
        %v2086 = vld [vmem:[%s6 + $0x408] sm:$0xff]
        %v2087 = vld [vmem:[%s6 + $0x410] sm:$0xff]
        %v2088 = vld [vmem:[%s6 + $0x418] sm:$0xff]
        %v2089 = vld [vmem:[%s6 + $0x420] sm:$0xff]
        %v2090 = vld [vmem:[%s6 + $0x428] sm:$0xff]
        %v2091 = vld [vmem:[%s6 + $0x430] sm:$0xff]
        %v2092 = vld [vmem:[%s6 + $0x438] sm:$0xff]
        %v2093 = vld [vmem:[%s6 + $0x440] sm:$0xff]
        %v2094 = vld [vmem:[%s6 + $0x448] sm:$0xff]
        %v2095 = vld [vmem:[%s6 + $0x450] sm:$0xff]
        %v2096 = vld [vmem:[%s6 + $0x458] sm:$0xff]
        %v2097 = vld [vmem:[%s6 + $0x460] sm:$0xff]
        %v2098 = vld [vmem:[%s6 + $0x468] sm:$0xff]
        %v2099 = vld [vmem:[%s6 + $0x470] sm:$0xff]
        %v2100 = vld [vmem:[%s6 + $0x478] sm:$0xff]
        %v2101 = vld [vmem:[%s6 + $0x480] sm:$0xff]
        %v2102 = vld [vmem:[%s6 + $0x488] sm:$0xff]
        %v2103 = vld [vmem:[%s6 + $0x490] sm:$0xff]
        %v2104 = vld [vmem:[%s6 + $0x498] sm:$0xff]
        %v2105 = vld [vmem:[%s6 + $0x4a0] sm:$0xff]
        %v2106 = vld [vmem:[%s6 + $0x4a8] sm:$0xff]
        %v2107 = vld [vmem:[%s6 + $0x4b0] sm:$0xff]
        %v2108 = vld [vmem:[%s6 + $0x4b8] sm:$0xff]
        %v2109 = vld [vmem:[%s6 + $0x4c0] sm:$0xff]
        %v2110 = vld [vmem:[%s6 + $0x4c8] sm:$0xff]
        %v2111 = vld [vmem:[%s6 + $0x4d0] sm:$0xff]
        %v2112 = vld [vmem:[%s6 + $0x4d8] sm:$0xff]
        %v2113 = vld [vmem:[%s6 + $0x4e0] sm:$0xff]
        %v2114 = vld [vmem:[%s6 + $0x4e8] sm:$0xff]
        %v2115 = vld [vmem:[%s6 + $0x4f0] sm:$0xff]
        %v2116 = vld [vmem:[%s6 + $0x4f8] sm:$0xff]
        %v2117 = vld [vmem:[%s6 + $0x500] sm:$0xff]
        %v2118 = vld [vmem:[%s6 + $0x508] sm:$0xff]
        %v2119 = vld [vmem:[%s6 + $0x510] sm:$0xff]
        %v2120 = vld [vmem:[%s6 + $0x518] sm:$0xff]
        %v2121 = vld [vmem:[%s6 + $0x520] sm:$0xff]
        %v2122 = vld [vmem:[%s6 + $0x528] sm:$0xff]
        %v2123 = vld [vmem:[%s6 + $0x530] sm:$0xff]
        %v2124 = vld [vmem:[%s6 + $0x538] sm:$0xff]
        %v2125 = vld [vmem:[%s6 + $0x540] sm:$0xff]
        %v2126 = vld [vmem:[%s6 + $0x548] sm:$0xff]
        %v2127 = vld [vmem:[%s6 + $0x550] sm:$0xff]
        %v2128 = vld [vmem:[%s6 + $0x558] sm:$0xff]
        %v2129 = vld [vmem:[%s6 + $0x560] sm:$0xff]
        %v2130 = vld [vmem:[%s6 + $0x568] sm:$0xff]
        %v2131 = vld [vmem:[%s6 + $0x570] sm:$0xff]
        %v2132 = vld [vmem:[%s6 + $0x578] sm:$0xff]
        %v2133 = vld [vmem:[%s6 + $0x580] sm:$0xff]
        %v2134 = vld [vmem:[%s6 + $0x588] sm:$0xff]
        %v2135 = vld [vmem:[%s6 + $0x590] sm:$0xff]
        %v2136 = vld [vmem:[%s6 + $0x598] sm:$0xff]
        %v2137 = vld [vmem:[%s6 + $0x5a0] sm:$0xff]
        %v2138 = vld [vmem:[%s6 + $0x5a8] sm:$0xff]
        %v2139 = vld [vmem:[%s6 + $0x5b0] sm:$0xff]
        %v2140 = vld [vmem:[%s6 + $0x5b8] sm:$0xff]
        %v2141 = vld [vmem:[%s6 + $0x5c0] sm:$0xff]
        %v2142 = vld [vmem:[%s6 + $0x5c8] sm:$0xff]
        %v2143 = vld [vmem:[%s6 + $0x5d0] sm:$0xff]
        %v2144 = vld [vmem:[%s6 + $0x5d8] sm:$0xff]
        %v2145 = vld [vmem:[%s6 + $0x5e0] sm:$0xff]
        %v2146 = vld [vmem:[%s6 + $0x5e8] sm:$0xff]
        %v2147 = vld [vmem:[%s6 + $0x5f0] sm:$0xff]
        %v2148 = vld [vmem:[%s6 + $0x5f8] sm:$0xff]
        %v2149 = vld [vmem:[%s6 + $0x600] sm:$0xff]
        %v2150 = vld [vmem:[%s6 + $0x608] sm:$0xff]
        %v2151 = vld [vmem:[%s6 + $0x610] sm:$0xff]
        %v2152 = vld [vmem:[%s6 + $0x618] sm:$0xff]
        %v2153 = vld [vmem:[%s6 + $0x620] sm:$0xff]
        %v2154 = vld [vmem:[%s6 + $0x628] sm:$0xff]
        %v2155 = vld [vmem:[%s6 + $0x630] sm:$0xff]
        %v2156 = vld [vmem:[%s6 + $0x638] sm:$0xff]
        %v2157 = vld [vmem:[%s6 + $0x640] sm:$0xff]
        %v2158 = vld [vmem:[%s6 + $0x648] sm:$0xff]
        %v2159 = vld [vmem:[%s6 + $0x650] sm:$0xff]
        %v2160 = vld [vmem:[%s6 + $0x658] sm:$0xff]
        %v2161 = vld [vmem:[%s6 + $0x660] sm:$0xff]
        %v2162 = vld [vmem:[%s6 + $0x668] sm:$0xff]
        %v2163 = vld [vmem:[%s6 + $0x670] sm:$0xff]
        %v2164 = vld [vmem:[%s6 + $0x678] sm:$0xff]
        %v2165 = vld [vmem:[%s6 + $0x680] sm:$0xff]
        %v2166 = vld [vmem:[%s6 + $0x688] sm:$0xff]
        %v2167 = vld [vmem:[%s6 + $0x690] sm:$0xff]
        %v2168 = vld [vmem:[%s6 + $0x698] sm:$0xff]
        %v2169 = vld [vmem:[%s6 + $0x6a0] sm:$0xff]
        %v2170 = vld [vmem:[%s6 + $0x6a8] sm:$0xff]
        %v2171 = vld [vmem:[%s6 + $0x6b0] sm:$0xff]
        %v2172 = vld [vmem:[%s6 + $0x6b8] sm:$0xff]
        %v2173 = vld [vmem:[%s6 + $0x6c0] sm:$0xff]
        %v2174 = vld [vmem:[%s6 + $0x6c8] sm:$0xff]
        %v2175 = vld [vmem:[%s6 + $0x6d0] sm:$0xff]
        %v2176 = vld [vmem:[%s6 + $0x6d8] sm:$0xff]
        %v2177 = vld [vmem:[%s6 + $0x6e0] sm:$0xff]
        %v2178 = vld [vmem:[%s6 + $0x6e8] sm:$0xff]
        %v2179 = vld [vmem:[%s6 + $0x6f0] sm:$0xff]
        %v2180 = vld [vmem:[%s6 + $0x6f8] sm:$0xff]
        %v2181 = vld [vmem:[%s6 + $0x700] sm:$0xff]
        %v2182 = vld [vmem:[%s6 + $0x708] sm:$0xff]
        %v2183 = vld [vmem:[%s6 + $0x710] sm:$0xff]
        %v2184 = vld [vmem:[%s6 + $0x718] sm:$0xff]
        %v2185 = vld [vmem:[%s6 + $0x720] sm:$0xff]
        %v2186 = vld [vmem:[%s6 + $0x728] sm:$0xff]
        %v2187 = vld [vmem:[%s6 + $0x730] sm:$0xff]
        %v2188 = vld [vmem:[%s6 + $0x738] sm:$0xff]
        %v2189 = vld [vmem:[%s6 + $0x740] sm:$0xff]
        %v2190 = vld [vmem:[%s6 + $0x748] sm:$0xff]
        %v2191 = vld [vmem:[%s6 + $0x750] sm:$0xff]
        %v2192 = vld [vmem:[%s6 + $0x758] sm:$0xff]
        %v2193 = vld [vmem:[%s6 + $0x760] sm:$0xff]
        %v2194 = vld [vmem:[%s6 + $0x768] sm:$0xff]
        %v2195 = vld [vmem:[%s6 + $0x770] sm:$0xff]
        %v2196 = vld [vmem:[%s6 + $0x778] sm:$0xff]
        %v2197 = vld [vmem:[%s6 + $0x780] sm:$0xff]
        %v2198 = vld [vmem:[%s6 + $0x788] sm:$0xff]
        %v2199 = vld [vmem:[%s6 + $0x790] sm:$0xff]
        %v2200 = vld [vmem:[%s6 + $0x798] sm:$0xff]
        %v2201 = vld [vmem:[%s6 + $0x7a0] sm:$0xff]
        %v2202 = vld [vmem:[%s6 + $0x7a8] sm:$0xff]
        %v2203 = vld [vmem:[%s6 + $0x7b0] sm:$0xff]
        %v2204 = vld [vmem:[%s6 + $0x7b8] sm:$0xff]
        %v2205 = vld [vmem:[%s6 + $0x7c0] sm:$0xff]
        %v2206 = vld [vmem:[%s6 + $0x7c8] sm:$0xff]
        %v2207 = vld [vmem:[%s6 + $0x7d0] sm:$0xff]
        %v2208 = vld [vmem:[%s6 + $0x7d8] sm:$0xff]
        %v2209 = vld [vmem:[%s6 + $0x7e0] sm:$0xff]
        %v2210 = vld [vmem:[%s6 + $0x7e8] sm:$0xff]
        %v2211 = vld [vmem:[%s6 + $0x7f0] sm:$0xff]
        %v2212 = vld [vmem:[%s6 + $0x7f8] sm:$0xff]
        %v2213 = vld [vmem:[%s6 + $0x800] sm:$0xff]
        %v2214 = vld [vmem:[%s6 + $0x808] sm:$0xff]
        %v2215 = vld [vmem:[%s6 + $0x810] sm:$0xff]
        %v2216 = vld [vmem:[%s6 + $0x818] sm:$0xff]
        %v2217 = vld [vmem:[%s6 + $0x820] sm:$0xff]
        %v2218 = vld [vmem:[%s6 + $0x828] sm:$0xff]
        %v2219 = vld [vmem:[%s6 + $0x830] sm:$0xff]
        %v2220 = vld [vmem:[%s6 + $0x838] sm:$0xff]
        %v2221 = vld [vmem:[%s6 + $0x840] sm:$0xff]
        %v2222 = vld [vmem:[%s6 + $0x848] sm:$0xff]
        %v2223 = vld [vmem:[%s6 + $0x850] sm:$0xff]
        %v2224 = vld [vmem:[%s6 + $0x858] sm:$0xff]
        %v2225 = vld [vmem:[%s6 + $0x860] sm:$0xff]
        %v2226 = vld [vmem:[%s6 + $0x868] sm:$0xff]
        %v2227 = vld [vmem:[%s6 + $0x870] sm:$0xff]
        %v2228 = vld [vmem:[%s6 + $0x878] sm:$0xff]
        %v2229 = vld [vmem:[%s6 + $0x880] sm:$0xff]
        %v2230 = vld [vmem:[%s6 + $0x888] sm:$0xff]
        %v2231 = vld [vmem:[%s6 + $0x890] sm:$0xff]
        %v2232 = vld [vmem:[%s6 + $0x898] sm:$0xff]
        %v2233 = vld [vmem:[%s6 + $0x8a0] sm:$0xff]
        %v2234 = vld [vmem:[%s6 + $0x8a8] sm:$0xff]
        %v2235 = vld [vmem:[%s6 + $0x8b0] sm:$0xff]
        %v2236 = vld [vmem:[%s6 + $0x8b8] sm:$0xff]
        %v2237 = vld [vmem:[%s6 + $0x8c0] sm:$0xff]
        %v2238 = vld [vmem:[%s6 + $0x8c8] sm:$0xff]
        %v2239 = vld [vmem:[%s6 + $0x8d0] sm:$0xff]
        %v2240 = vld [vmem:[%s6 + $0x8d8] sm:$0xff]
        %v2241 = vld [vmem:[%s6 + $0x8e0] sm:$0xff]
        %v2242 = vld [vmem:[%s6 + $0x8e8] sm:$0xff]
        %v2243 = vld [vmem:[%s6 + $0x8f0] sm:$0xff]
        %v2244 = vld [vmem:[%s6 + $0x8f8] sm:$0xff]
        %v2245 = vld [vmem:[%s6 + $0x900] sm:$0xff]
        %v2246 = vld [vmem:[%s6 + $0x908] sm:$0xff]
        %v2247 = vld [vmem:[%s6 + $0x910] sm:$0xff]
        %v2248 = vld [vmem:[%s6 + $0x918] sm:$0xff]
        %v2249 = vld [vmem:[%s6 + $0x920] sm:$0xff]
        %v2250 = vld [vmem:[%s6 + $0x928] sm:$0xff]
        %v2251 = vld [vmem:[%s6 + $0x930] sm:$0xff]
        %v2252 = vld [vmem:[%s6 + $0x938] sm:$0xff]
        %v2253 = vld [vmem:[%s6 + $0x940] sm:$0xff]
        %v2254 = vld [vmem:[%s6 + $0x948] sm:$0xff]
        %v2255 = vld [vmem:[%s6 + $0x950] sm:$0xff]
        %v2256 = vld [vmem:[%s6 + $0x958] sm:$0xff]
        %v2257 = vld [vmem:[%s6 + $0x960] sm:$0xff]
        %v2258 = vld [vmem:[%s6 + $0x968] sm:$0xff]
        %v2259 = vld [vmem:[%s6 + $0x970] sm:$0xff]
        %v2260 = vld [vmem:[%s6 + $0x978] sm:$0xff]
        %v2261 = vld [vmem:[%s6 + $0x980] sm:$0xff]
        %v2262 = vld [vmem:[%s6 + $0x988] sm:$0xff]
        %v2263 = vld [vmem:[%s6 + $0x990] sm:$0xff]
        %v2264 = vld [vmem:[%s6 + $0x998] sm:$0xff]
        %v2265 = vld [vmem:[%s6 + $0x9a0] sm:$0xff]
        %v2266 = vld [vmem:[%s6 + $0x9a8] sm:$0xff]
        %v2267 = vld [vmem:[%s6 + $0x9b0] sm:$0xff]
        %v2268 = vld [vmem:[%s6 + $0x9b8] sm:$0xff]
        %v2269 = vld [vmem:[%s6 + $0x9c0] sm:$0xff]
        %v2270 = vld [vmem:[%s6 + $0x9c8] sm:$0xff]
        %v2271 = vld [vmem:[%s6 + $0x9d0] sm:$0xff]
        %v2272 = vld [vmem:[%s6 + $0x9d8] sm:$0xff]
        %v2273 = vld [vmem:[%s6 + $0x9e0] sm:$0xff]
        %v2274 = vld [vmem:[%s6 + $0x9e8] sm:$0xff]
        %v2275 = vld [vmem:[%s6 + $0x9f0] sm:$0xff]
        %v2276 = vld [vmem:[%s6 + $0x9f8] sm:$0xff]
        %v2277 = vld [vmem:[%s6 + $0xa00] sm:$0xff]
        %v2278 = vld [vmem:[%s6 + $0xa08] sm:$0xff]
        %v2279 = vld [vmem:[%s6 + $0xa10] sm:$0xff]
        %v2280 = vld [vmem:[%s6 + $0xa18] sm:$0xff]
        %v2281 = vld [vmem:[%s6 + $0xa20] sm:$0xff]
        %v2282 = vld [vmem:[%s6 + $0xa28] sm:$0xff]
        %v2283 = vld [vmem:[%s6 + $0xa30] sm:$0xff]
        %v2284 = vld [vmem:[%s6 + $0xa38] sm:$0xff]
        %v2285 = vld [vmem:[%s6 + $0xa40] sm:$0xff]
        %v2286 = vld [vmem:[%s6 + $0xa48] sm:$0xff]
        %v2287 = vld [vmem:[%s6 + $0xa50] sm:$0xff]
        %v2288 = vld [vmem:[%s6 + $0xa58] sm:$0xff]
        %v2289 = vld [vmem:[%s6 + $0xa60] sm:$0xff]
        %v2290 = vld [vmem:[%s6 + $0xa68] sm:$0xff]
        %v2291 = vld [vmem:[%s6 + $0xa70] sm:$0xff]
        %v2292 = vld [vmem:[%s6 + $0xa78] sm:$0xff]
        %v2293 = vld [vmem:[%s6 + $0xa80] sm:$0xff]
        %v2294 = vld [vmem:[%s6 + $0xa88] sm:$0xff]
        %v2295 = vld [vmem:[%s6 + $0xa90] sm:$0xff]
        %v2296 = vld [vmem:[%s6 + $0xa98] sm:$0xff]
        %v2297 = vld [vmem:[%s6 + $0xaa0] sm:$0xff]
        %v2298 = vld [vmem:[%s6 + $0xaa8] sm:$0xff]
        %v2299 = vld [vmem:[%s6 + $0xab0] sm:$0xff]
        %v2300 = vld [vmem:[%s6 + $0xab8] sm:$0xff]
        %v2301 = vld [vmem:[%s6 + $0xac0] sm:$0xff]
        %v2302 = vld [vmem:[%s6 + $0xac8] sm:$0xff]
        %v2303 = vld [vmem:[%s6 + $0xad0] sm:$0xff]
        %v2304 = vld [vmem:[%s6 + $0xad8] sm:$0xff]
        %v2305 = vld [vmem:[%s6 + $0xae0] sm:$0xff]
        %v2306 = vld [vmem:[%s6 + $0xae8] sm:$0xff]
        %v2307 = vld [vmem:[%s6 + $0xaf0] sm:$0xff]
        %v2308 = vld [vmem:[%s6 + $0xaf8] sm:$0xff]
        %v2309 = vld [vmem:[%s6 + $0xb00] sm:$0xff]
        %v2310 = vld [vmem:[%s6 + $0xb08] sm:$0xff]
        %v2311 = vld [vmem:[%s6 + $0xb10] sm:$0xff]
        %v2312 = vld [vmem:[%s6 + $0xb18] sm:$0xff]
        %v2313 = vld [vmem:[%s6 + $0xb20] sm:$0xff]
        %v2314 = vld [vmem:[%s6 + $0xb28] sm:$0xff]
        %v2315 = vld [vmem:[%s6 + $0xb30] sm:$0xff]
        %v2316 = vld [vmem:[%s6 + $0xb38] sm:$0xff]
        %v2317 = vld [vmem:[%s6 + $0xb40] sm:$0xff]
        %v2318 = vld [vmem:[%s6 + $0xb48] sm:$0xff]
        %v2319 = vld [vmem:[%s6 + $0xb50] sm:$0xff]
        %v2320 = vld [vmem:[%s6 + $0xb58] sm:$0xff]
        %v2321 = vld [vmem:[%s6 + $0xb60] sm:$0xff]
        %v2322 = vld [vmem:[%s6 + $0xb68] sm:$0xff]
        %v2323 = vld [vmem:[%s6 + $0xb70] sm:$0xff]
        %v2324 = vld [vmem:[%s6 + $0xb78] sm:$0xff]
        %v2325 = vld [vmem:[%s6 + $0xb80] sm:$0xff]
        %v2326 = vld [vmem:[%s6 + $0xb88] sm:$0xff]
        %v2327 = vld [vmem:[%s6 + $0xb90] sm:$0xff]
        %v2328 = vld [vmem:[%s6 + $0xb98] sm:$0xff]
        %v2329 = vld [vmem:[%s6 + $0xba0] sm:$0xff]
        %v2330 = vld [vmem:[%s6 + $0xba8] sm:$0xff]
        %v2331 = vld [vmem:[%s6 + $0xbb0] sm:$0xff]
        %v2332 = vld [vmem:[%s6 + $0xbb8] sm:$0xff]
        %v2333 = vld [vmem:[%s6 + $0xbc0] sm:$0xff]
        %v2334 = vld [vmem:[%s6 + $0xbc8] sm:$0xff]
        %v2335 = vld [vmem:[%s6 + $0xbd0] sm:$0xff]
        %v2336 = vld [vmem:[%s6 + $0xbd8] sm:$0xff]
        %v2337 = vld [vmem:[%s6 + $0xbe0] sm:$0xff]
        %v2338 = vld [vmem:[%s6 + $0xbe8] sm:$0xff]
        %v2339 = vld [vmem:[%s6 + $0xbf0] sm:$0xff]
        %v2340 = vld [vmem:[%s6 + $0xbf8] sm:$0xff]
        %v2341 = vld [vmem:[%s6 + $0xc00] sm:$0xff]
        %v2342 = vld [vmem:[%s6 + $0xc08] sm:$0xff]
        %v2343 = vld [vmem:[%s6 + $0xc10] sm:$0xff]
        %v2344 = vld [vmem:[%s6 + $0xc18] sm:$0xff]
        %v2345 = vld [vmem:[%s6 + $0xc20] sm:$0xff]
        %v2346 = vld [vmem:[%s6 + $0xc28] sm:$0xff]
        %v2347 = vld [vmem:[%s6 + $0xc30] sm:$0xff]
        %v2348 = vld [vmem:[%s6 + $0xc38] sm:$0xff]
        %v2349 = vld [vmem:[%s6 + $0xc40] sm:$0xff]
        %v2350 = vld [vmem:[%s6 + $0xc48] sm:$0xff]
        %v2351 = vld [vmem:[%s6 + $0xc50] sm:$0xff]
        %v2352 = vld [vmem:[%s6 + $0xc58] sm:$0xff]
        %v2353 = vld [vmem:[%s6 + $0xc60] sm:$0xff]
        %v2354 = vld [vmem:[%s6 + $0xc68] sm:$0xff]
        %v2355 = vld [vmem:[%s6 + $0xc70] sm:$0xff]
        %v2356 = vld [vmem:[%s6 + $0xc78] sm:$0xff]
        %v2357 = vld [vmem:[%s6 + $0xc80] sm:$0xff]
        %v2358 = vld [vmem:[%s6 + $0xc88] sm:$0xff]
        %v2359 = vld [vmem:[%s6 + $0xc90] sm:$0xff]
        %v2360 = vld [vmem:[%s6 + $0xc98] sm:$0xff]
        %v2361 = vld [vmem:[%s6 + $0xca0] sm:$0xff]
        %v2362 = vld [vmem:[%s6 + $0xca8] sm:$0xff]
        %v2363 = vld [vmem:[%s6 + $0xcb0] sm:$0xff]
        %v2364 = vld [vmem:[%s6 + $0xcb8] sm:$0xff]
        %v2365 = vld [vmem:[%s6 + $0xcc0] sm:$0xff]
        %v2366 = vld [vmem:[%s6 + $0xcc8] sm:$0xff]
        %v2367 = vld [vmem:[%s6 + $0xcd0] sm:$0xff]
        %v2368 = vld [vmem:[%s6 + $0xcd8] sm:$0xff]
        %v2369 = vld [vmem:[%s6 + $0xce0] sm:$0xff]
        %v2370 = vld [vmem:[%s6 + $0xce8] sm:$0xff]
        %v2371 = vld [vmem:[%s6 + $0xcf0] sm:$0xff]
        %v2372 = vld [vmem:[%s6 + $0xcf8] sm:$0xff]
        %v2373 = vld [vmem:[%s6 + $0xd00] sm:$0xff]
        %v2374 = vld [vmem:[%s6 + $0xd08] sm:$0xff]
        %v2375 = vld [vmem:[%s6 + $0xd10] sm:$0xff]
        %v2376 = vld [vmem:[%s6 + $0xd18] sm:$0xff]
        %v2377 = vld [vmem:[%s6 + $0xd20] sm:$0xff]
        %v2378 = vld [vmem:[%s6 + $0xd28] sm:$0xff]
        %v2379 = vld [vmem:[%s6 + $0xd30] sm:$0xff]
        %v2380 = vld [vmem:[%s6 + $0xd38] sm:$0xff]
        %v2381 = vld [vmem:[%s6 + $0xd40] sm:$0xff]
        %v2382 = vld [vmem:[%s6 + $0xd48] sm:$0xff]
        %v2383 = vld [vmem:[%s6 + $0xd50] sm:$0xff]
        %v2384 = vld [vmem:[%s6 + $0xd58] sm:$0xff]
        %v2385 = vld [vmem:[%s6 + $0xd60] sm:$0xff]
        %v2386 = vld [vmem:[%s6 + $0xd68] sm:$0xff]
        %v2387 = vld [vmem:[%s6 + $0xd70] sm:$0xff]
        %v2388 = vld [vmem:[%s6 + $0xd78] sm:$0xff]
        %v2389 = vld [vmem:[%s6 + $0xd80] sm:$0xff]
        %v2390 = vld [vmem:[%s6 + $0xd88] sm:$0xff]
        %v2391 = vld [vmem:[%s6 + $0xd90] sm:$0xff]
        %v2392 = vld [vmem:[%s6 + $0xd98] sm:$0xff]
        %v2393 = vld [vmem:[%s6 + $0xda0] sm:$0xff]
        %v2394 = vld [vmem:[%s6 + $0xda8] sm:$0xff]
        %v2395 = vld [vmem:[%s6 + $0xdb0] sm:$0xff]
        %v2396 = vld [vmem:[%s6 + $0xdb8] sm:$0xff]
        %v2397 = vld [vmem:[%s6 + $0xdc0] sm:$0xff]
        %v2398 = vld [vmem:[%s6 + $0xdc8] sm:$0xff]
        %v2399 = vld [vmem:[%s6 + $0xdd0] sm:$0xff]
        %v2400 = vld [vmem:[%s6 + $0xdd8] sm:$0xff]
        %v2401 = vld [vmem:[%s6 + $0xde0] sm:$0xff]
        %v2402 = vld [vmem:[%s6 + $0xde8] sm:$0xff]
        %v2403 = vld [vmem:[%s6 + $0xdf0] sm:$0xff]
        %v2404 = vld [vmem:[%s6 + $0xdf8] sm:$0xff]
        %v2405 = vld [vmem:[%s6 + $0xe00] sm:$0xff]
        %v2406 = vld [vmem:[%s6 + $0xe08] sm:$0xff]
        %v2407 = vld [vmem:[%s6 + $0xe10] sm:$0xff]
        %v2408 = vld [vmem:[%s6 + $0xe18] sm:$0xff]
        %v2409 = vld [vmem:[%s6 + $0xe20] sm:$0xff]
        %v2410 = vld [vmem:[%s6 + $0xe28] sm:$0xff]
        %v2411 = vld [vmem:[%s6 + $0xe30] sm:$0xff]
        %v2412 = vld [vmem:[%s6 + $0xe38] sm:$0xff]
        %v2413 = vld [vmem:[%s6 + $0xe40] sm:$0xff]
        %v2414 = vld [vmem:[%s6 + $0xe48] sm:$0xff]
        %v2415 = vld [vmem:[%s6 + $0xe50] sm:$0xff]
        %v2416 = vld [vmem:[%s6 + $0xe58] sm:$0xff]
        %v2417 = vld [vmem:[%s6 + $0xe60] sm:$0xff]
        %v2418 = vld [vmem:[%s6 + $0xe68] sm:$0xff]
        %v2419 = vld [vmem:[%s6 + $0xe70] sm:$0xff]
        %v2420 = vld [vmem:[%s6 + $0xe78] sm:$0xff]
        %v2421 = vld [vmem:[%s6 + $0xe80] sm:$0xff]
        %v2422 = vld [vmem:[%s6 + $0xe88] sm:$0xff]
        %v2423 = vld [vmem:[%s6 + $0xe90] sm:$0xff]
        %v2424 = vld [vmem:[%s6 + $0xe98] sm:$0xff]
        %v2425 = vld [vmem:[%s6 + $0xea0] sm:$0xff]
        %v2426 = vld [vmem:[%s6 + $0xea8] sm:$0xff]
        %v2427 = vld [vmem:[%s6 + $0xeb0] sm:$0xff]
        %v2428 = vld [vmem:[%s6 + $0xeb8] sm:$0xff]
        %v2429 = vld [vmem:[%s6 + $0xec0] sm:$0xff]
        %v2430 = vld [vmem:[%s6 + $0xec8] sm:$0xff]
        %v2431 = vld [vmem:[%s6 + $0xed0] sm:$0xff]
        %v2432 = vld [vmem:[%s6 + $0xed8] sm:$0xff]
        %v2433 = vld [vmem:[%s6 + $0xee0] sm:$0xff]
        %v2434 = vld [vmem:[%s6 + $0xee8] sm:$0xff]
        %v2435 = vld [vmem:[%s6 + $0xef0] sm:$0xff]
        %v2436 = vld [vmem:[%s6 + $0xef8] sm:$0xff]
        %v2437 = vld [vmem:[%s6 + $0xf00] sm:$0xff]
        %v2438 = vld [vmem:[%s6 + $0xf08] sm:$0xff]
        %v2439 = vld [vmem:[%s6 + $0xf10] sm:$0xff]
        %v2440 = vld [vmem:[%s6 + $0xf18] sm:$0xff]
        %v2441 = vld [vmem:[%s6 + $0xf20] sm:$0xff]
        %v2442 = vld [vmem:[%s6 + $0xf28] sm:$0xff]
        %v2443 = vld [vmem:[%s6 + $0xf30] sm:$0xff]
        %v2444 = vld [vmem:[%s6 + $0xf38] sm:$0xff]
        %v2445 = vld [vmem:[%s6 + $0xf40] sm:$0xff]
        %v2446 = vld [vmem:[%s6 + $0xf48] sm:$0xff]
        %v2447 = vld [vmem:[%s6 + $0xf50] sm:$0xff]
        %v2448 = vld [vmem:[%s6 + $0xf58] sm:$0xff]
        %v2449 = vld [vmem:[%s6 + $0xf60] sm:$0xff]
        %v2450 = vld [vmem:[%s6 + $0xf68] sm:$0xff]
        %v2451 = vld [vmem:[%s6 + $0xf70] sm:$0xff]
        %v2452 = vld [vmem:[%s6 + $0xf78] sm:$0xff]
        %v2453 = vld [vmem:[%s6 + $0xf80] sm:$0xff]
        %v2454 = vld [vmem:[%s6 + $0xf88] sm:$0xff]
        %v2455 = vld [vmem:[%s6 + $0xf90] sm:$0xff]
        %v2456 = vld [vmem:[%s6 + $0xf98] sm:$0xff]
        %v2457 = vld [vmem:[%s6 + $0xfa0] sm:$0xff]
        %v2458 = vld [vmem:[%s6 + $0xfa8] sm:$0xff]
        %v2459 = vld [vmem:[%s6 + $0xfb0] sm:$0xff]
        %v2460 = vld [vmem:[%s6 + $0xfb8] sm:$0xff]
        %v2461 = vld [vmem:[%s6 + $0xfc0] sm:$0xff]
        %v2462 = vld [vmem:[%s6 + $0xfc8] sm:$0xff]
        %v2463 = vld [vmem:[%s6 + $0xfd0] sm:$0xff]
        %v2464 = vld [vmem:[%s6 + $0xfd8] sm:$0xff]
        %v2465 = vld [vmem:[%s6 + $0xfe0] sm:$0xff]
        %v2466 = vld [vmem:[%s6 + $0xfe8] sm:$0xff]
        %v2467 = vld [vmem:[%s6 + $0xff0] sm:$0xff]
        %v2468 = vld [vmem:[%s6 + $0xff8] sm:$0xff]
        %v2469 = vld [vmem:[%s7] sm:$0xf]
        %vm2470 = vcmask 48128
        %v2471 = vsel %vm2470, %v395, 0
        %v2474 = vsel %vm1512, %v1955, 0
        %v2477 = vsel %vm1512, %v1956, 0
        %2479 = vmatprep.subr.mxu0 0.0
        %2480 = vmatpush1.msra.mxu0 0.0
        %2481 = vmatprep.subr.mxu0 0.0
        %2482 = vmatpush1.msra.mxu0 0.0
        %2483 = vmatprep.subr.mxu0 0.0
        %2484 = vmatpush1.msra.mxu0 0.0
        %2485 = vmatprep.subr.mxu0 0.0
        %2486 = vmatpush1.msra.mxu0 0.0
        %2487 = vmatprep.subr.mxu0 0.0
        %2488 = vmatpush1.msra.mxu0 0.0
        %2489 = vmatprep.subr.mxu0 0.0
        %2490 = vmatpush1.msra.mxu0 0.0
        %2491 = vmatprep.subr.mxu0 0.0
        %2492 = vmatpush1.msra.mxu0 0.0
        %2493 = vmatprep.subr.mxu0 0.0
        %2494 = vmatpush1.msra.mxu0 0.0
        %2495 = vmatprep.subr.mxu0 0.0
        %2496 = vmatpush1.msra.mxu0 0.0
        %2497 = vmatprep.subr.mxu0 0.0
        %2498 = vmatpush1.msra.mxu0 0.0
        %2499 = vmatprep.subr.mxu0 0.0
        %2500 = vmatpush1.msra.mxu0 0.0
        %2501 = vmatprep.subr.mxu0 0.0
        %2502 = vmatpush1.msra.mxu0 0.0
        %2503 = vmatprep.subr.mxu0 0.0
        %2504 = vmatpush1.msra.mxu0 0.0
        %2505 = vmatprep.subr.mxu0 0.0
        %2506 = vmatpush1.msra.mxu0 0.0
        %2507 = vmatprep.subr.mxu0 0.0
        %2508 = vmatpush1.msra.mxu0 0.0
        %2509 = vmatprep.subr.mxu0 %v2477
        %2510 = vmatpush1.msra.mxu0 %v2474
        %2511 = vmatprep.subr.mxu0 0.0
        %2512 = vmatpush2.msra.mxu0 0.0
        %2513 = vmatprep.subr.mxu0 0.0
        %2514 = vmatpush2.msra.mxu0 0.0
        %2515 = vmatprep.subr.mxu0 0.0
        %2516 = vmatpush2.msra.mxu0 0.0
        %2517 = vmatprep.subr.mxu0 0.0
        %2518 = vmatpush2.msra.mxu0 0.0
        %2519 = vmatprep.subr.mxu0 0.0
        %2520 = vmatpush2.msra.mxu0 0.0
        %2521 = vmatprep.subr.mxu0 0.0
        %2522 = vmatpush2.msra.mxu0 0.0
        %2523 = vmatprep.subr.mxu0 0.0
        %2524 = vmatpush2.msra.mxu0 0.0
        %2525 = vmatprep.subr.mxu0 0.0
        %2526 = vmatpush2.msra.mxu0 0.0
        %2527 = vmatprep.subr.mxu0 0.0
        %2528 = vmatpush2.msra.mxu0 0.0
        %2529 = vmatprep.subr.mxu0 0.0
        %2530 = vmatpush2.msra.mxu0 0.0
        %2531 = vmatprep.subr.mxu0 0.0
        %2532 = vmatpush2.msra.mxu0 0.0
        %2533 = vmatprep.subr.mxu0 0.0
        %2534 = vmatpush2.msra.mxu0 0.0
        %2535 = vmatprep.subr.mxu0 0.0
        %2536 = vmatpush2.msra.mxu0 0.0
        %2537 = vmatprep.subr.mxu0 0.0
        %2538 = vmatpush2.msra.mxu0 0.0
        %2539 = vmatprep.subr.mxu0 0.0
        %2540 = vmatpush2.msra.mxu0 0.0
        %2541 = vmatprep.subr.mxu0 0.0
        %2542 = vmatpush2.msra.mxu0 0.0
        %2543 = vmatprep.mubr.f32.mxu0 0.0
        %2544 = vmatmul.mubr.f32.gmra.mxu0 %v2471
        %v2545 = vpop.f32.mrf.mxu0
        %v2546 = vadd.f32 0.0, %v2545
        %v2547 = vpop.f32.mrf.mxu0
        %v2548 = vadd.f32 0.0, %v2547
        %2549 = vdwg.mxu0
        %v2550 = vsel %vm2470, %v411, 0
        %2552 = vmatprep.subr.mxu0 0.0
        %2553 = vmatpush1.msra.mxu0 0.0
        %2554 = vmatprep.subr.mxu0 0.0
        %2555 = vmatpush1.msra.mxu0 0.0
        %2556 = vmatprep.subr.mxu0 0.0
        %2557 = vmatpush1.msra.mxu0 0.0
        %2558 = vmatprep.subr.mxu0 0.0
        %2559 = vmatpush1.msra.mxu0 0.0
        %2560 = vmatprep.subr.mxu0 0.0
        %2561 = vmatpush1.msra.mxu0 0.0
        %2562 = vmatprep.subr.mxu0 0.0
        %2563 = vmatpush1.msra.mxu0 0.0
        %2564 = vmatprep.subr.mxu0 0.0
        %2565 = vmatpush1.msra.mxu0 0.0
        %2566 = vmatprep.subr.mxu0 0.0
        %2567 = vmatpush1.msra.mxu0 0.0
        %2568 = vmatprep.subr.mxu0 0.0
        %2569 = vmatpush1.msra.mxu0 0.0
        %2570 = vmatprep.subr.mxu0 0.0
        %2571 = vmatpush1.msra.mxu0 0.0
        %2572 = vmatprep.subr.mxu0 0.0
        %2573 = vmatpush1.msra.mxu0 0.0
        %2574 = vmatprep.subr.mxu0 0.0
        %2575 = vmatpush1.msra.mxu0 0.0
        %2576 = vmatprep.subr.mxu0 0.0
        %2577 = vmatpush1.msra.mxu0 0.0
        %2578 = vmatprep.subr.mxu0 0.0
        %2579 = vmatpush1.msra.mxu0 0.0
        %2580 = vmatprep.subr.mxu0 0.0
        %2581 = vmatpush1.msra.mxu0 0.0
        %2582 = vmatprep.subr.mxu0 %v2477
        %2583 = vmatpush1.msra.mxu0 %v2474
        %2584 = vmatprep.subr.mxu0 0.0
        %2585 = vmatpush2.msra.mxu0 0.0
        %2586 = vmatprep.subr.mxu0 0.0
        %2587 = vmatpush2.msra.mxu0 0.0
        %2588 = vmatprep.subr.mxu0 0.0
        %2589 = vmatpush2.msra.mxu0 0.0
        %2590 = vmatprep.subr.mxu0 0.0
        %2591 = vmatpush2.msra.mxu0 0.0
        %2592 = vmatprep.subr.mxu0 0.0
        %2593 = vmatpush2.msra.mxu0 0.0
        %2594 = vmatprep.subr.mxu0 0.0
        %2595 = vmatpush2.msra.mxu0 0.0
        %2596 = vmatprep.subr.mxu0 0.0
        %2597 = vmatpush2.msra.mxu0 0.0
        %2598 = vmatprep.subr.mxu0 0.0
        %2599 = vmatpush2.msra.mxu0 0.0
        %2600 = vmatprep.subr.mxu0 0.0
        %2601 = vmatpush2.msra.mxu0 0.0
        %2602 = vmatprep.subr.mxu0 0.0
        %2603 = vmatpush2.msra.mxu0 0.0
        %2604 = vmatprep.subr.mxu0 0.0
        %2605 = vmatpush2.msra.mxu0 0.0
        %2606 = vmatprep.subr.mxu0 0.0
        %2607 = vmatpush2.msra.mxu0 0.0
        %2608 = vmatprep.subr.mxu0 0.0
        %2609 = vmatpush2.msra.mxu0 0.0
        %2610 = vmatprep.subr.mxu0 0.0
        %2611 = vmatpush2.msra.mxu0 0.0
        %2612 = vmatprep.subr.mxu0 0.0
        %2613 = vmatpush2.msra.mxu0 0.0
        %2614 = vmatprep.subr.mxu0 0.0
        %2615 = vmatpush2.msra.mxu0 0.0
        %2616 = vmatprep.mubr.f32.mxu0 0.0
        %2617 = vmatmul.mubr.f32.gmra.mxu0 %v2550
        %v2618 = vpop.f32.mrf.mxu0
        %v2619 = vadd.f32 0.0, %v2618
        %v2620 = vpop.f32.mrf.mxu0
        %v2621 = vadd.f32 0.0, %v2620
        %2622 = vdwg.mxu0
        %v2623 = vsel %vm2470, %v654, 0
        %2625 = vmatprep.subr.mxu0 0.0
        %2626 = vmatpush1.msra.mxu0 0.0
        %2627 = vmatprep.subr.mxu0 0.0
        %2628 = vmatpush1.msra.mxu0 0.0
        %2629 = vmatprep.subr.mxu0 0.0
        %2630 = vmatpush1.msra.mxu0 0.0
        %2631 = vmatprep.subr.mxu0 0.0
        %2632 = vmatpush1.msra.mxu0 0.0
        %2633 = vmatprep.subr.mxu0 0.0
        %2634 = vmatpush1.msra.mxu0 0.0
        %2635 = vmatprep.subr.mxu0 0.0
        %2636 = vmatpush1.msra.mxu0 0.0
        %2637 = vmatprep.subr.mxu0 0.0
        %2638 = vmatpush1.msra.mxu0 0.0
        %2639 = vmatprep.subr.mxu0 0.0
        %2640 = vmatpush1.msra.mxu0 0.0
        %2641 = vmatprep.subr.mxu0 0.0
        %2642 = vmatpush1.msra.mxu0 0.0
        %2643 = vmatprep.subr.mxu0 0.0
        %2644 = vmatpush1.msra.mxu0 0.0
        %2645 = vmatprep.subr.mxu0 0.0
        %2646 = vmatpush1.msra.mxu0 0.0
        %2647 = vmatprep.subr.mxu0 0.0
        %2648 = vmatpush1.msra.mxu0 0.0
        %2649 = vmatprep.subr.mxu0 0.0
        %2650 = vmatpush1.msra.mxu0 0.0
        %2651 = vmatprep.subr.mxu0 0.0
        %2652 = vmatpush1.msra.mxu0 0.0
        %2653 = vmatprep.subr.mxu0 0.0
        %2654 = vmatpush1.msra.mxu0 0.0
        %2655 = vmatprep.subr.mxu0 %v2477
        %2656 = vmatpush1.msra.mxu0 %v2474
        %2657 = vmatprep.subr.mxu0 0.0
        %2658 = vmatpush2.msra.mxu0 0.0
        %2659 = vmatprep.subr.mxu0 0.0
        %2660 = vmatpush2.msra.mxu0 0.0
        %2661 = vmatprep.subr.mxu0 0.0
        %2662 = vmatpush2.msra.mxu0 0.0
        %2663 = vmatprep.subr.mxu0 0.0
        %2664 = vmatpush2.msra.mxu0 0.0
        %2665 = vmatprep.subr.mxu0 0.0
        %2666 = vmatpush2.msra.mxu0 0.0
        %2667 = vmatprep.subr.mxu0 0.0
        %2668 = vmatpush2.msra.mxu0 0.0
        %2669 = vmatprep.subr.mxu0 0.0
        %2670 = vmatpush2.msra.mxu0 0.0
        %2671 = vmatprep.subr.mxu0 0.0
        %2672 = vmatpush2.msra.mxu0 0.0
        %2673 = vmatprep.subr.mxu0 0.0
        %2674 = vmatpush2.msra.mxu0 0.0
        %2675 = vmatprep.subr.mxu0 0.0
        %2676 = vmatpush2.msra.mxu0 0.0
        %2677 = vmatprep.subr.mxu0 0.0
        %2678 = vmatpush2.msra.mxu0 0.0
        %2679 = vmatprep.subr.mxu0 0.0
        %2680 = vmatpush2.msra.mxu0 0.0
        %2681 = vmatprep.subr.mxu0 0.0
        %2682 = vmatpush2.msra.mxu0 0.0
        %2683 = vmatprep.subr.mxu0 0.0
        %2684 = vmatpush2.msra.mxu0 0.0
        %2685 = vmatprep.subr.mxu0 0.0
        %2686 = vmatpush2.msra.mxu0 0.0
        %2687 = vmatprep.subr.mxu0 0.0
        %2688 = vmatpush2.msra.mxu0 0.0
        %2689 = vmatprep.mubr.f32.mxu0 0.0
        %2690 = vmatmul.mubr.f32.gmra.mxu0 %v2623
        %v2691 = vpop.f32.mrf.mxu0
        %v2692 = vadd.f32 0.0, %v2691
        %v2693 = vpop.f32.mrf.mxu0
        %v2694 = vadd.f32 0.0, %v2693
        %2695 = vdwg.mxu0
        %v2696 = vsel %vm2470, %v771, 0
        %2698 = vmatprep.subr.mxu0 0.0
        %2699 = vmatpush1.msra.mxu0 0.0
        %2700 = vmatprep.subr.mxu0 0.0
        %2701 = vmatpush1.msra.mxu0 0.0
        %2702 = vmatprep.subr.mxu0 0.0
        %2703 = vmatpush1.msra.mxu0 0.0
        %2704 = vmatprep.subr.mxu0 0.0
        %2705 = vmatpush1.msra.mxu0 0.0
        %2706 = vmatprep.subr.mxu0 0.0
        %2707 = vmatpush1.msra.mxu0 0.0
        %2708 = vmatprep.subr.mxu0 0.0
        %2709 = vmatpush1.msra.mxu0 0.0
        %2710 = vmatprep.subr.mxu0 0.0
        %2711 = vmatpush1.msra.mxu0 0.0
        %2712 = vmatprep.subr.mxu0 0.0
        %2713 = vmatpush1.msra.mxu0 0.0
        %2714 = vmatprep.subr.mxu0 0.0
        %2715 = vmatpush1.msra.mxu0 0.0
        %2716 = vmatprep.subr.mxu0 0.0
        %2717 = vmatpush1.msra.mxu0 0.0
        %2718 = vmatprep.subr.mxu0 0.0
        %2719 = vmatpush1.msra.mxu0 0.0
        %2720 = vmatprep.subr.mxu0 0.0
        %2721 = vmatpush1.msra.mxu0 0.0
        %2722 = vmatprep.subr.mxu0 0.0
        %2723 = vmatpush1.msra.mxu0 0.0
        %2724 = vmatprep.subr.mxu0 0.0
        %2725 = vmatpush1.msra.mxu0 0.0
        %2726 = vmatprep.subr.mxu0 0.0
        %2727 = vmatpush1.msra.mxu0 0.0
        %2728 = vmatprep.subr.mxu0 %v2477
        %2729 = vmatpush1.msra.mxu0 %v2474
        %2730 = vmatprep.subr.mxu0 0.0
        %2731 = vmatpush2.msra.mxu0 0.0
        %2732 = vmatprep.subr.mxu0 0.0
        %2733 = vmatpush2.msra.mxu0 0.0
        %2734 = vmatprep.subr.mxu0 0.0
        %2735 = vmatpush2.msra.mxu0 0.0
        %2736 = vmatprep.subr.mxu0 0.0
        %2737 = vmatpush2.msra.mxu0 0.0
        %2738 = vmatprep.subr.mxu0 0.0
        %2739 = vmatpush2.msra.mxu0 0.0
        %2740 = vmatprep.subr.mxu0 0.0
        %2741 = vmatpush2.msra.mxu0 0.0
        %2742 = vmatprep.subr.mxu0 0.0
        %2743 = vmatpush2.msra.mxu0 0.0
        %2744 = vmatprep.subr.mxu0 0.0
        %2745 = vmatpush2.msra.mxu0 0.0
        %2746 = vmatprep.subr.mxu0 0.0
        %2747 = vmatpush2.msra.mxu0 0.0
        %2748 = vmatprep.subr.mxu0 0.0
        %2749 = vmatpush2.msra.mxu0 0.0
        %2750 = vmatprep.subr.mxu0 0.0
        %2751 = vmatpush2.msra.mxu0 0.0
        %2752 = vmatprep.subr.mxu0 0.0
        %2753 = vmatpush2.msra.mxu0 0.0
        %2754 = vmatprep.subr.mxu0 0.0
        %2755 = vmatpush2.msra.mxu0 0.0
        %2756 = vmatprep.subr.mxu0 0.0
        %2757 = vmatpush2.msra.mxu0 0.0
        %2758 = vmatprep.subr.mxu0 0.0
        %2759 = vmatpush2.msra.mxu0 0.0
        %2760 = vmatprep.subr.mxu0 0.0
        %2761 = vmatpush2.msra.mxu0 0.0
        %2762 = vmatprep.mubr.f32.mxu0 0.0
        %2763 = vmatmul.mubr.f32.gmra.mxu0 %v2696
        %v2764 = vpop.f32.mrf.mxu0
        %v2765 = vadd.f32 0.0, %v2764
        %v2766 = vpop.f32.mrf.mxu0
        %v2767 = vadd.f32 0.0, %v2766
        %2768 = vdwg.mxu0
        %v2770 = vlaneseq
        %v2771 = vshrl.u32 %v2770, 7
        %v2772 = vsub.s32 0, %v2771
        %v2773 = vrot.slane %v2469, %v2772
        %v2774 = vlaneseq
        %v2775 = vshrl.u32 %v2774, 7
        %v2776 = vsub.s32 1, %v2775
        %v2777 = vrot.slane %v2469, %v2776
        %v2778 = vlaneseq
        %v2779 = vshrl.u32 %v2778, 7
        %v2780 = vsub.s32 2, %v2779
        %v2781 = vrot.slane %v2469, %v2780
        %v2782 = vlaneseq
        %v2783 = vshrl.u32 %v2782, 7
        %v2784 = vsub.s32 3, %v2783
        %v2785 = vrot.slane %v2469, %v2784
        %2790 = vmatprep.subr.mxu0 %v2018
        %2791 = vmatpush1.msra.mxu0 %v2017
        %2792 = vmatprep.subr.mxu0 %v2014
        %2793 = vmatpush1.msra.mxu0 %v2013
        %2794 = vmatprep.subr.mxu0 %v2010
        %2795 = vmatpush1.msra.mxu0 %v2009
        %2796 = vmatprep.subr.mxu0 %v2006
        %2797 = vmatpush1.msra.mxu0 %v2005
        %2798 = vmatprep.subr.mxu0 %v2002
        %2799 = vmatpush1.msra.mxu0 %v2001
        %2800 = vmatprep.subr.mxu0 %v1998
        %2801 = vmatpush1.msra.mxu0 %v1997
        %2802 = vmatprep.subr.mxu0 %v1994
        %2803 = vmatpush1.msra.mxu0 %v1993
        %2804 = vmatprep.subr.mxu0 %v1990
        %2805 = vmatpush1.msra.mxu0 %v1989
        %2806 = vmatprep.subr.mxu0 %v1986
        %2807 = vmatpush1.msra.mxu0 %v1985
        %2808 = vmatprep.subr.mxu0 %v1982
        %2809 = vmatpush1.msra.mxu0 %v1981
        %2810 = vmatprep.subr.mxu0 %v1978
        %2811 = vmatpush1.msra.mxu0 %v1977
        %2812 = vmatprep.subr.mxu0 %v1974
        %2813 = vmatpush1.msra.mxu0 %v1973
        %2814 = vmatprep.subr.mxu0 %v1970
        %2815 = vmatpush1.msra.mxu0 %v1969
        %2816 = vmatprep.subr.mxu0 %v1966
        %2817 = vmatpush1.msra.mxu0 %v1965
        %2818 = vmatprep.subr.mxu0 %v1962
        %2819 = vmatpush1.msra.mxu0 %v1961
        %2820 = vmatprep.subr.mxu0 %v1958
        %2821 = vmatpush1.msra.mxu0 %v1957
        %2822 = vmatprep.subr.mxu0 %v2082
        %2823 = vmatpush2.msra.mxu0 %v2081
        %2824 = vmatprep.subr.mxu0 %v2078
        %2825 = vmatpush2.msra.mxu0 %v2077
        %2826 = vmatprep.subr.mxu0 %v2074
        %2827 = vmatpush2.msra.mxu0 %v2073
        %2828 = vmatprep.subr.mxu0 %v2070
        %2829 = vmatpush2.msra.mxu0 %v2069
        %2830 = vmatprep.subr.mxu0 %v2066
        %2831 = vmatpush2.msra.mxu0 %v2065
        %2832 = vmatprep.subr.mxu0 %v2062
        %2833 = vmatpush2.msra.mxu0 %v2061
        %2834 = vmatprep.subr.mxu0 %v2058
        %2835 = vmatpush2.msra.mxu0 %v2057
        %2836 = vmatprep.subr.mxu0 %v2054
        %2837 = vmatpush2.msra.mxu0 %v2053
        %2838 = vmatprep.subr.mxu0 %v2050
        %2839 = vmatpush2.msra.mxu0 %v2049
        %2840 = vmatprep.subr.mxu0 %v2046
        %2841 = vmatpush2.msra.mxu0 %v2045
        %2842 = vmatprep.subr.mxu0 %v2042
        %2843 = vmatpush2.msra.mxu0 %v2041
        %2844 = vmatprep.subr.mxu0 %v2038
        %2845 = vmatpush2.msra.mxu0 %v2037
        %2846 = vmatprep.subr.mxu0 %v2034
        %2847 = vmatpush2.msra.mxu0 %v2033
        %2848 = vmatprep.subr.mxu0 %v2030
        %2849 = vmatpush2.msra.mxu0 %v2029
        %2850 = vmatprep.subr.mxu0 %v2026
        %2851 = vmatpush2.msra.mxu0 %v2025
        %2852 = vmatprep.subr.mxu0 %v2022
        %2853 = vmatpush2.msra.mxu0 %v2021
        %2854 = vmatprep.mubr.f32.mxu0 %v2548
        %2855 = vmatmul.mubr.f32.gmra.mxu0 %v2546
        %v2856 = vpop.f32.mrf.mxu0
        %v2857 = vadd.f32 %v2773, %v2856
        %v2858 = vpop.f32.mrf.mxu0
        %v2859 = vadd.f32 %v2777, %v2858
        %2860 = vdwg.mxu0
        %2861 = vmatprep.subr.mxu0 %v2146
        %2862 = vmatpush1.msra.mxu0 %v2145
        %2863 = vmatprep.subr.mxu0 %v2142
        %2864 = vmatpush1.msra.mxu0 %v2141
        %2865 = vmatprep.subr.mxu0 %v2138
        %2866 = vmatpush1.msra.mxu0 %v2137
        %2867 = vmatprep.subr.mxu0 %v2134
        %2868 = vmatpush1.msra.mxu0 %v2133
        %2869 = vmatprep.subr.mxu0 %v2130
        %2870 = vmatpush1.msra.mxu0 %v2129
        %2871 = vmatprep.subr.mxu0 %v2126
        %2872 = vmatpush1.msra.mxu0 %v2125
        %2873 = vmatprep.subr.mxu0 %v2122
        %2874 = vmatpush1.msra.mxu0 %v2121
        %2875 = vmatprep.subr.mxu0 %v2118
        %2876 = vmatpush1.msra.mxu0 %v2117
        %2877 = vmatprep.subr.mxu0 %v2114
        %2878 = vmatpush1.msra.mxu0 %v2113
        %2879 = vmatprep.subr.mxu0 %v2110
        %2880 = vmatpush1.msra.mxu0 %v2109
        %2881 = vmatprep.subr.mxu0 %v2106
        %2882 = vmatpush1.msra.mxu0 %v2105
        %2883 = vmatprep.subr.mxu0 %v2102
        %2884 = vmatpush1.msra.mxu0 %v2101
        %2885 = vmatprep.subr.mxu0 %v2098
        %2886 = vmatpush1.msra.mxu0 %v2097
        %2887 = vmatprep.subr.mxu0 %v2094
        %2888 = vmatpush1.msra.mxu0 %v2093
        %2889 = vmatprep.subr.mxu0 %v2090
        %2890 = vmatpush1.msra.mxu0 %v2089
        %2891 = vmatprep.subr.mxu0 %v2086
        %2892 = vmatpush1.msra.mxu0 %v2085
        %2893 = vmatprep.subr.mxu0 %v2210
        %2894 = vmatpush2.msra.mxu0 %v2209
        %2895 = vmatprep.subr.mxu0 %v2206
        %2896 = vmatpush2.msra.mxu0 %v2205
        %2897 = vmatprep.subr.mxu0 %v2202
        %2898 = vmatpush2.msra.mxu0 %v2201
        %2899 = vmatprep.subr.mxu0 %v2198
        %2900 = vmatpush2.msra.mxu0 %v2197
        %2901 = vmatprep.subr.mxu0 %v2194
        %2902 = vmatpush2.msra.mxu0 %v2193
        %2903 = vmatprep.subr.mxu0 %v2190
        %2904 = vmatpush2.msra.mxu0 %v2189
        %2905 = vmatprep.subr.mxu0 %v2186
        %2906 = vmatpush2.msra.mxu0 %v2185
        %2907 = vmatprep.subr.mxu0 %v2182
        %2908 = vmatpush2.msra.mxu0 %v2181
        %2909 = vmatprep.subr.mxu0 %v2178
        %2910 = vmatpush2.msra.mxu0 %v2177
        %2911 = vmatprep.subr.mxu0 %v2174
        %2912 = vmatpush2.msra.mxu0 %v2173
        %2913 = vmatprep.subr.mxu0 %v2170
        %2914 = vmatpush2.msra.mxu0 %v2169
        %2915 = vmatprep.subr.mxu0 %v2166
        %2916 = vmatpush2.msra.mxu0 %v2165
        %2917 = vmatprep.subr.mxu0 %v2162
        %2918 = vmatpush2.msra.mxu0 %v2161
        %2919 = vmatprep.subr.mxu0 %v2158
        %2920 = vmatpush2.msra.mxu0 %v2157
        %2921 = vmatprep.subr.mxu0 %v2154
        %2922 = vmatpush2.msra.mxu0 %v2153
        %2923 = vmatprep.subr.mxu0 %v2150
        %2924 = vmatpush2.msra.mxu0 %v2149
        %2925 = vmatprep.mubr.f32.mxu0 %v2621
        %2926 = vmatmul.mubr.f32.gmra.mxu0 %v2619
        %v2927 = vpop.f32.mrf.mxu0
        %v2928 = vadd.f32 %v2857, %v2927
        %v2929 = vpop.f32.mrf.mxu0
        %v2930 = vadd.f32 %v2859, %v2929
        %2931 = vdwg.mxu0
        %2932 = vmatprep.subr.mxu0 %v2274
        %2933 = vmatpush1.msra.mxu0 %v2273
        %2934 = vmatprep.subr.mxu0 %v2270
        %2935 = vmatpush1.msra.mxu0 %v2269
        %2936 = vmatprep.subr.mxu0 %v2266
        %2937 = vmatpush1.msra.mxu0 %v2265
        %2938 = vmatprep.subr.mxu0 %v2262
        %2939 = vmatpush1.msra.mxu0 %v2261
        %2940 = vmatprep.subr.mxu0 %v2258
        %2941 = vmatpush1.msra.mxu0 %v2257
        %2942 = vmatprep.subr.mxu0 %v2254
        %2943 = vmatpush1.msra.mxu0 %v2253
        %2944 = vmatprep.subr.mxu0 %v2250
        %2945 = vmatpush1.msra.mxu0 %v2249
        %2946 = vmatprep.subr.mxu0 %v2246
        %2947 = vmatpush1.msra.mxu0 %v2245
        %2948 = vmatprep.subr.mxu0 %v2242
        %2949 = vmatpush1.msra.mxu0 %v2241
        %2950 = vmatprep.subr.mxu0 %v2238
        %2951 = vmatpush1.msra.mxu0 %v2237
        %2952 = vmatprep.subr.mxu0 %v2234
        %2953 = vmatpush1.msra.mxu0 %v2233
        %2954 = vmatprep.subr.mxu0 %v2230
        %2955 = vmatpush1.msra.mxu0 %v2229
        %2956 = vmatprep.subr.mxu0 %v2226
        %2957 = vmatpush1.msra.mxu0 %v2225
        %2958 = vmatprep.subr.mxu0 %v2222
        %2959 = vmatpush1.msra.mxu0 %v2221
        %2960 = vmatprep.subr.mxu0 %v2218
        %2961 = vmatpush1.msra.mxu0 %v2217
        %2962 = vmatprep.subr.mxu0 %v2214
        %2963 = vmatpush1.msra.mxu0 %v2213
        %2964 = vmatprep.subr.mxu0 %v2338
        %2965 = vmatpush2.msra.mxu0 %v2337
        %2966 = vmatprep.subr.mxu0 %v2334
        %2967 = vmatpush2.msra.mxu0 %v2333
        %2968 = vmatprep.subr.mxu0 %v2330
        %2969 = vmatpush2.msra.mxu0 %v2329
        %2970 = vmatprep.subr.mxu0 %v2326
        %2971 = vmatpush2.msra.mxu0 %v2325
        %2972 = vmatprep.subr.mxu0 %v2322
        %2973 = vmatpush2.msra.mxu0 %v2321
        %2974 = vmatprep.subr.mxu0 %v2318
        %2975 = vmatpush2.msra.mxu0 %v2317
        %2976 = vmatprep.subr.mxu0 %v2314
        %2977 = vmatpush2.msra.mxu0 %v2313
        %2978 = vmatprep.subr.mxu0 %v2310
        %2979 = vmatpush2.msra.mxu0 %v2309
        %2980 = vmatprep.subr.mxu0 %v2306
        %2981 = vmatpush2.msra.mxu0 %v2305
        %2982 = vmatprep.subr.mxu0 %v2302
        %2983 = vmatpush2.msra.mxu0 %v2301
        %2984 = vmatprep.subr.mxu0 %v2298
        %2985 = vmatpush2.msra.mxu0 %v2297
        %2986 = vmatprep.subr.mxu0 %v2294
        %2987 = vmatpush2.msra.mxu0 %v2293
        %2988 = vmatprep.subr.mxu0 %v2290
        %2989 = vmatpush2.msra.mxu0 %v2289
        %2990 = vmatprep.subr.mxu0 %v2286
        %2991 = vmatpush2.msra.mxu0 %v2285
        %2992 = vmatprep.subr.mxu0 %v2282
        %2993 = vmatpush2.msra.mxu0 %v2281
        %2994 = vmatprep.subr.mxu0 %v2278
        %2995 = vmatpush2.msra.mxu0 %v2277
        %2996 = vmatprep.mubr.f32.mxu0 %v2694
        %2997 = vmatmul.mubr.f32.gmra.mxu0 %v2692
        %v2998 = vpop.f32.mrf.mxu0
        %v2999 = vadd.f32 %v2928, %v2998
        %v3000 = vpop.f32.mrf.mxu0
        %v3001 = vadd.f32 %v2930, %v3000
        %3002 = vdwg.mxu0
        %3003 = vmatprep.subr.mxu0 %v2402
        %3004 = vmatpush1.msra.mxu0 %v2401
        %3005 = vmatprep.subr.mxu0 %v2398
        %3006 = vmatpush1.msra.mxu0 %v2397
        %3007 = vmatprep.subr.mxu0 %v2394
        %3008 = vmatpush1.msra.mxu0 %v2393
        %3009 = vmatprep.subr.mxu0 %v2390
        %3010 = vmatpush1.msra.mxu0 %v2389
        %3011 = vmatprep.subr.mxu0 %v2386
        %3012 = vmatpush1.msra.mxu0 %v2385
        %3013 = vmatprep.subr.mxu0 %v2382
        %3014 = vmatpush1.msra.mxu0 %v2381
        %3015 = vmatprep.subr.mxu0 %v2378
        %3016 = vmatpush1.msra.mxu0 %v2377
        %3017 = vmatprep.subr.mxu0 %v2374
        %3018 = vmatpush1.msra.mxu0 %v2373
        %3019 = vmatprep.subr.mxu0 %v2370
        %3020 = vmatpush1.msra.mxu0 %v2369
        %3021 = vmatprep.subr.mxu0 %v2366
        %3022 = vmatpush1.msra.mxu0 %v2365
        %3023 = vmatprep.subr.mxu0 %v2362
        %3024 = vmatpush1.msra.mxu0 %v2361
        %3025 = vmatprep.subr.mxu0 %v2358
        %3026 = vmatpush1.msra.mxu0 %v2357
        %3027 = vmatprep.subr.mxu0 %v2354
        %3028 = vmatpush1.msra.mxu0 %v2353
        %3029 = vmatprep.subr.mxu0 %v2350
        %3030 = vmatpush1.msra.mxu0 %v2349
        %3031 = vmatprep.subr.mxu0 %v2346
        %3032 = vmatpush1.msra.mxu0 %v2345
        %3033 = vmatprep.subr.mxu0 %v2342
        %3034 = vmatpush1.msra.mxu0 %v2341
        %3035 = vmatprep.subr.mxu0 %v2466
        %3036 = vmatpush2.msra.mxu0 %v2465
        %3037 = vmatprep.subr.mxu0 %v2462
        %3038 = vmatpush2.msra.mxu0 %v2461
        %3039 = vmatprep.subr.mxu0 %v2458
        %3040 = vmatpush2.msra.mxu0 %v2457
        %3041 = vmatprep.subr.mxu0 %v2454
        %3042 = vmatpush2.msra.mxu0 %v2453
        %3043 = vmatprep.subr.mxu0 %v2450
        %3044 = vmatpush2.msra.mxu0 %v2449
        %3045 = vmatprep.subr.mxu0 %v2446
        %3046 = vmatpush2.msra.mxu0 %v2445
        %3047 = vmatprep.subr.mxu0 %v2442
        %3048 = vmatpush2.msra.mxu0 %v2441
        %3049 = vmatprep.subr.mxu0 %v2438
        %3050 = vmatpush2.msra.mxu0 %v2437
        %3051 = vmatprep.subr.mxu0 %v2434
        %3052 = vmatpush2.msra.mxu0 %v2433
        %3053 = vmatprep.subr.mxu0 %v2430
        %3054 = vmatpush2.msra.mxu0 %v2429
        %3055 = vmatprep.subr.mxu0 %v2426
        %3056 = vmatpush2.msra.mxu0 %v2425
        %3057 = vmatprep.subr.mxu0 %v2422
        %3058 = vmatpush2.msra.mxu0 %v2421
        %3059 = vmatprep.subr.mxu0 %v2418
        %3060 = vmatpush2.msra.mxu0 %v2417
        %3061 = vmatprep.subr.mxu0 %v2414
        %3062 = vmatpush2.msra.mxu0 %v2413
        %3063 = vmatprep.subr.mxu0 %v2410
        %3064 = vmatpush2.msra.mxu0 %v2409
        %3065 = vmatprep.subr.mxu0 %v2406
        %3066 = vmatpush2.msra.mxu0 %v2405
        %3067 = vmatprep.mubr.f32.mxu0 %v2767
        %3068 = vmatmul.mubr.f32.gmra.mxu0 %v2765
        %v3069 = vpop.f32.mrf.mxu0
        %v3070 = vadd.f32 %v2999, %v3069
        %v3071 = vpop.f32.mrf.mxu0
        %v3072 = vadd.f32 %v3001, %v3071
        %3073 = vdwg.mxu0
        %3074 = vmatprep.subr.mxu0 %v2020
        %3075 = vmatpush1.msra.mxu0 %v2019
        %3076 = vmatprep.subr.mxu0 %v2016
        %3077 = vmatpush1.msra.mxu0 %v2015
        %3078 = vmatprep.subr.mxu0 %v2012
        %3079 = vmatpush1.msra.mxu0 %v2011
        %3080 = vmatprep.subr.mxu0 %v2008
        %3081 = vmatpush1.msra.mxu0 %v2007
        %3082 = vmatprep.subr.mxu0 %v2004
        %3083 = vmatpush1.msra.mxu0 %v2003
        %3084 = vmatprep.subr.mxu0 %v2000
        %3085 = vmatpush1.msra.mxu0 %v1999
        %3086 = vmatprep.subr.mxu0 %v1996
        %3087 = vmatpush1.msra.mxu0 %v1995
        %3088 = vmatprep.subr.mxu0 %v1992
        %3089 = vmatpush1.msra.mxu0 %v1991
        %3090 = vmatprep.subr.mxu0 %v1988
        %3091 = vmatpush1.msra.mxu0 %v1987
        %3092 = vmatprep.subr.mxu0 %v1984
        %3093 = vmatpush1.msra.mxu0 %v1983
        %3094 = vmatprep.subr.mxu0 %v1980
        %3095 = vmatpush1.msra.mxu0 %v1979
        %3096 = vmatprep.subr.mxu0 %v1976
        %3097 = vmatpush1.msra.mxu0 %v1975
        %3098 = vmatprep.subr.mxu0 %v1972
        %3099 = vmatpush1.msra.mxu0 %v1971
        %3100 = vmatprep.subr.mxu0 %v1968
        %3101 = vmatpush1.msra.mxu0 %v1967
        %3102 = vmatprep.subr.mxu0 %v1964
        %3103 = vmatpush1.msra.mxu0 %v1963
        %3104 = vmatprep.subr.mxu0 %v1960
        %3105 = vmatpush1.msra.mxu0 %v1959
        %3106 = vmatprep.subr.mxu0 %v2084
        %3107 = vmatpush2.msra.mxu0 %v2083
        %3108 = vmatprep.subr.mxu0 %v2080
        %3109 = vmatpush2.msra.mxu0 %v2079
        %3110 = vmatprep.subr.mxu0 %v2076
        %3111 = vmatpush2.msra.mxu0 %v2075
        %3112 = vmatprep.subr.mxu0 %v2072
        %3113 = vmatpush2.msra.mxu0 %v2071
        %3114 = vmatprep.subr.mxu0 %v2068
        %3115 = vmatpush2.msra.mxu0 %v2067
        %3116 = vmatprep.subr.mxu0 %v2064
        %3117 = vmatpush2.msra.mxu0 %v2063
        %3118 = vmatprep.subr.mxu0 %v2060
        %3119 = vmatpush2.msra.mxu0 %v2059
        %3120 = vmatprep.subr.mxu0 %v2056
        %3121 = vmatpush2.msra.mxu0 %v2055
        %3122 = vmatprep.subr.mxu0 %v2052
        %3123 = vmatpush2.msra.mxu0 %v2051
        %3124 = vmatprep.subr.mxu0 %v2048
        %3125 = vmatpush2.msra.mxu0 %v2047
        %3126 = vmatprep.subr.mxu0 %v2044
        %3127 = vmatpush2.msra.mxu0 %v2043
        %3128 = vmatprep.subr.mxu0 %v2040
        %3129 = vmatpush2.msra.mxu0 %v2039
        %3130 = vmatprep.subr.mxu0 %v2036
        %3131 = vmatpush2.msra.mxu0 %v2035
        %3132 = vmatprep.subr.mxu0 %v2032
        %3133 = vmatpush2.msra.mxu0 %v2031
        %3134 = vmatprep.subr.mxu0 %v2028
        %3135 = vmatpush2.msra.mxu0 %v2027
        %3136 = vmatprep.subr.mxu0 %v2024
        %3137 = vmatpush2.msra.mxu0 %v2023
        %3138 = vmatprep.mubr.f32.mxu0 %v2548
        %3139 = vmatmul.mubr.f32.gmra.mxu0 %v2546
        %v3140 = vpop.f32.mrf.mxu0
        %v3141 = vadd.f32 %v2781, %v3140
        %v3142 = vpop.f32.mrf.mxu0
        %v3143 = vadd.f32 %v2785, %v3142
        %3144 = vdwg.mxu0
        %3145 = vmatprep.subr.mxu0 %v2148
        %3146 = vmatpush1.msra.mxu0 %v2147
        %3147 = vmatprep.subr.mxu0 %v2144
        %3148 = vmatpush1.msra.mxu0 %v2143
        %3149 = vmatprep.subr.mxu0 %v2140
        %3150 = vmatpush1.msra.mxu0 %v2139
        %3151 = vmatprep.subr.mxu0 %v2136
        %3152 = vmatpush1.msra.mxu0 %v2135
        %3153 = vmatprep.subr.mxu0 %v2132
        %3154 = vmatpush1.msra.mxu0 %v2131
        %3155 = vmatprep.subr.mxu0 %v2128
        %3156 = vmatpush1.msra.mxu0 %v2127
        %3157 = vmatprep.subr.mxu0 %v2124
        %3158 = vmatpush1.msra.mxu0 %v2123
        %3159 = vmatprep.subr.mxu0 %v2120
        %3160 = vmatpush1.msra.mxu0 %v2119
        %3161 = vmatprep.subr.mxu0 %v2116
        %3162 = vmatpush1.msra.mxu0 %v2115
        %3163 = vmatprep.subr.mxu0 %v2112
        %3164 = vmatpush1.msra.mxu0 %v2111
        %3165 = vmatprep.subr.mxu0 %v2108
        %3166 = vmatpush1.msra.mxu0 %v2107
        %3167 = vmatprep.subr.mxu0 %v2104
        %3168 = vmatpush1.msra.mxu0 %v2103
        %3169 = vmatprep.subr.mxu0 %v2100
        %3170 = vmatpush1.msra.mxu0 %v2099
        %3171 = vmatprep.subr.mxu0 %v2096
        %3172 = vmatpush1.msra.mxu0 %v2095
        %3173 = vmatprep.subr.mxu0 %v2092
        %3174 = vmatpush1.msra.mxu0 %v2091
        %3175 = vmatprep.subr.mxu0 %v2088
        %3176 = vmatpush1.msra.mxu0 %v2087
        %3177 = vmatprep.subr.mxu0 %v2212
        %3178 = vmatpush2.msra.mxu0 %v2211
        %3179 = vmatprep.subr.mxu0 %v2208
        %3180 = vmatpush2.msra.mxu0 %v2207
        %3181 = vmatprep.subr.mxu0 %v2204
        %3182 = vmatpush2.msra.mxu0 %v2203
        %3183 = vmatprep.subr.mxu0 %v2200
        %3184 = vmatpush2.msra.mxu0 %v2199
        %3185 = vmatprep.subr.mxu0 %v2196
        %3186 = vmatpush2.msra.mxu0 %v2195
        %3187 = vmatprep.subr.mxu0 %v2192
        %3188 = vmatpush2.msra.mxu0 %v2191
        %3189 = vmatprep.subr.mxu0 %v2188
        %3190 = vmatpush2.msra.mxu0 %v2187
        %3191 = vmatprep.subr.mxu0 %v2184
        %3192 = vmatpush2.msra.mxu0 %v2183
        %3193 = vmatprep.subr.mxu0 %v2180
        %3194 = vmatpush2.msra.mxu0 %v2179
        %3195 = vmatprep.subr.mxu0 %v2176
        %3196 = vmatpush2.msra.mxu0 %v2175
        %3197 = vmatprep.subr.mxu0 %v2172
        %3198 = vmatpush2.msra.mxu0 %v2171
        %3199 = vmatprep.subr.mxu0 %v2168
        %3200 = vmatpush2.msra.mxu0 %v2167
        %3201 = vmatprep.subr.mxu0 %v2164
        %3202 = vmatpush2.msra.mxu0 %v2163
        %3203 = vmatprep.subr.mxu0 %v2160
        %3204 = vmatpush2.msra.mxu0 %v2159
        %3205 = vmatprep.subr.mxu0 %v2156
        %3206 = vmatpush2.msra.mxu0 %v2155
        %3207 = vmatprep.subr.mxu0 %v2152
        %3208 = vmatpush2.msra.mxu0 %v2151
        %3209 = vmatprep.mubr.f32.mxu0 %v2621
        %3210 = vmatmul.mubr.f32.gmra.mxu0 %v2619
        %v3211 = vpop.f32.mrf.mxu0
        %v3212 = vadd.f32 %v3141, %v3211
        %v3213 = vpop.f32.mrf.mxu0
        %v3214 = vadd.f32 %v3143, %v3213
        %3215 = vdwg.mxu0
        %3216 = vmatprep.subr.mxu0 %v2276
        %3217 = vmatpush1.msra.mxu0 %v2275
        %3218 = vmatprep.subr.mxu0 %v2272
        %3219 = vmatpush1.msra.mxu0 %v2271
        %3220 = vmatprep.subr.mxu0 %v2268
        %3221 = vmatpush1.msra.mxu0 %v2267
        %3222 = vmatprep.subr.mxu0 %v2264
        %3223 = vmatpush1.msra.mxu0 %v2263
        %3224 = vmatprep.subr.mxu0 %v2260
        %3225 = vmatpush1.msra.mxu0 %v2259
        %3226 = vmatprep.subr.mxu0 %v2256
        %3227 = vmatpush1.msra.mxu0 %v2255
        %3228 = vmatprep.subr.mxu0 %v2252
        %3229 = vmatpush1.msra.mxu0 %v2251
        %3230 = vmatprep.subr.mxu0 %v2248
        %3231 = vmatpush1.msra.mxu0 %v2247
        %3232 = vmatprep.subr.mxu0 %v2244
        %3233 = vmatpush1.msra.mxu0 %v2243
        %3234 = vmatprep.subr.mxu0 %v2240
        %3235 = vmatpush1.msra.mxu0 %v2239
        %3236 = vmatprep.subr.mxu0 %v2236
        %3237 = vmatpush1.msra.mxu0 %v2235
        %3238 = vmatprep.subr.mxu0 %v2232
        %3239 = vmatpush1.msra.mxu0 %v2231
        %3240 = vmatprep.subr.mxu0 %v2228
        %3241 = vmatpush1.msra.mxu0 %v2227
        %3242 = vmatprep.subr.mxu0 %v2224
        %3243 = vmatpush1.msra.mxu0 %v2223
        %3244 = vmatprep.subr.mxu0 %v2220
        %3245 = vmatpush1.msra.mxu0 %v2219
        %3246 = vmatprep.subr.mxu0 %v2216
        %3247 = vmatpush1.msra.mxu0 %v2215
        %3248 = vmatprep.subr.mxu0 %v2340
        %3249 = vmatpush2.msra.mxu0 %v2339
        %3250 = vmatprep.subr.mxu0 %v2336
        %3251 = vmatpush2.msra.mxu0 %v2335
        %3252 = vmatprep.subr.mxu0 %v2332
        %3253 = vmatpush2.msra.mxu0 %v2331
        %3254 = vmatprep.subr.mxu0 %v2328
        %3255 = vmatpush2.msra.mxu0 %v2327
        %3256 = vmatprep.subr.mxu0 %v2324
        %3257 = vmatpush2.msra.mxu0 %v2323
        %3258 = vmatprep.subr.mxu0 %v2320
        %3259 = vmatpush2.msra.mxu0 %v2319
        %3260 = vmatprep.subr.mxu0 %v2316
        %3261 = vmatpush2.msra.mxu0 %v2315
        %3262 = vmatprep.subr.mxu0 %v2312
        %3263 = vmatpush2.msra.mxu0 %v2311
        %3264 = vmatprep.subr.mxu0 %v2308
        %3265 = vmatpush2.msra.mxu0 %v2307
        %3266 = vmatprep.subr.mxu0 %v2304
        %3267 = vmatpush2.msra.mxu0 %v2303
        %3268 = vmatprep.subr.mxu0 %v2300
        %3269 = vmatpush2.msra.mxu0 %v2299
        %3270 = vmatprep.subr.mxu0 %v2296
        %3271 = vmatpush2.msra.mxu0 %v2295
        %3272 = vmatprep.subr.mxu0 %v2292
        %3273 = vmatpush2.msra.mxu0 %v2291
        %3274 = vmatprep.subr.mxu0 %v2288
        %3275 = vmatpush2.msra.mxu0 %v2287
        %3276 = vmatprep.subr.mxu0 %v2284
        %3277 = vmatpush2.msra.mxu0 %v2283
        %3278 = vmatprep.subr.mxu0 %v2280
        %3279 = vmatpush2.msra.mxu0 %v2279
        %3280 = vmatprep.mubr.f32.mxu0 %v2694
        %3281 = vmatmul.mubr.f32.gmra.mxu0 %v2692
        %v3282 = vpop.f32.mrf.mxu0
        %v3283 = vadd.f32 %v3212, %v3282
        %v3284 = vpop.f32.mrf.mxu0
        %v3285 = vadd.f32 %v3214, %v3284
        %3286 = vdwg.mxu0
        %3287 = vmatprep.subr.mxu0 %v2404
        %3288 = vmatpush1.msra.mxu0 %v2403
        %3289 = vmatprep.subr.mxu0 %v2400
        %3290 = vmatpush1.msra.mxu0 %v2399
        %3291 = vmatprep.subr.mxu0 %v2396
        %3292 = vmatpush1.msra.mxu0 %v2395
        %3293 = vmatprep.subr.mxu0 %v2392
        %3294 = vmatpush1.msra.mxu0 %v2391
        %3295 = vmatprep.subr.mxu0 %v2388
        %3296 = vmatpush1.msra.mxu0 %v2387
        %3297 = vmatprep.subr.mxu0 %v2384
        %3298 = vmatpush1.msra.mxu0 %v2383
        %3299 = vmatprep.subr.mxu0 %v2380
        %3300 = vmatpush1.msra.mxu0 %v2379
        %3301 = vmatprep.subr.mxu0 %v2376
        %3302 = vmatpush1.msra.mxu0 %v2375
        %3303 = vmatprep.subr.mxu0 %v2372
        %3304 = vmatpush1.msra.mxu0 %v2371
        %3305 = vmatprep.subr.mxu0 %v2368
        %3306 = vmatpush1.msra.mxu0 %v2367
        %3307 = vmatprep.subr.mxu0 %v2364
        %3308 = vmatpush1.msra.mxu0 %v2363
        %3309 = vmatprep.subr.mxu0 %v2360
        %3310 = vmatpush1.msra.mxu0 %v2359
        %3311 = vmatprep.subr.mxu0 %v2356
        %3312 = vmatpush1.msra.mxu0 %v2355
        %3313 = vmatprep.subr.mxu0 %v2352
        %3314 = vmatpush1.msra.mxu0 %v2351
        %3315 = vmatprep.subr.mxu0 %v2348
        %3316 = vmatpush1.msra.mxu0 %v2347
        %3317 = vmatprep.subr.mxu0 %v2344
        %3318 = vmatpush1.msra.mxu0 %v2343
        %3319 = vmatprep.subr.mxu0 %v2468
        %3320 = vmatpush2.msra.mxu0 %v2467
        %3321 = vmatprep.subr.mxu0 %v2464
        %3322 = vmatpush2.msra.mxu0 %v2463
        %3323 = vmatprep.subr.mxu0 %v2460
        %3324 = vmatpush2.msra.mxu0 %v2459
        %3325 = vmatprep.subr.mxu0 %v2456
        %3326 = vmatpush2.msra.mxu0 %v2455
        %3327 = vmatprep.subr.mxu0 %v2452
        %3328 = vmatpush2.msra.mxu0 %v2451
        %3329 = vmatprep.subr.mxu0 %v2448
        %3330 = vmatpush2.msra.mxu0 %v2447
        %3331 = vmatprep.subr.mxu0 %v2444
        %3332 = vmatpush2.msra.mxu0 %v2443
        %3333 = vmatprep.subr.mxu0 %v2440
        %3334 = vmatpush2.msra.mxu0 %v2439
        %3335 = vmatprep.subr.mxu0 %v2436
        %3336 = vmatpush2.msra.mxu0 %v2435
        %3337 = vmatprep.subr.mxu0 %v2432
        %3338 = vmatpush2.msra.mxu0 %v2431
        %3339 = vmatprep.subr.mxu0 %v2428
        %3340 = vmatpush2.msra.mxu0 %v2427
        %3341 = vmatprep.subr.mxu0 %v2424
        %3342 = vmatpush2.msra.mxu0 %v2423
        %3343 = vmatprep.subr.mxu0 %v2420
        %3344 = vmatpush2.msra.mxu0 %v2419
        %3345 = vmatprep.subr.mxu0 %v2416
        %3346 = vmatpush2.msra.mxu0 %v2415
        %3347 = vmatprep.subr.mxu0 %v2412
        %3348 = vmatpush2.msra.mxu0 %v2411
        %3349 = vmatprep.subr.mxu0 %v2408
        %3350 = vmatpush2.msra.mxu0 %v2407
        %3351 = vmatprep.mubr.f32.mxu0 %v2767
        %3352 = vmatmul.mubr.f32.gmra.mxu0 %v2765
        %v3353 = vpop.f32.mrf.mxu0
        %v3354 = vadd.f32 %v3283, %v3353
        %v3355 = vpop.f32.mrf.mxu0
        %v3356 = vadd.f32 %v3285, %v3355
        %3357 = vdwg.mxu0
        %v3358 = vld [vmem:[%s8] sm:$0xf]
        %v3360 = vlaneseq
        %v3361 = vshrl.u32 %v3360, 7
        %v3362 = vsub.s32 0, %v3361
        %v3363 = vrot.slane %v3358, %v3362
        %v3364 = vlaneseq
        %v3365 = vshrl.u32 %v3364, 7
        %v3366 = vsub.s32 1, %v3365
        %v3367 = vrot.slane %v3358, %v3366
        %v3368 = vlaneseq
        %v3369 = vshrl.u32 %v3368, 7
        %v3370 = vsub.s32 2, %v3369
        %v3371 = vrot.slane %v3358, %v3370
        %v3372 = vlaneseq
        %v3373 = vshrl.u32 %v3372, 7
        %v3374 = vsub.s32 3, %v3373
        %v3375 = vrot.slane %v3358, %v3374
        %v3380 = vmul.f32 %v3070, %v3363
        %v3381 = vmul.f32 %v3072, %v3367
        %v3382 = vmul.f32 %v3354, %v3371
        %v3383 = vmul.f32 %v3356, %v3375
        %vm3384 = vcmask 1041408
        %v3385 = vsel %vm3384, %v3380, 0.0
        %v3386 = vsel %vm3384, %v3381, 0.0
        %v3387 = vadd.f32 %v3385, %v3386
        %v3388 = vsel %vm3384, %v3382, 0.0
        %v3389 = vadd.f32 %v3387, %v3388
        %v3390 = vsel %vm3384, %v3383, 0.0
        %v3391 = vadd.f32 %v3389, %v3390
        %3392 = vadd.xlane.f32.xlu0 %v3391
        %v3393 = vpop.xlane.xlu0 %3392
        %v3394 = vld [vmem:[#allocation2] sm:$0x1]
        %v3396 = vlaneseq
        %v3397 = vshrl.u32 %v3396, 7
        %v3398 = vsub.s32 0, %v3397
        %v3399 = vrot.slane %v3394, %v3398
        %v3401 = vadd.f32 %v3393, %v3399
        %v3402 = vxor.u32 %v3401, 2147483648
        %v3403 = vmul.f32 %v3402, 1.442695
        %v3404 = vpow.pop %v3403
        %v3405 = vadd.f32 %v3404, 1.0
        %v3406 = vrcp.pop %v3405
        %v3407 = vmul.f32 1.0, %v3406
        %3409 = vset.pattern.permute.xlu0 0
        %3410 = vperm.xlu0 %3409, %v3407
        %v3411 = vpop.permute.xlu0 %3410
        %v3413 = vmul.f32 %v3070, %v3411
        %v3414 = vmul.f32 %v3072, %v3411
        %v3415 = vmul.f32 %v3354, %v3411
        %v3416 = vmul.f32 %v3356, %v3411
        %v3421 = vcombine.low %v3413, %v3414
        %v3422 = vcombine.low %v3415, %v3416
        %v3424 = vunpack.c.l.s4 1983009808
        %v3425 = vunpack.c.0.s8 %v3424
        %v3426 = vlaneseq
        %v3427 = vshrl.u32 %v3426, 7
        %v3428 = vsub.s32 %v3425, %v3427
        %v3429 = vrot.slane %v3421, %v3428
        %v3431 = vunpack.c.l.s4 1983009808
        %v3432 = vunpack.c.0.s8 %v3431
        %v3433 = vlaneseq
        %v3434 = vshrl.u32 %v3433, 7
        %v3435 = vsub.s32 %v3432, %v3434
        %v3436 = vrot.slane %v3422, %v3435
        %v3437 = vcombine.low %v3429, %v3436
        %3439 = vst [vmem:[%s354] sm:$0xff] %v3437
        %s3440 = sand.u32 %s249, 1
        %s3441 = scalar_lea.sflag [#allocation4], %s3440
        %s3442 = sand.u32 %s249, 1
        %s3443 = smul.addr %s3442, 8
        %s3444 = scalar_lea.vmem [#allocation3], %s3443
        // Predicated region
        $region61: #{adapter_forward.3} parent=59 // pred_check
          %p3445 = pneg %p259
        $region62: #{adapter_forward.3} parent=59 // pred_check_branch
          %3447 = sbr.rel (%p3445) target = $region64
        $region63: #{adapter_forward.3} parent=59 // pred_region
          %s3449 = ssub.s32 128, 128
          %3450 = vsyncadd %s3441, %s3449
          %s3451 = smul.addr %s26, 4
          %s3452 = smul.addr %s3451, 32
          %s3453 = scalar_lea.hbm %s10, %s3452
          %s3455 = sshll.u32 %s3444, 4
          %s3456 = int_to_ptr.vmem [resolvable:$true] %s3455
          %3458 = dma.vmem_to_hbm [thread:$0]  %s3456, 128, %s3453, %s3441
        $region64: #{adapter_forward.3} parent=59 // pred_fallthru
          _
      $region60: #{adapter_forward.3} parent=5 // pred_fallthru
        _
      %p3459 = scmp.le.s32.totalorder 2, %s21
      // Predicated region
      $region65: #{adapter_forward.3} parent=5 // pred_check
        %p3460 = pneg %p3459
      $region66: #{adapter_forward.3} parent=5 // pred_check_branch
        %3462 = sbr.rel (%p3460) target = $region68
      $region67: #{adapter_forward.3} parent=5 // pred_region
        %s3463 = ssub.s32 %s21, 2
        // Predicated region
        $region69: #{adapter_forward.3} parent=67 // pred_check
          %p3464 = pneg %p265
        $region70: #{adapter_forward.3} parent=67 // pred_check_branch
          %3466 = sbr.rel (%p3464) target = $region72
        $region71: #{adapter_forward.3} parent=67 // pred_region
          %s3467 = sand.u32 %s250, 1
          %s3468 = scalar_lea.sflag [#allocation4], %s3467
          %s3469 = sand.u32 %s250, 1
          %s3470 = smul.addr %s3469, 8
          %s3471 = scalar_lea.vmem [#allocation3], %s3470
          %3472 = dma.done %s3468, 128
        $region72: #{adapter_forward.3} parent=67 // pred_fallthru
          _
      $region68: #{adapter_forward.3} parent=5 // pred_fallthru
        _
    $region6: #{adapter_forward.3} parent=1 // loop_footer
      %s25 = sadd.s32 1, %s21
    $region7: #{adapter_forward.3} parent=1 // loop_footer_branch
      %20 = sbr.rel target = $region3
    $region8: #{adapter_forward.3} parent=1 // loop_exit
      _
    %3473 = vsyncpa [#allocation4], 1
    %s3474 = scalar_lea.sflag [#allocation4], 1
    %3475 = vsyncpa %s3474, 1

// kernel: adapter_forward.2
$region0: #{adapter_forward.2}
  #allocation0 [shape = 'u32[]', space=smem, size = 0x4, offset = 0x4, fixed_abs, tag = 'smem constant byte address 0x4 - core index']
  #allocation1 [shape = 'u32[144,128]{1,0:T(1,128)}', space=vmem, size = 0x12000, scoped, tag = 'internal scratch']
  #allocation2 [shape = 'f32[128,256]{1,0:T(8,128)}', space=vmem, size = 0x20000, scoped, tag = 'scratch operand']
  %s0 = inlined_call_operand.vmem [shape: bf16[128,21504], index: 0, kind: input, shape index: {}]
  %s1 = inlined_call_operand.vmem [shape: bf16[21504,256], index: 1, kind: input, shape index: {}]
  %s2 = inlined_call_operand.vmem [shape: f32[128,256], index: 2, kind: output, shape index: {}]
  %s3 = sld [smem:[#allocation0]]
  $region75: #{adapter_forward.2} parent=0
    _
  %s5 = ssub.s32 1, %s3
  %s6 = scalar_select 0, %s5, %s3
  $region1: #{adapter_forward.2} parent=0
    #allocation3 [shape = 'u8[1376256]{0}', space=vmem, size = 0x150000, scoped, tag = 'input window, operand 0']
    loop: start=0, step=1, limit=10
    $region2: #{adapter_forward.2} parent=1 // loop_pre_header
      _
    $region3: #{adapter_forward.2} parent=1 // loop_header
      %s8 = sphi 0, %s12
      %p9 = scmp.ge.s32.totalorder %s8, 10
      %s15 = sphi 0, %s27
      %s16 = sphi 0, %s23
      %s17 = sphi 0, %s15
      %s18 = sphi 0, %s16
      %s19 = sphi 0, %s17
      %s20 = sphi 0, %s18
      %s32 = sphi 0, %s34
      %s35 = sphi 0, %s32
      %s36 = sphi 0, %s35
      %s52 = sphi 0, %s36
      %s58 = sphi 0, %s60
      %s61 = sphi 0, %s58
      %s62 = sphi 0, %s61
      %s78 = sphi 0, %s62
      %s84 = sphi 0, %s86
      %s87 = sphi 0, %s84
      %s88 = sphi 0, %s87
      %s104 = sphi 0, %s88
    $region4: #{adapter_forward.2} parent=1 // loop_header_branch
      %11 = sbr.rel (%p9) target = $region8
    $region5: #{adapter_forward.2} parent=1 // loop_body
      %s13 = ssub.s32 %s8, 1
      %s14 = ssub.s32 %s8, 2
      %s21 = sadd.s32 1, %s16
      %p22 = scmp.ge.s32.totalorder %s21, 8
      %s23 = scalar_select %p22, 0, %s21
      %s24 = sadd.s32 1, %s15
      %s25 = scalar_select %p22, %s24, %s15
      %p26 = scmp.ge.s32.totalorder %s25, 1
      %s27 = scalar_select %p26, 0, %s25
      %s28 = ssub.s32 %s15, %s27
      %s29 = ssub.s32 %s16, %s23
      %s30 = sor.u32 %s28, %s29
      %p31 = scmp.eq.s32.totalorder %s30, 0
      %s33 = sadd.s32 %s32, 1
      %s34 = scalar_select %p31, %s32, %s33
      %p37 = pneg %p31
      %p38 = scmp.eq.s32.totalorder %s8, 7
      %p39 = por %p37, %p38
      %p40 = scmp.ne.s32.totalorder %s32, %s35
      %p41 = scmp.eq.s32.totalorder %s8, 0
      %p42 = por %p40, %p41
      %p43 = scmp.ne.s32.totalorder %s32, %s35
      %p44 = scmp.eq.s32.totalorder %s13, 7
      %p45 = por %p43, %p44
      %p46 = scmp.ne.s32.totalorder %s35, %s36
      %p47 = scmp.eq.s32.totalorder %s13, 0
      %p48 = por %p46, %p47
      %p49 = scmp.ne.s32.totalorder %s35, %s36
      %p50 = scmp.eq.s32.totalorder %s14, 7
      %p51 = por %p49, %p50
      %p53 = scmp.ne.s32.totalorder %s36, %s52
      %p54 = scmp.eq.s32.totalorder %s14, 0
      %p55 = por %p53, %p54
      %s56 = ssub.s32 %s16, %s23
      %p57 = scmp.eq.s32.totalorder %s56, 0
      %s59 = sadd.s32 %s58, 1
      %s60 = scalar_select %p57, %s58, %s59
      %p63 = pneg %p57
      %p64 = scmp.eq.s32.totalorder %s8, 7
      %p65 = por %p63, %p64
      %p66 = scmp.ne.s32.totalorder %s58, %s61
      %p67 = scmp.eq.s32.totalorder %s8, 0
      %p68 = por %p66, %p67
      %p69 = scmp.ne.s32.totalorder %s58, %s61
      %p70 = scmp.eq.s32.totalorder %s13, 7
      %p71 = por %p69, %p70
      %p72 = scmp.ne.s32.totalorder %s61, %s62
      %p73 = scmp.eq.s32.totalorder %s13, 0
      %p74 = por %p72, %p73
      %p75 = scmp.ne.s32.totalorder %s61, %s62
      %p76 = scmp.eq.s32.totalorder %s14, 7
      %p77 = por %p75, %p76
      %p79 = scmp.ne.s32.totalorder %s62, %s78
      %p80 = scmp.eq.s32.totalorder %s14, 0
      %p81 = por %p79, %p80
      %s82 = ssub.s32 %s15, %s27
      %p83 = scmp.eq.s32.totalorder %s82, 0
      %s85 = sadd.s32 %s84, 1
      %s86 = scalar_select %p83, %s84, %s85
      %p89 = pneg %p83
      %p90 = scmp.eq.s32.totalorder %s8, 7
      %p91 = por %p89, %p90
      %p92 = scmp.ne.s32.totalorder %s84, %s87
      %p93 = scmp.eq.s32.totalorder %s8, 0
      %p94 = por %p92, %p93
      %p95 = scmp.ne.s32.totalorder %s84, %s87
      %p96 = scmp.eq.s32.totalorder %s13, 7
      %p97 = por %p95, %p96
      %p98 = scmp.ne.s32.totalorder %s87, %s88
      %p99 = scmp.eq.s32.totalorder %s13, 0
      %p100 = por %p98, %p99
      %p101 = scmp.ne.s32.totalorder %s87, %s88
      %p102 = scmp.eq.s32.totalorder %s14, 7
      %p103 = por %p101, %p102
      %p105 = scmp.ne.s32.totalorder %s88, %s104
      %p106 = scmp.eq.s32.totalorder %s14, 0
      %p107 = por %p105, %p106
      %p108 = scmp.le.s32.totalorder 1, %s8
      %p109 = scmp.lt.s32.totalorder %s8, 9
      %p110 = pnand %p108, %p109
      %p111 = pneg %p110
      // Predicated region
      $region9: #{adapter_forward.2} parent=5 // pred_check
        _
      $region10: #{adapter_forward.2} parent=5 // pred_check_branch
        %113 = sbr.rel (%p110) target = $region12
      $region11: #{adapter_forward.2} parent=5 // pred_region
        %s114 = ssub.s32 %s8, 1
      $region12: #{adapter_forward.2} parent=5 // pred_fallthru
        _
      %p115 = scmp.lt.s32.totalorder %s8, 8
      // Predicated region
      $region13: #{adapter_forward.2} parent=5 // pred_check
        %p116 = pneg %p115
      $region14: #{adapter_forward.2} parent=5 // pred_check_branch
        %118 = sbr.rel (%p116) target = $region16
      $region15: #{adapter_forward.2} parent=5 // pred_region
        // Predicated region
        $region17: #{adapter_forward.2} parent=15 // pred_check
          %p119 = pneg %p42
        $region18: #{adapter_forward.2} parent=15 // pred_check_branch
          %121 = sbr.rel (%p119) target = $region20
        $region19: #{adapter_forward.2} parent=15 // pred_region
          %s122 = sand.u32 %s32, 1
          %s123 = sand.u32 %s32, 1
          %s124 = smul.addr %s123, 1344
          %s125 = scalar_lea.vmem [#allocation3], %s124
          %s126 = smul.u32 16, %s15
          %s127 = smul.u32 21, %s16
          %s128 = smul.addr %s126, 168
          %s129 = sadd.s32 %s127, %s128
          %s130 = smul.addr %s129, 4
          %s131 = scalar_lea.vmem %s0, %s130
          // Predicated region
          $region21: #{adapter_forward.2} parent=19 // pred_check
            _
          $region22: #{adapter_forward.2} parent=19 // pred_check_branch
            %133 = sbr.rel (0) target = $region24
          $region23: #{adapter_forward.2} parent=19 // pred_region
            // Predicated region
            $region25: #{adapter_forward.2} parent=23 // pred_check
              _
            $region26: #{adapter_forward.2} parent=23 // pred_check_branch
              %135 = sbr.rel (0) target = $region28
            $region27: #{adapter_forward.2} parent=23 // pred_region
              %s136 = scalar_lea.vmem %s131, 80
              %s137 = scalar_lea.vmem %s125, 80 [#allocation3]
              loop: start=0, step=1, limit=1
              $region29: #{adapter_forward.2} parent=27 // loop_pre_header
                _
              $region30: #{adapter_forward.2} parent=27 // loop_header
                %s139 = sphi 0, %s143
                %p140 = scmp.ge.s32.totalorder %s139, 1
                %s144 = sphi %s131, %s131
                %s145 = sphi %s125, %s125
              $region31: #{adapter_forward.2} parent=27 // loop_header_branch
                %142 = sbr.rel (%p140) target = $region35
              $region32: #{adapter_forward.2} parent=27 // loop_body
                %v146 = vld [vmem:[%s144] sm:$0xff]
                %147 = vst [vmem:[%s145] sm:$0xff] %v146
                %v148 = vld [vmem:[%s144 + $0x8] sm:$0xff]
                %149 = vst [vmem:[%s145 + $0x8] sm:$0xff] %v148
                %v150 = vld [vmem:[%s144 + $0x10] sm:$0xff]
                %151 = vst [vmem:[%s145 + $0x10] sm:$0xff] %v150
                %v152 = vld [vmem:[%s144 + $0x18] sm:$0xff]
                %153 = vst [vmem:[%s145 + $0x18] sm:$0xff] %v152
                %v154 = vld [vmem:[%s144 + $0x20] sm:$0xff]
                %155 = vst [vmem:[%s145 + $0x20] sm:$0xff] %v154
                %v156 = vld [vmem:[%s144 + $0x28] sm:$0xff]
                %157 = vst [vmem:[%s145 + $0x28] sm:$0xff] %v156
                %v158 = vld [vmem:[%s144 + $0x30] sm:$0xff]
                %159 = vst [vmem:[%s145 + $0x30] sm:$0xff] %v158
                %v160 = vld [vmem:[%s144 + $0x38] sm:$0xff]
                %161 = vst [vmem:[%s145 + $0x38] sm:$0xff] %v160
                %v162 = vld [vmem:[%s144 + $0x40] sm:$0xff]
                %163 = vst [vmem:[%s145 + $0x40] sm:$0xff] %v162
                %v164 = vld [vmem:[%s144 + $0x48] sm:$0xff]
                %165 = vst [vmem:[%s145 + $0x48] sm:$0xff] %v164
                %v166 = vld [vmem:[%s144 + $0x2a0] sm:$0xff]
                %167 = vst [vmem:[%s145 + $0x54] sm:$0xff] %v166
                %v168 = vld [vmem:[%s144 + $0x2a8] sm:$0xff]
                %169 = vst [vmem:[%s145 + $0x5c] sm:$0xff] %v168
                %v170 = vld [vmem:[%s144 + $0x2b0] sm:$0xff]
                %171 = vst [vmem:[%s145 + $0x64] sm:$0xff] %v170
                %v172 = vld [vmem:[%s144 + $0x2b8] sm:$0xff]
                %173 = vst [vmem:[%s145 + $0x6c] sm:$0xff] %v172
                %v174 = vld [vmem:[%s144 + $0x2c0] sm:$0xff]
                %175 = vst [vmem:[%s145 + $0x74] sm:$0xff] %v174
                %v176 = vld [vmem:[%s144 + $0x2c8] sm:$0xff]
                %177 = vst [vmem:[%s145 + $0x7c] sm:$0xff] %v176
                %v178 = vld [vmem:[%s144 + $0x2d0] sm:$0xff]
                %179 = vst [vmem:[%s145 + $0x84] sm:$0xff] %v178
                %v180 = vld [vmem:[%s144 + $0x2d8] sm:$0xff]
                %181 = vst [vmem:[%s145 + $0x8c] sm:$0xff] %v180
                %v182 = vld [vmem:[%s144 + $0x2e0] sm:$0xff]
                %183 = vst [vmem:[%s145 + $0x94] sm:$0xff] %v182
                %v184 = vld [vmem:[%s144 + $0x2e8] sm:$0xff]
                %185 = vst [vmem:[%s145 + $0x9c] sm:$0xff] %v184
                %v186 = vld [vmem:[%s144 + $0x540] sm:$0xff]
                %187 = vst [vmem:[%s145 + $0xa8] sm:$0xff] %v186
                %v188 = vld [vmem:[%s144 + $0x548] sm:$0xff]
                %189 = vst [vmem:[%s145 + $0xb0] sm:$0xff] %v188
                %v190 = vld [vmem:[%s144 + $0x550] sm:$0xff]
                %191 = vst [vmem:[%s145 + $0xb8] sm:$0xff] %v190
                %v192 = vld [vmem:[%s144 + $0x558] sm:$0xff]
                %193 = vst [vmem:[%s145 + $0xc0] sm:$0xff] %v192
                %v194 = vld [vmem:[%s144 + $0x560] sm:$0xff]
                %195 = vst [vmem:[%s145 + $0xc8] sm:$0xff] %v194
                %v196 = vld [vmem:[%s144 + $0x568] sm:$0xff]
                %197 = vst [vmem:[%s145 + $0xd0] sm:$0xff] %v196
                %v198 = vld [vmem:[%s144 + $0x570] sm:$0xff]
                %199 = vst [vmem:[%s145 + $0xd8] sm:$0xff] %v198
                %v200 = vld [vmem:[%s144 + $0x578] sm:$0xff]
                %201 = vst [vmem:[%s145 + $0xe0] sm:$0xff] %v200
                %v202 = vld [vmem:[%s144 + $0x580] sm:$0xff]
                %203 = vst [vmem:[%s145 + $0xe8] sm:$0xff] %v202
                %v204 = vld [vmem:[%s144 + $0x588] sm:$0xff]
                %205 = vst [vmem:[%s145 + $0xf0] sm:$0xff] %v204
                %v206 = vld [vmem:[%s144 + $0x7e0] sm:$0xff]
                %207 = vst [vmem:[%s145 + $0xfc] sm:$0xff] %v206
                %v208 = vld [vmem:[%s144 + $0x7e8] sm:$0xff]
                %209 = vst [vmem:[%s145 + $0x104] sm:$0xff] %v208
                %v210 = vld [vmem:[%s144 + $0x7f0] sm:$0xff]
                %211 = vst [vmem:[%s145 + $0x10c] sm:$0xff] %v210
                %v212 = vld [vmem:[%s144 + $0x7f8] sm:$0xff]
                %213 = vst [vmem:[%s145 + $0x114] sm:$0xff] %v212
                %v214 = vld [vmem:[%s144 + $0x800] sm:$0xff]
                %215 = vst [vmem:[%s145 + $0x11c] sm:$0xff] %v214
                %v216 = vld [vmem:[%s144 + $0x808] sm:$0xff]
                %217 = vst [vmem:[%s145 + $0x124] sm:$0xff] %v216
                %v218 = vld [vmem:[%s144 + $0x810] sm:$0xff]
                %219 = vst [vmem:[%s145 + $0x12c] sm:$0xff] %v218
                %v220 = vld [vmem:[%s144 + $0x818] sm:$0xff]
                %221 = vst [vmem:[%s145 + $0x134] sm:$0xff] %v220
                %v222 = vld [vmem:[%s144 + $0x820] sm:$0xff]
                %223 = vst [vmem:[%s145 + $0x13c] sm:$0xff] %v222
                %v224 = vld [vmem:[%s144 + $0x828] sm:$0xff]
                %225 = vst [vmem:[%s145 + $0x144] sm:$0xff] %v224
                %v226 = vld [vmem:[%s144 + $0xa80] sm:$0xff]
                %227 = vst [vmem:[%s145 + $0x150] sm:$0xff] %v226
                %v228 = vld [vmem:[%s144 + $0xa88] sm:$0xff]
                %229 = vst [vmem:[%s145 + $0x158] sm:$0xff] %v228
                %v230 = vld [vmem:[%s144 + $0xa90] sm:$0xff]
                %231 = vst [vmem:[%s145 + $0x160] sm:$0xff] %v230
                %v232 = vld [vmem:[%s144 + $0xa98] sm:$0xff]
                %233 = vst [vmem:[%s145 + $0x168] sm:$0xff] %v232
                %v234 = vld [vmem:[%s144 + $0xaa0] sm:$0xff]
                %235 = vst [vmem:[%s145 + $0x170] sm:$0xff] %v234
                %v236 = vld [vmem:[%s144 + $0xaa8] sm:$0xff]
                %237 = vst [vmem:[%s145 + $0x178] sm:$0xff] %v236
                %v238 = vld [vmem:[%s144 + $0xab0] sm:$0xff]
                %239 = vst [vmem:[%s145 + $0x180] sm:$0xff] %v238
                %v240 = vld [vmem:[%s144 + $0xab8] sm:$0xff]
                %241 = vst [vmem:[%s145 + $0x188] sm:$0xff] %v240
                %v242 = vld [vmem:[%s144 + $0xac0] sm:$0xff]
                %243 = vst [vmem:[%s145 + $0x190] sm:$0xff] %v242
                %v244 = vld [vmem:[%s144 + $0xac8] sm:$0xff]
                %245 = vst [vmem:[%s145 + $0x198] sm:$0xff] %v244
                %v246 = vld [vmem:[%s144 + $0xd20] sm:$0xff]
                %247 = vst [vmem:[%s145 + $0x1a4] sm:$0xff] %v246
                %v248 = vld [vmem:[%s144 + $0xd28] sm:$0xff]
                %249 = vst [vmem:[%s145 + $0x1ac] sm:$0xff] %v248
                %v250 = vld [vmem:[%s144 + $0xd30] sm:$0xff]
                %251 = vst [vmem:[%s145 + $0x1b4] sm:$0xff] %v250
                %v252 = vld [vmem:[%s144 + $0xd38] sm:$0xff]
                %253 = vst [vmem:[%s145 + $0x1bc] sm:$0xff] %v252
                %v254 = vld [vmem:[%s144 + $0xd40] sm:$0xff]
                %255 = vst [vmem:[%s145 + $0x1c4] sm:$0xff] %v254
                %v256 = vld [vmem:[%s144 + $0xd48] sm:$0xff]
                %257 = vst [vmem:[%s145 + $0x1cc] sm:$0xff] %v256
                %v258 = vld [vmem:[%s144 + $0xd50] sm:$0xff]
                %259 = vst [vmem:[%s145 + $0x1d4] sm:$0xff] %v258
                %v260 = vld [vmem:[%s144 + $0xd58] sm:$0xff]
                %261 = vst [vmem:[%s145 + $0x1dc] sm:$0xff] %v260
                %v262 = vld [vmem:[%s144 + $0xd60] sm:$0xff]
                %263 = vst [vmem:[%s145 + $0x1e4] sm:$0xff] %v262
                %v264 = vld [vmem:[%s144 + $0xd68] sm:$0xff]
                %265 = vst [vmem:[%s145 + $0x1ec] sm:$0xff] %v264
                %v266 = vld [vmem:[%s144 + $0xfc0] sm:$0xff]
                %267 = vst [vmem:[%s145 + $0x1f8] sm:$0xff] %v266
                %v268 = vld [vmem:[%s144 + $0xfc8] sm:$0xff]
                %269 = vst [vmem:[%s145 + $0x200] sm:$0xff] %v268
                %v270 = vld [vmem:[%s144 + $0xfd0] sm:$0xff]
                %271 = vst [vmem:[%s145 + $0x208] sm:$0xff] %v270
                %v272 = vld [vmem:[%s144 + $0xfd8] sm:$0xff]
                %273 = vst [vmem:[%s145 + $0x210] sm:$0xff] %v272
                %v274 = vld [vmem:[%s144 + $0xfe0] sm:$0xff]
                %275 = vst [vmem:[%s145 + $0x218] sm:$0xff] %v274
                %v276 = vld [vmem:[%s144 + $0xfe8] sm:$0xff]
                %277 = vst [vmem:[%s145 + $0x220] sm:$0xff] %v276
                %v278 = vld [vmem:[%s144 + $0xff0] sm:$0xff]
                %279 = vst [vmem:[%s145 + $0x228] sm:$0xff] %v278
                %v280 = vld [vmem:[%s144 + $0xff8] sm:$0xff]
                %281 = vst [vmem:[%s145 + $0x230] sm:$0xff] %v280
                %v282 = vld [vmem:[%s144 + $0x1000] sm:$0xff]
                %283 = vst [vmem:[%s145 + $0x238] sm:$0xff] %v282
                %v284 = vld [vmem:[%s144 + $0x1008] sm:$0xff]
                %285 = vst [vmem:[%s145 + $0x240] sm:$0xff] %v284
                %v286 = vld [vmem:[%s144 + $0x1260] sm:$0xff]
                %287 = vst [vmem:[%s145 + $0x24c] sm:$0xff] %v286
                %v288 = vld [vmem:[%s144 + $0x1268] sm:$0xff]
                %289 = vst [vmem:[%s145 + $0x254] sm:$0xff] %v288
                %v290 = vld [vmem:[%s144 + $0x1270] sm:$0xff]
                %291 = vst [vmem:[%s145 + $0x25c] sm:$0xff] %v290
                %v292 = vld [vmem:[%s144 + $0x1278] sm:$0xff]
                %293 = vst [vmem:[%s145 + $0x264] sm:$0xff] %v292
                %v294 = vld [vmem:[%s144 + $0x1280] sm:$0xff]
                %295 = vst [vmem:[%s145 + $0x26c] sm:$0xff] %v294
                %v296 = vld [vmem:[%s144 + $0x1288] sm:$0xff]
                %297 = vst [vmem:[%s145 + $0x274] sm:$0xff] %v296
                %v298 = vld [vmem:[%s144 + $0x1290] sm:$0xff]
                %299 = vst [vmem:[%s145 + $0x27c] sm:$0xff] %v298
                %v300 = vld [vmem:[%s144 + $0x1298] sm:$0xff]
                %301 = vst [vmem:[%s145 + $0x284] sm:$0xff] %v300
                %v302 = vld [vmem:[%s144 + $0x12a0] sm:$0xff]
                %303 = vst [vmem:[%s145 + $0x28c] sm:$0xff] %v302
                %v304 = vld [vmem:[%s144 + $0x12a8] sm:$0xff]
                %305 = vst [vmem:[%s145 + $0x294] sm:$0xff] %v304
                %v306 = vld [vmem:[%s144 + $0x1500] sm:$0xff]
                %307 = vst [vmem:[%s145 + $0x2a0] sm:$0xff] %v306
                %v308 = vld [vmem:[%s144 + $0x1508] sm:$0xff]
                %309 = vst [vmem:[%s145 + $0x2a8] sm:$0xff] %v308
                %v310 = vld [vmem:[%s144 + $0x1510] sm:$0xff]
                %311 = vst [vmem:[%s145 + $0x2b0] sm:$0xff] %v310
                %v312 = vld [vmem:[%s144 + $0x1518] sm:$0xff]
                %313 = vst [vmem:[%s145 + $0x2b8] sm:$0xff] %v312
                %v314 = vld [vmem:[%s144 + $0x1520] sm:$0xff]
                %315 = vst [vmem:[%s145 + $0x2c0] sm:$0xff] %v314
                %v316 = vld [vmem:[%s144 + $0x1528] sm:$0xff]
                %317 = vst [vmem:[%s145 + $0x2c8] sm:$0xff] %v316
                %v318 = vld [vmem:[%s144 + $0x1530] sm:$0xff]
                %319 = vst [vmem:[%s145 + $0x2d0] sm:$0xff] %v318
                %v320 = vld [vmem:[%s144 + $0x1538] sm:$0xff]
                %321 = vst [vmem:[%s145 + $0x2d8] sm:$0xff] %v320
                %v322 = vld [vmem:[%s144 + $0x1540] sm:$0xff]
                %323 = vst [vmem:[%s145 + $0x2e0] sm:$0xff] %v322
                %v324 = vld [vmem:[%s144 + $0x1548] sm:$0xff]
                %325 = vst [vmem:[%s145 + $0x2e8] sm:$0xff] %v324
                %v326 = vld [vmem:[%s144 + $0x17a0] sm:$0xff]
                %327 = vst [vmem:[%s145 + $0x2f4] sm:$0xff] %v326
                %v328 = vld [vmem:[%s144 + $0x17a8] sm:$0xff]
                %329 = vst [vmem:[%s145 + $0x2fc] sm:$0xff] %v328
                %v330 = vld [vmem:[%s144 + $0x17b0] sm:$0xff]
                %331 = vst [vmem:[%s145 + $0x304] sm:$0xff] %v330
                %v332 = vld [vmem:[%s144 + $0x17b8] sm:$0xff]
                %333 = vst [vmem:[%s145 + $0x30c] sm:$0xff] %v332
                %v334 = vld [vmem:[%s144 + $0x17c0] sm:$0xff]
                %335 = vst [vmem:[%s145 + $0x314] sm:$0xff] %v334
                %v336 = vld [vmem:[%s144 + $0x17c8] sm:$0xff]
                %337 = vst [vmem:[%s145 + $0x31c] sm:$0xff] %v336
                %v338 = vld [vmem:[%s144 + $0x17d0] sm:$0xff]
                %339 = vst [vmem:[%s145 + $0x324] sm:$0xff] %v338
                %v340 = vld [vmem:[%s144 + $0x17d8] sm:$0xff]
                %341 = vst [vmem:[%s145 + $0x32c] sm:$0xff] %v340
                %v342 = vld [vmem:[%s144 + $0x17e0] sm:$0xff]
                %343 = vst [vmem:[%s145 + $0x334] sm:$0xff] %v342
                %v344 = vld [vmem:[%s144 + $0x17e8] sm:$0xff]
                %345 = vst [vmem:[%s145 + $0x33c] sm:$0xff] %v344
                %v346 = vld [vmem:[%s144 + $0x1a40] sm:$0xff]
                %347 = vst [vmem:[%s145 + $0x348] sm:$0xff] %v346
                %v348 = vld [vmem:[%s144 + $0x1a48] sm:$0xff]
                %349 = vst [vmem:[%s145 + $0x350] sm:$0xff] %v348
                %v350 = vld [vmem:[%s144 + $0x1a50] sm:$0xff]
                %351 = vst [vmem:[%s145 + $0x358] sm:$0xff] %v350
                %v352 = vld [vmem:[%s144 + $0x1a58] sm:$0xff]
                %353 = vst [vmem:[%s145 + $0x360] sm:$0xff] %v352
                %v354 = vld [vmem:[%s144 + $0x1a60] sm:$0xff]
                %355 = vst [vmem:[%s145 + $0x368] sm:$0xff] %v354
                %v356 = vld [vmem:[%s144 + $0x1a68] sm:$0xff]
                %357 = vst [vmem:[%s145 + $0x370] sm:$0xff] %v356
                %v358 = vld [vmem:[%s144 + $0x1a70] sm:$0xff]
                %359 = vst [vmem:[%s145 + $0x378] sm:$0xff] %v358
                %v360 = vld [vmem:[%s144 + $0x1a78] sm:$0xff]
                %361 = vst [vmem:[%s145 + $0x380] sm:$0xff] %v360
                %v362 = vld [vmem:[%s144 + $0x1a80] sm:$0xff]
                %363 = vst [vmem:[%s145 + $0x388] sm:$0xff] %v362
                %v364 = vld [vmem:[%s144 + $0x1a88] sm:$0xff]
                %365 = vst [vmem:[%s145 + $0x390] sm:$0xff] %v364
                %v366 = vld [vmem:[%s144 + $0x1ce0] sm:$0xff]
                %367 = vst [vmem:[%s145 + $0x39c] sm:$0xff] %v366
                %v368 = vld [vmem:[%s144 + $0x1ce8] sm:$0xff]
                %369 = vst [vmem:[%s145 + $0x3a4] sm:$0xff] %v368
                %v370 = vld [vmem:[%s144 + $0x1cf0] sm:$0xff]
                %371 = vst [vmem:[%s145 + $0x3ac] sm:$0xff] %v370
                %v372 = vld [vmem:[%s144 + $0x1cf8] sm:$0xff]
                %373 = vst [vmem:[%s145 + $0x3b4] sm:$0xff] %v372
                %v374 = vld [vmem:[%s144 + $0x1d00] sm:$0xff]
                %375 = vst [vmem:[%s145 + $0x3bc] sm:$0xff] %v374
                %v376 = vld [vmem:[%s144 + $0x1d08] sm:$0xff]
                %377 = vst [vmem:[%s145 + $0x3c4] sm:$0xff] %v376
                %v378 = vld [vmem:[%s144 + $0x1d10] sm:$0xff]
                %379 = vst [vmem:[%s145 + $0x3cc] sm:$0xff] %v378
                %v380 = vld [vmem:[%s144 + $0x1d18] sm:$0xff]
                %381 = vst [vmem:[%s145 + $0x3d4] sm:$0xff] %v380
                %v382 = vld [vmem:[%s144 + $0x1d20] sm:$0xff]
                %383 = vst [vmem:[%s145 + $0x3dc] sm:$0xff] %v382
                %v384 = vld [vmem:[%s144 + $0x1d28] sm:$0xff]
                %385 = vst [vmem:[%s145 + $0x3e4] sm:$0xff] %v384
                %v386 = vld [vmem:[%s144 + $0x1f80] sm:$0xff]
                %387 = vst [vmem:[%s145 + $0x3f0] sm:$0xff] %v386
                %v388 = vld [vmem:[%s144 + $0x1f88] sm:$0xff]
                %389 = vst [vmem:[%s145 + $0x3f8] sm:$0xff] %v388
                %v390 = vld [vmem:[%s144 + $0x1f90] sm:$0xff]
                %391 = vst [vmem:[%s145 + $0x400] sm:$0xff] %v390
                %v392 = vld [vmem:[%s144 + $0x1f98] sm:$0xff]
                %393 = vst [vmem:[%s145 + $0x408] sm:$0xff] %v392
                %v394 = vld [vmem:[%s144 + $0x1fa0] sm:$0xff]
                %395 = vst [vmem:[%s145 + $0x410] sm:$0xff] %v394
                %v396 = vld [vmem:[%s144 + $0x1fa8] sm:$0xff]
                %397 = vst [vmem:[%s145 + $0x418] sm:$0xff] %v396
                %v398 = vld [vmem:[%s144 + $0x1fb0] sm:$0xff]
                %399 = vst [vmem:[%s145 + $0x420] sm:$0xff] %v398
                %v400 = vld [vmem:[%s144 + $0x1fb8] sm:$0xff]
                %401 = vst [vmem:[%s145 + $0x428] sm:$0xff] %v400
                %v402 = vld [vmem:[%s144 + $0x1fc0] sm:$0xff]
                %403 = vst [vmem:[%s145 + $0x430] sm:$0xff] %v402
                %v404 = vld [vmem:[%s144 + $0x1fc8] sm:$0xff]
                %405 = vst [vmem:[%s145 + $0x438] sm:$0xff] %v404
                %v406 = vld [vmem:[%s144 + $0x2220] sm:$0xff]
                %407 = vst [vmem:[%s145 + $0x444] sm:$0xff] %v406
                %v408 = vld [vmem:[%s144 + $0x2228] sm:$0xff]
                %409 = vst [vmem:[%s145 + $0x44c] sm:$0xff] %v408
                %v410 = vld [vmem:[%s144 + $0x2230] sm:$0xff]
                %411 = vst [vmem:[%s145 + $0x454] sm:$0xff] %v410
                %v412 = vld [vmem:[%s144 + $0x2238] sm:$0xff]
                %413 = vst [vmem:[%s145 + $0x45c] sm:$0xff] %v412
                %v414 = vld [vmem:[%s144 + $0x2240] sm:$0xff]
                %415 = vst [vmem:[%s145 + $0x464] sm:$0xff] %v414
                %v416 = vld [vmem:[%s144 + $0x2248] sm:$0xff]
                %417 = vst [vmem:[%s145 + $0x46c] sm:$0xff] %v416
                %v418 = vld [vmem:[%s144 + $0x2250] sm:$0xff]
                %419 = vst [vmem:[%s145 + $0x474] sm:$0xff] %v418
                %v420 = vld [vmem:[%s144 + $0x2258] sm:$0xff]
                %421 = vst [vmem:[%s145 + $0x47c] sm:$0xff] %v420
                %v422 = vld [vmem:[%s144 + $0x2260] sm:$0xff]
                %423 = vst [vmem:[%s145 + $0x484] sm:$0xff] %v422
                %v424 = vld [vmem:[%s144 + $0x2268] sm:$0xff]
                %425 = vst [vmem:[%s145 + $0x48c] sm:$0xff] %v424
                %v426 = vld [vmem:[%s144 + $0x24c0] sm:$0xff]
                %427 = vst [vmem:[%s145 + $0x498] sm:$0xff] %v426
                %v428 = vld [vmem:[%s144 + $0x24c8] sm:$0xff]
                %429 = vst [vmem:[%s145 + $0x4a0] sm:$0xff] %v428
                %v430 = vld [vmem:[%s144 + $0x24d0] sm:$0xff]
                %431 = vst [vmem:[%s145 + $0x4a8] sm:$0xff] %v430
                %v432 = vld [vmem:[%s144 + $0x24d8] sm:$0xff]
                %433 = vst [vmem:[%s145 + $0x4b0] sm:$0xff] %v432
                %v434 = vld [vmem:[%s144 + $0x24e0] sm:$0xff]
                %435 = vst [vmem:[%s145 + $0x4b8] sm:$0xff] %v434
                %v436 = vld [vmem:[%s144 + $0x24e8] sm:$0xff]
                %437 = vst [vmem:[%s145 + $0x4c0] sm:$0xff] %v436
                %v438 = vld [vmem:[%s144 + $0x24f0] sm:$0xff]
                %439 = vst [vmem:[%s145 + $0x4c8] sm:$0xff] %v438
                %v440 = vld [vmem:[%s144 + $0x24f8] sm:$0xff]
                %441 = vst [vmem:[%s145 + $0x4d0] sm:$0xff] %v440
                %v442 = vld [vmem:[%s144 + $0x2500] sm:$0xff]
                %443 = vst [vmem:[%s145 + $0x4d8] sm:$0xff] %v442
                %v444 = vld [vmem:[%s144 + $0x2508] sm:$0xff]
                %445 = vst [vmem:[%s145 + $0x4e0] sm:$0xff] %v444
                %v446 = vld [vmem:[%s144 + $0x2760] sm:$0xff]
                %447 = vst [vmem:[%s145 + $0x4ec] sm:$0xff] %v446
                %v448 = vld [vmem:[%s144 + $0x2768] sm:$0xff]
                %449 = vst [vmem:[%s145 + $0x4f4] sm:$0xff] %v448
                %v450 = vld [vmem:[%s144 + $0x2770] sm:$0xff]
                %451 = vst [vmem:[%s145 + $0x4fc] sm:$0xff] %v450
                %v452 = vld [vmem:[%s144 + $0x2778] sm:$0xff]
                %453 = vst [vmem:[%s145 + $0x504] sm:$0xff] %v452
                %v454 = vld [vmem:[%s144 + $0x2780] sm:$0xff]
                %455 = vst [vmem:[%s145 + $0x50c] sm:$0xff] %v454
                %v456 = vld [vmem:[%s144 + $0x2788] sm:$0xff]
                %457 = vst [vmem:[%s145 + $0x514] sm:$0xff] %v456
                %v458 = vld [vmem:[%s144 + $0x2790] sm:$0xff]
                %459 = vst [vmem:[%s145 + $0x51c] sm:$0xff] %v458
                %v460 = vld [vmem:[%s144 + $0x2798] sm:$0xff]
                %461 = vst [vmem:[%s145 + $0x524] sm:$0xff] %v460
                %v462 = vld [vmem:[%s144 + $0x27a0] sm:$0xff]
                %463 = vst [vmem:[%s145 + $0x52c] sm:$0xff] %v462
                %v464 = vld [vmem:[%s144 + $0x27a8] sm:$0xff]
                %465 = vst [vmem:[%s145 + $0x534] sm:$0xff] %v464
              $region33: #{adapter_forward.2} parent=27 // loop_footer
                %s143 = sadd.s32 1, %s139
              $region34: #{adapter_forward.2} parent=27 // loop_footer_branch
                %138 = sbr.rel target = $region30
              $region35: #{adapter_forward.2} parent=27 // loop_exit
                _
              %s467 = ssub.s32 16, 1
              loop: start=0, step=1, limit=1
              $region36: #{adapter_forward.2} parent=27 // loop_pre_header
                _
              $region37: #{adapter_forward.2} parent=27 // loop_header
                %s469 = sphi 0, %s473
                %p470 = scmp.ge.s32.totalorder %s469, 1
                %s474 = sphi %s136, %s136
                %s475 = sphi %s137, %s137
              $region38: #{adapter_forward.2} parent=27 // loop_header_branch
                %472 = sbr.rel (%p470) target = $region42
              $region39: #{adapter_forward.2} parent=27 // loop_body
                %v476 = vld [vmem:[%s474] sm:%s467]
                %477 = vst [vmem:[%s475] sm:%s467] %v476
                %v478 = vld [vmem:[%s474 + $0x2a0] sm:%s467]
                %479 = vst [vmem:[%s475 + $0x54] sm:%s467] %v478
                %v480 = vld [vmem:[%s474 + $0x540] sm:%s467]
                %481 = vst [vmem:[%s475 + $0xa8] sm:%s467] %v480
                %v482 = vld [vmem:[%s474 + $0x7e0] sm:%s467]
                %483 = vst [vmem:[%s475 + $0xfc] sm:%s467] %v482
                %v484 = vld [vmem:[%s474 + $0xa80] sm:%s467]
                %485 = vst [vmem:[%s475 + $0x150] sm:%s467] %v484
                %v486 = vld [vmem:[%s474 + $0xd20] sm:%s467]
                %487 = vst [vmem:[%s475 + $0x1a4] sm:%s467] %v486
                %v488 = vld [vmem:[%s474 + $0xfc0] sm:%s467]
                %489 = vst [vmem:[%s475 + $0x1f8] sm:%s467] %v488
                %v490 = vld [vmem:[%s474 + $0x1260] sm:%s467]
                %491 = vst [vmem:[%s475 + $0x24c] sm:%s467] %v490
                %v492 = vld [vmem:[%s474 + $0x1500] sm:%s467]
                %493 = vst [vmem:[%s475 + $0x2a0] sm:%s467] %v492
                %v494 = vld [vmem:[%s474 + $0x17a0] sm:%s467]
                %495 = vst [vmem:[%s475 + $0x2f4] sm:%s467] %v494
                %v496 = vld [vmem:[%s474 + $0x1a40] sm:%s467]
                %497 = vst [vmem:[%s475 + $0x348] sm:%s467] %v496
                %v498 = vld [vmem:[%s474 + $0x1ce0] sm:%s467]
                %499 = vst [vmem:[%s475 + $0x39c] sm:%s467] %v498
                %v500 = vld [vmem:[%s474 + $0x1f80] sm:%s467]
                %501 = vst [vmem:[%s475 + $0x3f0] sm:%s467] %v500
                %v502 = vld [vmem:[%s474 + $0x2220] sm:%s467]
                %503 = vst [vmem:[%s475 + $0x444] sm:%s467] %v502
                %v504 = vld [vmem:[%s474 + $0x24c0] sm:%s467]
                %505 = vst [vmem:[%s475 + $0x498] sm:%s467] %v504
                %v506 = vld [vmem:[%s474 + $0x2760] sm:%s467]
                %507 = vst [vmem:[%s475 + $0x4ec] sm:%s467] %v506
              $region40: #{adapter_forward.2} parent=27 // loop_footer
                %s473 = sadd.s32 1, %s469
              $region41: #{adapter_forward.2} parent=27 // loop_footer_branch
                %468 = sbr.rel target = $region37
              $region42: #{adapter_forward.2} parent=27 // loop_exit
                _
            $region28: #{adapter_forward.2} parent=23 // pred_fallthru
              _
          $region24: #{adapter_forward.2} parent=19 // pred_fallthru
            _
          %508 = vnop
        $region20: #{adapter_forward.2} parent=15 // pred_fallthru
          _
        // Predicated region
        $region43: #{adapter_forward.2} parent=15 // pred_check
          %p509 = pneg %p68
        $region44: #{adapter_forward.2} parent=15 // pred_check_branch
          %511 = sbr.rel (%p509) target = $region46
        $region45: #{adapter_forward.2} parent=15 // pred_region
          %s512 = smul.u32 336, %s16
          %p513 = scmp.lt.s32.totalorder %s512, 2687
          %s514 = scalar_select %p513, %s512, 2687
          %s515 = smul.addr %s514, 2
          %s516 = smul.addr %s515, 4
          %s517 = scalar_lea.vmem %s1, %s516
          %s518 = smul.u32 336, %s16
        $region46: #{adapter_forward.2} parent=15 // pred_fallthru
          _
      $region16: #{adapter_forward.2} parent=5 // pred_fallthru
        _
      %p519 = scmp.le.s32.totalorder 1, %s8
      %p520 = scmp.lt.s32.totalorder %s8, 9
      %p521 = pnand %p519, %p520
      %p522 = pneg %p521
      // Predicated region
      $region47: #{adapter_forward.2} parent=5 // pred_check
        _
      $region48: #{adapter_forward.2} parent=5 // pred_check_branch
        %524 = sbr.rel (%p521) target = $region50
      $region49: #{adapter_forward.2} parent=5 // pred_region
        %s525 = ssub.s32 %s8, 1
        %s526 = sand.u32 %s35, 1
        %s527 = sand.u32 %s35, 1
        %s528 = smul.addr %s527, 1344
        %s529 = scalar_lea.vmem [#allocation3], %s528
        // Predicated region
        $region51: #{adapter_forward.2} parent=49 // pred_check
          %p530 = pneg %p48
        $region52: #{adapter_forward.2} parent=49 // pred_check_branch
          %532 = sbr.rel (%p530) target = $region54
        $region53: #{adapter_forward.2} parent=49 // pred_region
          _
        $region54: #{adapter_forward.2} parent=49 // pred_fallthru
          _
        %s533 = sand.u32 %s35, 1
        %s534 = sand.u32 %s35, 1
        %s535 = smul.addr %s534, 1344
        %s536 = scalar_lea.vmem [#allocation3], %s535
        %p537 = pneg %p48
        %p538 = pneg %p45
        %s539 = smul.u32 336, %s18
        %p540 = scmp.lt.s32.totalorder %s539, 2687
        %s541 = scalar_select %p540, %s539, 2687
        %s542 = smul.addr %s541, 2
        %s543 = smul.addr %s542, 4
        %s544 = scalar_lea.vmem %s1, %s543
        %p545 = pneg %p74
        %p546 = pneg %p71
        %p547 = pneg %p100
        %p548 = pneg %p97
        %s549 = smul.u32 16, %s17
        %p550 = scmp.lt.s32.totalorder %s549, 15
        %s551 = scalar_select %p550, %s549, 15
        %s552 = smul.addr %s551, 2
        %s553 = smul.addr %s552, 8
        %s554 = scalar_lea.vmem %s2, %s553
        %s555 = smul.u32 16, %s17
        %s556 = smul.u32 21, %s18
        %s557 = smul.u32 336, %s18
        %p558 = scmp.lt.s32.totalorder %s557, 2687
        %s559 = scalar_select %p558, %s557, 2687
        %s560 = smul.addr %s559, 2
        %s561 = smul.addr %s560, 4
        %s562 = scalar_lea.vmem %s1, %s561
        %s563 = smul.u32 336, %s18
        %s564 = smul.u32 16, %s17
        %p565 = scmp.lt.s32.totalorder %s564, 15
        %s566 = scalar_select %p565, %s564, 15
        %s567 = smul.addr %s566, 2
        %s568 = smul.addr %s567, 8
        %s569 = scalar_lea.vmem %s2, %s568
        %s570 = smul.u32 16, %s17
        %p572 = scmp.eq.s32.totalorder %s18, 0
        // Predicated region
        $region55: #{adapter_forward.2} parent=49 // pred_check
          %p573 = pneg %p572
        $region56: #{adapter_forward.2} parent=49 // pred_check_branch
          %575 = sbr.rel (%p573) target = $region58
        $region57: #{adapter_forward.2} parent=49 // pred_region
          %576 = vst [vmem:[#allocation2] sm:$0xff] 0.0
          %577 = vst [vmem:[#allocation2 + $0x8] sm:$0xff] 0.0
          %578 = vst [vmem:[#allocation2 + $0x10] sm:$0xff] 0.0
          %579 = vst [vmem:[#allocation2 + $0x18] sm:$0xff] 0.0
          %580 = vst [vmem:[#allocation2 + $0x20] sm:$0xff] 0.0
          %581 = vst [vmem:[#allocation2 + $0x28] sm:$0xff] 0.0
          %582 = vst [vmem:[#allocation2 + $0x30] sm:$0xff] 0.0
          %583 = vst [vmem:[#allocation2 + $0x38] sm:$0xff] 0.0
          %584 = vst [vmem:[#allocation2 + $0x40] sm:$0xff] 0.0
          %585 = vst [vmem:[#allocation2 + $0x48] sm:$0xff] 0.0
          %586 = vst [vmem:[#allocation2 + $0x50] sm:$0xff] 0.0
          %587 = vst [vmem:[#allocation2 + $0x58] sm:$0xff] 0.0
          %588 = vst [vmem:[#allocation2 + $0x60] sm:$0xff] 0.0
          %589 = vst [vmem:[#allocation2 + $0x68] sm:$0xff] 0.0
          %590 = vst [vmem:[#allocation2 + $0x70] sm:$0xff] 0.0
          %591 = vst [vmem:[#allocation2 + $0x78] sm:$0xff] 0.0
          %592 = vst [vmem:[#allocation2 + $0x80] sm:$0xff] 0.0
          %593 = vst [vmem:[#allocation2 + $0x88] sm:$0xff] 0.0
          %594 = vst [vmem:[#allocation2 + $0x90] sm:$0xff] 0.0
          %595 = vst [vmem:[#allocation2 + $0x98] sm:$0xff] 0.0
          %596 = vst [vmem:[#allocation2 + $0xa0] sm:$0xff] 0.0
          %597 = vst [vmem:[#allocation2 + $0xa8] sm:$0xff] 0.0
          %598 = vst [vmem:[#allocation2 + $0xb0] sm:$0xff] 0.0
          %599 = vst [vmem:[#allocation2 + $0xb8] sm:$0xff] 0.0
          %600 = vst [vmem:[#allocation2 + $0xc0] sm:$0xff] 0.0
          %601 = vst [vmem:[#allocation2 + $0xc8] sm:$0xff] 0.0
          %602 = vst [vmem:[#allocation2 + $0xd0] sm:$0xff] 0.0
          %603 = vst [vmem:[#allocation2 + $0xd8] sm:$0xff] 0.0
          %604 = vst [vmem:[#allocation2 + $0xe0] sm:$0xff] 0.0
          %605 = vst [vmem:[#allocation2 + $0xe8] sm:$0xff] 0.0
          %606 = vst [vmem:[#allocation2 + $0xf0] sm:$0xff] 0.0
          %607 = vst [vmem:[#allocation2 + $0xf8] sm:$0xff] 0.0
        $region58: #{adapter_forward.2} parent=49 // pred_fallthru
          _
        %v608 = vld [vmem:[#allocation2] sm:$0xff]
        %v609 = vld [vmem:[#allocation2 + $0x8] sm:$0xff]
        %v610 = vld [vmem:[#allocation2 + $0x10] sm:$0xff]
        %v611 = vld [vmem:[#allocation2 + $0x18] sm:$0xff]
        %v612 = vld [vmem:[#allocation2 + $0x20] sm:$0xff]
        %v613 = vld [vmem:[#allocation2 + $0x28] sm:$0xff]
        %v614 = vld [vmem:[#allocation2 + $0x30] sm:$0xff]
        %v615 = vld [vmem:[#allocation2 + $0x38] sm:$0xff]
        %v616 = vld [vmem:[#allocation2 + $0x40] sm:$0xff]
        %v617 = vld [vmem:[#allocation2 + $0x48] sm:$0xff]
        %v618 = vld [vmem:[#allocation2 + $0x50] sm:$0xff]
        %v619 = vld [vmem:[#allocation2 + $0x58] sm:$0xff]
        %v620 = vld [vmem:[#allocation2 + $0x60] sm:$0xff]
        %v621 = vld [vmem:[#allocation2 + $0x68] sm:$0xff]
        %v622 = vld [vmem:[#allocation2 + $0x70] sm:$0xff]
        %v623 = vld [vmem:[#allocation2 + $0x78] sm:$0xff]
        %v624 = vld [vmem:[#allocation2 + $0x80] sm:$0xff]
        %v625 = vld [vmem:[#allocation2 + $0x88] sm:$0xff]
        %v626 = vld [vmem:[#allocation2 + $0x90] sm:$0xff]
        %v627 = vld [vmem:[#allocation2 + $0x98] sm:$0xff]
        %v628 = vld [vmem:[#allocation2 + $0xa0] sm:$0xff]
        %v629 = vld [vmem:[#allocation2 + $0xa8] sm:$0xff]
        %v630 = vld [vmem:[#allocation2 + $0xb0] sm:$0xff]
        %v631 = vld [vmem:[#allocation2 + $0xb8] sm:$0xff]
        %v632 = vld [vmem:[#allocation2 + $0xc0] sm:$0xff]
        %v633 = vld [vmem:[#allocation2 + $0xc8] sm:$0xff]
        %v634 = vld [vmem:[#allocation2 + $0xd0] sm:$0xff]
        %v635 = vld [vmem:[#allocation2 + $0xd8] sm:$0xff]
        %v636 = vld [vmem:[#allocation2 + $0xe0] sm:$0xff]
        %v637 = vld [vmem:[#allocation2 + $0xe8] sm:$0xff]
        %v638 = vld [vmem:[#allocation2 + $0xf0] sm:$0xff]
        %v639 = vld [vmem:[#allocation2 + $0xf8] sm:$0xff]
        %v640 = vld [vmem:[%s529] sm:$0xff]
        %v641 = vld [vmem:[%s529 + $0x8] sm:$0xff]
        %v642 = vld [vmem:[%s529 + $0x10] sm:$0xff]
        %v643 = vld [vmem:[%s529 + $0x18] sm:$0xff]
        %v644 = vld [vmem:[%s529 + $0x20] sm:$0xff]
        %v645 = vld [vmem:[%s529 + $0x28] sm:$0xff]
        %v646 = vld [vmem:[%s529 + $0x30] sm:$0xff]
        %v647 = vld [vmem:[%s529 + $0x38] sm:$0xff]
        %v648 = vld [vmem:[%s529 + $0x40] sm:$0xff]
        %v649 = vld [vmem:[%s529 + $0x48] sm:$0xff]
        %v650 = vld [vmem:[%s529 + $0x50] sm:$0xf]
        %v651 = vld [vmem:[%s529 + $0x54] sm:$0xff]
        %v652 = vld [vmem:[%s529 + $0x5c] sm:$0xff]
        %v653 = vld [vmem:[%s529 + $0x64] sm:$0xff]
        %v654 = vld [vmem:[%s529 + $0x6c] sm:$0xff]
        %v655 = vld [vmem:[%s529 + $0x74] sm:$0xff]
        %v656 = vld [vmem:[%s529 + $0x7c] sm:$0xff]
        %v657 = vld [vmem:[%s529 + $0x84] sm:$0xff]
        %v658 = vld [vmem:[%s529 + $0x8c] sm:$0xff]
        %v659 = vld [vmem:[%s529 + $0x94] sm:$0xff]
        %v660 = vld [vmem:[%s529 + $0x9c] sm:$0xff]
        %v661 = vld [vmem:[%s529 + $0xa4] sm:$0xf]
        %v662 = vld [vmem:[%s529 + $0xa8] sm:$0xff]
        %v663 = vld [vmem:[%s529 + $0xb0] sm:$0xff]
        %v664 = vld [vmem:[%s529 + $0xb8] sm:$0xff]
        %v665 = vld [vmem:[%s529 + $0xc0] sm:$0xff]
        %v666 = vld [vmem:[%s529 + $0xc8] sm:$0xff]
        %v667 = vld [vmem:[%s529 + $0xd0] sm:$0xff]
        %v668 = vld [vmem:[%s529 + $0xd8] sm:$0xff]
        %v669 = vld [vmem:[%s529 + $0xe0] sm:$0xff]
        %v670 = vld [vmem:[%s529 + $0xe8] sm:$0xff]
        %v671 = vld [vmem:[%s529 + $0xf0] sm:$0xff]
        %v672 = vld [vmem:[%s529 + $0xf8] sm:$0xf]
        %v673 = vld [vmem:[%s529 + $0xfc] sm:$0xff]
        %v674 = vld [vmem:[%s529 + $0x104] sm:$0xff]
        %v675 = vld [vmem:[%s529 + $0x10c] sm:$0xff]
        %v676 = vld [vmem:[%s529 + $0x114] sm:$0xff]
        %v677 = vld [vmem:[%s529 + $0x11c] sm:$0xff]
        %v678 = vld [vmem:[%s529 + $0x124] sm:$0xff]
        %v679 = vld [vmem:[%s529 + $0x12c] sm:$0xff]
        %v680 = vld [vmem:[%s529 + $0x134] sm:$0xff]
        %v681 = vld [vmem:[%s529 + $0x13c] sm:$0xff]
        %v682 = vld [vmem:[%s529 + $0x144] sm:$0xff]
        %v683 = vld [vmem:[%s529 + $0x14c] sm:$0xf]
        %v684 = vld [vmem:[%s529 + $0x150] sm:$0xff]
        %v685 = vld [vmem:[%s529 + $0x158] sm:$0xff]
        %v686 = vld [vmem:[%s529 + $0x160] sm:$0xff]
        %v687 = vld [vmem:[%s529 + $0x168] sm:$0xff]
        %v688 = vld [vmem:[%s529 + $0x170] sm:$0xff]
        %v689 = vld [vmem:[%s529 + $0x178] sm:$0xff]
        %v690 = vld [vmem:[%s529 + $0x180] sm:$0xff]
        %v691 = vld [vmem:[%s529 + $0x188] sm:$0xff]
        %v692 = vld [vmem:[%s529 + $0x190] sm:$0xff]
        %v693 = vld [vmem:[%s529 + $0x198] sm:$0xff]
        %v694 = vld [vmem:[%s529 + $0x1a0] sm:$0xf]
        %v695 = vld [vmem:[%s529 + $0x1a4] sm:$0xff]
        %v696 = vld [vmem:[%s529 + $0x1ac] sm:$0xff]
        %v697 = vld [vmem:[%s529 + $0x1b4] sm:$0xff]
        %v698 = vld [vmem:[%s529 + $0x1bc] sm:$0xff]
        %v699 = vld [vmem:[%s529 + $0x1c4] sm:$0xff]
        %v700 = vld [vmem:[%s529 + $0x1cc] sm:$0xff]
        %v701 = vld [vmem:[%s529 + $0x1d4] sm:$0xff]
        %v702 = vld [vmem:[%s529 + $0x1dc] sm:$0xff]
        %v703 = vld [vmem:[%s529 + $0x1e4] sm:$0xff]
        %v704 = vld [vmem:[%s529 + $0x1ec] sm:$0xff]
        %v705 = vld [vmem:[%s529 + $0x1f4] sm:$0xf]
        %v706 = vld [vmem:[%s529 + $0x1f8] sm:$0xff]
        %v707 = vld [vmem:[%s529 + $0x200] sm:$0xff]
        %v708 = vld [vmem:[%s529 + $0x208] sm:$0xff]
        %v709 = vld [vmem:[%s529 + $0x210] sm:$0xff]
        %v710 = vld [vmem:[%s529 + $0x218] sm:$0xff]
        %v711 = vld [vmem:[%s529 + $0x220] sm:$0xff]
        %v712 = vld [vmem:[%s529 + $0x228] sm:$0xff]
        %v713 = vld [vmem:[%s529 + $0x230] sm:$0xff]
        %v714 = vld [vmem:[%s529 + $0x238] sm:$0xff]
        %v715 = vld [vmem:[%s529 + $0x240] sm:$0xff]
        %v716 = vld [vmem:[%s529 + $0x248] sm:$0xf]
        %v717 = vld [vmem:[%s529 + $0x24c] sm:$0xff]
        %v718 = vld [vmem:[%s529 + $0x254] sm:$0xff]
        %v719 = vld [vmem:[%s529 + $0x25c] sm:$0xff]
        %v720 = vld [vmem:[%s529 + $0x264] sm:$0xff]
        %v721 = vld [vmem:[%s529 + $0x26c] sm:$0xff]
        %v722 = vld [vmem:[%s529 + $0x274] sm:$0xff]
        %v723 = vld [vmem:[%s529 + $0x27c] sm:$0xff]
        %v724 = vld [vmem:[%s529 + $0x284] sm:$0xff]
        %v725 = vld [vmem:[%s529 + $0x28c] sm:$0xff]
        %v726 = vld [vmem:[%s529 + $0x294] sm:$0xff]
        %v727 = vld [vmem:[%s529 + $0x29c] sm:$0xf]
        %v728 = vld [vmem:[%s529 + $0x2a0] sm:$0xff]
        %v729 = vld [vmem:[%s529 + $0x2a8] sm:$0xff]
        %v730 = vld [vmem:[%s529 + $0x2b0] sm:$0xff]
        %v731 = vld [vmem:[%s529 + $0x2b8] sm:$0xff]
        %v732 = vld [vmem:[%s529 + $0x2c0] sm:$0xff]
        %v733 = vld [vmem:[%s529 + $0x2c8] sm:$0xff]
        %v734 = vld [vmem:[%s529 + $0x2d0] sm:$0xff]
        %v735 = vld [vmem:[%s529 + $0x2d8] sm:$0xff]
        %v736 = vld [vmem:[%s529 + $0x2e0] sm:$0xff]
        %v737 = vld [vmem:[%s529 + $0x2e8] sm:$0xff]
        %v738 = vld [vmem:[%s529 + $0x2f0] sm:$0xf]
        %v739 = vld [vmem:[%s529 + $0x2f4] sm:$0xff]
        %v740 = vld [vmem:[%s529 + $0x2fc] sm:$0xff]
        %v741 = vld [vmem:[%s529 + $0x304] sm:$0xff]
        %v742 = vld [vmem:[%s529 + $0x30c] sm:$0xff]
        %v743 = vld [vmem:[%s529 + $0x314] sm:$0xff]
        %v744 = vld [vmem:[%s529 + $0x31c] sm:$0xff]
        %v745 = vld [vmem:[%s529 + $0x324] sm:$0xff]
        %v746 = vld [vmem:[%s529 + $0x32c] sm:$0xff]
        %v747 = vld [vmem:[%s529 + $0x334] sm:$0xff]
        %v748 = vld [vmem:[%s529 + $0x33c] sm:$0xff]
        %v749 = vld [vmem:[%s529 + $0x344] sm:$0xf]
        %v750 = vld [vmem:[%s529 + $0x348] sm:$0xff]
        %v751 = vld [vmem:[%s529 + $0x350] sm:$0xff]
        %v752 = vld [vmem:[%s529 + $0x358] sm:$0xff]
        %v753 = vld [vmem:[%s529 + $0x360] sm:$0xff]
        %v754 = vld [vmem:[%s529 + $0x368] sm:$0xff]
        %v755 = vld [vmem:[%s529 + $0x370] sm:$0xff]
        %v756 = vld [vmem:[%s529 + $0x378] sm:$0xff]
        %v757 = vld [vmem:[%s529 + $0x380] sm:$0xff]
        %v758 = vld [vmem:[%s529 + $0x388] sm:$0xff]
        %v759 = vld [vmem:[%s529 + $0x390] sm:$0xff]
        %v760 = vld [vmem:[%s529 + $0x398] sm:$0xf]
        %v761 = vld [vmem:[%s529 + $0x39c] sm:$0xff]
        %v762 = vld [vmem:[%s529 + $0x3a4] sm:$0xff]
        %v763 = vld [vmem:[%s529 + $0x3ac] sm:$0xff]
        %v764 = vld [vmem:[%s529 + $0x3b4] sm:$0xff]
        %v765 = vld [vmem:[%s529 + $0x3bc] sm:$0xff]
        %v766 = vld [vmem:[%s529 + $0x3c4] sm:$0xff]
        %v767 = vld [vmem:[%s529 + $0x3cc] sm:$0xff]
        %v768 = vld [vmem:[%s529 + $0x3d4] sm:$0xff]
        %v769 = vld [vmem:[%s529 + $0x3dc] sm:$0xff]
        %v770 = vld [vmem:[%s529 + $0x3e4] sm:$0xff]
        %v771 = vld [vmem:[%s529 + $0x3ec] sm:$0xf]
        %v772 = vld [vmem:[%s529 + $0x3f0] sm:$0xff]
        %v773 = vld [vmem:[%s529 + $0x3f8] sm:$0xff]
        %v774 = vld [vmem:[%s529 + $0x400] sm:$0xff]
        %v775 = vld [vmem:[%s529 + $0x408] sm:$0xff]
        %v776 = vld [vmem:[%s529 + $0x410] sm:$0xff]
        %v777 = vld [vmem:[%s529 + $0x418] sm:$0xff]
        %v778 = vld [vmem:[%s529 + $0x420] sm:$0xff]
        %v779 = vld [vmem:[%s529 + $0x428] sm:$0xff]
        %v780 = vld [vmem:[%s529 + $0x430] sm:$0xff]
        %v781 = vld [vmem:[%s529 + $0x438] sm:$0xff]
        %v782 = vld [vmem:[%s529 + $0x440] sm:$0xf]
        %v783 = vld [vmem:[%s529 + $0x444] sm:$0xff]
        %v784 = vld [vmem:[%s529 + $0x44c] sm:$0xff]
        %v785 = vld [vmem:[%s529 + $0x454] sm:$0xff]
        %v786 = vld [vmem:[%s529 + $0x45c] sm:$0xff]
        %v787 = vld [vmem:[%s529 + $0x464] sm:$0xff]
        %v788 = vld [vmem:[%s529 + $0x46c] sm:$0xff]
        %v789 = vld [vmem:[%s529 + $0x474] sm:$0xff]
        %v790 = vld [vmem:[%s529 + $0x47c] sm:$0xff]
        %v791 = vld [vmem:[%s529 + $0x484] sm:$0xff]
        %v792 = vld [vmem:[%s529 + $0x48c] sm:$0xff]
        %v793 = vld [vmem:[%s529 + $0x494] sm:$0xf]
        %v794 = vld [vmem:[%s529 + $0x498] sm:$0xff]
        %v795 = vld [vmem:[%s529 + $0x4a0] sm:$0xff]
        %v796 = vld [vmem:[%s529 + $0x4a8] sm:$0xff]
        %v797 = vld [vmem:[%s529 + $0x4b0] sm:$0xff]
        %v798 = vld [vmem:[%s529 + $0x4b8] sm:$0xff]
        %v799 = vld [vmem:[%s529 + $0x4c0] sm:$0xff]
        %v800 = vld [vmem:[%s529 + $0x4c8] sm:$0xff]
        %v801 = vld [vmem:[%s529 + $0x4d0] sm:$0xff]
        %v802 = vld [vmem:[%s529 + $0x4d8] sm:$0xff]
        %v803 = vld [vmem:[%s529 + $0x4e0] sm:$0xff]
        %v804 = vld [vmem:[%s529 + $0x4e8] sm:$0xf]
        %v805 = vld [vmem:[%s529 + $0x4ec] sm:$0xff]
        %v806 = vld [vmem:[%s529 + $0x4f4] sm:$0xff]
        %v807 = vld [vmem:[%s529 + $0x4fc] sm:$0xff]
        %v808 = vld [vmem:[%s529 + $0x504] sm:$0xff]
        %v809 = vld [vmem:[%s529 + $0x50c] sm:$0xff]
        %v810 = vld [vmem:[%s529 + $0x514] sm:$0xff]
        %v811 = vld [vmem:[%s529 + $0x51c] sm:$0xff]
        %v812 = vld [vmem:[%s529 + $0x524] sm:$0xff]
        %v813 = vld [vmem:[%s529 + $0x52c] sm:$0xff]
        %v814 = vld [vmem:[%s529 + $0x534] sm:$0xff]
        %v815 = vld [vmem:[%s529 + $0x53c] sm:$0xf]
        %v816 = vld [vmem:[%s562] sm:$0xff]
        %v817 = vld [vmem:[%s562 + $0x8] sm:$0xff]
        %v818 = vld [vmem:[%s562 + $0x10] sm:$0xff]
        %v819 = vld [vmem:[%s562 + $0x18] sm:$0xff]
        %v820 = vld [vmem:[%s562 + $0x20] sm:$0xff]
        %v821 = vld [vmem:[%s562 + $0x28] sm:$0xff]
        %v822 = vld [vmem:[%s562 + $0x30] sm:$0xff]
        %v823 = vld [vmem:[%s562 + $0x38] sm:$0xff]
        %v824 = vld [vmem:[%s562 + $0x40] sm:$0xff]
        %v825 = vld [vmem:[%s562 + $0x48] sm:$0xff]
        %v826 = vld [vmem:[%s562 + $0x50] sm:$0xff]
        %v827 = vld [vmem:[%s562 + $0x58] sm:$0xff]
        %v828 = vld [vmem:[%s562 + $0x60] sm:$0xff]
        %v829 = vld [vmem:[%s562 + $0x68] sm:$0xff]
        %v830 = vld [vmem:[%s562 + $0x70] sm:$0xff]
        %v831 = vld [vmem:[%s562 + $0x78] sm:$0xff]
        %v832 = vld [vmem:[%s562 + $0x80] sm:$0xff]
        %v833 = vld [vmem:[%s562 + $0x88] sm:$0xff]
        %v834 = vld [vmem:[%s562 + $0x90] sm:$0xff]
        %v835 = vld [vmem:[%s562 + $0x98] sm:$0xff]
        %v836 = vld [vmem:[%s562 + $0xa0] sm:$0xff]
        %v837 = vld [vmem:[%s562 + $0xa8] sm:$0xff]
        %v838 = vld [vmem:[%s562 + $0xb0] sm:$0xff]
        %v839 = vld [vmem:[%s562 + $0xb8] sm:$0xff]
        %v840 = vld [vmem:[%s562 + $0xc0] sm:$0xff]
        %v841 = vld [vmem:[%s562 + $0xc8] sm:$0xff]
        %v842 = vld [vmem:[%s562 + $0xd0] sm:$0xff]
        %v843 = vld [vmem:[%s562 + $0xd8] sm:$0xff]
        %v844 = vld [vmem:[%s562 + $0xe0] sm:$0xff]
        %v845 = vld [vmem:[%s562 + $0xe8] sm:$0xff]
        %v846 = vld [vmem:[%s562 + $0xf0] sm:$0xff]
        %v847 = vld [vmem:[%s562 + $0xf8] sm:$0xff]
        %v848 = vld [vmem:[%s562 + $0x100] sm:$0xff]
        %v849 = vld [vmem:[%s562 + $0x108] sm:$0xff]
        %v850 = vld [vmem:[%s562 + $0x110] sm:$0xff]
        %v851 = vld [vmem:[%s562 + $0x118] sm:$0xff]
        %v852 = vld [vmem:[%s562 + $0x120] sm:$0xff]
        %v853 = vld [vmem:[%s562 + $0x128] sm:$0xff]
        %v854 = vld [vmem:[%s562 + $0x130] sm:$0xff]
        %v855 = vld [vmem:[%s562 + $0x138] sm:$0xff]
        %v856 = vld [vmem:[%s562 + $0x140] sm:$0xff]
        %v857 = vld [vmem:[%s562 + $0x148] sm:$0xff]
        %v858 = vld [vmem:[%s562 + $0x150] sm:$0xff]
        %v859 = vld [vmem:[%s562 + $0x158] sm:$0xff]
        %v860 = vld [vmem:[%s562 + $0x160] sm:$0xff]
        %v861 = vld [vmem:[%s562 + $0x168] sm:$0xff]
        %v862 = vld [vmem:[%s562 + $0x170] sm:$0xff]
        %v863 = vld [vmem:[%s562 + $0x178] sm:$0xff]
        %v864 = vld [vmem:[%s562 + $0x180] sm:$0xff]
        %v865 = vld [vmem:[%s562 + $0x188] sm:$0xff]
        %v866 = vld [vmem:[%s562 + $0x190] sm:$0xff]
        %v867 = vld [vmem:[%s562 + $0x198] sm:$0xff]
        %v868 = vld [vmem:[%s562 + $0x1a0] sm:$0xff]
        %v869 = vld [vmem:[%s562 + $0x1a8] sm:$0xff]
        %v870 = vld [vmem:[%s562 + $0x1b0] sm:$0xff]
        %v871 = vld [vmem:[%s562 + $0x1b8] sm:$0xff]
        %v872 = vld [vmem:[%s562 + $0x1c0] sm:$0xff]
        %v873 = vld [vmem:[%s562 + $0x1c8] sm:$0xff]
        %v874 = vld [vmem:[%s562 + $0x1d0] sm:$0xff]
        %v875 = vld [vmem:[%s562 + $0x1d8] sm:$0xff]
        %v876 = vld [vmem:[%s562 + $0x1e0] sm:$0xff]
        %v877 = vld [vmem:[%s562 + $0x1e8] sm:$0xff]
        %v878 = vld [vmem:[%s562 + $0x1f0] sm:$0xff]
        %v879 = vld [vmem:[%s562 + $0x1f8] sm:$0xff]
        %v880 = vld [vmem:[%s562 + $0x200] sm:$0xff]
        %v881 = vld [vmem:[%s562 + $0x208] sm:$0xff]
        %v882 = vld [vmem:[%s562 + $0x210] sm:$0xff]
        %v883 = vld [vmem:[%s562 + $0x218] sm:$0xff]
        %v884 = vld [vmem:[%s562 + $0x220] sm:$0xff]
        %v885 = vld [vmem:[%s562 + $0x228] sm:$0xff]
        %v886 = vld [vmem:[%s562 + $0x230] sm:$0xff]
        %v887 = vld [vmem:[%s562 + $0x238] sm:$0xff]
        %v888 = vld [vmem:[%s562 + $0x240] sm:$0xff]
        %v889 = vld [vmem:[%s562 + $0x248] sm:$0xff]
        %v890 = vld [vmem:[%s562 + $0x250] sm:$0xff]
        %v891 = vld [vmem:[%s562 + $0x258] sm:$0xff]
        %v892 = vld [vmem:[%s562 + $0x260] sm:$0xff]
        %v893 = vld [vmem:[%s562 + $0x268] sm:$0xff]
        %v894 = vld [vmem:[%s562 + $0x270] sm:$0xff]
        %v895 = vld [vmem:[%s562 + $0x278] sm:$0xff]
        %v896 = vld [vmem:[%s562 + $0x280] sm:$0xff]
        %v897 = vld [vmem:[%s562 + $0x288] sm:$0xff]
        %v898 = vld [vmem:[%s562 + $0x290] sm:$0xff]
        %v899 = vld [vmem:[%s562 + $0x298] sm:$0xff]
        %v900 = vld [vmem:[%s562 + $0x2a0] sm:$0xff]
        %v901 = vld [vmem:[%s562 + $0x2a8] sm:$0xff]
        %v902 = vld [vmem:[%s562 + $0x2b0] sm:$0xff]
        %v903 = vld [vmem:[%s562 + $0x2b8] sm:$0xff]
        %v904 = vld [vmem:[%s562 + $0x2c0] sm:$0xff]
        %v905 = vld [vmem:[%s562 + $0x2c8] sm:$0xff]
        %v906 = vld [vmem:[%s562 + $0x2d0] sm:$0xff]
        %v907 = vld [vmem:[%s562 + $0x2d8] sm:$0xff]
        %v908 = vld [vmem:[%s562 + $0x2e0] sm:$0xff]
        %v909 = vld [vmem:[%s562 + $0x2e8] sm:$0xff]
        %v910 = vld [vmem:[%s562 + $0x2f0] sm:$0xff]
        %v911 = vld [vmem:[%s562 + $0x2f8] sm:$0xff]
        %v912 = vld [vmem:[%s562 + $0x300] sm:$0xff]
        %v913 = vld [vmem:[%s562 + $0x308] sm:$0xff]
        %v914 = vld [vmem:[%s562 + $0x310] sm:$0xff]
        %v915 = vld [vmem:[%s562 + $0x318] sm:$0xff]
        %v916 = vld [vmem:[%s562 + $0x320] sm:$0xff]
        %v917 = vld [vmem:[%s562 + $0x328] sm:$0xff]
        %v918 = vld [vmem:[%s562 + $0x330] sm:$0xff]
        %v919 = vld [vmem:[%s562 + $0x338] sm:$0xff]
        %v920 = vld [vmem:[%s562 + $0x340] sm:$0xff]
        %v921 = vld [vmem:[%s562 + $0x348] sm:$0xff]
        %v922 = vld [vmem:[%s562 + $0x350] sm:$0xff]
        %v923 = vld [vmem:[%s562 + $0x358] sm:$0xff]
        %v924 = vld [vmem:[%s562 + $0x360] sm:$0xff]
        %v925 = vld [vmem:[%s562 + $0x368] sm:$0xff]
        %v926 = vld [vmem:[%s562 + $0x370] sm:$0xff]
        %v927 = vld [vmem:[%s562 + $0x378] sm:$0xff]
        %v928 = vld [vmem:[%s562 + $0x380] sm:$0xff]
        %v929 = vld [vmem:[%s562 + $0x388] sm:$0xff]
        %v930 = vld [vmem:[%s562 + $0x390] sm:$0xff]
        %v931 = vld [vmem:[%s562 + $0x398] sm:$0xff]
        %v932 = vld [vmem:[%s562 + $0x3a0] sm:$0xff]
        %v933 = vld [vmem:[%s562 + $0x3a8] sm:$0xff]
        %v934 = vld [vmem:[%s562 + $0x3b0] sm:$0xff]
        %v935 = vld [vmem:[%s562 + $0x3b8] sm:$0xff]
        %v936 = vld [vmem:[%s562 + $0x3c0] sm:$0xff]
        %v937 = vld [vmem:[%s562 + $0x3c8] sm:$0xff]
        %v938 = vld [vmem:[%s562 + $0x3d0] sm:$0xff]
        %v939 = vld [vmem:[%s562 + $0x3d8] sm:$0xff]
        %v940 = vld [vmem:[%s562 + $0x3e0] sm:$0xff]
        %v941 = vld [vmem:[%s562 + $0x3e8] sm:$0xff]
        %v942 = vld [vmem:[%s562 + $0x3f0] sm:$0xff]
        %v943 = vld [vmem:[%s562 + $0x3f8] sm:$0xff]
        %v944 = vld [vmem:[%s562 + $0x400] sm:$0xff]
        %v945 = vld [vmem:[%s562 + $0x408] sm:$0xff]
        %v946 = vld [vmem:[%s562 + $0x410] sm:$0xff]
        %v947 = vld [vmem:[%s562 + $0x418] sm:$0xff]
        %v948 = vld [vmem:[%s562 + $0x420] sm:$0xff]
        %v949 = vld [vmem:[%s562 + $0x428] sm:$0xff]
        %v950 = vld [vmem:[%s562 + $0x430] sm:$0xff]
        %v951 = vld [vmem:[%s562 + $0x438] sm:$0xff]
        %v952 = vld [vmem:[%s562 + $0x440] sm:$0xff]
        %v953 = vld [vmem:[%s562 + $0x448] sm:$0xff]
        %v954 = vld [vmem:[%s562 + $0x450] sm:$0xff]
        %v955 = vld [vmem:[%s562 + $0x458] sm:$0xff]
        %v956 = vld [vmem:[%s562 + $0x460] sm:$0xff]
        %v957 = vld [vmem:[%s562 + $0x468] sm:$0xff]
        %v958 = vld [vmem:[%s562 + $0x470] sm:$0xff]
        %v959 = vld [vmem:[%s562 + $0x478] sm:$0xff]
        %v960 = vld [vmem:[%s562 + $0x480] sm:$0xff]
        %v961 = vld [vmem:[%s562 + $0x488] sm:$0xff]
        %v962 = vld [vmem:[%s562 + $0x490] sm:$0xff]
        %v963 = vld [vmem:[%s562 + $0x498] sm:$0xff]
        %v964 = vld [vmem:[%s562 + $0x4a0] sm:$0xff]
        %v965 = vld [vmem:[%s562 + $0x4a8] sm:$0xff]
        %v966 = vld [vmem:[%s562 + $0x4b0] sm:$0xff]
        %v967 = vld [vmem:[%s562 + $0x4b8] sm:$0xff]
        %v968 = vld [vmem:[%s562 + $0x4c0] sm:$0xff]
        %v969 = vld [vmem:[%s562 + $0x4c8] sm:$0xff]
        %v970 = vld [vmem:[%s562 + $0x4d0] sm:$0xff]
        %v971 = vld [vmem:[%s562 + $0x4d8] sm:$0xff]
        %v972 = vld [vmem:[%s562 + $0x4e0] sm:$0xff]
        %v973 = vld [vmem:[%s562 + $0x4e8] sm:$0xff]
        %v974 = vld [vmem:[%s562 + $0x4f0] sm:$0xff]
        %v975 = vld [vmem:[%s562 + $0x4f8] sm:$0xff]
        %v976 = vld [vmem:[%s562 + $0x500] sm:$0xff]
        %v977 = vld [vmem:[%s562 + $0x508] sm:$0xff]
        %v978 = vld [vmem:[%s562 + $0x510] sm:$0xff]
        %v979 = vld [vmem:[%s562 + $0x518] sm:$0xff]
        %v980 = vld [vmem:[%s562 + $0x520] sm:$0xff]
        %v981 = vld [vmem:[%s562 + $0x528] sm:$0xff]
        %v982 = vld [vmem:[%s562 + $0x530] sm:$0xff]
        %v983 = vld [vmem:[%s562 + $0x538] sm:$0xff]
        %v984 = vld [vmem:[%s562 + $0x540] sm:$0xff]
        %v985 = vld [vmem:[%s562 + $0x548] sm:$0xff]
        %v986 = vld [vmem:[%s562 + $0x550] sm:$0xff]
        %v987 = vld [vmem:[%s562 + $0x558] sm:$0xff]
        %v988 = vld [vmem:[%s562 + $0x560] sm:$0xff]
        %v989 = vld [vmem:[%s562 + $0x568] sm:$0xff]
        %v990 = vld [vmem:[%s562 + $0x570] sm:$0xff]
        %v991 = vld [vmem:[%s562 + $0x578] sm:$0xff]
        %v992 = vld [vmem:[%s562 + $0x580] sm:$0xff]
        %v993 = vld [vmem:[%s562 + $0x588] sm:$0xff]
        %v994 = vld [vmem:[%s562 + $0x590] sm:$0xff]
        %v995 = vld [vmem:[%s562 + $0x598] sm:$0xff]
        %v996 = vld [vmem:[%s562 + $0x5a0] sm:$0xff]
        %v997 = vld [vmem:[%s562 + $0x5a8] sm:$0xff]
        %v998 = vld [vmem:[%s562 + $0x5b0] sm:$0xff]
        %v999 = vld [vmem:[%s562 + $0x5b8] sm:$0xff]
        %v1000 = vld [vmem:[%s562 + $0x5c0] sm:$0xff]
        %v1001 = vld [vmem:[%s562 + $0x5c8] sm:$0xff]
        %v1002 = vld [vmem:[%s562 + $0x5d0] sm:$0xff]
        %v1003 = vld [vmem:[%s562 + $0x5d8] sm:$0xff]
        %v1004 = vld [vmem:[%s562 + $0x5e0] sm:$0xff]
        %v1005 = vld [vmem:[%s562 + $0x5e8] sm:$0xff]
        %v1006 = vld [vmem:[%s562 + $0x5f0] sm:$0xff]
        %v1007 = vld [vmem:[%s562 + $0x5f8] sm:$0xff]
        %v1008 = vld [vmem:[%s562 + $0x600] sm:$0xff]
        %v1009 = vld [vmem:[%s562 + $0x608] sm:$0xff]
        %v1010 = vld [vmem:[%s562 + $0x610] sm:$0xff]
        %v1011 = vld [vmem:[%s562 + $0x618] sm:$0xff]
        %v1012 = vld [vmem:[%s562 + $0x620] sm:$0xff]
        %v1013 = vld [vmem:[%s562 + $0x628] sm:$0xff]
        %v1014 = vld [vmem:[%s562 + $0x630] sm:$0xff]
        %v1015 = vld [vmem:[%s562 + $0x638] sm:$0xff]
        %v1016 = vld [vmem:[%s562 + $0x640] sm:$0xff]
        %v1017 = vld [vmem:[%s562 + $0x648] sm:$0xff]
        %v1018 = vld [vmem:[%s562 + $0x650] sm:$0xff]
        %v1019 = vld [vmem:[%s562 + $0x658] sm:$0xff]
        %v1020 = vld [vmem:[%s562 + $0x660] sm:$0xff]
        %v1021 = vld [vmem:[%s562 + $0x668] sm:$0xff]
        %v1022 = vld [vmem:[%s562 + $0x670] sm:$0xff]
        %v1023 = vld [vmem:[%s562 + $0x678] sm:$0xff]
        %v1024 = vld [vmem:[%s562 + $0x680] sm:$0xff]
        %v1025 = vld [vmem:[%s562 + $0x688] sm:$0xff]
        %v1026 = vld [vmem:[%s562 + $0x690] sm:$0xff]
        %v1027 = vld [vmem:[%s562 + $0x698] sm:$0xff]
        %v1028 = vld [vmem:[%s562 + $0x6a0] sm:$0xff]
        %v1029 = vld [vmem:[%s562 + $0x6a8] sm:$0xff]
        %v1030 = vld [vmem:[%s562 + $0x6b0] sm:$0xff]
        %v1031 = vld [vmem:[%s562 + $0x6b8] sm:$0xff]
        %v1032 = vld [vmem:[%s562 + $0x6c0] sm:$0xff]
        %v1033 = vld [vmem:[%s562 + $0x6c8] sm:$0xff]
        %v1034 = vld [vmem:[%s562 + $0x6d0] sm:$0xff]
        %v1035 = vld [vmem:[%s562 + $0x6d8] sm:$0xff]
        %v1036 = vld [vmem:[%s562 + $0x6e0] sm:$0xff]
        %v1037 = vld [vmem:[%s562 + $0x6e8] sm:$0xff]
        %v1038 = vld [vmem:[%s562 + $0x6f0] sm:$0xff]
        %v1039 = vld [vmem:[%s562 + $0x6f8] sm:$0xff]
        %v1040 = vld [vmem:[%s562 + $0x700] sm:$0xff]
        %v1041 = vld [vmem:[%s562 + $0x708] sm:$0xff]
        %v1042 = vld [vmem:[%s562 + $0x710] sm:$0xff]
        %v1043 = vld [vmem:[%s562 + $0x718] sm:$0xff]
        %v1044 = vld [vmem:[%s562 + $0x720] sm:$0xff]
        %v1045 = vld [vmem:[%s562 + $0x728] sm:$0xff]
        %v1046 = vld [vmem:[%s562 + $0x730] sm:$0xff]
        %v1047 = vld [vmem:[%s562 + $0x738] sm:$0xff]
        %v1048 = vld [vmem:[%s562 + $0x740] sm:$0xff]
        %v1049 = vld [vmem:[%s562 + $0x748] sm:$0xff]
        %v1050 = vld [vmem:[%s562 + $0x750] sm:$0xff]
        %v1051 = vld [vmem:[%s562 + $0x758] sm:$0xff]
        %v1052 = vld [vmem:[%s562 + $0x760] sm:$0xff]
        %v1053 = vld [vmem:[%s562 + $0x768] sm:$0xff]
        %v1054 = vld [vmem:[%s562 + $0x770] sm:$0xff]
        %v1055 = vld [vmem:[%s562 + $0x778] sm:$0xff]
        %v1056 = vld [vmem:[%s562 + $0x780] sm:$0xff]
        %v1057 = vld [vmem:[%s562 + $0x788] sm:$0xff]
        %v1058 = vld [vmem:[%s562 + $0x790] sm:$0xff]
        %v1059 = vld [vmem:[%s562 + $0x798] sm:$0xff]
        %v1060 = vld [vmem:[%s562 + $0x7a0] sm:$0xff]
        %v1061 = vld [vmem:[%s562 + $0x7a8] sm:$0xff]
        %v1062 = vld [vmem:[%s562 + $0x7b0] sm:$0xff]
        %v1063 = vld [vmem:[%s562 + $0x7b8] sm:$0xff]
        %v1064 = vld [vmem:[%s562 + $0x7c0] sm:$0xff]
        %v1065 = vld [vmem:[%s562 + $0x7c8] sm:$0xff]
        %v1066 = vld [vmem:[%s562 + $0x7d0] sm:$0xff]
        %v1067 = vld [vmem:[%s562 + $0x7d8] sm:$0xff]
        %v1068 = vld [vmem:[%s562 + $0x7e0] sm:$0xff]
        %v1069 = vld [vmem:[%s562 + $0x7e8] sm:$0xff]
        %v1070 = vld [vmem:[%s562 + $0x7f0] sm:$0xff]
        %v1071 = vld [vmem:[%s562 + $0x7f8] sm:$0xff]
        %v1072 = vld [vmem:[%s562 + $0x800] sm:$0xff]
        %v1073 = vld [vmem:[%s562 + $0x808] sm:$0xff]
        %v1074 = vld [vmem:[%s562 + $0x810] sm:$0xff]
        %v1075 = vld [vmem:[%s562 + $0x818] sm:$0xff]
        %v1076 = vld [vmem:[%s562 + $0x820] sm:$0xff]
        %v1077 = vld [vmem:[%s562 + $0x828] sm:$0xff]
        %v1078 = vld [vmem:[%s562 + $0x830] sm:$0xff]
        %v1079 = vld [vmem:[%s562 + $0x838] sm:$0xff]
        %v1080 = vld [vmem:[%s562 + $0x840] sm:$0xff]
        %v1081 = vld [vmem:[%s562 + $0x848] sm:$0xff]
        %v1082 = vld [vmem:[%s562 + $0x850] sm:$0xff]
        %v1083 = vld [vmem:[%s562 + $0x858] sm:$0xff]
        %v1084 = vld [vmem:[%s562 + $0x860] sm:$0xff]
        %v1085 = vld [vmem:[%s562 + $0x868] sm:$0xff]
        %v1086 = vld [vmem:[%s562 + $0x870] sm:$0xff]
        %v1087 = vld [vmem:[%s562 + $0x878] sm:$0xff]
        %v1088 = vld [vmem:[%s562 + $0x880] sm:$0xff]
        %v1089 = vld [vmem:[%s562 + $0x888] sm:$0xff]
        %v1090 = vld [vmem:[%s562 + $0x890] sm:$0xff]
        %v1091 = vld [vmem:[%s562 + $0x898] sm:$0xff]
        %v1092 = vld [vmem:[%s562 + $0x8a0] sm:$0xff]
        %v1093 = vld [vmem:[%s562 + $0x8a8] sm:$0xff]
        %v1094 = vld [vmem:[%s562 + $0x8b0] sm:$0xff]
        %v1095 = vld [vmem:[%s562 + $0x8b8] sm:$0xff]
        %v1096 = vld [vmem:[%s562 + $0x8c0] sm:$0xff]
        %v1097 = vld [vmem:[%s562 + $0x8c8] sm:$0xff]
        %v1098 = vld [vmem:[%s562 + $0x8d0] sm:$0xff]
        %v1099 = vld [vmem:[%s562 + $0x8d8] sm:$0xff]
        %v1100 = vld [vmem:[%s562 + $0x8e0] sm:$0xff]
        %v1101 = vld [vmem:[%s562 + $0x8e8] sm:$0xff]
        %v1102 = vld [vmem:[%s562 + $0x8f0] sm:$0xff]
        %v1103 = vld [vmem:[%s562 + $0x8f8] sm:$0xff]
        %v1104 = vld [vmem:[%s562 + $0x900] sm:$0xff]
        %v1105 = vld [vmem:[%s562 + $0x908] sm:$0xff]
        %v1106 = vld [vmem:[%s562 + $0x910] sm:$0xff]
        %v1107 = vld [vmem:[%s562 + $0x918] sm:$0xff]
        %v1108 = vld [vmem:[%s562 + $0x920] sm:$0xff]
        %v1109 = vld [vmem:[%s562 + $0x928] sm:$0xff]
        %v1110 = vld [vmem:[%s562 + $0x930] sm:$0xff]
        %v1111 = vld [vmem:[%s562 + $0x938] sm:$0xff]
        %v1112 = vld [vmem:[%s562 + $0x940] sm:$0xff]
        %v1113 = vld [vmem:[%s562 + $0x948] sm:$0xff]
        %v1114 = vld [vmem:[%s562 + $0x950] sm:$0xff]
        %v1115 = vld [vmem:[%s562 + $0x958] sm:$0xff]
        %v1116 = vld [vmem:[%s562 + $0x960] sm:$0xff]
        %v1117 = vld [vmem:[%s562 + $0x968] sm:$0xff]
        %v1118 = vld [vmem:[%s562 + $0x970] sm:$0xff]
        %v1119 = vld [vmem:[%s562 + $0x978] sm:$0xff]
        %v1120 = vld [vmem:[%s562 + $0x980] sm:$0xff]
        %v1121 = vld [vmem:[%s562 + $0x988] sm:$0xff]
        %v1122 = vld [vmem:[%s562 + $0x990] sm:$0xff]
        %v1123 = vld [vmem:[%s562 + $0x998] sm:$0xff]
        %v1124 = vld [vmem:[%s562 + $0x9a0] sm:$0xff]
        %v1125 = vld [vmem:[%s562 + $0x9a8] sm:$0xff]
        %v1126 = vld [vmem:[%s562 + $0x9b0] sm:$0xff]
        %v1127 = vld [vmem:[%s562 + $0x9b8] sm:$0xff]
        %v1128 = vld [vmem:[%s562 + $0x9c0] sm:$0xff]
        %v1129 = vld [vmem:[%s562 + $0x9c8] sm:$0xff]
        %v1130 = vld [vmem:[%s562 + $0x9d0] sm:$0xff]
        %v1131 = vld [vmem:[%s562 + $0x9d8] sm:$0xff]
        %v1132 = vld [vmem:[%s562 + $0x9e0] sm:$0xff]
        %v1133 = vld [vmem:[%s562 + $0x9e8] sm:$0xff]
        %v1134 = vld [vmem:[%s562 + $0x9f0] sm:$0xff]
        %v1135 = vld [vmem:[%s562 + $0x9f8] sm:$0xff]
        %v1136 = vld [vmem:[%s562 + $0xa00] sm:$0xff]
        %v1137 = vld [vmem:[%s562 + $0xa08] sm:$0xff]
        %v1138 = vld [vmem:[%s562 + $0xa10] sm:$0xff]
        %v1139 = vld [vmem:[%s562 + $0xa18] sm:$0xff]
        %v1140 = vld [vmem:[%s562 + $0xa20] sm:$0xff]
        %v1141 = vld [vmem:[%s562 + $0xa28] sm:$0xff]
        %v1142 = vld [vmem:[%s562 + $0xa30] sm:$0xff]
        %v1143 = vld [vmem:[%s562 + $0xa38] sm:$0xff]
        %v1144 = vld [vmem:[%s562 + $0xa40] sm:$0xff]
        %v1145 = vld [vmem:[%s562 + $0xa48] sm:$0xff]
        %v1146 = vld [vmem:[%s562 + $0xa50] sm:$0xff]
        %v1147 = vld [vmem:[%s562 + $0xa58] sm:$0xff]
        %v1148 = vld [vmem:[%s562 + $0xa60] sm:$0xff]
        %v1149 = vld [vmem:[%s562 + $0xa68] sm:$0xff]
        %v1150 = vld [vmem:[%s562 + $0xa70] sm:$0xff]
        %v1151 = vld [vmem:[%s562 + $0xa78] sm:$0xff]
        %v1328 = vunpack.c.l.b16 %v640
        %v1329 = vunpack.c.h.b16 %v640
        %v1330 = vunpack.c.l.b16 %v641
        %v1331 = vunpack.c.h.b16 %v641
        %v1332 = vunpack.c.l.b16 %v642
        %v1333 = vunpack.c.h.b16 %v642
        %v1334 = vunpack.c.l.b16 %v643
        %v1335 = vunpack.c.h.b16 %v643
        %v1336 = vunpack.c.l.b16 %v644
        %v1337 = vunpack.c.h.b16 %v644
        %v1338 = vunpack.c.l.b16 %v645
        %v1339 = vunpack.c.h.b16 %v645
        %v1340 = vunpack.c.l.b16 %v646
        %v1341 = vunpack.c.h.b16 %v646
        %v1342 = vunpack.c.l.b16 %v647
        %v1343 = vunpack.c.h.b16 %v647
        %v1344 = vunpack.c.l.b16 %v648
        %v1345 = vunpack.c.h.b16 %v648
        %v1346 = vunpack.c.l.b16 %v649
        %v1347 = vunpack.c.h.b16 %v649
        %v1348 = vunpack.c.l.b16 %v650
        %v1349 = vunpack.c.l.b16 %v651
        %v1350 = vunpack.c.h.b16 %v651
        %v1351 = vunpack.c.l.b16 %v652
        %v1352 = vunpack.c.h.b16 %v652
        %v1353 = vunpack.c.l.b16 %v653
        %v1354 = vunpack.c.h.b16 %v653
        %v1355 = vunpack.c.l.b16 %v654
        %v1356 = vunpack.c.h.b16 %v654
        %v1357 = vunpack.c.l.b16 %v655
        %v1358 = vunpack.c.h.b16 %v655
        %v1359 = vunpack.c.l.b16 %v656
        %v1360 = vunpack.c.h.b16 %v656
        %v1361 = vunpack.c.l.b16 %v657
        %v1362 = vunpack.c.h.b16 %v657
        %v1363 = vunpack.c.l.b16 %v658
        %v1364 = vunpack.c.h.b16 %v658
        %v1365 = vunpack.c.l.b16 %v659
        %v1366 = vunpack.c.h.b16 %v659
        %v1367 = vunpack.c.l.b16 %v660
        %v1368 = vunpack.c.h.b16 %v660
        %v1369 = vunpack.c.l.b16 %v661
        %v1370 = vunpack.c.l.b16 %v662
        %v1371 = vunpack.c.h.b16 %v662
        %v1372 = vunpack.c.l.b16 %v663
        %v1373 = vunpack.c.h.b16 %v663
        %v1374 = vunpack.c.l.b16 %v664
        %v1375 = vunpack.c.h.b16 %v664
        %v1376 = vunpack.c.l.b16 %v665
        %v1377 = vunpack.c.h.b16 %v665
        %v1378 = vunpack.c.l.b16 %v666
        %v1379 = vunpack.c.h.b16 %v666
        %v1380 = vunpack.c.l.b16 %v667
        %v1381 = vunpack.c.h.b16 %v667
        %v1382 = vunpack.c.l.b16 %v668
        %v1383 = vunpack.c.h.b16 %v668
        %v1384 = vunpack.c.l.b16 %v669
        %v1385 = vunpack.c.h.b16 %v669
        %v1386 = vunpack.c.l.b16 %v670
        %v1387 = vunpack.c.h.b16 %v670
        %v1388 = vunpack.c.l.b16 %v671
        %v1389 = vunpack.c.h.b16 %v671
        %v1390 = vunpack.c.l.b16 %v672
        %v1391 = vunpack.c.l.b16 %v673
        %v1392 = vunpack.c.h.b16 %v673
        %v1393 = vunpack.c.l.b16 %v674
        %v1394 = vunpack.c.h.b16 %v674
        %v1395 = vunpack.c.l.b16 %v675
        %v1396 = vunpack.c.h.b16 %v675
        %v1397 = vunpack.c.l.b16 %v676
        %v1398 = vunpack.c.h.b16 %v676
        %v1399 = vunpack.c.l.b16 %v677
        %v1400 = vunpack.c.h.b16 %v677
        %v1401 = vunpack.c.l.b16 %v678
        %v1402 = vunpack.c.h.b16 %v678
        %v1403 = vunpack.c.l.b16 %v679
        %v1404 = vunpack.c.h.b16 %v679
        %v1405 = vunpack.c.l.b16 %v680
        %v1406 = vunpack.c.h.b16 %v680
        %v1407 = vunpack.c.l.b16 %v681
        %v1408 = vunpack.c.h.b16 %v681
        %v1409 = vunpack.c.l.b16 %v682
        %v1410 = vunpack.c.h.b16 %v682
        %v1411 = vunpack.c.l.b16 %v683
        %v1412 = vunpack.c.l.b16 %v684
        %v1413 = vunpack.c.h.b16 %v684
        %v1414 = vunpack.c.l.b16 %v685
        %v1415 = vunpack.c.h.b16 %v685
        %v1416 = vunpack.c.l.b16 %v686
        %v1417 = vunpack.c.h.b16 %v686
        %v1418 = vunpack.c.l.b16 %v687
        %v1419 = vunpack.c.h.b16 %v687
        %v1420 = vunpack.c.l.b16 %v688
        %v1421 = vunpack.c.h.b16 %v688
        %v1422 = vunpack.c.l.b16 %v689
        %v1423 = vunpack.c.h.b16 %v689
        %v1424 = vunpack.c.l.b16 %v690
        %v1425 = vunpack.c.h.b16 %v690
        %v1426 = vunpack.c.l.b16 %v691
        %v1427 = vunpack.c.h.b16 %v691
        %v1428 = vunpack.c.l.b16 %v692
        %v1429 = vunpack.c.h.b16 %v692
        %v1430 = vunpack.c.l.b16 %v693
        %v1431 = vunpack.c.h.b16 %v693
        %v1432 = vunpack.c.l.b16 %v694
        %v1433 = vunpack.c.l.b16 %v695
        %v1434 = vunpack.c.h.b16 %v695
        %v1435 = vunpack.c.l.b16 %v696
        %v1436 = vunpack.c.h.b16 %v696
        %v1437 = vunpack.c.l.b16 %v697
        %v1438 = vunpack.c.h.b16 %v697
        %v1439 = vunpack.c.l.b16 %v698
        %v1440 = vunpack.c.h.b16 %v698
        %v1441 = vunpack.c.l.b16 %v699
        %v1442 = vunpack.c.h.b16 %v699
        %v1443 = vunpack.c.l.b16 %v700
        %v1444 = vunpack.c.h.b16 %v700
        %v1445 = vunpack.c.l.b16 %v701
        %v1446 = vunpack.c.h.b16 %v701
        %v1447 = vunpack.c.l.b16 %v702
        %v1448 = vunpack.c.h.b16 %v702
        %v1449 = vunpack.c.l.b16 %v703
        %v1450 = vunpack.c.h.b16 %v703
        %v1451 = vunpack.c.l.b16 %v704
        %v1452 = vunpack.c.h.b16 %v704
        %v1453 = vunpack.c.l.b16 %v705
        %v1454 = vunpack.c.l.b16 %v706
        %v1455 = vunpack.c.h.b16 %v706
        %v1456 = vunpack.c.l.b16 %v707
        %v1457 = vunpack.c.h.b16 %v707
        %v1458 = vunpack.c.l.b16 %v708
        %v1459 = vunpack.c.h.b16 %v708
        %v1460 = vunpack.c.l.b16 %v709
        %v1461 = vunpack.c.h.b16 %v709
        %v1462 = vunpack.c.l.b16 %v710
        %v1463 = vunpack.c.h.b16 %v710
        %v1464 = vunpack.c.l.b16 %v711
        %v1465 = vunpack.c.h.b16 %v711
        %v1466 = vunpack.c.l.b16 %v712
        %v1467 = vunpack.c.h.b16 %v712
        %v1468 = vunpack.c.l.b16 %v713
        %v1469 = vunpack.c.h.b16 %v713
        %v1470 = vunpack.c.l.b16 %v714
        %v1471 = vunpack.c.h.b16 %v714
        %v1472 = vunpack.c.l.b16 %v715
        %v1473 = vunpack.c.h.b16 %v715
        %v1474 = vunpack.c.l.b16 %v716
        %v1475 = vunpack.c.l.b16 %v717
        %v1476 = vunpack.c.h.b16 %v717
        %v1477 = vunpack.c.l.b16 %v718
        %v1478 = vunpack.c.h.b16 %v718
        %v1479 = vunpack.c.l.b16 %v719
        %v1480 = vunpack.c.h.b16 %v719
        %v1481 = vunpack.c.l.b16 %v720
        %v1482 = vunpack.c.h.b16 %v720
        %v1483 = vunpack.c.l.b16 %v721
        %v1484 = vunpack.c.h.b16 %v721
        %v1485 = vunpack.c.l.b16 %v722
        %v1486 = vunpack.c.h.b16 %v722
        %v1487 = vunpack.c.l.b16 %v723
        %v1488 = vunpack.c.h.b16 %v723
        %v1489 = vunpack.c.l.b16 %v724
        %v1490 = vunpack.c.h.b16 %v724
        %v1491 = vunpack.c.l.b16 %v725
        %v1492 = vunpack.c.h.b16 %v725
        %v1493 = vunpack.c.l.b16 %v726
        %v1494 = vunpack.c.h.b16 %v726
        %v1495 = vunpack.c.l.b16 %v727
        %v1496 = vunpack.c.l.b16 %v728
        %v1497 = vunpack.c.h.b16 %v728
        %v1498 = vunpack.c.l.b16 %v729
        %v1499 = vunpack.c.h.b16 %v729
        %v1500 = vunpack.c.l.b16 %v730
        %v1501 = vunpack.c.h.b16 %v730
        %v1502 = vunpack.c.l.b16 %v731
        %v1503 = vunpack.c.h.b16 %v731
        %v1504 = vunpack.c.l.b16 %v732
        %v1505 = vunpack.c.h.b16 %v732
        %v1506 = vunpack.c.l.b16 %v733
        %v1507 = vunpack.c.h.b16 %v733
        %v1508 = vunpack.c.l.b16 %v734
        %v1509 = vunpack.c.h.b16 %v734
        %v1510 = vunpack.c.l.b16 %v735
        %v1511 = vunpack.c.h.b16 %v735
        %v1512 = vunpack.c.l.b16 %v736
        %v1513 = vunpack.c.h.b16 %v736
        %v1514 = vunpack.c.l.b16 %v737
        %v1515 = vunpack.c.h.b16 %v737
        %v1516 = vunpack.c.l.b16 %v738
        %v1517 = vunpack.c.l.b16 %v739
        %v1518 = vunpack.c.h.b16 %v739
        %v1519 = vunpack.c.l.b16 %v740
        %v1520 = vunpack.c.h.b16 %v740
        %v1521 = vunpack.c.l.b16 %v741
        %v1522 = vunpack.c.h.b16 %v741
        %v1523 = vunpack.c.l.b16 %v742
        %v1524 = vunpack.c.h.b16 %v742
        %v1525 = vunpack.c.l.b16 %v743
        %v1526 = vunpack.c.h.b16 %v743
        %v1527 = vunpack.c.l.b16 %v744
        %v1528 = vunpack.c.h.b16 %v744
        %v1529 = vunpack.c.l.b16 %v745
        %v1530 = vunpack.c.h.b16 %v745
        %v1531 = vunpack.c.l.b16 %v746
        %v1532 = vunpack.c.h.b16 %v746
        %v1533 = vunpack.c.l.b16 %v747
        %v1534 = vunpack.c.h.b16 %v747
        %v1535 = vunpack.c.l.b16 %v748
        %v1536 = vunpack.c.h.b16 %v748
        %v1537 = vunpack.c.l.b16 %v749
        %v1538 = vunpack.c.l.b16 %v750
        %v1539 = vunpack.c.h.b16 %v750
        %v1540 = vunpack.c.l.b16 %v751
        %v1541 = vunpack.c.h.b16 %v751
        %v1542 = vunpack.c.l.b16 %v752
        %v1543 = vunpack.c.h.b16 %v752
        %v1544 = vunpack.c.l.b16 %v753
        %v1545 = vunpack.c.h.b16 %v753
        %v1546 = vunpack.c.l.b16 %v754
        %v1547 = vunpack.c.h.b16 %v754
        %v1548 = vunpack.c.l.b16 %v755
        %v1549 = vunpack.c.h.b16 %v755
        %v1550 = vunpack.c.l.b16 %v756
        %v1551 = vunpack.c.h.b16 %v756
        %v1552 = vunpack.c.l.b16 %v757
        %v1553 = vunpack.c.h.b16 %v757
        %v1554 = vunpack.c.l.b16 %v758
        %v1555 = vunpack.c.h.b16 %v758
        %v1556 = vunpack.c.l.b16 %v759
        %v1557 = vunpack.c.h.b16 %v759
        %v1558 = vunpack.c.l.b16 %v760
        %v1559 = vunpack.c.l.b16 %v761
        %v1560 = vunpack.c.h.b16 %v761
        %v1561 = vunpack.c.l.b16 %v762
        %v1562 = vunpack.c.h.b16 %v762
        %v1563 = vunpack.c.l.b16 %v763
        %v1564 = vunpack.c.h.b16 %v763
        %v1565 = vunpack.c.l.b16 %v764
        %v1566 = vunpack.c.h.b16 %v764
        %v1567 = vunpack.c.l.b16 %v765
        %v1568 = vunpack.c.h.b16 %v765
        %v1569 = vunpack.c.l.b16 %v766
        %v1570 = vunpack.c.h.b16 %v766
        %v1571 = vunpack.c.l.b16 %v767
        %v1572 = vunpack.c.h.b16 %v767
        %v1573 = vunpack.c.l.b16 %v768
        %v1574 = vunpack.c.h.b16 %v768
        %v1575 = vunpack.c.l.b16 %v769
        %v1576 = vunpack.c.h.b16 %v769
        %v1577 = vunpack.c.l.b16 %v770
        %v1578 = vunpack.c.h.b16 %v770
        %v1579 = vunpack.c.l.b16 %v771
        %v1580 = vunpack.c.l.b16 %v772
        %v1581 = vunpack.c.h.b16 %v772
        %v1582 = vunpack.c.l.b16 %v773
        %v1583 = vunpack.c.h.b16 %v773
        %v1584 = vunpack.c.l.b16 %v774
        %v1585 = vunpack.c.h.b16 %v774
        %v1586 = vunpack.c.l.b16 %v775
        %v1587 = vunpack.c.h.b16 %v775
        %v1588 = vunpack.c.l.b16 %v776
        %v1589 = vunpack.c.h.b16 %v776
        %v1590 = vunpack.c.l.b16 %v777
        %v1591 = vunpack.c.h.b16 %v777
        %v1592 = vunpack.c.l.b16 %v778
        %v1593 = vunpack.c.h.b16 %v778
        %v1594 = vunpack.c.l.b16 %v779
        %v1595 = vunpack.c.h.b16 %v779
        %v1596 = vunpack.c.l.b16 %v780
        %v1597 = vunpack.c.h.b16 %v780
        %v1598 = vunpack.c.l.b16 %v781
        %v1599 = vunpack.c.h.b16 %v781
        %v1600 = vunpack.c.l.b16 %v782
        %v1601 = vunpack.c.l.b16 %v783
        %v1602 = vunpack.c.h.b16 %v783
        %v1603 = vunpack.c.l.b16 %v784
        %v1604 = vunpack.c.h.b16 %v784
        %v1605 = vunpack.c.l.b16 %v785
        %v1606 = vunpack.c.h.b16 %v785
        %v1607 = vunpack.c.l.b16 %v786
        %v1608 = vunpack.c.h.b16 %v786
        %v1609 = vunpack.c.l.b16 %v787
        %v1610 = vunpack.c.h.b16 %v787
        %v1611 = vunpack.c.l.b16 %v788
        %v1612 = vunpack.c.h.b16 %v788
        %v1613 = vunpack.c.l.b16 %v789
        %v1614 = vunpack.c.h.b16 %v789
        %v1615 = vunpack.c.l.b16 %v790
        %v1616 = vunpack.c.h.b16 %v790
        %v1617 = vunpack.c.l.b16 %v791
        %v1618 = vunpack.c.h.b16 %v791
        %v1619 = vunpack.c.l.b16 %v792
        %v1620 = vunpack.c.h.b16 %v792
        %v1621 = vunpack.c.l.b16 %v793
        %v1622 = vunpack.c.l.b16 %v794
        %v1623 = vunpack.c.h.b16 %v794
        %v1624 = vunpack.c.l.b16 %v795
        %v1625 = vunpack.c.h.b16 %v795
        %v1626 = vunpack.c.l.b16 %v796
        %v1627 = vunpack.c.h.b16 %v796
        %v1628 = vunpack.c.l.b16 %v797
        %v1629 = vunpack.c.h.b16 %v797
        %v1630 = vunpack.c.l.b16 %v798
        %v1631 = vunpack.c.h.b16 %v798
        %v1632 = vunpack.c.l.b16 %v799
        %v1633 = vunpack.c.h.b16 %v799
        %v1634 = vunpack.c.l.b16 %v800
        %v1635 = vunpack.c.h.b16 %v800
        %v1636 = vunpack.c.l.b16 %v801
        %v1637 = vunpack.c.h.b16 %v801
        %v1638 = vunpack.c.l.b16 %v802
        %v1639 = vunpack.c.h.b16 %v802
        %v1640 = vunpack.c.l.b16 %v803
        %v1641 = vunpack.c.h.b16 %v803
        %v1642 = vunpack.c.l.b16 %v804
        %v1643 = vunpack.c.l.b16 %v805
        %v1644 = vunpack.c.h.b16 %v805
        %v1645 = vunpack.c.l.b16 %v806
        %v1646 = vunpack.c.h.b16 %v806
        %v1647 = vunpack.c.l.b16 %v807
        %v1648 = vunpack.c.h.b16 %v807
        %v1649 = vunpack.c.l.b16 %v808
        %v1650 = vunpack.c.h.b16 %v808
        %v1651 = vunpack.c.l.b16 %v809
        %v1652 = vunpack.c.h.b16 %v809
        %v1653 = vunpack.c.l.b16 %v810
        %v1654 = vunpack.c.h.b16 %v810
        %v1655 = vunpack.c.l.b16 %v811
        %v1656 = vunpack.c.h.b16 %v811
        %v1657 = vunpack.c.l.b16 %v812
        %v1658 = vunpack.c.h.b16 %v812
        %v1659 = vunpack.c.l.b16 %v813
        %v1660 = vunpack.c.h.b16 %v813
        %v1661 = vunpack.c.l.b16 %v814
        %v1662 = vunpack.c.h.b16 %v814
        %v1663 = vunpack.c.l.b16 %v815
        %v1664 = vpack.c.b16 %v1349, %v1328
        %v1665 = vpack.c.b16 %v1350, %v1329
        %v1666 = vpack.c.b16 %v1351, %v1330
        %v1667 = vpack.c.b16 %v1352, %v1331
        %v1668 = vpack.c.b16 %v1353, %v1332
        %v1669 = vpack.c.b16 %v1354, %v1333
        %v1670 = vpack.c.b16 %v1355, %v1334
        %v1671 = vpack.c.b16 %v1356, %v1335
        %v1672 = vpack.c.b16 %v1357, %v1336
        %v1673 = vpack.c.b16 %v1358, %v1337
        %v1674 = vpack.c.b16 %v1359, %v1338
        %v1675 = vpack.c.b16 %v1360, %v1339
        %v1676 = vpack.c.b16 %v1361, %v1340
        %v1677 = vpack.c.b16 %v1362, %v1341
        %v1678 = vpack.c.b16 %v1363, %v1342
        %v1679 = vpack.c.b16 %v1364, %v1343
        %v1680 = vpack.c.b16 %v1365, %v1344
        %v1681 = vpack.c.b16 %v1366, %v1345
        %v1682 = vpack.c.b16 %v1367, %v1346
        %v1683 = vpack.c.b16 %v1368, %v1347
        %v1684 = vpack.c.b16 %v1369, %v1348
        %v1685 = vpack.c.b16 %v1391, %v1370
        %v1686 = vpack.c.b16 %v1392, %v1371
        %v1687 = vpack.c.b16 %v1393, %v1372
        %v1688 = vpack.c.b16 %v1394, %v1373
        %v1689 = vpack.c.b16 %v1395, %v1374
        %v1690 = vpack.c.b16 %v1396, %v1375
        %v1691 = vpack.c.b16 %v1397, %v1376
        %v1692 = vpack.c.b16 %v1398, %v1377
        %v1693 = vpack.c.b16 %v1399, %v1378
        %v1694 = vpack.c.b16 %v1400, %v1379
        %v1695 = vpack.c.b16 %v1401, %v1380
        %v1696 = vpack.c.b16 %v1402, %v1381
        %v1697 = vpack.c.b16 %v1403, %v1382
        %v1698 = vpack.c.b16 %v1404, %v1383
        %v1699 = vpack.c.b16 %v1405, %v1384
        %v1700 = vpack.c.b16 %v1406, %v1385
        %v1701 = vpack.c.b16 %v1407, %v1386
        %v1702 = vpack.c.b16 %v1408, %v1387
        %v1703 = vpack.c.b16 %v1409, %v1388
        %v1704 = vpack.c.b16 %v1410, %v1389
        %v1705 = vpack.c.b16 %v1411, %v1390
        %v1706 = vpack.c.b16 %v1433, %v1412
        %v1707 = vpack.c.b16 %v1434, %v1413
        %v1708 = vpack.c.b16 %v1435, %v1414
        %v1709 = vpack.c.b16 %v1436, %v1415
        %v1710 = vpack.c.b16 %v1437, %v1416
        %v1711 = vpack.c.b16 %v1438, %v1417
        %v1712 = vpack.c.b16 %v1439, %v1418
        %v1713 = vpack.c.b16 %v1440, %v1419
        %v1714 = vpack.c.b16 %v1441, %v1420
        %v1715 = vpack.c.b16 %v1442, %v1421
        %v1716 = vpack.c.b16 %v1443, %v1422
        %v1717 = vpack.c.b16 %v1444, %v1423
        %v1718 = vpack.c.b16 %v1445, %v1424
        %v1719 = vpack.c.b16 %v1446, %v1425
        %v1720 = vpack.c.b16 %v1447, %v1426
        %v1721 = vpack.c.b16 %v1448, %v1427
        %v1722 = vpack.c.b16 %v1449, %v1428
        %v1723 = vpack.c.b16 %v1450, %v1429
        %v1724 = vpack.c.b16 %v1451, %v1430
        %v1725 = vpack.c.b16 %v1452, %v1431
        %v1726 = vpack.c.b16 %v1453, %v1432
        %v1727 = vpack.c.b16 %v1475, %v1454
        %v1728 = vpack.c.b16 %v1476, %v1455
        %v1729 = vpack.c.b16 %v1477, %v1456
        %v1730 = vpack.c.b16 %v1478, %v1457
        %v1731 = vpack.c.b16 %v1479, %v1458
        %v1732 = vpack.c.b16 %v1480, %v1459
        %v1733 = vpack.c.b16 %v1481, %v1460
        %v1734 = vpack.c.b16 %v1482, %v1461
        %v1735 = vpack.c.b16 %v1483, %v1462
        %v1736 = vpack.c.b16 %v1484, %v1463
        %v1737 = vpack.c.b16 %v1485, %v1464
        %v1738 = vpack.c.b16 %v1486, %v1465
        %v1739 = vpack.c.b16 %v1487, %v1466
        %v1740 = vpack.c.b16 %v1488, %v1467
        %v1741 = vpack.c.b16 %v1489, %v1468
        %v1742 = vpack.c.b16 %v1490, %v1469
        %v1743 = vpack.c.b16 %v1491, %v1470
        %v1744 = vpack.c.b16 %v1492, %v1471
        %v1745 = vpack.c.b16 %v1493, %v1472
        %v1746 = vpack.c.b16 %v1494, %v1473
        %v1747 = vpack.c.b16 %v1495, %v1474
        %v1748 = vpack.c.b16 %v1517, %v1496
        %v1749 = vpack.c.b16 %v1518, %v1497
        %v1750 = vpack.c.b16 %v1519, %v1498
        %v1751 = vpack.c.b16 %v1520, %v1499
        %v1752 = vpack.c.b16 %v1521, %v1500
        %v1753 = vpack.c.b16 %v1522, %v1501
        %v1754 = vpack.c.b16 %v1523, %v1502
        %v1755 = vpack.c.b16 %v1524, %v1503
        %v1756 = vpack.c.b16 %v1525, %v1504
        %v1757 = vpack.c.b16 %v1526, %v1505
        %v1758 = vpack.c.b16 %v1527, %v1506
        %v1759 = vpack.c.b16 %v1528, %v1507
        %v1760 = vpack.c.b16 %v1529, %v1508
        %v1761 = vpack.c.b16 %v1530, %v1509
        %v1762 = vpack.c.b16 %v1531, %v1510
        %v1763 = vpack.c.b16 %v1532, %v1511
        %v1764 = vpack.c.b16 %v1533, %v1512
        %v1765 = vpack.c.b16 %v1534, %v1513
        %v1766 = vpack.c.b16 %v1535, %v1514
        %v1767 = vpack.c.b16 %v1536, %v1515
        %v1768 = vpack.c.b16 %v1537, %v1516
        %v1769 = vpack.c.b16 %v1559, %v1538
        %v1770 = vpack.c.b16 %v1560, %v1539
        %v1771 = vpack.c.b16 %v1561, %v1540
        %v1772 = vpack.c.b16 %v1562, %v1541
        %v1773 = vpack.c.b16 %v1563, %v1542
        %v1774 = vpack.c.b16 %v1564, %v1543
        %v1775 = vpack.c.b16 %v1565, %v1544
        %v1776 = vpack.c.b16 %v1566, %v1545
        %v1777 = vpack.c.b16 %v1567, %v1546
        %v1778 = vpack.c.b16 %v1568, %v1547
        %v1779 = vpack.c.b16 %v1569, %v1548
        %v1780 = vpack.c.b16 %v1570, %v1549
        %v1781 = vpack.c.b16 %v1571, %v1550
        %v1782 = vpack.c.b16 %v1572, %v1551
        %v1783 = vpack.c.b16 %v1573, %v1552
        %v1784 = vpack.c.b16 %v1574, %v1553
        %v1785 = vpack.c.b16 %v1575, %v1554
        %v1786 = vpack.c.b16 %v1576, %v1555
        %v1787 = vpack.c.b16 %v1577, %v1556
        %v1788 = vpack.c.b16 %v1578, %v1557
        %v1789 = vpack.c.b16 %v1579, %v1558
        %v1790 = vpack.c.b16 %v1601, %v1580
        %v1791 = vpack.c.b16 %v1602, %v1581
        %v1792 = vpack.c.b16 %v1603, %v1582
        %v1793 = vpack.c.b16 %v1604, %v1583
        %v1794 = vpack.c.b16 %v1605, %v1584
        %v1795 = vpack.c.b16 %v1606, %v1585
        %v1796 = vpack.c.b16 %v1607, %v1586
        %v1797 = vpack.c.b16 %v1608, %v1587
        %v1798 = vpack.c.b16 %v1609, %v1588
        %v1799 = vpack.c.b16 %v1610, %v1589
        %v1800 = vpack.c.b16 %v1611, %v1590
        %v1801 = vpack.c.b16 %v1612, %v1591
        %v1802 = vpack.c.b16 %v1613, %v1592
        %v1803 = vpack.c.b16 %v1614, %v1593
        %v1804 = vpack.c.b16 %v1615, %v1594
        %v1805 = vpack.c.b16 %v1616, %v1595
        %v1806 = vpack.c.b16 %v1617, %v1596
        %v1807 = vpack.c.b16 %v1618, %v1597
        %v1808 = vpack.c.b16 %v1619, %v1598
        %v1809 = vpack.c.b16 %v1620, %v1599
        %v1810 = vpack.c.b16 %v1621, %v1600
        %v1811 = vpack.c.b16 %v1643, %v1622
        %v1812 = vpack.c.b16 %v1644, %v1623
        %v1813 = vpack.c.b16 %v1645, %v1624
        %v1814 = vpack.c.b16 %v1646, %v1625
        %v1815 = vpack.c.b16 %v1647, %v1626
        %v1816 = vpack.c.b16 %v1648, %v1627
        %v1817 = vpack.c.b16 %v1649, %v1628
        %v1818 = vpack.c.b16 %v1650, %v1629
        %v1819 = vpack.c.b16 %v1651, %v1630
        %v1820 = vpack.c.b16 %v1652, %v1631
        %v1821 = vpack.c.b16 %v1653, %v1632
        %v1822 = vpack.c.b16 %v1654, %v1633
        %v1823 = vpack.c.b16 %v1655, %v1634
        %v1824 = vpack.c.b16 %v1656, %v1635
        %v1825 = vpack.c.b16 %v1657, %v1636
        %v1826 = vpack.c.b16 %v1658, %v1637
        %v1827 = vpack.c.b16 %v1659, %v1638
        %v1828 = vpack.c.b16 %v1660, %v1639
        %v1829 = vpack.c.b16 %v1661, %v1640
        %v1830 = vpack.c.b16 %v1662, %v1641
        %v1831 = vpack.c.b16 %v1663, %v1642
        %v2336 = vunpack.c.l.b16 %v816
        %v2337 = vunpack.c.h.b16 %v816
        %v2338 = vunpack.c.l.b16 %v817
        %v2339 = vunpack.c.h.b16 %v817
        %v2340 = vunpack.c.l.b16 %v818
        %v2341 = vunpack.c.h.b16 %v818
        %v2342 = vunpack.c.l.b16 %v819
        %v2343 = vunpack.c.h.b16 %v819
        %v2344 = vunpack.c.l.b16 %v820
        %v2345 = vunpack.c.h.b16 %v820
        %v2346 = vunpack.c.l.b16 %v821
        %v2347 = vunpack.c.h.b16 %v821
        %v2348 = vunpack.c.l.b16 %v822
        %v2349 = vunpack.c.h.b16 %v822
        %v2350 = vunpack.c.l.b16 %v823
        %v2351 = vunpack.c.h.b16 %v823
        %v2352 = vunpack.c.l.b16 %v824
        %v2353 = vunpack.c.h.b16 %v824
        %v2354 = vunpack.c.l.b16 %v825
        %v2355 = vunpack.c.h.b16 %v825
        %v2356 = vunpack.c.l.b16 %v826
        %v2357 = vunpack.c.h.b16 %v826
        %v2358 = vunpack.c.l.b16 %v827
        %v2359 = vunpack.c.h.b16 %v827
        %v2360 = vunpack.c.l.b16 %v828
        %v2361 = vunpack.c.h.b16 %v828
        %v2362 = vunpack.c.l.b16 %v829
        %v2363 = vunpack.c.h.b16 %v829
        %v2364 = vunpack.c.l.b16 %v830
        %v2365 = vunpack.c.h.b16 %v830
        %v2366 = vunpack.c.l.b16 %v831
        %v2367 = vunpack.c.h.b16 %v831
        %v2368 = vunpack.c.l.b16 %v832
        %v2369 = vunpack.c.h.b16 %v832
        %v2370 = vunpack.c.l.b16 %v833
        %v2371 = vunpack.c.h.b16 %v833
        %v2372 = vunpack.c.l.b16 %v834
        %v2373 = vunpack.c.h.b16 %v834
        %v2374 = vunpack.c.l.b16 %v835
        %v2375 = vunpack.c.h.b16 %v835
        %v2376 = vunpack.c.l.b16 %v836
        %v2377 = vunpack.c.h.b16 %v836
        %v2378 = vunpack.c.l.b16 %v837
        %v2379 = vunpack.c.h.b16 %v837
        %v2380 = vunpack.c.l.b16 %v838
        %v2381 = vunpack.c.h.b16 %v838
        %v2382 = vunpack.c.l.b16 %v839
        %v2383 = vunpack.c.h.b16 %v839
        %v2384 = vunpack.c.l.b16 %v840
        %v2385 = vunpack.c.h.b16 %v840
        %v2386 = vunpack.c.l.b16 %v841
        %v2387 = vunpack.c.h.b16 %v841
        %v2388 = vunpack.c.l.b16 %v842
        %v2389 = vunpack.c.h.b16 %v842
        %v2390 = vunpack.c.l.b16 %v843
        %v2391 = vunpack.c.h.b16 %v843
        %v2392 = vunpack.c.l.b16 %v844
        %v2393 = vunpack.c.h.b16 %v844
        %v2394 = vunpack.c.l.b16 %v845
        %v2395 = vunpack.c.h.b16 %v845
        %v2396 = vunpack.c.l.b16 %v846
        %v2397 = vunpack.c.h.b16 %v846
        %v2398 = vunpack.c.l.b16 %v847
        %v2399 = vunpack.c.h.b16 %v847
        %v2400 = vunpack.c.l.b16 %v848
        %v2401 = vunpack.c.h.b16 %v848
        %v2402 = vunpack.c.l.b16 %v849
        %v2403 = vunpack.c.h.b16 %v849
        %v2404 = vunpack.c.l.b16 %v850
        %v2405 = vunpack.c.h.b16 %v850
        %v2406 = vunpack.c.l.b16 %v851
        %v2407 = vunpack.c.h.b16 %v851
        %v2408 = vunpack.c.l.b16 %v852
        %v2409 = vunpack.c.h.b16 %v852
        %v2410 = vunpack.c.l.b16 %v853
        %v2411 = vunpack.c.h.b16 %v853
        %v2412 = vunpack.c.l.b16 %v854
        %v2413 = vunpack.c.h.b16 %v854
        %v2414 = vunpack.c.l.b16 %v855
        %v2415 = vunpack.c.h.b16 %v855
        %v2416 = vunpack.c.l.b16 %v856
        %v2417 = vunpack.c.h.b16 %v856
        %v2418 = vunpack.c.l.b16 %v857
        %v2419 = vunpack.c.h.b16 %v857
        %v2420 = vunpack.c.l.b16 %v858
        %v2421 = vunpack.c.h.b16 %v858
        %v2422 = vunpack.c.l.b16 %v859
        %v2423 = vunpack.c.h.b16 %v859
        %v2424 = vunpack.c.l.b16 %v860
        %v2425 = vunpack.c.h.b16 %v860
        %v2426 = vunpack.c.l.b16 %v861
        %v2427 = vunpack.c.h.b16 %v861
        %v2428 = vunpack.c.l.b16 %v862
        %v2429 = vunpack.c.h.b16 %v862
        %v2430 = vunpack.c.l.b16 %v863
        %v2431 = vunpack.c.h.b16 %v863
        %v2432 = vunpack.c.l.b16 %v864
        %v2433 = vunpack.c.h.b16 %v864
        %v2434 = vunpack.c.l.b16 %v865
        %v2435 = vunpack.c.h.b16 %v865
        %v2436 = vunpack.c.l.b16 %v866
        %v2437 = vunpack.c.h.b16 %v866
        %v2438 = vunpack.c.l.b16 %v867
        %v2439 = vunpack.c.h.b16 %v867
        %v2440 = vunpack.c.l.b16 %v868
        %v2441 = vunpack.c.h.b16 %v868
        %v2442 = vunpack.c.l.b16 %v869
        %v2443 = vunpack.c.h.b16 %v869
        %v2444 = vunpack.c.l.b16 %v870
        %v2445 = vunpack.c.h.b16 %v870
        %v2446 = vunpack.c.l.b16 %v871
        %v2447 = vunpack.c.h.b16 %v871
        %v2448 = vunpack.c.l.b16 %v872
        %v2449 = vunpack.c.h.b16 %v872
        %v2450 = vunpack.c.l.b16 %v873
        %v2451 = vunpack.c.h.b16 %v873
        %v2452 = vunpack.c.l.b16 %v874
        %v2453 = vunpack.c.h.b16 %v874
        %v2454 = vunpack.c.l.b16 %v875
        %v2455 = vunpack.c.h.b16 %v875
        %v2456 = vunpack.c.l.b16 %v876
        %v2457 = vunpack.c.h.b16 %v876
        %v2458 = vunpack.c.l.b16 %v877
        %v2459 = vunpack.c.h.b16 %v877
        %v2460 = vunpack.c.l.b16 %v878
        %v2461 = vunpack.c.h.b16 %v878
        %v2462 = vunpack.c.l.b16 %v879
        %v2463 = vunpack.c.h.b16 %v879
        %v2464 = vunpack.c.l.b16 %v880
        %v2465 = vunpack.c.h.b16 %v880
        %v2466 = vunpack.c.l.b16 %v881
        %v2467 = vunpack.c.h.b16 %v881
        %v2468 = vunpack.c.l.b16 %v882
        %v2469 = vunpack.c.h.b16 %v882
        %v2470 = vunpack.c.l.b16 %v883
        %v2471 = vunpack.c.h.b16 %v883
        %v2472 = vunpack.c.l.b16 %v884
        %v2473 = vunpack.c.h.b16 %v884
        %v2474 = vunpack.c.l.b16 %v885
        %v2475 = vunpack.c.h.b16 %v885
        %v2476 = vunpack.c.l.b16 %v886
        %v2477 = vunpack.c.h.b16 %v886
        %v2478 = vunpack.c.l.b16 %v887
        %v2479 = vunpack.c.h.b16 %v887
        %v2480 = vunpack.c.l.b16 %v888
        %v2481 = vunpack.c.h.b16 %v888
        %v2482 = vunpack.c.l.b16 %v889
        %v2483 = vunpack.c.h.b16 %v889
        %v2484 = vunpack.c.l.b16 %v890
        %v2485 = vunpack.c.h.b16 %v890
        %v2486 = vunpack.c.l.b16 %v891
        %v2487 = vunpack.c.h.b16 %v891
        %v2488 = vunpack.c.l.b16 %v892
        %v2489 = vunpack.c.h.b16 %v892
        %v2490 = vunpack.c.l.b16 %v893
        %v2491 = vunpack.c.h.b16 %v893
        %v2492 = vunpack.c.l.b16 %v894
        %v2493 = vunpack.c.h.b16 %v894
        %v2494 = vunpack.c.l.b16 %v895
        %v2495 = vunpack.c.h.b16 %v895
        %v2496 = vunpack.c.l.b16 %v896
        %v2497 = vunpack.c.h.b16 %v896
        %v2498 = vunpack.c.l.b16 %v897
        %v2499 = vunpack.c.h.b16 %v897
        %v2500 = vunpack.c.l.b16 %v898
        %v2501 = vunpack.c.h.b16 %v898
        %v2502 = vunpack.c.l.b16 %v899
        %v2503 = vunpack.c.h.b16 %v899
        %v2504 = vunpack.c.l.b16 %v900
        %v2505 = vunpack.c.h.b16 %v900
        %v2506 = vunpack.c.l.b16 %v901
        %v2507 = vunpack.c.h.b16 %v901
        %v2508 = vunpack.c.l.b16 %v902
        %v2509 = vunpack.c.h.b16 %v902
        %v2510 = vunpack.c.l.b16 %v903
        %v2511 = vunpack.c.h.b16 %v903
        %v2512 = vunpack.c.l.b16 %v904
        %v2513 = vunpack.c.h.b16 %v904
        %v2514 = vunpack.c.l.b16 %v905
        %v2515 = vunpack.c.h.b16 %v905
        %v2516 = vunpack.c.l.b16 %v906
        %v2517 = vunpack.c.h.b16 %v906
        %v2518 = vunpack.c.l.b16 %v907
        %v2519 = vunpack.c.h.b16 %v907
        %v2520 = vunpack.c.l.b16 %v908
        %v2521 = vunpack.c.h.b16 %v908
        %v2522 = vunpack.c.l.b16 %v909
        %v2523 = vunpack.c.h.b16 %v909
        %v2524 = vunpack.c.l.b16 %v910
        %v2525 = vunpack.c.h.b16 %v910
        %v2526 = vunpack.c.l.b16 %v911
        %v2527 = vunpack.c.h.b16 %v911
        %v2528 = vunpack.c.l.b16 %v912
        %v2529 = vunpack.c.h.b16 %v912
        %v2530 = vunpack.c.l.b16 %v913
        %v2531 = vunpack.c.h.b16 %v913
        %v2532 = vunpack.c.l.b16 %v914
        %v2533 = vunpack.c.h.b16 %v914
        %v2534 = vunpack.c.l.b16 %v915
        %v2535 = vunpack.c.h.b16 %v915
        %v2536 = vunpack.c.l.b16 %v916
        %v2537 = vunpack.c.h.b16 %v916
        %v2538 = vunpack.c.l.b16 %v917
        %v2539 = vunpack.c.h.b16 %v917
        %v2540 = vunpack.c.l.b16 %v918
        %v2541 = vunpack.c.h.b16 %v918
        %v2542 = vunpack.c.l.b16 %v919
        %v2543 = vunpack.c.h.b16 %v919
        %v2544 = vunpack.c.l.b16 %v920
        %v2545 = vunpack.c.h.b16 %v920
        %v2546 = vunpack.c.l.b16 %v921
        %v2547 = vunpack.c.h.b16 %v921
        %v2548 = vunpack.c.l.b16 %v922
        %v2549 = vunpack.c.h.b16 %v922
        %v2550 = vunpack.c.l.b16 %v923
        %v2551 = vunpack.c.h.b16 %v923
        %v2552 = vunpack.c.l.b16 %v924
        %v2553 = vunpack.c.h.b16 %v924
        %v2554 = vunpack.c.l.b16 %v925
        %v2555 = vunpack.c.h.b16 %v925
        %v2556 = vunpack.c.l.b16 %v926
        %v2557 = vunpack.c.h.b16 %v926
        %v2558 = vunpack.c.l.b16 %v927
        %v2559 = vunpack.c.h.b16 %v927
        %v2560 = vunpack.c.l.b16 %v928
        %v2561 = vunpack.c.h.b16 %v928
        %v2562 = vunpack.c.l.b16 %v929
        %v2563 = vunpack.c.h.b16 %v929
        %v2564 = vunpack.c.l.b16 %v930
        %v2565 = vunpack.c.h.b16 %v930
        %v2566 = vunpack.c.l.b16 %v931
        %v2567 = vunpack.c.h.b16 %v931
        %v2568 = vunpack.c.l.b16 %v932
        %v2569 = vunpack.c.h.b16 %v932
        %v2570 = vunpack.c.l.b16 %v933
        %v2571 = vunpack.c.h.b16 %v933
        %v2572 = vunpack.c.l.b16 %v934
        %v2573 = vunpack.c.h.b16 %v934
        %v2574 = vunpack.c.l.b16 %v935
        %v2575 = vunpack.c.h.b16 %v935
        %v2576 = vunpack.c.l.b16 %v936
        %v2577 = vunpack.c.h.b16 %v936
        %v2578 = vunpack.c.l.b16 %v937
        %v2579 = vunpack.c.h.b16 %v937
        %v2580 = vunpack.c.l.b16 %v938
        %v2581 = vunpack.c.h.b16 %v938
        %v2582 = vunpack.c.l.b16 %v939
        %v2583 = vunpack.c.h.b16 %v939
        %v2584 = vunpack.c.l.b16 %v940
        %v2585 = vunpack.c.h.b16 %v940
        %v2586 = vunpack.c.l.b16 %v941
        %v2587 = vunpack.c.h.b16 %v941
        %v2588 = vunpack.c.l.b16 %v942
        %v2589 = vunpack.c.h.b16 %v942
        %v2590 = vunpack.c.l.b16 %v943
        %v2591 = vunpack.c.h.b16 %v943
        %v2592 = vunpack.c.l.b16 %v944
        %v2593 = vunpack.c.h.b16 %v944
        %v2594 = vunpack.c.l.b16 %v945
        %v2595 = vunpack.c.h.b16 %v945
        %v2596 = vunpack.c.l.b16 %v946
        %v2597 = vunpack.c.h.b16 %v946
        %v2598 = vunpack.c.l.b16 %v947
        %v2599 = vunpack.c.h.b16 %v947
        %v2600 = vunpack.c.l.b16 %v948
        %v2601 = vunpack.c.h.b16 %v948
        %v2602 = vunpack.c.l.b16 %v949
        %v2603 = vunpack.c.h.b16 %v949
        %v2604 = vunpack.c.l.b16 %v950
        %v2605 = vunpack.c.h.b16 %v950
        %v2606 = vunpack.c.l.b16 %v951
        %v2607 = vunpack.c.h.b16 %v951
        %v2608 = vunpack.c.l.b16 %v952
        %v2609 = vunpack.c.h.b16 %v952
        %v2610 = vunpack.c.l.b16 %v953
        %v2611 = vunpack.c.h.b16 %v953
        %v2612 = vunpack.c.l.b16 %v954
        %v2613 = vunpack.c.h.b16 %v954
        %v2614 = vunpack.c.l.b16 %v955
        %v2615 = vunpack.c.h.b16 %v955
        %v2616 = vunpack.c.l.b16 %v956
        %v2617 = vunpack.c.h.b16 %v956
        %v2618 = vunpack.c.l.b16 %v957
        %v2619 = vunpack.c.h.b16 %v957
        %v2620 = vunpack.c.l.b16 %v958
        %v2621 = vunpack.c.h.b16 %v958
        %v2622 = vunpack.c.l.b16 %v959
        %v2623 = vunpack.c.h.b16 %v959
        %v2624 = vunpack.c.l.b16 %v960
        %v2625 = vunpack.c.h.b16 %v960
        %v2626 = vunpack.c.l.b16 %v961
        %v2627 = vunpack.c.h.b16 %v961
        %v2628 = vunpack.c.l.b16 %v962
        %v2629 = vunpack.c.h.b16 %v962
        %v2630 = vunpack.c.l.b16 %v963
        %v2631 = vunpack.c.h.b16 %v963
        %v2632 = vunpack.c.l.b16 %v964
        %v2633 = vunpack.c.h.b16 %v964
        %v2634 = vunpack.c.l.b16 %v965
        %v2635 = vunpack.c.h.b16 %v965
        %v2636 = vunpack.c.l.b16 %v966
        %v2637 = vunpack.c.h.b16 %v966
        %v2638 = vunpack.c.l.b16 %v967
        %v2639 = vunpack.c.h.b16 %v967
        %v2640 = vunpack.c.l.b16 %v968
        %v2641 = vunpack.c.h.b16 %v968
        %v2642 = vunpack.c.l.b16 %v969
        %v2643 = vunpack.c.h.b16 %v969
        %v2644 = vunpack.c.l.b16 %v970
        %v2645 = vunpack.c.h.b16 %v970
        %v2646 = vunpack.c.l.b16 %v971
        %v2647 = vunpack.c.h.b16 %v971
        %v2648 = vunpack.c.l.b16 %v972
        %v2649 = vunpack.c.h.b16 %v972
        %v2650 = vunpack.c.l.b16 %v973
        %v2651 = vunpack.c.h.b16 %v973
        %v2652 = vunpack.c.l.b16 %v974
        %v2653 = vunpack.c.h.b16 %v974
        %v2654 = vunpack.c.l.b16 %v975
        %v2655 = vunpack.c.h.b16 %v975
        %v2656 = vunpack.c.l.b16 %v976
        %v2657 = vunpack.c.h.b16 %v976
        %v2658 = vunpack.c.l.b16 %v977
        %v2659 = vunpack.c.h.b16 %v977
        %v2660 = vunpack.c.l.b16 %v978
        %v2661 = vunpack.c.h.b16 %v978
        %v2662 = vunpack.c.l.b16 %v979
        %v2663 = vunpack.c.h.b16 %v979
        %v2664 = vunpack.c.l.b16 %v980
        %v2665 = vunpack.c.h.b16 %v980
        %v2666 = vunpack.c.l.b16 %v981
        %v2667 = vunpack.c.h.b16 %v981
        %v2668 = vunpack.c.l.b16 %v982
        %v2669 = vunpack.c.h.b16 %v982
        %v2670 = vunpack.c.l.b16 %v983
        %v2671 = vunpack.c.h.b16 %v983
        %v2672 = vunpack.c.l.b16 %v984
        %v2673 = vunpack.c.h.b16 %v984
        %v2674 = vunpack.c.l.b16 %v985
        %v2675 = vunpack.c.h.b16 %v985
        %v2676 = vunpack.c.l.b16 %v986
        %v2677 = vunpack.c.h.b16 %v986
        %v2678 = vunpack.c.l.b16 %v987
        %v2679 = vunpack.c.h.b16 %v987
        %v2680 = vunpack.c.l.b16 %v988
        %v2681 = vunpack.c.h.b16 %v988
        %v2682 = vunpack.c.l.b16 %v989
        %v2683 = vunpack.c.h.b16 %v989
        %v2684 = vunpack.c.l.b16 %v990
        %v2685 = vunpack.c.h.b16 %v990
        %v2686 = vunpack.c.l.b16 %v991
        %v2687 = vunpack.c.h.b16 %v991
        %v2688 = vunpack.c.l.b16 %v992
        %v2689 = vunpack.c.h.b16 %v992
        %v2690 = vunpack.c.l.b16 %v993
        %v2691 = vunpack.c.h.b16 %v993
        %v2692 = vunpack.c.l.b16 %v994
        %v2693 = vunpack.c.h.b16 %v994
        %v2694 = vunpack.c.l.b16 %v995
        %v2695 = vunpack.c.h.b16 %v995
        %v2696 = vunpack.c.l.b16 %v996
        %v2697 = vunpack.c.h.b16 %v996
        %v2698 = vunpack.c.l.b16 %v997
        %v2699 = vunpack.c.h.b16 %v997
        %v2700 = vunpack.c.l.b16 %v998
        %v2701 = vunpack.c.h.b16 %v998
        %v2702 = vunpack.c.l.b16 %v999
        %v2703 = vunpack.c.h.b16 %v999
        %v2704 = vunpack.c.l.b16 %v1000
        %v2705 = vunpack.c.h.b16 %v1000
        %v2706 = vunpack.c.l.b16 %v1001
        %v2707 = vunpack.c.h.b16 %v1001
        %v2708 = vunpack.c.l.b16 %v1002
        %v2709 = vunpack.c.h.b16 %v1002
        %v2710 = vunpack.c.l.b16 %v1003
        %v2711 = vunpack.c.h.b16 %v1003
        %v2712 = vunpack.c.l.b16 %v1004
        %v2713 = vunpack.c.h.b16 %v1004
        %v2714 = vunpack.c.l.b16 %v1005
        %v2715 = vunpack.c.h.b16 %v1005
        %v2716 = vunpack.c.l.b16 %v1006
        %v2717 = vunpack.c.h.b16 %v1006
        %v2718 = vunpack.c.l.b16 %v1007
        %v2719 = vunpack.c.h.b16 %v1007
        %v2720 = vunpack.c.l.b16 %v1008
        %v2721 = vunpack.c.h.b16 %v1008
        %v2722 = vunpack.c.l.b16 %v1009
        %v2723 = vunpack.c.h.b16 %v1009
        %v2724 = vunpack.c.l.b16 %v1010
        %v2725 = vunpack.c.h.b16 %v1010
        %v2726 = vunpack.c.l.b16 %v1011
        %v2727 = vunpack.c.h.b16 %v1011
        %v2728 = vunpack.c.l.b16 %v1012
        %v2729 = vunpack.c.h.b16 %v1012
        %v2730 = vunpack.c.l.b16 %v1013
        %v2731 = vunpack.c.h.b16 %v1013
        %v2732 = vunpack.c.l.b16 %v1014
        %v2733 = vunpack.c.h.b16 %v1014
        %v2734 = vunpack.c.l.b16 %v1015
        %v2735 = vunpack.c.h.b16 %v1015
        %v2736 = vunpack.c.l.b16 %v1016
        %v2737 = vunpack.c.h.b16 %v1016
        %v2738 = vunpack.c.l.b16 %v1017
        %v2739 = vunpack.c.h.b16 %v1017
        %v2740 = vunpack.c.l.b16 %v1018
        %v2741 = vunpack.c.h.b16 %v1018
        %v2742 = vunpack.c.l.b16 %v1019
        %v2743 = vunpack.c.h.b16 %v1019
        %v2744 = vunpack.c.l.b16 %v1020
        %v2745 = vunpack.c.h.b16 %v1020
        %v2746 = vunpack.c.l.b16 %v1021
        %v2747 = vunpack.c.h.b16 %v1021
        %v2748 = vunpack.c.l.b16 %v1022
        %v2749 = vunpack.c.h.b16 %v1022
        %v2750 = vunpack.c.l.b16 %v1023
        %v2751 = vunpack.c.h.b16 %v1023
        %v2752 = vunpack.c.l.b16 %v1024
        %v2753 = vunpack.c.h.b16 %v1024
        %v2754 = vunpack.c.l.b16 %v1025
        %v2755 = vunpack.c.h.b16 %v1025
        %v2756 = vunpack.c.l.b16 %v1026
        %v2757 = vunpack.c.h.b16 %v1026
        %v2758 = vunpack.c.l.b16 %v1027
        %v2759 = vunpack.c.h.b16 %v1027
        %v2760 = vunpack.c.l.b16 %v1028
        %v2761 = vunpack.c.h.b16 %v1028
        %v2762 = vunpack.c.l.b16 %v1029
        %v2763 = vunpack.c.h.b16 %v1029
        %v2764 = vunpack.c.l.b16 %v1030
        %v2765 = vunpack.c.h.b16 %v1030
        %v2766 = vunpack.c.l.b16 %v1031
        %v2767 = vunpack.c.h.b16 %v1031
        %v2768 = vunpack.c.l.b16 %v1032
        %v2769 = vunpack.c.h.b16 %v1032
        %v2770 = vunpack.c.l.b16 %v1033
        %v2771 = vunpack.c.h.b16 %v1033
        %v2772 = vunpack.c.l.b16 %v1034
        %v2773 = vunpack.c.h.b16 %v1034
        %v2774 = vunpack.c.l.b16 %v1035
        %v2775 = vunpack.c.h.b16 %v1035
        %v2776 = vunpack.c.l.b16 %v1036
        %v2777 = vunpack.c.h.b16 %v1036
        %v2778 = vunpack.c.l.b16 %v1037
        %v2779 = vunpack.c.h.b16 %v1037
        %v2780 = vunpack.c.l.b16 %v1038
        %v2781 = vunpack.c.h.b16 %v1038
        %v2782 = vunpack.c.l.b16 %v1039
        %v2783 = vunpack.c.h.b16 %v1039
        %v2784 = vunpack.c.l.b16 %v1040
        %v2785 = vunpack.c.h.b16 %v1040
        %v2786 = vunpack.c.l.b16 %v1041
        %v2787 = vunpack.c.h.b16 %v1041
        %v2788 = vunpack.c.l.b16 %v1042
        %v2789 = vunpack.c.h.b16 %v1042
        %v2790 = vunpack.c.l.b16 %v1043
        %v2791 = vunpack.c.h.b16 %v1043
        %v2792 = vunpack.c.l.b16 %v1044
        %v2793 = vunpack.c.h.b16 %v1044
        %v2794 = vunpack.c.l.b16 %v1045
        %v2795 = vunpack.c.h.b16 %v1045
        %v2796 = vunpack.c.l.b16 %v1046
        %v2797 = vunpack.c.h.b16 %v1046
        %v2798 = vunpack.c.l.b16 %v1047
        %v2799 = vunpack.c.h.b16 %v1047
        %v2800 = vunpack.c.l.b16 %v1048
        %v2801 = vunpack.c.h.b16 %v1048
        %v2802 = vunpack.c.l.b16 %v1049
        %v2803 = vunpack.c.h.b16 %v1049
        %v2804 = vunpack.c.l.b16 %v1050
        %v2805 = vunpack.c.h.b16 %v1050
        %v2806 = vunpack.c.l.b16 %v1051
        %v2807 = vunpack.c.h.b16 %v1051
        %v2808 = vunpack.c.l.b16 %v1052
        %v2809 = vunpack.c.h.b16 %v1052
        %v2810 = vunpack.c.l.b16 %v1053
        %v2811 = vunpack.c.h.b16 %v1053
        %v2812 = vunpack.c.l.b16 %v1054
        %v2813 = vunpack.c.h.b16 %v1054
        %v2814 = vunpack.c.l.b16 %v1055
        %v2815 = vunpack.c.h.b16 %v1055
        %v2816 = vunpack.c.l.b16 %v1056
        %v2817 = vunpack.c.h.b16 %v1056
        %v2818 = vunpack.c.l.b16 %v1057
        %v2819 = vunpack.c.h.b16 %v1057
        %v2820 = vunpack.c.l.b16 %v1058
        %v2821 = vunpack.c.h.b16 %v1058
        %v2822 = vunpack.c.l.b16 %v1059
        %v2823 = vunpack.c.h.b16 %v1059
        %v2824 = vunpack.c.l.b16 %v1060
        %v2825 = vunpack.c.h.b16 %v1060
        %v2826 = vunpack.c.l.b16 %v1061
        %v2827 = vunpack.c.h.b16 %v1061
        %v2828 = vunpack.c.l.b16 %v1062
        %v2829 = vunpack.c.h.b16 %v1062
        %v2830 = vunpack.c.l.b16 %v1063
        %v2831 = vunpack.c.h.b16 %v1063
        %v2832 = vunpack.c.l.b16 %v1064
        %v2833 = vunpack.c.h.b16 %v1064
        %v2834 = vunpack.c.l.b16 %v1065
        %v2835 = vunpack.c.h.b16 %v1065
        %v2836 = vunpack.c.l.b16 %v1066
        %v2837 = vunpack.c.h.b16 %v1066
        %v2838 = vunpack.c.l.b16 %v1067
        %v2839 = vunpack.c.h.b16 %v1067
        %v2840 = vunpack.c.l.b16 %v1068
        %v2841 = vunpack.c.h.b16 %v1068
        %v2842 = vunpack.c.l.b16 %v1069
        %v2843 = vunpack.c.h.b16 %v1069
        %v2844 = vunpack.c.l.b16 %v1070
        %v2845 = vunpack.c.h.b16 %v1070
        %v2846 = vunpack.c.l.b16 %v1071
        %v2847 = vunpack.c.h.b16 %v1071
        %v2848 = vunpack.c.l.b16 %v1072
        %v2849 = vunpack.c.h.b16 %v1072
        %v2850 = vunpack.c.l.b16 %v1073
        %v2851 = vunpack.c.h.b16 %v1073
        %v2852 = vunpack.c.l.b16 %v1074
        %v2853 = vunpack.c.h.b16 %v1074
        %v2854 = vunpack.c.l.b16 %v1075
        %v2855 = vunpack.c.h.b16 %v1075
        %v2856 = vunpack.c.l.b16 %v1076
        %v2857 = vunpack.c.h.b16 %v1076
        %v2858 = vunpack.c.l.b16 %v1077
        %v2859 = vunpack.c.h.b16 %v1077
        %v2860 = vunpack.c.l.b16 %v1078
        %v2861 = vunpack.c.h.b16 %v1078
        %v2862 = vunpack.c.l.b16 %v1079
        %v2863 = vunpack.c.h.b16 %v1079
        %v2864 = vunpack.c.l.b16 %v1080
        %v2865 = vunpack.c.h.b16 %v1080
        %v2866 = vunpack.c.l.b16 %v1081
        %v2867 = vunpack.c.h.b16 %v1081
        %v2868 = vunpack.c.l.b16 %v1082
        %v2869 = vunpack.c.h.b16 %v1082
        %v2870 = vunpack.c.l.b16 %v1083
        %v2871 = vunpack.c.h.b16 %v1083
        %v2872 = vunpack.c.l.b16 %v1084
        %v2873 = vunpack.c.h.b16 %v1084
        %v2874 = vunpack.c.l.b16 %v1085
        %v2875 = vunpack.c.h.b16 %v1085
        %v2876 = vunpack.c.l.b16 %v1086
        %v2877 = vunpack.c.h.b16 %v1086
        %v2878 = vunpack.c.l.b16 %v1087
        %v2879 = vunpack.c.h.b16 %v1087
        %v2880 = vunpack.c.l.b16 %v1088
        %v2881 = vunpack.c.h.b16 %v1088
        %v2882 = vunpack.c.l.b16 %v1089
        %v2883 = vunpack.c.h.b16 %v1089
        %v2884 = vunpack.c.l.b16 %v1090
        %v2885 = vunpack.c.h.b16 %v1090
        %v2886 = vunpack.c.l.b16 %v1091
        %v2887 = vunpack.c.h.b16 %v1091
        %v2888 = vunpack.c.l.b16 %v1092
        %v2889 = vunpack.c.h.b16 %v1092
        %v2890 = vunpack.c.l.b16 %v1093
        %v2891 = vunpack.c.h.b16 %v1093
        %v2892 = vunpack.c.l.b16 %v1094
        %v2893 = vunpack.c.h.b16 %v1094
        %v2894 = vunpack.c.l.b16 %v1095
        %v2895 = vunpack.c.h.b16 %v1095
        %v2896 = vunpack.c.l.b16 %v1096
        %v2897 = vunpack.c.h.b16 %v1096
        %v2898 = vunpack.c.l.b16 %v1097
        %v2899 = vunpack.c.h.b16 %v1097
        %v2900 = vunpack.c.l.b16 %v1098
        %v2901 = vunpack.c.h.b16 %v1098
        %v2902 = vunpack.c.l.b16 %v1099
        %v2903 = vunpack.c.h.b16 %v1099
        %v2904 = vunpack.c.l.b16 %v1100
        %v2905 = vunpack.c.h.b16 %v1100
        %v2906 = vunpack.c.l.b16 %v1101
        %v2907 = vunpack.c.h.b16 %v1101
        %v2908 = vunpack.c.l.b16 %v1102
        %v2909 = vunpack.c.h.b16 %v1102
        %v2910 = vunpack.c.l.b16 %v1103
        %v2911 = vunpack.c.h.b16 %v1103
        %v2912 = vunpack.c.l.b16 %v1104
        %v2913 = vunpack.c.h.b16 %v1104
        %v2914 = vunpack.c.l.b16 %v1105
        %v2915 = vunpack.c.h.b16 %v1105
        %v2916 = vunpack.c.l.b16 %v1106
        %v2917 = vunpack.c.h.b16 %v1106
        %v2918 = vunpack.c.l.b16 %v1107
        %v2919 = vunpack.c.h.b16 %v1107
        %v2920 = vunpack.c.l.b16 %v1108
        %v2921 = vunpack.c.h.b16 %v1108
        %v2922 = vunpack.c.l.b16 %v1109
        %v2923 = vunpack.c.h.b16 %v1109
        %v2924 = vunpack.c.l.b16 %v1110
        %v2925 = vunpack.c.h.b16 %v1110
        %v2926 = vunpack.c.l.b16 %v1111
        %v2927 = vunpack.c.h.b16 %v1111
        %v2928 = vunpack.c.l.b16 %v1112
        %v2929 = vunpack.c.h.b16 %v1112
        %v2930 = vunpack.c.l.b16 %v1113
        %v2931 = vunpack.c.h.b16 %v1113
        %v2932 = vunpack.c.l.b16 %v1114
        %v2933 = vunpack.c.h.b16 %v1114
        %v2934 = vunpack.c.l.b16 %v1115
        %v2935 = vunpack.c.h.b16 %v1115
        %v2936 = vunpack.c.l.b16 %v1116
        %v2937 = vunpack.c.h.b16 %v1116
        %v2938 = vunpack.c.l.b16 %v1117
        %v2939 = vunpack.c.h.b16 %v1117
        %v2940 = vunpack.c.l.b16 %v1118
        %v2941 = vunpack.c.h.b16 %v1118
        %v2942 = vunpack.c.l.b16 %v1119
        %v2943 = vunpack.c.h.b16 %v1119
        %v2944 = vunpack.c.l.b16 %v1120
        %v2945 = vunpack.c.h.b16 %v1120
        %v2946 = vunpack.c.l.b16 %v1121
        %v2947 = vunpack.c.h.b16 %v1121
        %v2948 = vunpack.c.l.b16 %v1122
        %v2949 = vunpack.c.h.b16 %v1122
        %v2950 = vunpack.c.l.b16 %v1123
        %v2951 = vunpack.c.h.b16 %v1123
        %v2952 = vunpack.c.l.b16 %v1124
        %v2953 = vunpack.c.h.b16 %v1124
        %v2954 = vunpack.c.l.b16 %v1125
        %v2955 = vunpack.c.h.b16 %v1125
        %v2956 = vunpack.c.l.b16 %v1126
        %v2957 = vunpack.c.h.b16 %v1126
        %v2958 = vunpack.c.l.b16 %v1127
        %v2959 = vunpack.c.h.b16 %v1127
        %v2960 = vunpack.c.l.b16 %v1128
        %v2961 = vunpack.c.h.b16 %v1128
        %v2962 = vunpack.c.l.b16 %v1129
        %v2963 = vunpack.c.h.b16 %v1129
        %v2964 = vunpack.c.l.b16 %v1130
        %v2965 = vunpack.c.h.b16 %v1130
        %v2966 = vunpack.c.l.b16 %v1131
        %v2967 = vunpack.c.h.b16 %v1131
        %v2968 = vunpack.c.l.b16 %v1132
        %v2969 = vunpack.c.h.b16 %v1132
        %v2970 = vunpack.c.l.b16 %v1133
        %v2971 = vunpack.c.h.b16 %v1133
        %v2972 = vunpack.c.l.b16 %v1134
        %v2973 = vunpack.c.h.b16 %v1134
        %v2974 = vunpack.c.l.b16 %v1135
        %v2975 = vunpack.c.h.b16 %v1135
        %v2976 = vunpack.c.l.b16 %v1136
        %v2977 = vunpack.c.h.b16 %v1136
        %v2978 = vunpack.c.l.b16 %v1137
        %v2979 = vunpack.c.h.b16 %v1137
        %v2980 = vunpack.c.l.b16 %v1138
        %v2981 = vunpack.c.h.b16 %v1138
        %v2982 = vunpack.c.l.b16 %v1139
        %v2983 = vunpack.c.h.b16 %v1139
        %v2984 = vunpack.c.l.b16 %v1140
        %v2985 = vunpack.c.h.b16 %v1140
        %v2986 = vunpack.c.l.b16 %v1141
        %v2987 = vunpack.c.h.b16 %v1141
        %v2988 = vunpack.c.l.b16 %v1142
        %v2989 = vunpack.c.h.b16 %v1142
        %v2990 = vunpack.c.l.b16 %v1143
        %v2991 = vunpack.c.h.b16 %v1143
        %v2992 = vunpack.c.l.b16 %v1144
        %v2993 = vunpack.c.h.b16 %v1144
        %v2994 = vunpack.c.l.b16 %v1145
        %v2995 = vunpack.c.h.b16 %v1145
        %v2996 = vunpack.c.l.b16 %v1146
        %v2997 = vunpack.c.h.b16 %v1146
        %v2998 = vunpack.c.l.b16 %v1147
        %v2999 = vunpack.c.h.b16 %v1147
        %v3000 = vunpack.c.l.b16 %v1148
        %v3001 = vunpack.c.h.b16 %v1148
        %v3002 = vunpack.c.l.b16 %v1149
        %v3003 = vunpack.c.h.b16 %v1149
        %v3004 = vunpack.c.l.b16 %v1150
        %v3005 = vunpack.c.h.b16 %v1150
        %v3006 = vunpack.c.l.b16 %v1151
        %v3007 = vunpack.c.h.b16 %v1151
        %v3008 = vpack.c.b16 %v2338, %v2336
        %v3009 = vpack.c.b16 %v2339, %v2337
        %v3010 = vpack.c.b16 %v2342, %v2340
        %v3011 = vpack.c.b16 %v2343, %v2341
        %v3012 = vpack.c.b16 %v2346, %v2344
        %v3013 = vpack.c.b16 %v2347, %v2345
        %v3014 = vpack.c.b16 %v2350, %v2348
        %v3015 = vpack.c.b16 %v2351, %v2349
        %v3016 = vpack.c.b16 %v2354, %v2352
        %v3017 = vpack.c.b16 %v2355, %v2353
        %v3018 = vpack.c.b16 %v2358, %v2356
        %v3019 = vpack.c.b16 %v2359, %v2357
        %v3020 = vpack.c.b16 %v2362, %v2360
        %v3021 = vpack.c.b16 %v2363, %v2361
        %v3022 = vpack.c.b16 %v2366, %v2364
        %v3023 = vpack.c.b16 %v2367, %v2365
        %v3024 = vpack.c.b16 %v2370, %v2368
        %v3025 = vpack.c.b16 %v2371, %v2369
        %v3026 = vpack.c.b16 %v2374, %v2372
        %v3027 = vpack.c.b16 %v2375, %v2373
        %v3028 = vpack.c.b16 %v2378, %v2376
        %v3029 = vpack.c.b16 %v2379, %v2377
        %v3030 = vpack.c.b16 %v2382, %v2380
        %v3031 = vpack.c.b16 %v2383, %v2381
        %v3032 = vpack.c.b16 %v2386, %v2384
        %v3033 = vpack.c.b16 %v2387, %v2385
        %v3034 = vpack.c.b16 %v2390, %v2388
        %v3035 = vpack.c.b16 %v2391, %v2389
        %v3036 = vpack.c.b16 %v2394, %v2392
        %v3037 = vpack.c.b16 %v2395, %v2393
        %v3038 = vpack.c.b16 %v2398, %v2396
        %v3039 = vpack.c.b16 %v2399, %v2397
        %v3040 = vpack.c.b16 %v2402, %v2400
        %v3041 = vpack.c.b16 %v2403, %v2401
        %v3042 = vpack.c.b16 %v2406, %v2404
        %v3043 = vpack.c.b16 %v2407, %v2405
        %v3044 = vpack.c.b16 %v2410, %v2408
        %v3045 = vpack.c.b16 %v2411, %v2409
        %v3046 = vpack.c.b16 %v2414, %v2412
        %v3047 = vpack.c.b16 %v2415, %v2413
        %v3048 = vpack.c.b16 %v2418, %v2416
        %v3049 = vpack.c.b16 %v2419, %v2417
        %v3050 = vpack.c.b16 %v2422, %v2420
        %v3051 = vpack.c.b16 %v2423, %v2421
        %v3052 = vpack.c.b16 %v2426, %v2424
        %v3053 = vpack.c.b16 %v2427, %v2425
        %v3054 = vpack.c.b16 %v2430, %v2428
        %v3055 = vpack.c.b16 %v2431, %v2429
        %v3056 = vpack.c.b16 %v2434, %v2432
        %v3057 = vpack.c.b16 %v2435, %v2433
        %v3058 = vpack.c.b16 %v2438, %v2436
        %v3059 = vpack.c.b16 %v2439, %v2437
        %v3060 = vpack.c.b16 %v2442, %v2440
        %v3061 = vpack.c.b16 %v2443, %v2441
        %v3062 = vpack.c.b16 %v2446, %v2444
        %v3063 = vpack.c.b16 %v2447, %v2445
        %v3064 = vpack.c.b16 %v2450, %v2448
        %v3065 = vpack.c.b16 %v2451, %v2449
        %v3066 = vpack.c.b16 %v2454, %v2452
        %v3067 = vpack.c.b16 %v2455, %v2453
        %v3068 = vpack.c.b16 %v2458, %v2456
        %v3069 = vpack.c.b16 %v2459, %v2457
        %v3070 = vpack.c.b16 %v2462, %v2460
        %v3071 = vpack.c.b16 %v2463, %v2461
        %v3072 = vpack.c.b16 %v2466, %v2464
        %v3073 = vpack.c.b16 %v2467, %v2465
        %v3074 = vpack.c.b16 %v2470, %v2468
        %v3075 = vpack.c.b16 %v2471, %v2469
        %v3076 = vpack.c.b16 %v2474, %v2472
        %v3077 = vpack.c.b16 %v2475, %v2473
        %v3078 = vpack.c.b16 %v2478, %v2476
        %v3079 = vpack.c.b16 %v2479, %v2477
        %v3080 = vpack.c.b16 %v2482, %v2480
        %v3081 = vpack.c.b16 %v2483, %v2481
        %v3082 = vpack.c.b16 %v2486, %v2484
        %v3083 = vpack.c.b16 %v2487, %v2485
        %v3084 = vpack.c.b16 %v2490, %v2488
        %v3085 = vpack.c.b16 %v2491, %v2489
        %v3086 = vpack.c.b16 %v2494, %v2492
        %v3087 = vpack.c.b16 %v2495, %v2493
        %v3088 = vpack.c.b16 %v2498, %v2496
        %v3089 = vpack.c.b16 %v2499, %v2497
        %v3090 = vpack.c.b16 %v2502, %v2500
        %v3091 = vpack.c.b16 %v2503, %v2501
        %v3092 = vpack.c.b16 %v2506, %v2504
        %v3093 = vpack.c.b16 %v2507, %v2505
        %v3094 = vpack.c.b16 %v2510, %v2508
        %v3095 = vpack.c.b16 %v2511, %v2509
        %v3096 = vpack.c.b16 %v2514, %v2512
        %v3097 = vpack.c.b16 %v2515, %v2513
        %v3098 = vpack.c.b16 %v2518, %v2516
        %v3099 = vpack.c.b16 %v2519, %v2517
        %v3100 = vpack.c.b16 %v2522, %v2520
        %v3101 = vpack.c.b16 %v2523, %v2521
        %v3102 = vpack.c.b16 %v2526, %v2524
        %v3103 = vpack.c.b16 %v2527, %v2525
        %v3104 = vpack.c.b16 %v2530, %v2528
        %v3105 = vpack.c.b16 %v2531, %v2529
        %v3106 = vpack.c.b16 %v2534, %v2532
        %v3107 = vpack.c.b16 %v2535, %v2533
        %v3108 = vpack.c.b16 %v2538, %v2536
        %v3109 = vpack.c.b16 %v2539, %v2537
        %v3110 = vpack.c.b16 %v2542, %v2540
        %v3111 = vpack.c.b16 %v2543, %v2541
        %v3112 = vpack.c.b16 %v2546, %v2544
        %v3113 = vpack.c.b16 %v2547, %v2545
        %v3114 = vpack.c.b16 %v2550, %v2548
        %v3115 = vpack.c.b16 %v2551, %v2549
        %v3116 = vpack.c.b16 %v2554, %v2552
        %v3117 = vpack.c.b16 %v2555, %v2553
        %v3118 = vpack.c.b16 %v2558, %v2556
        %v3119 = vpack.c.b16 %v2559, %v2557
        %v3120 = vpack.c.b16 %v2562, %v2560
        %v3121 = vpack.c.b16 %v2563, %v2561
        %v3122 = vpack.c.b16 %v2566, %v2564
        %v3123 = vpack.c.b16 %v2567, %v2565
        %v3124 = vpack.c.b16 %v2570, %v2568
        %v3125 = vpack.c.b16 %v2571, %v2569
        %v3126 = vpack.c.b16 %v2574, %v2572
        %v3127 = vpack.c.b16 %v2575, %v2573
        %v3128 = vpack.c.b16 %v2578, %v2576
        %v3129 = vpack.c.b16 %v2579, %v2577
        %v3130 = vpack.c.b16 %v2582, %v2580
        %v3131 = vpack.c.b16 %v2583, %v2581
        %v3132 = vpack.c.b16 %v2586, %v2584
        %v3133 = vpack.c.b16 %v2587, %v2585
        %v3134 = vpack.c.b16 %v2590, %v2588
        %v3135 = vpack.c.b16 %v2591, %v2589
        %v3136 = vpack.c.b16 %v2594, %v2592
        %v3137 = vpack.c.b16 %v2595, %v2593
        %v3138 = vpack.c.b16 %v2598, %v2596
        %v3139 = vpack.c.b16 %v2599, %v2597
        %v3140 = vpack.c.b16 %v2602, %v2600
        %v3141 = vpack.c.b16 %v2603, %v2601
        %v3142 = vpack.c.b16 %v2606, %v2604
        %v3143 = vpack.c.b16 %v2607, %v2605
        %v3144 = vpack.c.b16 %v2610, %v2608
        %v3145 = vpack.c.b16 %v2611, %v2609
        %v3146 = vpack.c.b16 %v2614, %v2612
        %v3147 = vpack.c.b16 %v2615, %v2613
        %v3148 = vpack.c.b16 %v2618, %v2616
        %v3149 = vpack.c.b16 %v2619, %v2617
        %v3150 = vpack.c.b16 %v2622, %v2620
        %v3151 = vpack.c.b16 %v2623, %v2621
        %v3152 = vpack.c.b16 %v2626, %v2624
        %v3153 = vpack.c.b16 %v2627, %v2625
        %v3154 = vpack.c.b16 %v2630, %v2628
        %v3155 = vpack.c.b16 %v2631, %v2629
        %v3156 = vpack.c.b16 %v2634, %v2632
        %v3157 = vpack.c.b16 %v2635, %v2633
        %v3158 = vpack.c.b16 %v2638, %v2636
        %v3159 = vpack.c.b16 %v2639, %v2637
        %v3160 = vpack.c.b16 %v2642, %v2640
        %v3161 = vpack.c.b16 %v2643, %v2641
        %v3162 = vpack.c.b16 %v2646, %v2644
        %v3163 = vpack.c.b16 %v2647, %v2645
        %v3164 = vpack.c.b16 %v2650, %v2648
        %v3165 = vpack.c.b16 %v2651, %v2649
        %v3166 = vpack.c.b16 %v2654, %v2652
        %v3167 = vpack.c.b16 %v2655, %v2653
        %v3168 = vpack.c.b16 %v2658, %v2656
        %v3169 = vpack.c.b16 %v2659, %v2657
        %v3170 = vpack.c.b16 %v2662, %v2660
        %v3171 = vpack.c.b16 %v2663, %v2661
        %v3172 = vpack.c.b16 %v2666, %v2664
        %v3173 = vpack.c.b16 %v2667, %v2665
        %v3174 = vpack.c.b16 %v2670, %v2668
        %v3175 = vpack.c.b16 %v2671, %v2669
        %v3176 = vpack.c.b16 %v2674, %v2672
        %v3177 = vpack.c.b16 %v2675, %v2673
        %v3178 = vpack.c.b16 %v2678, %v2676
        %v3179 = vpack.c.b16 %v2679, %v2677
        %v3180 = vpack.c.b16 %v2682, %v2680
        %v3181 = vpack.c.b16 %v2683, %v2681
        %v3182 = vpack.c.b16 %v2686, %v2684
        %v3183 = vpack.c.b16 %v2687, %v2685
        %v3184 = vpack.c.b16 %v2690, %v2688
        %v3185 = vpack.c.b16 %v2691, %v2689
        %v3186 = vpack.c.b16 %v2694, %v2692
        %v3187 = vpack.c.b16 %v2695, %v2693
        %v3188 = vpack.c.b16 %v2698, %v2696
        %v3189 = vpack.c.b16 %v2699, %v2697
        %v3190 = vpack.c.b16 %v2702, %v2700
        %v3191 = vpack.c.b16 %v2703, %v2701
        %v3192 = vpack.c.b16 %v2706, %v2704
        %v3193 = vpack.c.b16 %v2707, %v2705
        %v3194 = vpack.c.b16 %v2710, %v2708
        %v3195 = vpack.c.b16 %v2711, %v2709
        %v3196 = vpack.c.b16 %v2714, %v2712
        %v3197 = vpack.c.b16 %v2715, %v2713
        %v3198 = vpack.c.b16 %v2718, %v2716
        %v3199 = vpack.c.b16 %v2719, %v2717
        %v3200 = vpack.c.b16 %v2722, %v2720
        %v3201 = vpack.c.b16 %v2723, %v2721
        %v3202 = vpack.c.b16 %v2726, %v2724
        %v3203 = vpack.c.b16 %v2727, %v2725
        %v3204 = vpack.c.b16 %v2730, %v2728
        %v3205 = vpack.c.b16 %v2731, %v2729
        %v3206 = vpack.c.b16 %v2734, %v2732
        %v3207 = vpack.c.b16 %v2735, %v2733
        %v3208 = vpack.c.b16 %v2738, %v2736
        %v3209 = vpack.c.b16 %v2739, %v2737
        %v3210 = vpack.c.b16 %v2742, %v2740
        %v3211 = vpack.c.b16 %v2743, %v2741
        %v3212 = vpack.c.b16 %v2746, %v2744
        %v3213 = vpack.c.b16 %v2747, %v2745
        %v3214 = vpack.c.b16 %v2750, %v2748
        %v3215 = vpack.c.b16 %v2751, %v2749
        %v3216 = vpack.c.b16 %v2754, %v2752
        %v3217 = vpack.c.b16 %v2755, %v2753
        %v3218 = vpack.c.b16 %v2758, %v2756
        %v3219 = vpack.c.b16 %v2759, %v2757
        %v3220 = vpack.c.b16 %v2762, %v2760
        %v3221 = vpack.c.b16 %v2763, %v2761
        %v3222 = vpack.c.b16 %v2766, %v2764
        %v3223 = vpack.c.b16 %v2767, %v2765
        %v3224 = vpack.c.b16 %v2770, %v2768
        %v3225 = vpack.c.b16 %v2771, %v2769
        %v3226 = vpack.c.b16 %v2774, %v2772
        %v3227 = vpack.c.b16 %v2775, %v2773
        %v3228 = vpack.c.b16 %v2778, %v2776
        %v3229 = vpack.c.b16 %v2779, %v2777
        %v3230 = vpack.c.b16 %v2782, %v2780
        %v3231 = vpack.c.b16 %v2783, %v2781
        %v3232 = vpack.c.b16 %v2786, %v2784
        %v3233 = vpack.c.b16 %v2787, %v2785
        %v3234 = vpack.c.b16 %v2790, %v2788
        %v3235 = vpack.c.b16 %v2791, %v2789
        %v3236 = vpack.c.b16 %v2794, %v2792
        %v3237 = vpack.c.b16 %v2795, %v2793
        %v3238 = vpack.c.b16 %v2798, %v2796
        %v3239 = vpack.c.b16 %v2799, %v2797
        %v3240 = vpack.c.b16 %v2802, %v2800
        %v3241 = vpack.c.b16 %v2803, %v2801
        %v3242 = vpack.c.b16 %v2806, %v2804
        %v3243 = vpack.c.b16 %v2807, %v2805
        %v3244 = vpack.c.b16 %v2810, %v2808
        %v3245 = vpack.c.b16 %v2811, %v2809
        %v3246 = vpack.c.b16 %v2814, %v2812
        %v3247 = vpack.c.b16 %v2815, %v2813
        %v3248 = vpack.c.b16 %v2818, %v2816
        %v3249 = vpack.c.b16 %v2819, %v2817
        %v3250 = vpack.c.b16 %v2822, %v2820
        %v3251 = vpack.c.b16 %v2823, %v2821
        %v3252 = vpack.c.b16 %v2826, %v2824
        %v3253 = vpack.c.b16 %v2827, %v2825
        %v3254 = vpack.c.b16 %v2830, %v2828
        %v3255 = vpack.c.b16 %v2831, %v2829
        %v3256 = vpack.c.b16 %v2834, %v2832
        %v3257 = vpack.c.b16 %v2835, %v2833
        %v3258 = vpack.c.b16 %v2838, %v2836
        %v3259 = vpack.c.b16 %v2839, %v2837
        %v3260 = vpack.c.b16 %v2842, %v2840
        %v3261 = vpack.c.b16 %v2843, %v2841
        %v3262 = vpack.c.b16 %v2846, %v2844
        %v3263 = vpack.c.b16 %v2847, %v2845
        %v3264 = vpack.c.b16 %v2850, %v2848
        %v3265 = vpack.c.b16 %v2851, %v2849
        %v3266 = vpack.c.b16 %v2854, %v2852
        %v3267 = vpack.c.b16 %v2855, %v2853
        %v3268 = vpack.c.b16 %v2858, %v2856
        %v3269 = vpack.c.b16 %v2859, %v2857
        %v3270 = vpack.c.b16 %v2862, %v2860
        %v3271 = vpack.c.b16 %v2863, %v2861
        %v3272 = vpack.c.b16 %v2866, %v2864
        %v3273 = vpack.c.b16 %v2867, %v2865
        %v3274 = vpack.c.b16 %v2870, %v2868
        %v3275 = vpack.c.b16 %v2871, %v2869
        %v3276 = vpack.c.b16 %v2874, %v2872
        %v3277 = vpack.c.b16 %v2875, %v2873
        %v3278 = vpack.c.b16 %v2878, %v2876
        %v3279 = vpack.c.b16 %v2879, %v2877
        %v3280 = vpack.c.b16 %v2882, %v2880
        %v3281 = vpack.c.b16 %v2883, %v2881
        %v3282 = vpack.c.b16 %v2886, %v2884
        %v3283 = vpack.c.b16 %v2887, %v2885
        %v3284 = vpack.c.b16 %v2890, %v2888
        %v3285 = vpack.c.b16 %v2891, %v2889
        %v3286 = vpack.c.b16 %v2894, %v2892
        %v3287 = vpack.c.b16 %v2895, %v2893
        %v3288 = vpack.c.b16 %v2898, %v2896
        %v3289 = vpack.c.b16 %v2899, %v2897
        %v3290 = vpack.c.b16 %v2902, %v2900
        %v3291 = vpack.c.b16 %v2903, %v2901
        %v3292 = vpack.c.b16 %v2906, %v2904
        %v3293 = vpack.c.b16 %v2907, %v2905
        %v3294 = vpack.c.b16 %v2910, %v2908
        %v3295 = vpack.c.b16 %v2911, %v2909
        %v3296 = vpack.c.b16 %v2914, %v2912
        %v3297 = vpack.c.b16 %v2915, %v2913
        %v3298 = vpack.c.b16 %v2918, %v2916
        %v3299 = vpack.c.b16 %v2919, %v2917
        %v3300 = vpack.c.b16 %v2922, %v2920
        %v3301 = vpack.c.b16 %v2923, %v2921
        %v3302 = vpack.c.b16 %v2926, %v2924
        %v3303 = vpack.c.b16 %v2927, %v2925
        %v3304 = vpack.c.b16 %v2930, %v2928
        %v3305 = vpack.c.b16 %v2931, %v2929
        %v3306 = vpack.c.b16 %v2934, %v2932
        %v3307 = vpack.c.b16 %v2935, %v2933
        %v3308 = vpack.c.b16 %v2938, %v2936
        %v3309 = vpack.c.b16 %v2939, %v2937
        %v3310 = vpack.c.b16 %v2942, %v2940
        %v3311 = vpack.c.b16 %v2943, %v2941
        %v3312 = vpack.c.b16 %v2946, %v2944
        %v3313 = vpack.c.b16 %v2947, %v2945
        %v3314 = vpack.c.b16 %v2950, %v2948
        %v3315 = vpack.c.b16 %v2951, %v2949
        %v3316 = vpack.c.b16 %v2954, %v2952
        %v3317 = vpack.c.b16 %v2955, %v2953
        %v3318 = vpack.c.b16 %v2958, %v2956
        %v3319 = vpack.c.b16 %v2959, %v2957
        %v3320 = vpack.c.b16 %v2962, %v2960
        %v3321 = vpack.c.b16 %v2963, %v2961
        %v3322 = vpack.c.b16 %v2966, %v2964
        %v3323 = vpack.c.b16 %v2967, %v2965
        %v3324 = vpack.c.b16 %v2970, %v2968
        %v3325 = vpack.c.b16 %v2971, %v2969
        %v3326 = vpack.c.b16 %v2974, %v2972
        %v3327 = vpack.c.b16 %v2975, %v2973
        %v3328 = vpack.c.b16 %v2978, %v2976
        %v3329 = vpack.c.b16 %v2979, %v2977
        %v3330 = vpack.c.b16 %v2982, %v2980
        %v3331 = vpack.c.b16 %v2983, %v2981
        %v3332 = vpack.c.b16 %v2986, %v2984
        %v3333 = vpack.c.b16 %v2987, %v2985
        %v3334 = vpack.c.b16 %v2990, %v2988
        %v3335 = vpack.c.b16 %v2991, %v2989
        %v3336 = vpack.c.b16 %v2994, %v2992
        %v3337 = vpack.c.b16 %v2995, %v2993
        %v3338 = vpack.c.b16 %v2998, %v2996
        %v3339 = vpack.c.b16 %v2999, %v2997
        %v3340 = vpack.c.b16 %v3002, %v3000
        %v3341 = vpack.c.b16 %v3003, %v3001
        %v3342 = vpack.c.b16 %v3006, %v3004
        %v3343 = vpack.c.b16 %v3007, %v3005
        %3680 = vmatprep.subr.bf16.mxu0 %v3023
        %3681 = vmatpush1.bf16.msra.mxu0 %v3022
        %3682 = vmatprep.subr.bf16.mxu0 %v3021
        %3683 = vmatpush1.bf16.msra.mxu0 %v3020
        %3684 = vmatprep.subr.bf16.mxu0 %v3019
        %3685 = vmatpush1.bf16.msra.mxu0 %v3018
        %3686 = vmatprep.subr.bf16.mxu0 %v3017
        %3687 = vmatpush1.bf16.msra.mxu0 %v3016
        %3688 = vmatprep.subr.bf16.mxu0 %v3015
        %3689 = vmatpush1.bf16.msra.mxu0 %v3014
        %3690 = vmatprep.subr.bf16.mxu0 %v3013
        %3691 = vmatpush1.bf16.msra.mxu0 %v3012
        %3692 = vmatprep.subr.bf16.mxu0 %v3011
        %3693 = vmatpush1.bf16.msra.mxu0 %v3010
        %3694 = vmatprep.subr.bf16.mxu0 %v3009
        %3695 = vmatpush1.bf16.msra.mxu0 %v3008
        %3696 = vmatprep.subr.bf16.mxu0 %v3039
        %3697 = vmatpush2.bf16.msra.mxu0 %v3038
        %3698 = vmatprep.subr.bf16.mxu0 %v3037
        %3699 = vmatpush2.bf16.msra.mxu0 %v3036
        %3700 = vmatprep.subr.bf16.mxu0 %v3035
        %3701 = vmatpush2.bf16.msra.mxu0 %v3034
        %3702 = vmatprep.subr.bf16.mxu0 %v3033
        %3703 = vmatpush2.bf16.msra.mxu0 %v3032
        %3704 = vmatprep.subr.bf16.mxu0 %v3031
        %3705 = vmatpush2.bf16.msra.mxu0 %v3030
        %3706 = vmatprep.subr.bf16.mxu0 %v3029
        %3707 = vmatpush2.bf16.msra.mxu0 %v3028
        %3708 = vmatprep.subr.bf16.mxu0 %v3027
        %3709 = vmatpush2.bf16.msra.mxu0 %v3026
        %3710 = vmatprep.subr.bf16.mxu0 %v3025
        %3711 = vmatpush2.bf16.msra.mxu0 %v3024
        %3712 = vmatprep.mubr.bf16.mxu0 %v1665
        %3713 = vmatmul.mubr.bf16.gmra.mxu0 %v1664
        %v3714 = vpop.f32.mrf.mxu0
        %v3715 = vadd.f32 0.0, %v3714
        %v3716 = vpop.f32.mrf.mxu0
        %v3717 = vadd.f32 0.0, %v3716
        %v3718 = vpop.f32.mrf.mxu0
        %v3719 = vadd.f32 0.0, %v3718
        %v3720 = vpop.f32.mrf.mxu0
        %v3721 = vadd.f32 0.0, %v3720
        %3722 = vmatprep.mubr.bf16.mxu0 %v1686
        %3723 = vmatmul.mubr.bf16.gmra.mxu0 %v1685
        %v3724 = vpop.f32.mrf.mxu0
        %v3725 = vadd.f32 0.0, %v3724
        %v3726 = vpop.f32.mrf.mxu0
        %v3727 = vadd.f32 0.0, %v3726
        %v3728 = vpop.f32.mrf.mxu0
        %v3729 = vadd.f32 0.0, %v3728
        %v3730 = vpop.f32.mrf.mxu0
        %v3731 = vadd.f32 0.0, %v3730
        %3732 = vmatprep.mubr.bf16.mxu0 %v1707
        %3733 = vmatmul.mubr.bf16.gmra.mxu0 %v1706
        %v3734 = vpop.f32.mrf.mxu0
        %v3735 = vadd.f32 0.0, %v3734
        %v3736 = vpop.f32.mrf.mxu0
        %v3737 = vadd.f32 0.0, %v3736
        %v3738 = vpop.f32.mrf.mxu0
        %v3739 = vadd.f32 0.0, %v3738
        %v3740 = vpop.f32.mrf.mxu0
        %v3741 = vadd.f32 0.0, %v3740
        %3742 = vmatprep.mubr.bf16.mxu0 %v1728
        %3743 = vmatmul.mubr.bf16.gmra.mxu0 %v1727
        %v3744 = vpop.f32.mrf.mxu0
        %v3745 = vadd.f32 0.0, %v3744
        %v3746 = vpop.f32.mrf.mxu0
        %v3747 = vadd.f32 0.0, %v3746
        %v3748 = vpop.f32.mrf.mxu0
        %v3749 = vadd.f32 0.0, %v3748
        %v3750 = vpop.f32.mrf.mxu0
        %v3751 = vadd.f32 0.0, %v3750
        %3752 = vmatprep.mubr.bf16.mxu0 %v1749
        %3753 = vmatmul.mubr.bf16.gmra.mxu0 %v1748
        %v3754 = vpop.f32.mrf.mxu0
        %v3755 = vadd.f32 0.0, %v3754
        %v3756 = vpop.f32.mrf.mxu0
        %v3757 = vadd.f32 0.0, %v3756
        %v3758 = vpop.f32.mrf.mxu0
        %v3759 = vadd.f32 0.0, %v3758
        %v3760 = vpop.f32.mrf.mxu0
        %v3761 = vadd.f32 0.0, %v3760
        %3762 = vmatprep.mubr.bf16.mxu0 %v1770
        %3763 = vmatmul.mubr.bf16.gmra.mxu0 %v1769
        %v3764 = vpop.f32.mrf.mxu0
        %v3765 = vadd.f32 0.0, %v3764
        %v3766 = vpop.f32.mrf.mxu0
        %v3767 = vadd.f32 0.0, %v3766
        %v3768 = vpop.f32.mrf.mxu0
        %v3769 = vadd.f32 0.0, %v3768
        %v3770 = vpop.f32.mrf.mxu0
        %v3771 = vadd.f32 0.0, %v3770
        %3772 = vmatprep.mubr.bf16.mxu0 %v1791
        %3773 = vmatmul.mubr.bf16.gmra.mxu0 %v1790
        %v3774 = vpop.f32.mrf.mxu0
        %v3775 = vadd.f32 0.0, %v3774
        %v3776 = vpop.f32.mrf.mxu0
        %v3777 = vadd.f32 0.0, %v3776
        %v3778 = vpop.f32.mrf.mxu0
        %v3779 = vadd.f32 0.0, %v3778
        %v3780 = vpop.f32.mrf.mxu0
        %v3781 = vadd.f32 0.0, %v3780
        %3782 = vmatprep.mubr.bf16.mxu0 %v1812
        %3783 = vmatmul.mubr.bf16.gmra.mxu0 %v1811
        %v3784 = vpop.f32.mrf.mxu0
        %v3785 = vadd.f32 0.0, %v3784
        %v3786 = vpop.f32.mrf.mxu0
        %v3787 = vadd.f32 0.0, %v3786
        %v3788 = vpop.f32.mrf.mxu0
        %v3789 = vadd.f32 0.0, %v3788
        %v3790 = vpop.f32.mrf.mxu0
        %v3791 = vadd.f32 0.0, %v3790
        %3792 = vdwg.mxu0
        %3793 = vmatprep.subr.bf16.mxu0 %v3055
        %3794 = vmatpush1.bf16.msra.mxu0 %v3054
        %3795 = vmatprep.subr.bf16.mxu0 %v3053
        %3796 = vmatpush1.bf16.msra.mxu0 %v3052
        %3797 = vmatprep.subr.bf16.mxu0 %v3051
        %3798 = vmatpush1.bf16.msra.mxu0 %v3050
        %3799 = vmatprep.subr.bf16.mxu0 %v3049
        %3800 = vmatpush1.bf16.msra.mxu0 %v3048
        %3801 = vmatprep.subr.bf16.mxu0 %v3047
        %3802 = vmatpush1.bf16.msra.mxu0 %v3046
        %3803 = vmatprep.subr.bf16.mxu0 %v3045
        %3804 = vmatpush1.bf16.msra.mxu0 %v3044
        %3805 = vmatprep.subr.bf16.mxu0 %v3043
        %3806 = vmatpush1.bf16.msra.mxu0 %v3042
        %3807 = vmatprep.subr.bf16.mxu0 %v3041
        %3808 = vmatpush1.bf16.msra.mxu0 %v3040
        %3809 = vmatprep.subr.bf16.mxu0 %v3071
        %3810 = vmatpush2.bf16.msra.mxu0 %v3070
        %3811 = vmatprep.subr.bf16.mxu0 %v3069
        %3812 = vmatpush2.bf16.msra.mxu0 %v3068
        %3813 = vmatprep.subr.bf16.mxu0 %v3067
        %3814 = vmatpush2.bf16.msra.mxu0 %v3066
        %3815 = vmatprep.subr.bf16.mxu0 %v3065
        %3816 = vmatpush2.bf16.msra.mxu0 %v3064
        %3817 = vmatprep.subr.bf16.mxu0 %v3063
        %3818 = vmatpush2.bf16.msra.mxu0 %v3062
        %3819 = vmatprep.subr.bf16.mxu0 %v3061
        %3820 = vmatpush2.bf16.msra.mxu0 %v3060
        %3821 = vmatprep.subr.bf16.mxu0 %v3059
        %3822 = vmatpush2.bf16.msra.mxu0 %v3058
        %3823 = vmatprep.subr.bf16.mxu0 %v3057
        %3824 = vmatpush2.bf16.msra.mxu0 %v3056
        %3825 = vmatprep.mubr.bf16.mxu0 %v1667
        %3826 = vmatmul.mubr.bf16.gmra.mxu0 %v1666
        %v3827 = vpop.f32.mrf.mxu0
        %v3828 = vadd.f32 %v3715, %v3827
        %v3829 = vpop.f32.mrf.mxu0
        %v3830 = vadd.f32 %v3717, %v3829
        %v3831 = vpop.f32.mrf.mxu0
        %v3832 = vadd.f32 %v3719, %v3831
        %v3833 = vpop.f32.mrf.mxu0
        %v3834 = vadd.f32 %v3721, %v3833
        %3835 = vmatprep.mubr.bf16.mxu0 %v1688
        %3836 = vmatmul.mubr.bf16.gmra.mxu0 %v1687
        %v3837 = vpop.f32.mrf.mxu0
        %v3838 = vadd.f32 %v3725, %v3837
        %v3839 = vpop.f32.mrf.mxu0
        %v3840 = vadd.f32 %v3727, %v3839
        %v3841 = vpop.f32.mrf.mxu0
        %v3842 = vadd.f32 %v3729, %v3841
        %v3843 = vpop.f32.mrf.mxu0
        %v3844 = vadd.f32 %v3731, %v3843
        %3845 = vmatprep.mubr.bf16.mxu0 %v1709
        %3846 = vmatmul.mubr.bf16.gmra.mxu0 %v1708
        %v3847 = vpop.f32.mrf.mxu0
        %v3848 = vadd.f32 %v3735, %v3847
        %v3849 = vpop.f32.mrf.mxu0
        %v3850 = vadd.f32 %v3737, %v3849
        %v3851 = vpop.f32.mrf.mxu0
        %v3852 = vadd.f32 %v3739, %v3851
        %v3853 = vpop.f32.mrf.mxu0
        %v3854 = vadd.f32 %v3741, %v3853
        %3855 = vmatprep.mubr.bf16.mxu0 %v1730
        %3856 = vmatmul.mubr.bf16.gmra.mxu0 %v1729
        %v3857 = vpop.f32.mrf.mxu0
        %v3858 = vadd.f32 %v3745, %v3857
        %v3859 = vpop.f32.mrf.mxu0
        %v3860 = vadd.f32 %v3747, %v3859
        %v3861 = vpop.f32.mrf.mxu0
        %v3862 = vadd.f32 %v3749, %v3861
        %v3863 = vpop.f32.mrf.mxu0
        %v3864 = vadd.f32 %v3751, %v3863
        %3865 = vmatprep.mubr.bf16.mxu0 %v1751
        %3866 = vmatmul.mubr.bf16.gmra.mxu0 %v1750
        %v3867 = vpop.f32.mrf.mxu0
        %v3868 = vadd.f32 %v3755, %v3867
        %v3869 = vpop.f32.mrf.mxu0
        %v3870 = vadd.f32 %v3757, %v3869
        %v3871 = vpop.f32.mrf.mxu0
        %v3872 = vadd.f32 %v3759, %v3871
        %v3873 = vpop.f32.mrf.mxu0
        %v3874 = vadd.f32 %v3761, %v3873
        %3875 = vmatprep.mubr.bf16.mxu0 %v1772
        %3876 = vmatmul.mubr.bf16.gmra.mxu0 %v1771
        %v3877 = vpop.f32.mrf.mxu0
        %v3878 = vadd.f32 %v3765, %v3877
        %v3879 = vpop.f32.mrf.mxu0
        %v3880 = vadd.f32 %v3767, %v3879
        %v3881 = vpop.f32.mrf.mxu0
        %v3882 = vadd.f32 %v3769, %v3881
        %v3883 = vpop.f32.mrf.mxu0
        %v3884 = vadd.f32 %v3771, %v3883
        %3885 = vmatprep.mubr.bf16.mxu0 %v1793
        %3886 = vmatmul.mubr.bf16.gmra.mxu0 %v1792
        %v3887 = vpop.f32.mrf.mxu0
        %v3888 = vadd.f32 %v3775, %v3887
        %v3889 = vpop.f32.mrf.mxu0
        %v3890 = vadd.f32 %v3777, %v3889
        %v3891 = vpop.f32.mrf.mxu0
        %v3892 = vadd.f32 %v3779, %v3891
        %v3893 = vpop.f32.mrf.mxu0
        %v3894 = vadd.f32 %v3781, %v3893
        %3895 = vmatprep.mubr.bf16.mxu0 %v1814
        %3896 = vmatmul.mubr.bf16.gmra.mxu0 %v1813
        %v3897 = vpop.f32.mrf.mxu0
        %v3898 = vadd.f32 %v3785, %v3897
        %v3899 = vpop.f32.mrf.mxu0
        %v3900 = vadd.f32 %v3787, %v3899
        %v3901 = vpop.f32.mrf.mxu0
        %v3902 = vadd.f32 %v3789, %v3901
        %v3903 = vpop.f32.mrf.mxu0
        %v3904 = vadd.f32 %v3791, %v3903
        %3905 = vdwg.mxu0
        %3906 = vmatprep.subr.bf16.mxu0 %v3087
        %3907 = vmatpush1.bf16.msra.mxu0 %v3086
        %3908 = vmatprep.subr.bf16.mxu0 %v3085
        %3909 = vmatpush1.bf16.msra.mxu0 %v3084
        %3910 = vmatprep.subr.bf16.mxu0 %v3083
        %3911 = vmatpush1.bf16.msra.mxu0 %v3082
        %3912 = vmatprep.subr.bf16.mxu0 %v3081
        %3913 = vmatpush1.bf16.msra.mxu0 %v3080
        %3914 = vmatprep.subr.bf16.mxu0 %v3079
        %3915 = vmatpush1.bf16.msra.mxu0 %v3078
        %3916 = vmatprep.subr.bf16.mxu0 %v3077
        %3917 = vmatpush1.bf16.msra.mxu0 %v3076
        %3918 = vmatprep.subr.bf16.mxu0 %v3075
        %3919 = vmatpush1.bf16.msra.mxu0 %v3074
        %3920 = vmatprep.subr.bf16.mxu0 %v3073
        %3921 = vmatpush1.bf16.msra.mxu0 %v3072
        %3922 = vmatprep.subr.bf16.mxu0 %v3103
        %3923 = vmatpush2.bf16.msra.mxu0 %v3102
        %3924 = vmatprep.subr.bf16.mxu0 %v3101
        %3925 = vmatpush2.bf16.msra.mxu0 %v3100
        %3926 = vmatprep.subr.bf16.mxu0 %v3099
        %3927 = vmatpush2.bf16.msra.mxu0 %v3098
        %3928 = vmatprep.subr.bf16.mxu0 %v3097
        %3929 = vmatpush2.bf16.msra.mxu0 %v3096
        %3930 = vmatprep.subr.bf16.mxu0 %v3095
        %3931 = vmatpush2.bf16.msra.mxu0 %v3094
        %3932 = vmatprep.subr.bf16.mxu0 %v3093
        %3933 = vmatpush2.bf16.msra.mxu0 %v3092
        %3934 = vmatprep.subr.bf16.mxu0 %v3091
        %3935 = vmatpush2.bf16.msra.mxu0 %v3090
        %3936 = vmatprep.subr.bf16.mxu0 %v3089
        %3937 = vmatpush2.bf16.msra.mxu0 %v3088
        %3938 = vmatprep.mubr.bf16.mxu0 %v1669
        %3939 = vmatmul.mubr.bf16.gmra.mxu0 %v1668
        %v3940 = vpop.f32.mrf.mxu0
        %v3941 = vadd.f32 %v3828, %v3940
        %v3942 = vpop.f32.mrf.mxu0
        %v3943 = vadd.f32 %v3830, %v3942
        %v3944 = vpop.f32.mrf.mxu0
        %v3945 = vadd.f32 %v3832, %v3944
        %v3946 = vpop.f32.mrf.mxu0
        %v3947 = vadd.f32 %v3834, %v3946
        %3948 = vmatprep.mubr.bf16.mxu0 %v1690
        %3949 = vmatmul.mubr.bf16.gmra.mxu0 %v1689
        %v3950 = vpop.f32.mrf.mxu0
        %v3951 = vadd.f32 %v3838, %v3950
        %v3952 = vpop.f32.mrf.mxu0
        %v3953 = vadd.f32 %v3840, %v3952
        %v3954 = vpop.f32.mrf.mxu0
        %v3955 = vadd.f32 %v3842, %v3954
        %v3956 = vpop.f32.mrf.mxu0
        %v3957 = vadd.f32 %v3844, %v3956
        %3958 = vmatprep.mubr.bf16.mxu0 %v1711
        %3959 = vmatmul.mubr.bf16.gmra.mxu0 %v1710
        %v3960 = vpop.f32.mrf.mxu0
        %v3961 = vadd.f32 %v3848, %v3960
        %v3962 = vpop.f32.mrf.mxu0
        %v3963 = vadd.f32 %v3850, %v3962
        %v3964 = vpop.f32.mrf.mxu0
        %v3965 = vadd.f32 %v3852, %v3964
        %v3966 = vpop.f32.mrf.mxu0
        %v3967 = vadd.f32 %v3854, %v3966
        %3968 = vmatprep.mubr.bf16.mxu0 %v1732
        %3969 = vmatmul.mubr.bf16.gmra.mxu0 %v1731
        %v3970 = vpop.f32.mrf.mxu0
        %v3971 = vadd.f32 %v3858, %v3970
        %v3972 = vpop.f32.mrf.mxu0
        %v3973 = vadd.f32 %v3860, %v3972
        %v3974 = vpop.f32.mrf.mxu0
        %v3975 = vadd.f32 %v3862, %v3974
        %v3976 = vpop.f32.mrf.mxu0
        %v3977 = vadd.f32 %v3864, %v3976
        %3978 = vmatprep.mubr.bf16.mxu0 %v1753
        %3979 = vmatmul.mubr.bf16.gmra.mxu0 %v1752
        %v3980 = vpop.f32.mrf.mxu0
        %v3981 = vadd.f32 %v3868, %v3980
        %v3982 = vpop.f32.mrf.mxu0
        %v3983 = vadd.f32 %v3870, %v3982
        %v3984 = vpop.f32.mrf.mxu0
        %v3985 = vadd.f32 %v3872, %v3984
        %v3986 = vpop.f32.mrf.mxu0
        %v3987 = vadd.f32 %v3874, %v3986
        %3988 = vmatprep.mubr.bf16.mxu0 %v1774
        %3989 = vmatmul.mubr.bf16.gmra.mxu0 %v1773
        %v3990 = vpop.f32.mrf.mxu0
        %v3991 = vadd.f32 %v3878, %v3990
        %v3992 = vpop.f32.mrf.mxu0
        %v3993 = vadd.f32 %v3880, %v3992
        %v3994 = vpop.f32.mrf.mxu0
        %v3995 = vadd.f32 %v3882, %v3994
        %v3996 = vpop.f32.mrf.mxu0
        %v3997 = vadd.f32 %v3884, %v3996
        %3998 = vmatprep.mubr.bf16.mxu0 %v1795
        %3999 = vmatmul.mubr.bf16.gmra.mxu0 %v1794
        %v4000 = vpop.f32.mrf.mxu0
        %v4001 = vadd.f32 %v3888, %v4000
        %v4002 = vpop.f32.mrf.mxu0
        %v4003 = vadd.f32 %v3890, %v4002
        %v4004 = vpop.f32.mrf.mxu0
        %v4005 = vadd.f32 %v3892, %v4004
        %v4006 = vpop.f32.mrf.mxu0
        %v4007 = vadd.f32 %v3894, %v4006
        %4008 = vmatprep.mubr.bf16.mxu0 %v1816
        %4009 = vmatmul.mubr.bf16.gmra.mxu0 %v1815
        %v4010 = vpop.f32.mrf.mxu0
        %v4011 = vadd.f32 %v3898, %v4010
        %v4012 = vpop.f32.mrf.mxu0
        %v4013 = vadd.f32 %v3900, %v4012
        %v4014 = vpop.f32.mrf.mxu0
        %v4015 = vadd.f32 %v3902, %v4014
        %v4016 = vpop.f32.mrf.mxu0
        %v4017 = vadd.f32 %v3904, %v4016
        %4018 = vdwg.mxu0
        %4019 = vmatprep.subr.bf16.mxu0 %v3119
        %4020 = vmatpush1.bf16.msra.mxu0 %v3118
        %4021 = vmatprep.subr.bf16.mxu0 %v3117
        %4022 = vmatpush1.bf16.msra.mxu0 %v3116
        %4023 = vmatprep.subr.bf16.mxu0 %v3115
        %4024 = vmatpush1.bf16.msra.mxu0 %v3114
        %4025 = vmatprep.subr.bf16.mxu0 %v3113
        %4026 = vmatpush1.bf16.msra.mxu0 %v3112
        %4027 = vmatprep.subr.bf16.mxu0 %v3111
        %4028 = vmatpush1.bf16.msra.mxu0 %v3110
        %4029 = vmatprep.subr.bf16.mxu0 %v3109
        %4030 = vmatpush1.bf16.msra.mxu0 %v3108
        %4031 = vmatprep.subr.bf16.mxu0 %v3107
        %4032 = vmatpush1.bf16.msra.mxu0 %v3106
        %4033 = vmatprep.subr.bf16.mxu0 %v3105
        %4034 = vmatpush1.bf16.msra.mxu0 %v3104
        %4035 = vmatprep.subr.bf16.mxu0 %v3135
        %4036 = vmatpush2.bf16.msra.mxu0 %v3134
        %4037 = vmatprep.subr.bf16.mxu0 %v3133
        %4038 = vmatpush2.bf16.msra.mxu0 %v3132
        %4039 = vmatprep.subr.bf16.mxu0 %v3131
        %4040 = vmatpush2.bf16.msra.mxu0 %v3130
        %4041 = vmatprep.subr.bf16.mxu0 %v3129
        %4042 = vmatpush2.bf16.msra.mxu0 %v3128
        %4043 = vmatprep.subr.bf16.mxu0 %v3127
        %4044 = vmatpush2.bf16.msra.mxu0 %v3126
        %4045 = vmatprep.subr.bf16.mxu0 %v3125
        %4046 = vmatpush2.bf16.msra.mxu0 %v3124
        %4047 = vmatprep.subr.bf16.mxu0 %v3123
        %4048 = vmatpush2.bf16.msra.mxu0 %v3122
        %4049 = vmatprep.subr.bf16.mxu0 %v3121
        %4050 = vmatpush2.bf16.msra.mxu0 %v3120
        %4051 = vmatprep.mubr.bf16.mxu0 %v1671
        %4052 = vmatmul.mubr.bf16.gmra.mxu0 %v1670
        %v4053 = vpop.f32.mrf.mxu0
        %v4054 = vadd.f32 %v3941, %v4053
        %v4055 = vpop.f32.mrf.mxu0
        %v4056 = vadd.f32 %v3943, %v4055
        %v4057 = vpop.f32.mrf.mxu0
        %v4058 = vadd.f32 %v3945, %v4057
        %v4059 = vpop.f32.mrf.mxu0
        %v4060 = vadd.f32 %v3947, %v4059
        %4061 = vmatprep.mubr.bf16.mxu0 %v1692
        %4062 = vmatmul.mubr.bf16.gmra.mxu0 %v1691
        %v4063 = vpop.f32.mrf.mxu0
        %v4064 = vadd.f32 %v3951, %v4063
        %v4065 = vpop.f32.mrf.mxu0
        %v4066 = vadd.f32 %v3953, %v4065
        %v4067 = vpop.f32.mrf.mxu0
        %v4068 = vadd.f32 %v3955, %v4067
        %v4069 = vpop.f32.mrf.mxu0
        %v4070 = vadd.f32 %v3957, %v4069
        %4071 = vmatprep.mubr.bf16.mxu0 %v1713
        %4072 = vmatmul.mubr.bf16.gmra.mxu0 %v1712
        %v4073 = vpop.f32.mrf.mxu0
        %v4074 = vadd.f32 %v3961, %v4073
        %v4075 = vpop.f32.mrf.mxu0
        %v4076 = vadd.f32 %v3963, %v4075
        %v4077 = vpop.f32.mrf.mxu0
        %v4078 = vadd.f32 %v3965, %v4077
        %v4079 = vpop.f32.mrf.mxu0
        %v4080 = vadd.f32 %v3967, %v4079
        %4081 = vmatprep.mubr.bf16.mxu0 %v1734
        %4082 = vmatmul.mubr.bf16.gmra.mxu0 %v1733
        %v4083 = vpop.f32.mrf.mxu0
        %v4084 = vadd.f32 %v3971, %v4083
        %v4085 = vpop.f32.mrf.mxu0
        %v4086 = vadd.f32 %v3973, %v4085
        %v4087 = vpop.f32.mrf.mxu0
        %v4088 = vadd.f32 %v3975, %v4087
        %v4089 = vpop.f32.mrf.mxu0
        %v4090 = vadd.f32 %v3977, %v4089
        %4091 = vmatprep.mubr.bf16.mxu0 %v1755
        %4092 = vmatmul.mubr.bf16.gmra.mxu0 %v1754
        %v4093 = vpop.f32.mrf.mxu0
        %v4094 = vadd.f32 %v3981, %v4093
        %v4095 = vpop.f32.mrf.mxu0
        %v4096 = vadd.f32 %v3983, %v4095
        %v4097 = vpop.f32.mrf.mxu0
        %v4098 = vadd.f32 %v3985, %v4097
        %v4099 = vpop.f32.mrf.mxu0
        %v4100 = vadd.f32 %v3987, %v4099
        %4101 = vmatprep.mubr.bf16.mxu0 %v1776
        %4102 = vmatmul.mubr.bf16.gmra.mxu0 %v1775
        %v4103 = vpop.f32.mrf.mxu0
        %v4104 = vadd.f32 %v3991, %v4103
        %v4105 = vpop.f32.mrf.mxu0
        %v4106 = vadd.f32 %v3993, %v4105
        %v4107 = vpop.f32.mrf.mxu0
        %v4108 = vadd.f32 %v3995, %v4107
        %v4109 = vpop.f32.mrf.mxu0
        %v4110 = vadd.f32 %v3997, %v4109
        %4111 = vmatprep.mubr.bf16.mxu0 %v1797
        %4112 = vmatmul.mubr.bf16.gmra.mxu0 %v1796
        %v4113 = vpop.f32.mrf.mxu0
        %v4114 = vadd.f32 %v4001, %v4113
        %v4115 = vpop.f32.mrf.mxu0
        %v4116 = vadd.f32 %v4003, %v4115
        %v4117 = vpop.f32.mrf.mxu0
        %v4118 = vadd.f32 %v4005, %v4117
        %v4119 = vpop.f32.mrf.mxu0
        %v4120 = vadd.f32 %v4007, %v4119
        %4121 = vmatprep.mubr.bf16.mxu0 %v1818
        %4122 = vmatmul.mubr.bf16.gmra.mxu0 %v1817
        %v4123 = vpop.f32.mrf.mxu0
        %v4124 = vadd.f32 %v4011, %v4123
        %v4125 = vpop.f32.mrf.mxu0
        %v4126 = vadd.f32 %v4013, %v4125
        %v4127 = vpop.f32.mrf.mxu0
        %v4128 = vadd.f32 %v4015, %v4127
        %v4129 = vpop.f32.mrf.mxu0
        %v4130 = vadd.f32 %v4017, %v4129
        %4131 = vdwg.mxu0
        %4132 = vmatprep.subr.bf16.mxu0 %v3151
        %4133 = vmatpush1.bf16.msra.mxu0 %v3150
        %4134 = vmatprep.subr.bf16.mxu0 %v3149
        %4135 = vmatpush1.bf16.msra.mxu0 %v3148
        %4136 = vmatprep.subr.bf16.mxu0 %v3147
        %4137 = vmatpush1.bf16.msra.mxu0 %v3146
        %4138 = vmatprep.subr.bf16.mxu0 %v3145
        %4139 = vmatpush1.bf16.msra.mxu0 %v3144
        %4140 = vmatprep.subr.bf16.mxu0 %v3143
        %4141 = vmatpush1.bf16.msra.mxu0 %v3142
        %4142 = vmatprep.subr.bf16.mxu0 %v3141
        %4143 = vmatpush1.bf16.msra.mxu0 %v3140
        %4144 = vmatprep.subr.bf16.mxu0 %v3139
        %4145 = vmatpush1.bf16.msra.mxu0 %v3138
        %4146 = vmatprep.subr.bf16.mxu0 %v3137
        %4147 = vmatpush1.bf16.msra.mxu0 %v3136
        %4148 = vmatprep.subr.bf16.mxu0 %v3167
        %4149 = vmatpush2.bf16.msra.mxu0 %v3166
        %4150 = vmatprep.subr.bf16.mxu0 %v3165
        %4151 = vmatpush2.bf16.msra.mxu0 %v3164
        %4152 = vmatprep.subr.bf16.mxu0 %v3163
        %4153 = vmatpush2.bf16.msra.mxu0 %v3162
        %4154 = vmatprep.subr.bf16.mxu0 %v3161
        %4155 = vmatpush2.bf16.msra.mxu0 %v3160
        %4156 = vmatprep.subr.bf16.mxu0 %v3159
        %4157 = vmatpush2.bf16.msra.mxu0 %v3158
        %4158 = vmatprep.subr.bf16.mxu0 %v3157
        %4159 = vmatpush2.bf16.msra.mxu0 %v3156
        %4160 = vmatprep.subr.bf16.mxu0 %v3155
        %4161 = vmatpush2.bf16.msra.mxu0 %v3154
        %4162 = vmatprep.subr.bf16.mxu0 %v3153
        %4163 = vmatpush2.bf16.msra.mxu0 %v3152
        %4164 = vmatprep.mubr.bf16.mxu0 %v1673
        %4165 = vmatmul.mubr.bf16.gmra.mxu0 %v1672
        %v4166 = vpop.f32.mrf.mxu0
        %v4167 = vadd.f32 %v4054, %v4166
        %v4168 = vpop.f32.mrf.mxu0
        %v4169 = vadd.f32 %v4056, %v4168
        %v4170 = vpop.f32.mrf.mxu0
        %v4171 = vadd.f32 %v4058, %v4170
        %v4172 = vpop.f32.mrf.mxu0
        %v4173 = vadd.f32 %v4060, %v4172
        %4174 = vmatprep.mubr.bf16.mxu0 %v1694
        %4175 = vmatmul.mubr.bf16.gmra.mxu0 %v1693
        %v4176 = vpop.f32.mrf.mxu0
        %v4177 = vadd.f32 %v4064, %v4176
        %v4178 = vpop.f32.mrf.mxu0
        %v4179 = vadd.f32 %v4066, %v4178
        %v4180 = vpop.f32.mrf.mxu0
        %v4181 = vadd.f32 %v4068, %v4180
        %v4182 = vpop.f32.mrf.mxu0
        %v4183 = vadd.f32 %v4070, %v4182
        %4184 = vmatprep.mubr.bf16.mxu0 %v1715
        %4185 = vmatmul.mubr.bf16.gmra.mxu0 %v1714
        %v4186 = vpop.f32.mrf.mxu0
        %v4187 = vadd.f32 %v4074, %v4186
        %v4188 = vpop.f32.mrf.mxu0
        %v4189 = vadd.f32 %v4076, %v4188
        %v4190 = vpop.f32.mrf.mxu0
        %v4191 = vadd.f32 %v4078, %v4190
        %v4192 = vpop.f32.mrf.mxu0
        %v4193 = vadd.f32 %v4080, %v4192
        %4194 = vmatprep.mubr.bf16.mxu0 %v1736
        %4195 = vmatmul.mubr.bf16.gmra.mxu0 %v1735
        %v4196 = vpop.f32.mrf.mxu0
        %v4197 = vadd.f32 %v4084, %v4196
        %v4198 = vpop.f32.mrf.mxu0
        %v4199 = vadd.f32 %v4086, %v4198
        %v4200 = vpop.f32.mrf.mxu0
        %v4201 = vadd.f32 %v4088, %v4200
        %v4202 = vpop.f32.mrf.mxu0
        %v4203 = vadd.f32 %v4090, %v4202
        %4204 = vmatprep.mubr.bf16.mxu0 %v1757
        %4205 = vmatmul.mubr.bf16.gmra.mxu0 %v1756
        %v4206 = vpop.f32.mrf.mxu0
        %v4207 = vadd.f32 %v4094, %v4206
        %v4208 = vpop.f32.mrf.mxu0
        %v4209 = vadd.f32 %v4096, %v4208
        %v4210 = vpop.f32.mrf.mxu0
        %v4211 = vadd.f32 %v4098, %v4210
        %v4212 = vpop.f32.mrf.mxu0
        %v4213 = vadd.f32 %v4100, %v4212
        %4214 = vmatprep.mubr.bf16.mxu0 %v1778
        %4215 = vmatmul.mubr.bf16.gmra.mxu0 %v1777
        %v4216 = vpop.f32.mrf.mxu0
        %v4217 = vadd.f32 %v4104, %v4216
        %v4218 = vpop.f32.mrf.mxu0
        %v4219 = vadd.f32 %v4106, %v4218
        %v4220 = vpop.f32.mrf.mxu0
        %v4221 = vadd.f32 %v4108, %v4220
        %v4222 = vpop.f32.mrf.mxu0
        %v4223 = vadd.f32 %v4110, %v4222
        %4224 = vmatprep.mubr.bf16.mxu0 %v1799
        %4225 = vmatmul.mubr.bf16.gmra.mxu0 %v1798
        %v4226 = vpop.f32.mrf.mxu0
        %v4227 = vadd.f32 %v4114, %v4226
        %v4228 = vpop.f32.mrf.mxu0
        %v4229 = vadd.f32 %v4116, %v4228
        %v4230 = vpop.f32.mrf.mxu0
        %v4231 = vadd.f32 %v4118, %v4230
        %v4232 = vpop.f32.mrf.mxu0
        %v4233 = vadd.f32 %v4120, %v4232
        %4234 = vmatprep.mubr.bf16.mxu0 %v1820
        %4235 = vmatmul.mubr.bf16.gmra.mxu0 %v1819
        %v4236 = vpop.f32.mrf.mxu0
        %v4237 = vadd.f32 %v4124, %v4236
        %v4238 = vpop.f32.mrf.mxu0
        %v4239 = vadd.f32 %v4126, %v4238
        %v4240 = vpop.f32.mrf.mxu0
        %v4241 = vadd.f32 %v4128, %v4240
        %v4242 = vpop.f32.mrf.mxu0
        %v4243 = vadd.f32 %v4130, %v4242
        %4244 = vdwg.mxu0
        %4245 = vmatprep.subr.bf16.mxu0 %v3183
        %4246 = vmatpush1.bf16.msra.mxu0 %v3182
        %4247 = vmatprep.subr.bf16.mxu0 %v3181
        %4248 = vmatpush1.bf16.msra.mxu0 %v3180
        %4249 = vmatprep.subr.bf16.mxu0 %v3179
        %4250 = vmatpush1.bf16.msra.mxu0 %v3178
        %4251 = vmatprep.subr.bf16.mxu0 %v3177
        %4252 = vmatpush1.bf16.msra.mxu0 %v3176
        %4253 = vmatprep.subr.bf16.mxu0 %v3175
        %4254 = vmatpush1.bf16.msra.mxu0 %v3174
        %4255 = vmatprep.subr.bf16.mxu0 %v3173
        %4256 = vmatpush1.bf16.msra.mxu0 %v3172
        %4257 = vmatprep.subr.bf16.mxu0 %v3171
        %4258 = vmatpush1.bf16.msra.mxu0 %v3170
        %4259 = vmatprep.subr.bf16.mxu0 %v3169
        %4260 = vmatpush1.bf16.msra.mxu0 %v3168
        %4261 = vmatprep.subr.bf16.mxu0 %v3199
        %4262 = vmatpush2.bf16.msra.mxu0 %v3198
        %4263 = vmatprep.subr.bf16.mxu0 %v3197
        %4264 = vmatpush2.bf16.msra.mxu0 %v3196
        %4265 = vmatprep.subr.bf16.mxu0 %v3195
        %4266 = vmatpush2.bf16.msra.mxu0 %v3194
        %4267 = vmatprep.subr.bf16.mxu0 %v3193
        %4268 = vmatpush2.bf16.msra.mxu0 %v3192
        %4269 = vmatprep.subr.bf16.mxu0 %v3191
        %4270 = vmatpush2.bf16.msra.mxu0 %v3190
        %4271 = vmatprep.subr.bf16.mxu0 %v3189
        %4272 = vmatpush2.bf16.msra.mxu0 %v3188
        %4273 = vmatprep.subr.bf16.mxu0 %v3187
        %4274 = vmatpush2.bf16.msra.mxu0 %v3186
        %4275 = vmatprep.subr.bf16.mxu0 %v3185
        %4276 = vmatpush2.bf16.msra.mxu0 %v3184
        %4277 = vmatprep.mubr.bf16.mxu0 %v1675
        %4278 = vmatmul.mubr.bf16.gmra.mxu0 %v1674
        %v4279 = vpop.f32.mrf.mxu0
        %v4280 = vadd.f32 %v4167, %v4279
        %v4281 = vpop.f32.mrf.mxu0
        %v4282 = vadd.f32 %v4169, %v4281
        %v4283 = vpop.f32.mrf.mxu0
        %v4284 = vadd.f32 %v4171, %v4283
        %v4285 = vpop.f32.mrf.mxu0
        %v4286 = vadd.f32 %v4173, %v4285
        %4287 = vmatprep.mubr.bf16.mxu0 %v1696
        %4288 = vmatmul.mubr.bf16.gmra.mxu0 %v1695
        %v4289 = vpop.f32.mrf.mxu0
        %v4290 = vadd.f32 %v4177, %v4289
        %v4291 = vpop.f32.mrf.mxu0
        %v4292 = vadd.f32 %v4179, %v4291
        %v4293 = vpop.f32.mrf.mxu0
        %v4294 = vadd.f32 %v4181, %v4293
        %v4295 = vpop.f32.mrf.mxu0
        %v4296 = vadd.f32 %v4183, %v4295
        %4297 = vmatprep.mubr.bf16.mxu0 %v1717
        %4298 = vmatmul.mubr.bf16.gmra.mxu0 %v1716
        %v4299 = vpop.f32.mrf.mxu0
        %v4300 = vadd.f32 %v4187, %v4299
        %v4301 = vpop.f32.mrf.mxu0
        %v4302 = vadd.f32 %v4189, %v4301
        %v4303 = vpop.f32.mrf.mxu0
        %v4304 = vadd.f32 %v4191, %v4303
        %v4305 = vpop.f32.mrf.mxu0
        %v4306 = vadd.f32 %v4193, %v4305
        %4307 = vmatprep.mubr.bf16.mxu0 %v1738
        %4308 = vmatmul.mubr.bf16.gmra.mxu0 %v1737
        %v4309 = vpop.f32.mrf.mxu0
        %v4310 = vadd.f32 %v4197, %v4309
        %v4311 = vpop.f32.mrf.mxu0
        %v4312 = vadd.f32 %v4199, %v4311
        %v4313 = vpop.f32.mrf.mxu0
        %v4314 = vadd.f32 %v4201, %v4313
        %v4315 = vpop.f32.mrf.mxu0
        %v4316 = vadd.f32 %v4203, %v4315
        %4317 = vmatprep.mubr.bf16.mxu0 %v1759
        %4318 = vmatmul.mubr.bf16.gmra.mxu0 %v1758
        %v4319 = vpop.f32.mrf.mxu0
        %v4320 = vadd.f32 %v4207, %v4319
        %v4321 = vpop.f32.mrf.mxu0
        %v4322 = vadd.f32 %v4209, %v4321
        %v4323 = vpop.f32.mrf.mxu0
        %v4324 = vadd.f32 %v4211, %v4323
        %v4325 = vpop.f32.mrf.mxu0
        %v4326 = vadd.f32 %v4213, %v4325
        %4327 = vmatprep.mubr.bf16.mxu0 %v1780
        %4328 = vmatmul.mubr.bf16.gmra.mxu0 %v1779
        %v4329 = vpop.f32.mrf.mxu0
        %v4330 = vadd.f32 %v4217, %v4329
        %v4331 = vpop.f32.mrf.mxu0
        %v4332 = vadd.f32 %v4219, %v4331
        %v4333 = vpop.f32.mrf.mxu0
        %v4334 = vadd.f32 %v4221, %v4333
        %v4335 = vpop.f32.mrf.mxu0
        %v4336 = vadd.f32 %v4223, %v4335
        %4337 = vmatprep.mubr.bf16.mxu0 %v1801
        %4338 = vmatmul.mubr.bf16.gmra.mxu0 %v1800
        %v4339 = vpop.f32.mrf.mxu0
        %v4340 = vadd.f32 %v4227, %v4339
        %v4341 = vpop.f32.mrf.mxu0
        %v4342 = vadd.f32 %v4229, %v4341
        %v4343 = vpop.f32.mrf.mxu0
        %v4344 = vadd.f32 %v4231, %v4343
        %v4345 = vpop.f32.mrf.mxu0
        %v4346 = vadd.f32 %v4233, %v4345
        %4347 = vmatprep.mubr.bf16.mxu0 %v1822
        %4348 = vmatmul.mubr.bf16.gmra.mxu0 %v1821
        %v4349 = vpop.f32.mrf.mxu0
        %v4350 = vadd.f32 %v4237, %v4349
        %v4351 = vpop.f32.mrf.mxu0
        %v4352 = vadd.f32 %v4239, %v4351
        %v4353 = vpop.f32.mrf.mxu0
        %v4354 = vadd.f32 %v4241, %v4353
        %v4355 = vpop.f32.mrf.mxu0
        %v4356 = vadd.f32 %v4243, %v4355
        %4357 = vdwg.mxu0
        %4358 = vmatprep.subr.bf16.mxu0 %v3215
        %4359 = vmatpush1.bf16.msra.mxu0 %v3214
        %4360 = vmatprep.subr.bf16.mxu0 %v3213
        %4361 = vmatpush1.bf16.msra.mxu0 %v3212
        %4362 = vmatprep.subr.bf16.mxu0 %v3211
        %4363 = vmatpush1.bf16.msra.mxu0 %v3210
        %4364 = vmatprep.subr.bf16.mxu0 %v3209
        %4365 = vmatpush1.bf16.msra.mxu0 %v3208
        %4366 = vmatprep.subr.bf16.mxu0 %v3207
        %4367 = vmatpush1.bf16.msra.mxu0 %v3206
        %4368 = vmatprep.subr.bf16.mxu0 %v3205
        %4369 = vmatpush1.bf16.msra.mxu0 %v3204
        %4370 = vmatprep.subr.bf16.mxu0 %v3203
        %4371 = vmatpush1.bf16.msra.mxu0 %v3202
        %4372 = vmatprep.subr.bf16.mxu0 %v3201
        %4373 = vmatpush1.bf16.msra.mxu0 %v3200
        %4374 = vmatprep.subr.bf16.mxu0 %v3231
        %4375 = vmatpush2.bf16.msra.mxu0 %v3230
        %4376 = vmatprep.subr.bf16.mxu0 %v3229
        %4377 = vmatpush2.bf16.msra.mxu0 %v3228
        %4378 = vmatprep.subr.bf16.mxu0 %v3227
        %4379 = vmatpush2.bf16.msra.mxu0 %v3226
        %4380 = vmatprep.subr.bf16.mxu0 %v3225
        %4381 = vmatpush2.bf16.msra.mxu0 %v3224
        %4382 = vmatprep.subr.bf16.mxu0 %v3223
        %4383 = vmatpush2.bf16.msra.mxu0 %v3222
        %4384 = vmatprep.subr.bf16.mxu0 %v3221
        %4385 = vmatpush2.bf16.msra.mxu0 %v3220
        %4386 = vmatprep.subr.bf16.mxu0 %v3219
        %4387 = vmatpush2.bf16.msra.mxu0 %v3218
        %4388 = vmatprep.subr.bf16.mxu0 %v3217
        %4389 = vmatpush2.bf16.msra.mxu0 %v3216
        %4390 = vmatprep.mubr.bf16.mxu0 %v1677
        %4391 = vmatmul.mubr.bf16.gmra.mxu0 %v1676
        %v4392 = vpop.f32.mrf.mxu0
        %v4393 = vadd.f32 %v4280, %v4392
        %v4394 = vpop.f32.mrf.mxu0
        %v4395 = vadd.f32 %v4282, %v4394
        %v4396 = vpop.f32.mrf.mxu0
        %v4397 = vadd.f32 %v4284, %v4396
        %v4398 = vpop.f32.mrf.mxu0
        %v4399 = vadd.f32 %v4286, %v4398
        %4400 = vmatprep.mubr.bf16.mxu0 %v1698
        %4401 = vmatmul.mubr.bf16.gmra.mxu0 %v1697
        %v4402 = vpop.f32.mrf.mxu0
        %v4403 = vadd.f32 %v4290, %v4402
        %v4404 = vpop.f32.mrf.mxu0
        %v4405 = vadd.f32 %v4292, %v4404
        %v4406 = vpop.f32.mrf.mxu0
        %v4407 = vadd.f32 %v4294, %v4406
        %v4408 = vpop.f32.mrf.mxu0
        %v4409 = vadd.f32 %v4296, %v4408
        %4410 = vmatprep.mubr.bf16.mxu0 %v1719
        %4411 = vmatmul.mubr.bf16.gmra.mxu0 %v1718
        %v4412 = vpop.f32.mrf.mxu0
        %v4413 = vadd.f32 %v4300, %v4412
        %v4414 = vpop.f32.mrf.mxu0
        %v4415 = vadd.f32 %v4302, %v4414
        %v4416 = vpop.f32.mrf.mxu0
        %v4417 = vadd.f32 %v4304, %v4416
        %v4418 = vpop.f32.mrf.mxu0
        %v4419 = vadd.f32 %v4306, %v4418
        %4420 = vmatprep.mubr.bf16.mxu0 %v1740
        %4421 = vmatmul.mubr.bf16.gmra.mxu0 %v1739
        %v4422 = vpop.f32.mrf.mxu0
        %v4423 = vadd.f32 %v4310, %v4422
        %v4424 = vpop.f32.mrf.mxu0
        %v4425 = vadd.f32 %v4312, %v4424
        %v4426 = vpop.f32.mrf.mxu0
        %v4427 = vadd.f32 %v4314, %v4426
        %v4428 = vpop.f32.mrf.mxu0
        %v4429 = vadd.f32 %v4316, %v4428
        %4430 = vmatprep.mubr.bf16.mxu0 %v1761
        %4431 = vmatmul.mubr.bf16.gmra.mxu0 %v1760
        %v4432 = vpop.f32.mrf.mxu0
        %v4433 = vadd.f32 %v4320, %v4432
        %v4434 = vpop.f32.mrf.mxu0
        %v4435 = vadd.f32 %v4322, %v4434
        %v4436 = vpop.f32.mrf.mxu0
        %v4437 = vadd.f32 %v4324, %v4436
        %v4438 = vpop.f32.mrf.mxu0
        %v4439 = vadd.f32 %v4326, %v4438
        %4440 = vmatprep.mubr.bf16.mxu0 %v1782
        %4441 = vmatmul.mubr.bf16.gmra.mxu0 %v1781
        %v4442 = vpop.f32.mrf.mxu0
        %v4443 = vadd.f32 %v4330, %v4442
        %v4444 = vpop.f32.mrf.mxu0
        %v4445 = vadd.f32 %v4332, %v4444
        %v4446 = vpop.f32.mrf.mxu0
        %v4447 = vadd.f32 %v4334, %v4446
        %v4448 = vpop.f32.mrf.mxu0
        %v4449 = vadd.f32 %v4336, %v4448
        %4450 = vmatprep.mubr.bf16.mxu0 %v1803
        %4451 = vmatmul.mubr.bf16.gmra.mxu0 %v1802
        %v4452 = vpop.f32.mrf.mxu0
        %v4453 = vadd.f32 %v4340, %v4452
        %v4454 = vpop.f32.mrf.mxu0
        %v4455 = vadd.f32 %v4342, %v4454
        %v4456 = vpop.f32.mrf.mxu0
        %v4457 = vadd.f32 %v4344, %v4456
        %v4458 = vpop.f32.mrf.mxu0
        %v4459 = vadd.f32 %v4346, %v4458
        %4460 = vmatprep.mubr.bf16.mxu0 %v1824
        %4461 = vmatmul.mubr.bf16.gmra.mxu0 %v1823
        %v4462 = vpop.f32.mrf.mxu0
        %v4463 = vadd.f32 %v4350, %v4462
        %v4464 = vpop.f32.mrf.mxu0
        %v4465 = vadd.f32 %v4352, %v4464
        %v4466 = vpop.f32.mrf.mxu0
        %v4467 = vadd.f32 %v4354, %v4466
        %v4468 = vpop.f32.mrf.mxu0
        %v4469 = vadd.f32 %v4356, %v4468
        %4470 = vdwg.mxu0
        %4471 = vmatprep.subr.bf16.mxu0 %v3247
        %4472 = vmatpush1.bf16.msra.mxu0 %v3246
        %4473 = vmatprep.subr.bf16.mxu0 %v3245
        %4474 = vmatpush1.bf16.msra.mxu0 %v3244
        %4475 = vmatprep.subr.bf16.mxu0 %v3243
        %4476 = vmatpush1.bf16.msra.mxu0 %v3242
        %4477 = vmatprep.subr.bf16.mxu0 %v3241
        %4478 = vmatpush1.bf16.msra.mxu0 %v3240
        %4479 = vmatprep.subr.bf16.mxu0 %v3239
        %4480 = vmatpush1.bf16.msra.mxu0 %v3238
        %4481 = vmatprep.subr.bf16.mxu0 %v3237
        %4482 = vmatpush1.bf16.msra.mxu0 %v3236
        %4483 = vmatprep.subr.bf16.mxu0 %v3235
        %4484 = vmatpush1.bf16.msra.mxu0 %v3234
        %4485 = vmatprep.subr.bf16.mxu0 %v3233
        %4486 = vmatpush1.bf16.msra.mxu0 %v3232
        %4487 = vmatprep.subr.bf16.mxu0 %v3263
        %4488 = vmatpush2.bf16.msra.mxu0 %v3262
        %4489 = vmatprep.subr.bf16.mxu0 %v3261
        %4490 = vmatpush2.bf16.msra.mxu0 %v3260
        %4491 = vmatprep.subr.bf16.mxu0 %v3259
        %4492 = vmatpush2.bf16.msra.mxu0 %v3258
        %4493 = vmatprep.subr.bf16.mxu0 %v3257
        %4494 = vmatpush2.bf16.msra.mxu0 %v3256
        %4495 = vmatprep.subr.bf16.mxu0 %v3255
        %4496 = vmatpush2.bf16.msra.mxu0 %v3254
        %4497 = vmatprep.subr.bf16.mxu0 %v3253
        %4498 = vmatpush2.bf16.msra.mxu0 %v3252
        %4499 = vmatprep.subr.bf16.mxu0 %v3251
        %4500 = vmatpush2.bf16.msra.mxu0 %v3250
        %4501 = vmatprep.subr.bf16.mxu0 %v3249
        %4502 = vmatpush2.bf16.msra.mxu0 %v3248
        %4503 = vmatprep.mubr.bf16.mxu0 %v1679
        %4504 = vmatmul.mubr.bf16.gmra.mxu0 %v1678
        %v4505 = vpop.f32.mrf.mxu0
        %v4506 = vadd.f32 %v4393, %v4505
        %v4507 = vpop.f32.mrf.mxu0
        %v4508 = vadd.f32 %v4395, %v4507
        %v4509 = vpop.f32.mrf.mxu0
        %v4510 = vadd.f32 %v4397, %v4509
        %v4511 = vpop.f32.mrf.mxu0
        %v4512 = vadd.f32 %v4399, %v4511
        %4513 = vmatprep.mubr.bf16.mxu0 %v1700
        %4514 = vmatmul.mubr.bf16.gmra.mxu0 %v1699
        %v4515 = vpop.f32.mrf.mxu0
        %v4516 = vadd.f32 %v4403, %v4515
        %v4517 = vpop.f32.mrf.mxu0
        %v4518 = vadd.f32 %v4405, %v4517
        %v4519 = vpop.f32.mrf.mxu0
        %v4520 = vadd.f32 %v4407, %v4519
        %v4521 = vpop.f32.mrf.mxu0
        %v4522 = vadd.f32 %v4409, %v4521
        %4523 = vmatprep.mubr.bf16.mxu0 %v1721
        %4524 = vmatmul.mubr.bf16.gmra.mxu0 %v1720
        %v4525 = vpop.f32.mrf.mxu0
        %v4526 = vadd.f32 %v4413, %v4525
        %v4527 = vpop.f32.mrf.mxu0
        %v4528 = vadd.f32 %v4415, %v4527
        %v4529 = vpop.f32.mrf.mxu0
        %v4530 = vadd.f32 %v4417, %v4529
        %v4531 = vpop.f32.mrf.mxu0
        %v4532 = vadd.f32 %v4419, %v4531
        %4533 = vmatprep.mubr.bf16.mxu0 %v1742
        %4534 = vmatmul.mubr.bf16.gmra.mxu0 %v1741
        %v4535 = vpop.f32.mrf.mxu0
        %v4536 = vadd.f32 %v4423, %v4535
        %v4537 = vpop.f32.mrf.mxu0
        %v4538 = vadd.f32 %v4425, %v4537
        %v4539 = vpop.f32.mrf.mxu0
        %v4540 = vadd.f32 %v4427, %v4539
        %v4541 = vpop.f32.mrf.mxu0
        %v4542 = vadd.f32 %v4429, %v4541
        %4543 = vmatprep.mubr.bf16.mxu0 %v1763
        %4544 = vmatmul.mubr.bf16.gmra.mxu0 %v1762
        %v4545 = vpop.f32.mrf.mxu0
        %v4546 = vadd.f32 %v4433, %v4545
        %v4547 = vpop.f32.mrf.mxu0
        %v4548 = vadd.f32 %v4435, %v4547
        %v4549 = vpop.f32.mrf.mxu0
        %v4550 = vadd.f32 %v4437, %v4549
        %v4551 = vpop.f32.mrf.mxu0
        %v4552 = vadd.f32 %v4439, %v4551
        %4553 = vmatprep.mubr.bf16.mxu0 %v1784
        %4554 = vmatmul.mubr.bf16.gmra.mxu0 %v1783
        %v4555 = vpop.f32.mrf.mxu0
        %v4556 = vadd.f32 %v4443, %v4555
        %v4557 = vpop.f32.mrf.mxu0
        %v4558 = vadd.f32 %v4445, %v4557
        %v4559 = vpop.f32.mrf.mxu0
        %v4560 = vadd.f32 %v4447, %v4559
        %v4561 = vpop.f32.mrf.mxu0
        %v4562 = vadd.f32 %v4449, %v4561
        %4563 = vmatprep.mubr.bf16.mxu0 %v1805
        %4564 = vmatmul.mubr.bf16.gmra.mxu0 %v1804
        %v4565 = vpop.f32.mrf.mxu0
        %v4566 = vadd.f32 %v4453, %v4565
        %v4567 = vpop.f32.mrf.mxu0
        %v4568 = vadd.f32 %v4455, %v4567
        %v4569 = vpop.f32.mrf.mxu0
        %v4570 = vadd.f32 %v4457, %v4569
        %v4571 = vpop.f32.mrf.mxu0
        %v4572 = vadd.f32 %v4459, %v4571
        %4573 = vmatprep.mubr.bf16.mxu0 %v1826
        %4574 = vmatmul.mubr.bf16.gmra.mxu0 %v1825
        %v4575 = vpop.f32.mrf.mxu0
        %v4576 = vadd.f32 %v4463, %v4575
        %v4577 = vpop.f32.mrf.mxu0
        %v4578 = vadd.f32 %v4465, %v4577
        %v4579 = vpop.f32.mrf.mxu0
        %v4580 = vadd.f32 %v4467, %v4579
        %v4581 = vpop.f32.mrf.mxu0
        %v4582 = vadd.f32 %v4469, %v4581
        %4583 = vdwg.mxu0
        %4584 = vmatprep.subr.bf16.mxu0 %v3279
        %4585 = vmatpush1.bf16.msra.mxu0 %v3278
        %4586 = vmatprep.subr.bf16.mxu0 %v3277
        %4587 = vmatpush1.bf16.msra.mxu0 %v3276
        %4588 = vmatprep.subr.bf16.mxu0 %v3275
        %4589 = vmatpush1.bf16.msra.mxu0 %v3274
        %4590 = vmatprep.subr.bf16.mxu0 %v3273
        %4591 = vmatpush1.bf16.msra.mxu0 %v3272
        %4592 = vmatprep.subr.bf16.mxu0 %v3271
        %4593 = vmatpush1.bf16.msra.mxu0 %v3270
        %4594 = vmatprep.subr.bf16.mxu0 %v3269
        %4595 = vmatpush1.bf16.msra.mxu0 %v3268
        %4596 = vmatprep.subr.bf16.mxu0 %v3267
        %4597 = vmatpush1.bf16.msra.mxu0 %v3266
        %4598 = vmatprep.subr.bf16.mxu0 %v3265
        %4599 = vmatpush1.bf16.msra.mxu0 %v3264
        %4600 = vmatprep.subr.bf16.mxu0 %v3295
        %4601 = vmatpush2.bf16.msra.mxu0 %v3294
        %4602 = vmatprep.subr.bf16.mxu0 %v3293
        %4603 = vmatpush2.bf16.msra.mxu0 %v3292
        %4604 = vmatprep.subr.bf16.mxu0 %v3291
        %4605 = vmatpush2.bf16.msra.mxu0 %v3290
        %4606 = vmatprep.subr.bf16.mxu0 %v3289
        %4607 = vmatpush2.bf16.msra.mxu0 %v3288
        %4608 = vmatprep.subr.bf16.mxu0 %v3287
        %4609 = vmatpush2.bf16.msra.mxu0 %v3286
        %4610 = vmatprep.subr.bf16.mxu0 %v3285
        %4611 = vmatpush2.bf16.msra.mxu0 %v3284
        %4612 = vmatprep.subr.bf16.mxu0 %v3283
        %4613 = vmatpush2.bf16.msra.mxu0 %v3282
        %4614 = vmatprep.subr.bf16.mxu0 %v3281
        %4615 = vmatpush2.bf16.msra.mxu0 %v3280
        %4616 = vmatprep.mubr.bf16.mxu0 %v1681
        %4617 = vmatmul.mubr.bf16.gmra.mxu0 %v1680
        %v4618 = vpop.f32.mrf.mxu0
        %v4619 = vadd.f32 %v4506, %v4618
        %v4620 = vpop.f32.mrf.mxu0
        %v4621 = vadd.f32 %v4508, %v4620
        %v4622 = vpop.f32.mrf.mxu0
        %v4623 = vadd.f32 %v4510, %v4622
        %v4624 = vpop.f32.mrf.mxu0
        %v4625 = vadd.f32 %v4512, %v4624
        %4626 = vmatprep.mubr.bf16.mxu0 %v1702
        %4627 = vmatmul.mubr.bf16.gmra.mxu0 %v1701
        %v4628 = vpop.f32.mrf.mxu0
        %v4629 = vadd.f32 %v4516, %v4628
        %v4630 = vpop.f32.mrf.mxu0
        %v4631 = vadd.f32 %v4518, %v4630
        %v4632 = vpop.f32.mrf.mxu0
        %v4633 = vadd.f32 %v4520, %v4632
        %v4634 = vpop.f32.mrf.mxu0
        %v4635 = vadd.f32 %v4522, %v4634
        %4636 = vmatprep.mubr.bf16.mxu0 %v1723
        %4637 = vmatmul.mubr.bf16.gmra.mxu0 %v1722
        %v4638 = vpop.f32.mrf.mxu0
        %v4639 = vadd.f32 %v4526, %v4638
        %v4640 = vpop.f32.mrf.mxu0
        %v4641 = vadd.f32 %v4528, %v4640
        %v4642 = vpop.f32.mrf.mxu0
        %v4643 = vadd.f32 %v4530, %v4642
        %v4644 = vpop.f32.mrf.mxu0
        %v4645 = vadd.f32 %v4532, %v4644
        %4646 = vmatprep.mubr.bf16.mxu0 %v1744
        %4647 = vmatmul.mubr.bf16.gmra.mxu0 %v1743
        %v4648 = vpop.f32.mrf.mxu0
        %v4649 = vadd.f32 %v4536, %v4648
        %v4650 = vpop.f32.mrf.mxu0
        %v4651 = vadd.f32 %v4538, %v4650
        %v4652 = vpop.f32.mrf.mxu0
        %v4653 = vadd.f32 %v4540, %v4652
        %v4654 = vpop.f32.mrf.mxu0
        %v4655 = vadd.f32 %v4542, %v4654
        %4656 = vmatprep.mubr.bf16.mxu0 %v1765
        %4657 = vmatmul.mubr.bf16.gmra.mxu0 %v1764
        %v4658 = vpop.f32.mrf.mxu0
        %v4659 = vadd.f32 %v4546, %v4658
        %v4660 = vpop.f32.mrf.mxu0
        %v4661 = vadd.f32 %v4548, %v4660
        %v4662 = vpop.f32.mrf.mxu0
        %v4663 = vadd.f32 %v4550, %v4662
        %v4664 = vpop.f32.mrf.mxu0
        %v4665 = vadd.f32 %v4552, %v4664
        %4666 = vmatprep.mubr.bf16.mxu0 %v1786
        %4667 = vmatmul.mubr.bf16.gmra.mxu0 %v1785
        %v4668 = vpop.f32.mrf.mxu0
        %v4669 = vadd.f32 %v4556, %v4668
        %v4670 = vpop.f32.mrf.mxu0
        %v4671 = vadd.f32 %v4558, %v4670
        %v4672 = vpop.f32.mrf.mxu0
        %v4673 = vadd.f32 %v4560, %v4672
        %v4674 = vpop.f32.mrf.mxu0
        %v4675 = vadd.f32 %v4562, %v4674
        %4676 = vmatprep.mubr.bf16.mxu0 %v1807
        %4677 = vmatmul.mubr.bf16.gmra.mxu0 %v1806
        %v4678 = vpop.f32.mrf.mxu0
        %v4679 = vadd.f32 %v4566, %v4678
        %v4680 = vpop.f32.mrf.mxu0
        %v4681 = vadd.f32 %v4568, %v4680
        %v4682 = vpop.f32.mrf.mxu0
        %v4683 = vadd.f32 %v4570, %v4682
        %v4684 = vpop.f32.mrf.mxu0
        %v4685 = vadd.f32 %v4572, %v4684
        %4686 = vmatprep.mubr.bf16.mxu0 %v1828
        %4687 = vmatmul.mubr.bf16.gmra.mxu0 %v1827
        %v4688 = vpop.f32.mrf.mxu0
        %v4689 = vadd.f32 %v4576, %v4688
        %v4690 = vpop.f32.mrf.mxu0
        %v4691 = vadd.f32 %v4578, %v4690
        %v4692 = vpop.f32.mrf.mxu0
        %v4693 = vadd.f32 %v4580, %v4692
        %v4694 = vpop.f32.mrf.mxu0
        %v4695 = vadd.f32 %v4582, %v4694
        %4696 = vdwg.mxu0
        %4697 = vmatprep.subr.bf16.mxu0 %v3311
        %4698 = vmatpush1.bf16.msra.mxu0 %v3310
        %4699 = vmatprep.subr.bf16.mxu0 %v3309
        %4700 = vmatpush1.bf16.msra.mxu0 %v3308
        %4701 = vmatprep.subr.bf16.mxu0 %v3307
        %4702 = vmatpush1.bf16.msra.mxu0 %v3306
        %4703 = vmatprep.subr.bf16.mxu0 %v3305
        %4704 = vmatpush1.bf16.msra.mxu0 %v3304
        %4705 = vmatprep.subr.bf16.mxu0 %v3303
        %4706 = vmatpush1.bf16.msra.mxu0 %v3302
        %4707 = vmatprep.subr.bf16.mxu0 %v3301
        %4708 = vmatpush1.bf16.msra.mxu0 %v3300
        %4709 = vmatprep.subr.bf16.mxu0 %v3299
        %4710 = vmatpush1.bf16.msra.mxu0 %v3298
        %4711 = vmatprep.subr.bf16.mxu0 %v3297
        %4712 = vmatpush1.bf16.msra.mxu0 %v3296
        %4713 = vmatprep.subr.bf16.mxu0 %v3327
        %4714 = vmatpush2.bf16.msra.mxu0 %v3326
        %4715 = vmatprep.subr.bf16.mxu0 %v3325
        %4716 = vmatpush2.bf16.msra.mxu0 %v3324
        %4717 = vmatprep.subr.bf16.mxu0 %v3323
        %4718 = vmatpush2.bf16.msra.mxu0 %v3322
        %4719 = vmatprep.subr.bf16.mxu0 %v3321
        %4720 = vmatpush2.bf16.msra.mxu0 %v3320
        %4721 = vmatprep.subr.bf16.mxu0 %v3319
        %4722 = vmatpush2.bf16.msra.mxu0 %v3318
        %4723 = vmatprep.subr.bf16.mxu0 %v3317
        %4724 = vmatpush2.bf16.msra.mxu0 %v3316
        %4725 = vmatprep.subr.bf16.mxu0 %v3315
        %4726 = vmatpush2.bf16.msra.mxu0 %v3314
        %4727 = vmatprep.subr.bf16.mxu0 %v3313
        %4728 = vmatpush2.bf16.msra.mxu0 %v3312
        %4729 = vmatprep.mubr.bf16.mxu0 %v1683
        %4730 = vmatmul.mubr.bf16.gmra.mxu0 %v1682
        %v4731 = vpop.f32.mrf.mxu0
        %v4732 = vadd.f32 %v4619, %v4731
        %v4733 = vpop.f32.mrf.mxu0
        %v4734 = vadd.f32 %v4621, %v4733
        %v4735 = vpop.f32.mrf.mxu0
        %v4736 = vadd.f32 %v4623, %v4735
        %v4737 = vpop.f32.mrf.mxu0
        %v4738 = vadd.f32 %v4625, %v4737
        %4739 = vmatprep.mubr.bf16.mxu0 %v1704
        %4740 = vmatmul.mubr.bf16.gmra.mxu0 %v1703
        %v4741 = vpop.f32.mrf.mxu0
        %v4742 = vadd.f32 %v4629, %v4741
        %v4743 = vpop.f32.mrf.mxu0
        %v4744 = vadd.f32 %v4631, %v4743
        %v4745 = vpop.f32.mrf.mxu0
        %v4746 = vadd.f32 %v4633, %v4745
        %v4747 = vpop.f32.mrf.mxu0
        %v4748 = vadd.f32 %v4635, %v4747
        %4749 = vmatprep.mubr.bf16.mxu0 %v1725
        %4750 = vmatmul.mubr.bf16.gmra.mxu0 %v1724
        %v4751 = vpop.f32.mrf.mxu0
        %v4752 = vadd.f32 %v4639, %v4751
        %v4753 = vpop.f32.mrf.mxu0
        %v4754 = vadd.f32 %v4641, %v4753
        %v4755 = vpop.f32.mrf.mxu0
        %v4756 = vadd.f32 %v4643, %v4755
        %v4757 = vpop.f32.mrf.mxu0
        %v4758 = vadd.f32 %v4645, %v4757
        %4759 = vmatprep.mubr.bf16.mxu0 %v1746
        %4760 = vmatmul.mubr.bf16.gmra.mxu0 %v1745
        %v4761 = vpop.f32.mrf.mxu0
        %v4762 = vadd.f32 %v4649, %v4761
        %v4763 = vpop.f32.mrf.mxu0
        %v4764 = vadd.f32 %v4651, %v4763
        %v4765 = vpop.f32.mrf.mxu0
        %v4766 = vadd.f32 %v4653, %v4765
        %v4767 = vpop.f32.mrf.mxu0
        %v4768 = vadd.f32 %v4655, %v4767
        %4769 = vmatprep.mubr.bf16.mxu0 %v1767
        %4770 = vmatmul.mubr.bf16.gmra.mxu0 %v1766
        %v4771 = vpop.f32.mrf.mxu0
        %v4772 = vadd.f32 %v4659, %v4771
        %v4773 = vpop.f32.mrf.mxu0
        %v4774 = vadd.f32 %v4661, %v4773
        %v4775 = vpop.f32.mrf.mxu0
        %v4776 = vadd.f32 %v4663, %v4775
        %v4777 = vpop.f32.mrf.mxu0
        %v4778 = vadd.f32 %v4665, %v4777
        %4779 = vmatprep.mubr.bf16.mxu0 %v1788
        %4780 = vmatmul.mubr.bf16.gmra.mxu0 %v1787
        %v4781 = vpop.f32.mrf.mxu0
        %v4782 = vadd.f32 %v4669, %v4781
        %v4783 = vpop.f32.mrf.mxu0
        %v4784 = vadd.f32 %v4671, %v4783
        %v4785 = vpop.f32.mrf.mxu0
        %v4786 = vadd.f32 %v4673, %v4785
        %v4787 = vpop.f32.mrf.mxu0
        %v4788 = vadd.f32 %v4675, %v4787
        %4789 = vmatprep.mubr.bf16.mxu0 %v1809
        %4790 = vmatmul.mubr.bf16.gmra.mxu0 %v1808
        %v4791 = vpop.f32.mrf.mxu0
        %v4792 = vadd.f32 %v4679, %v4791
        %v4793 = vpop.f32.mrf.mxu0
        %v4794 = vadd.f32 %v4681, %v4793
        %v4795 = vpop.f32.mrf.mxu0
        %v4796 = vadd.f32 %v4683, %v4795
        %v4797 = vpop.f32.mrf.mxu0
        %v4798 = vadd.f32 %v4685, %v4797
        %4799 = vmatprep.mubr.bf16.mxu0 %v1830
        %4800 = vmatmul.mubr.bf16.gmra.mxu0 %v1829
        %v4801 = vpop.f32.mrf.mxu0
        %v4802 = vadd.f32 %v4689, %v4801
        %v4803 = vpop.f32.mrf.mxu0
        %v4804 = vadd.f32 %v4691, %v4803
        %v4805 = vpop.f32.mrf.mxu0
        %v4806 = vadd.f32 %v4693, %v4805
        %v4807 = vpop.f32.mrf.mxu0
        %v4808 = vadd.f32 %v4695, %v4807
        %4809 = vdwg.mxu0
        %4810 = vmatprep.subr.bf16.mxu0 %v3343
        %4811 = vmatpush1.bf16.msra.mxu0 %v3342
        %4812 = vmatprep.subr.bf16.mxu0 %v3341
        %4813 = vmatpush1.bf16.msra.mxu0 %v3340
        %4814 = vmatprep.subr.bf16.mxu0 %v3339
        %4815 = vmatpush1.bf16.msra.mxu0 %v3338
        %4816 = vmatprep.subr.bf16.mxu0 %v3337
        %4817 = vmatpush1.bf16.msra.mxu0 %v3336
        %4818 = vmatprep.subr.bf16.mxu0 %v3335
        %4819 = vmatpush1.bf16.msra.mxu0 %v3334
        %4820 = vmatprep.subr.bf16.mxu0 %v3333
        %4821 = vmatpush1.bf16.msra.mxu0 %v3332
        %4822 = vmatprep.subr.bf16.mxu0 %v3331
        %4823 = vmatpush1.bf16.msra.mxu0 %v3330
        %4824 = vmatprep.subr.bf16.mxu0 %v3329
        %4825 = vmatpush1.bf16.msra.mxu0 %v3328
        %4826 = vmatprep.subr.bf16.mxu0 0
        %4827 = vmatpush2.bf16.msra.mxu0 0
        %4828 = vmatprep.subr.bf16.mxu0 0
        %4829 = vmatpush2.bf16.msra.mxu0 0
        %4830 = vmatprep.subr.bf16.mxu0 0
        %4831 = vmatpush2.bf16.msra.mxu0 0
        %4832 = vmatprep.subr.bf16.mxu0 0
        %4833 = vmatpush2.bf16.msra.mxu0 0
        %4834 = vmatprep.subr.bf16.mxu0 0
        %4835 = vmatpush2.bf16.msra.mxu0 0
        %4836 = vmatprep.subr.bf16.mxu0 0
        %4837 = vmatpush2.bf16.msra.mxu0 0
        %4838 = vmatprep.subr.bf16.mxu0 0
        %4839 = vmatpush2.bf16.msra.mxu0 0
        %4840 = vmatprep.subr.bf16.mxu0 0
        %4841 = vmatpush2.bf16.msra.mxu0 0
        %4842 = vmatprep.mubr.bf16.mxu0 0
        %4843 = vmatmul.mubr.bf16.gmra.mxu0 %v1684
        %v4844 = vpop.f32.mrf.mxu0
        %v4845 = vadd.f32 %v4732, %v4844
        %v4846 = vpop.f32.mrf.mxu0
        %v4847 = vadd.f32 %v4734, %v4846
        %v4848 = vpop.f32.mrf.mxu0
        %v4849 = vadd.f32 %v4736, %v4848
        %v4850 = vpop.f32.mrf.mxu0
        %v4851 = vadd.f32 %v4738, %v4850
        %4852 = vmatprep.mubr.bf16.mxu0 0
        %4853 = vmatmul.mubr.bf16.gmra.mxu0 %v1705
        %v4854 = vpop.f32.mrf.mxu0
        %v4855 = vadd.f32 %v4742, %v4854
        %v4856 = vpop.f32.mrf.mxu0
        %v4857 = vadd.f32 %v4744, %v4856
        %v4858 = vpop.f32.mrf.mxu0
        %v4859 = vadd.f32 %v4746, %v4858
        %v4860 = vpop.f32.mrf.mxu0
        %v4861 = vadd.f32 %v4748, %v4860
        %4862 = vmatprep.mubr.bf16.mxu0 0
        %4863 = vmatmul.mubr.bf16.gmra.mxu0 %v1726
        %v4864 = vpop.f32.mrf.mxu0
        %v4865 = vadd.f32 %v4752, %v4864
        %v4866 = vpop.f32.mrf.mxu0
        %v4867 = vadd.f32 %v4754, %v4866
        %v4868 = vpop.f32.mrf.mxu0
        %v4869 = vadd.f32 %v4756, %v4868
        %v4870 = vpop.f32.mrf.mxu0
        %v4871 = vadd.f32 %v4758, %v4870
        %4872 = vmatprep.mubr.bf16.mxu0 0
        %4873 = vmatmul.mubr.bf16.gmra.mxu0 %v1747
        %v4874 = vpop.f32.mrf.mxu0
        %v4875 = vadd.f32 %v4762, %v4874
        %v4876 = vpop.f32.mrf.mxu0
        %v4877 = vadd.f32 %v4764, %v4876
        %v4878 = vpop.f32.mrf.mxu0
        %v4879 = vadd.f32 %v4766, %v4878
        %v4880 = vpop.f32.mrf.mxu0
        %v4881 = vadd.f32 %v4768, %v4880
        %4882 = vmatprep.mubr.bf16.mxu0 0
        %4883 = vmatmul.mubr.bf16.gmra.mxu0 %v1768
        %v4884 = vpop.f32.mrf.mxu0
        %v4885 = vadd.f32 %v4772, %v4884
        %v4886 = vpop.f32.mrf.mxu0
        %v4887 = vadd.f32 %v4774, %v4886
        %v4888 = vpop.f32.mrf.mxu0
        %v4889 = vadd.f32 %v4776, %v4888
        %v4890 = vpop.f32.mrf.mxu0
        %v4891 = vadd.f32 %v4778, %v4890
        %4892 = vmatprep.mubr.bf16.mxu0 0
        %4893 = vmatmul.mubr.bf16.gmra.mxu0 %v1789
        %v4894 = vpop.f32.mrf.mxu0
        %v4895 = vadd.f32 %v4782, %v4894
        %v4896 = vpop.f32.mrf.mxu0
        %v4897 = vadd.f32 %v4784, %v4896
        %v4898 = vpop.f32.mrf.mxu0
        %v4899 = vadd.f32 %v4786, %v4898
        %v4900 = vpop.f32.mrf.mxu0
        %v4901 = vadd.f32 %v4788, %v4900
        %4902 = vmatprep.mubr.bf16.mxu0 0
        %4903 = vmatmul.mubr.bf16.gmra.mxu0 %v1810
        %v4904 = vpop.f32.mrf.mxu0
        %v4905 = vadd.f32 %v4792, %v4904
        %v4906 = vpop.f32.mrf.mxu0
        %v4907 = vadd.f32 %v4794, %v4906
        %v4908 = vpop.f32.mrf.mxu0
        %v4909 = vadd.f32 %v4796, %v4908
        %v4910 = vpop.f32.mrf.mxu0
        %v4911 = vadd.f32 %v4798, %v4910
        %4912 = vmatprep.mubr.bf16.mxu0 0
        %4913 = vmatmul.mubr.bf16.gmra.mxu0 %v1831
        %v4914 = vpop.f32.mrf.mxu0
        %v4915 = vadd.f32 %v4802, %v4914
        %v4916 = vpop.f32.mrf.mxu0
        %v4917 = vadd.f32 %v4804, %v4916
        %v4918 = vpop.f32.mrf.mxu0
        %v4919 = vadd.f32 %v4806, %v4918
        %v4920 = vpop.f32.mrf.mxu0
        %v4921 = vadd.f32 %v4808, %v4920
        %4922 = vdwg.mxu0
        %v4923 = vadd.f32 %v608, %v4845
        %v4924 = vadd.f32 %v609, %v4847
        %v4925 = vadd.f32 %v610, %v4849
        %v4926 = vadd.f32 %v611, %v4851
        %v4927 = vadd.f32 %v612, %v4855
        %v4928 = vadd.f32 %v613, %v4857
        %v4929 = vadd.f32 %v614, %v4859
        %v4930 = vadd.f32 %v615, %v4861
        %v4931 = vadd.f32 %v616, %v4865
        %v4932 = vadd.f32 %v617, %v4867
        %v4933 = vadd.f32 %v618, %v4869
        %v4934 = vadd.f32 %v619, %v4871
        %v4935 = vadd.f32 %v620, %v4875
        %v4936 = vadd.f32 %v621, %v4877
        %v4937 = vadd.f32 %v622, %v4879
        %v4938 = vadd.f32 %v623, %v4881
        %v4939 = vadd.f32 %v624, %v4885
        %v4940 = vadd.f32 %v625, %v4887
        %v4941 = vadd.f32 %v626, %v4889
        %v4942 = vadd.f32 %v627, %v4891
        %v4943 = vadd.f32 %v628, %v4895
        %v4944 = vadd.f32 %v629, %v4897
        %v4945 = vadd.f32 %v630, %v4899
        %v4946 = vadd.f32 %v631, %v4901
        %v4947 = vadd.f32 %v632, %v4905
        %v4948 = vadd.f32 %v633, %v4907
        %v4949 = vadd.f32 %v634, %v4909
        %v4950 = vadd.f32 %v635, %v4911
        %v4951 = vadd.f32 %v636, %v4915
        %v4952 = vadd.f32 %v637, %v4917
        %v4953 = vadd.f32 %v638, %v4919
        %v4954 = vadd.f32 %v639, %v4921
        %4955 = vst [vmem:[#allocation2] sm:$0xff] %v4923
        %4956 = vst [vmem:[#allocation2 + $0x8] sm:$0xff] %v4924
        %4957 = vst [vmem:[#allocation2 + $0x10] sm:$0xff] %v4925
        %4958 = vst [vmem:[#allocation2 + $0x18] sm:$0xff] %v4926
        %4959 = vst [vmem:[#allocation2 + $0x20] sm:$0xff] %v4927
        %4960 = vst [vmem:[#allocation2 + $0x28] sm:$0xff] %v4928
        %4961 = vst [vmem:[#allocation2 + $0x30] sm:$0xff] %v4929
        %4962 = vst [vmem:[#allocation2 + $0x38] sm:$0xff] %v4930
        %4963 = vst [vmem:[#allocation2 + $0x40] sm:$0xff] %v4931
        %4964 = vst [vmem:[#allocation2 + $0x48] sm:$0xff] %v4932
        %4965 = vst [vmem:[#allocation2 + $0x50] sm:$0xff] %v4933
        %4966 = vst [vmem:[#allocation2 + $0x58] sm:$0xff] %v4934
        %4967 = vst [vmem:[#allocation2 + $0x60] sm:$0xff] %v4935
        %4968 = vst [vmem:[#allocation2 + $0x68] sm:$0xff] %v4936
        %4969 = vst [vmem:[#allocation2 + $0x70] sm:$0xff] %v4937
        %4970 = vst [vmem:[#allocation2 + $0x78] sm:$0xff] %v4938
        %4971 = vst [vmem:[#allocation2 + $0x80] sm:$0xff] %v4939
        %4972 = vst [vmem:[#allocation2 + $0x88] sm:$0xff] %v4940
        %4973 = vst [vmem:[#allocation2 + $0x90] sm:$0xff] %v4941
        %4974 = vst [vmem:[#allocation2 + $0x98] sm:$0xff] %v4942
        %4975 = vst [vmem:[#allocation2 + $0xa0] sm:$0xff] %v4943
        %4976 = vst [vmem:[#allocation2 + $0xa8] sm:$0xff] %v4944
        %4977 = vst [vmem:[#allocation2 + $0xb0] sm:$0xff] %v4945
        %4978 = vst [vmem:[#allocation2 + $0xb8] sm:$0xff] %v4946
        %4979 = vst [vmem:[#allocation2 + $0xc0] sm:$0xff] %v4947
        %4980 = vst [vmem:[#allocation2 + $0xc8] sm:$0xff] %v4948
        %4981 = vst [vmem:[#allocation2 + $0xd0] sm:$0xff] %v4949
        %4982 = vst [vmem:[#allocation2 + $0xd8] sm:$0xff] %v4950
        %4983 = vst [vmem:[#allocation2 + $0xe0] sm:$0xff] %v4951
        %4984 = vst [vmem:[#allocation2 + $0xe8] sm:$0xff] %v4952
        %4985 = vst [vmem:[#allocation2 + $0xf0] sm:$0xff] %v4953
        %4986 = vst [vmem:[#allocation2 + $0xf8] sm:$0xff] %v4954
        %p4987 = scmp.eq.s32.totalorder %s18, 7
        // Predicated region
        $region59: #{adapter_forward.2} parent=49 // pred_check
          %p4988 = pneg %p4987
        $region60: #{adapter_forward.2} parent=49 // pred_check_branch
          %4990 = sbr.rel (%p4988) target = $region62
        $region61: #{adapter_forward.2} parent=49 // pred_region
          %v4991 = vld [vmem:[#allocation2] sm:$0xff]
          %v4992 = vld [vmem:[#allocation2 + $0x8] sm:$0xff]
          %v4993 = vld [vmem:[#allocation2 + $0x10] sm:$0xff]
          %v4994 = vld [vmem:[#allocation2 + $0x18] sm:$0xff]
          %v4995 = vld [vmem:[#allocation2 + $0x20] sm:$0xff]
          %v4996 = vld [vmem:[#allocation2 + $0x28] sm:$0xff]
          %v4997 = vld [vmem:[#allocation2 + $0x30] sm:$0xff]
          %v4998 = vld [vmem:[#allocation2 + $0x38] sm:$0xff]
          %v4999 = vld [vmem:[#allocation2 + $0x40] sm:$0xff]
          %v5000 = vld [vmem:[#allocation2 + $0x48] sm:$0xff]
          %v5001 = vld [vmem:[#allocation2 + $0x50] sm:$0xff]
          %v5002 = vld [vmem:[#allocation2 + $0x58] sm:$0xff]
          %v5003 = vld [vmem:[#allocation2 + $0x60] sm:$0xff]
          %v5004 = vld [vmem:[#allocation2 + $0x68] sm:$0xff]
          %v5005 = vld [vmem:[#allocation2 + $0x70] sm:$0xff]
          %v5006 = vld [vmem:[#allocation2 + $0x78] sm:$0xff]
          %v5007 = vld [vmem:[#allocation2 + $0x80] sm:$0xff]
          %v5008 = vld [vmem:[#allocation2 + $0x88] sm:$0xff]
          %v5009 = vld [vmem:[#allocation2 + $0x90] sm:$0xff]
          %v5010 = vld [vmem:[#allocation2 + $0x98] sm:$0xff]
          %v5011 = vld [vmem:[#allocation2 + $0xa0] sm:$0xff]
          %v5012 = vld [vmem:[#allocation2 + $0xa8] sm:$0xff]
          %v5013 = vld [vmem:[#allocation2 + $0xb0] sm:$0xff]
          %v5014 = vld [vmem:[#allocation2 + $0xb8] sm:$0xff]
          %v5015 = vld [vmem:[#allocation2 + $0xc0] sm:$0xff]
          %v5016 = vld [vmem:[#allocation2 + $0xc8] sm:$0xff]
          %v5017 = vld [vmem:[#allocation2 + $0xd0] sm:$0xff]
          %v5018 = vld [vmem:[#allocation2 + $0xd8] sm:$0xff]
          %v5019 = vld [vmem:[#allocation2 + $0xe0] sm:$0xff]
          %v5020 = vld [vmem:[#allocation2 + $0xe8] sm:$0xff]
          %v5021 = vld [vmem:[#allocation2 + $0xf0] sm:$0xff]
          %v5022 = vld [vmem:[#allocation2 + $0xf8] sm:$0xff]
          %5023 = vst [vmem:[%s569] sm:$0xff] %v4991
          %5024 = vst [vmem:[%s569 + $0x8] sm:$0xff] %v4992
          %5025 = vst [vmem:[%s569 + $0x10] sm:$0xff] %v4993
          %5026 = vst [vmem:[%s569 + $0x18] sm:$0xff] %v4994
          %5027 = vst [vmem:[%s569 + $0x20] sm:$0xff] %v4995
          %5028 = vst [vmem:[%s569 + $0x28] sm:$0xff] %v4996
          %5029 = vst [vmem:[%s569 + $0x30] sm:$0xff] %v4997
          %5030 = vst [vmem:[%s569 + $0x38] sm:$0xff] %v4998
          %5031 = vst [vmem:[%s569 + $0x40] sm:$0xff] %v4999
          %5032 = vst [vmem:[%s569 + $0x48] sm:$0xff] %v5000
          %5033 = vst [vmem:[%s569 + $0x50] sm:$0xff] %v5001
          %5034 = vst [vmem:[%s569 + $0x58] sm:$0xff] %v5002
          %5035 = vst [vmem:[%s569 + $0x60] sm:$0xff] %v5003
          %5036 = vst [vmem:[%s569 + $0x68] sm:$0xff] %v5004
          %5037 = vst [vmem:[%s569 + $0x70] sm:$0xff] %v5005
          %5038 = vst [vmem:[%s569 + $0x78] sm:$0xff] %v5006
          %5039 = vst [vmem:[%s569 + $0x80] sm:$0xff] %v5007
          %5040 = vst [vmem:[%s569 + $0x88] sm:$0xff] %v5008
          %5041 = vst [vmem:[%s569 + $0x90] sm:$0xff] %v5009
          %5042 = vst [vmem:[%s569 + $0x98] sm:$0xff] %v5010
          %5043 = vst [vmem:[%s569 + $0xa0] sm:$0xff] %v5011
          %5044 = vst [vmem:[%s569 + $0xa8] sm:$0xff] %v5012
          %5045 = vst [vmem:[%s569 + $0xb0] sm:$0xff] %v5013
          %5046 = vst [vmem:[%s569 + $0xb8] sm:$0xff] %v5014
          %5047 = vst [vmem:[%s569 + $0xc0] sm:$0xff] %v5015
          %5048 = vst [vmem:[%s569 + $0xc8] sm:$0xff] %v5016
          %5049 = vst [vmem:[%s569 + $0xd0] sm:$0xff] %v5017
          %5050 = vst [vmem:[%s569 + $0xd8] sm:$0xff] %v5018
          %5051 = vst [vmem:[%s569 + $0xe0] sm:$0xff] %v5019
          %5052 = vst [vmem:[%s569 + $0xe8] sm:$0xff] %v5020
          %5053 = vst [vmem:[%s569 + $0xf0] sm:$0xff] %v5021
          %5054 = vst [vmem:[%s569 + $0xf8] sm:$0xff] %v5022
        $region62: #{adapter_forward.2} parent=49 // pred_fallthru
          _
        %s5055 = smul.u32 16, %s17
        %p5056 = scmp.lt.s32.totalorder %s5055, 15
        %s5057 = scalar_select %p5056, %s5055, 15
        %s5058 = smul.addr %s5057, 2
        %s5059 = smul.addr %s5058, 8
        %s5060 = scalar_lea.vmem %s2, %s5059
        // Predicated region
        $region63: #{adapter_forward.2} parent=49 // pred_check
          %p5061 = pneg %p97
        $region64: #{adapter_forward.2} parent=49 // pred_check_branch
          %5063 = sbr.rel (%p5061) target = $region66
        $region65: #{adapter_forward.2} parent=49 // pred_region
          %s5064 = smul.u32 16, %s17
        $region66: #{adapter_forward.2} parent=49 // pred_fallthru
          _
        // Predicated region
        $region67: #{adapter_forward.2} parent=49 // pred_check
          %p5065 = pneg %p97
        $region68: #{adapter_forward.2} parent=49 // pred_check_branch
          %5067 = sbr.rel (%p5065) target = $region70
        $region69: #{adapter_forward.2} parent=49 // pred_region
          %s5068 = smul.u32 16, %s17
          %p5069 = scmp.lt.s32.totalorder %s5068, 15
          %s5070 = scalar_select %p5069, %s5068, 15
          %s5071 = smul.addr %s5070, 2
          %s5072 = smul.addr %s5071, 8
          %s5073 = scalar_lea.vmem %s2, %s5072
        $region70: #{adapter_forward.2} parent=49 // pred_fallthru
          _
      $region50: #{adapter_forward.2} parent=5 // pred_fallthru
        _
      %p5074 = scmp.le.s32.totalorder 2, %s8
      // Predicated region
      $region71: #{adapter_forward.2} parent=5 // pred_check
        %p5075 = pneg %p5074
      $region72: #{adapter_forward.2} parent=5 // pred_check_branch
        %5077 = sbr.rel (%p5075) target = $region74
      $region73: #{adapter_forward.2} parent=5 // pred_region
        %s5078 = ssub.s32 %s8, 2
      $region74: #{adapter_forward.2} parent=5 // pred_fallthru
        _
    $region6: #{adapter_forward.2} parent=1 // loop_footer
      %s12 = sadd.s32 1, %s8
    $region7: #{adapter_forward.2} parent=1 // loop_footer_branch
      %7 = sbr.rel target = $region3
    $region8: #{adapter_forward.2} parent=1 // loop_exit
      _

</llo_original>
